<compile_context>
chip_gen: v7x
topology: tpu7x:2x2x1
jax: 0.10.0
libtpu: 0.0.40
codegen_flags: <defaults>
</compile_context>

<pallas_src>
import jax
import jax.numpy as jnp
from jax.experimental import pallas as pl
from jax.experimental.pallas import tpu as pltpu

H = 768  # hidden size baked into the PyTorch module


def intro_combiner_kernel(x_ref, y_ref, wct_ref, bc_ref, w2at_ref, o_ref, intro_ref):
    """Refs (VMEM):
      x_ref   : (B, n_input*H) f32   -- fully resident (small), sliced per batch
      y_ref   : (TS, H)        bf16  -- current sequence tile (batch dim squeezed)
      wct_ref : (n_input*H, H) f32   -- folded intro weight (W2b @ W1)^T, resident
      bc_ref  : (1, H)         f32   -- folded bias (b1 @ W2b^T + b2), resident
      w2at_ref: (H, H)         bf16  -- W2a^T (y-half of combiner2), resident
      o_ref   : (TS, H)        f32   -- output tile (batch dim squeezed)
      intro_ref: (1, H)        f32   -- scratch: intro contribution for this batch
    """
    b = pl.program_id(0)
    s = pl.program_id(1)

    # Intro contribution depends only on the batch index: compute it once per
    # batch (first sequence tile) and keep it in scratch for the other tiles.
    @pl.when(s == 0)
    def _():
        xb = x_ref[pl.ds(b, 1), :]                       # (1, n_input*H) f32
        intro_ref[...] = (
            jnp.dot(xb, wct_ref[...], preferred_element_type=jnp.float32)
            + bc_ref[...])

    # Hot path: bf16 MXU matmul with f32 accumulation, then add the cached
    # per-batch intro term (broadcast over the TS rows of the tile).
    acc = jnp.dot(y_ref[...], w2at_ref[...], preferred_element_type=jnp.float32)
    o_ref[...] = (acc + intro_ref[...]).astype(o_ref.dtype)


def intro_sentence_combiner(x, y, w1, b1, w2, b2, *, seq_tile=512):
    """x: (B, n_input, H) f32, y: (B, S, H) f32.
    w1: (H, n_input*H), b1: (H,), w2: (H, 2H), b2: (H,)  (PyTorch Linear layout)."""
    B, n_input, Hd = x.shape
    S = y.shape[1]
    assert Hd == H and y.shape == (B, S, H)

    # ---- one-time static weight folding (XLA ops outside the kernel) ----
    w2a = w2[:, :H]                                   # (H, H)   acts on y
    w2b = w2[:, H:]                                   # (H, H)   acts on intro
    wc = w2b @ w1                                     # (H, n_input*H) folded intro weight
    bc = b1 @ w2b.T + b2                              # (H,)     folded bias

    x_flat = x.reshape(B, n_input * H).astype(jnp.float32)
    wct = wc.T.astype(jnp.float32)                    # (n_input*H, H) keep f32: per-batch only
    bc2 = bc.reshape(1, H).astype(jnp.float32)
    w2at = w2a.T.astype(jnp.bfloat16)                 # (H, H) bf16 hot-path weight
    y_bf = y.astype(jnp.bfloat16)

    # Sequence tile: full S if small (satisfies layout rule by spanning the
    # dim), else a multiple-of-8 tile sized for VMEM on all generations.
    ts = S if S <= seq_tile else seq_tile
    n_s = pl.cdiv(S, ts)

    in_specs = [
        pl.BlockSpec((B, n_input * H), lambda b, s: (0, 0)),   # x: resident
        pl.BlockSpec((None, ts, H), lambda b, s: (b, s, 0)),   # y tile (pipelined)
        pl.BlockSpec((n_input * H, H), lambda b, s: (0, 0)),   # Wc^T: resident
        pl.BlockSpec((1, H), lambda b, s: (0, 0)),             # bc: resident
        pl.BlockSpec((H, H), lambda b, s: (0, 0)),             # W2a^T: resident
    ]
    out_specs = pl.BlockSpec((None, ts, H), lambda b, s: (b, s, 0))

    # VMEM budget: resident weights/x + double-buffered y (bf16) and out (f32)
    # tiles + scratch, plus headroom. Cap below v7x's 64 MiB physical VMEM.
    vmem_bytes = (x_flat.size * 4 + wct.size * 4 + bc2.size * 4 + w2at.size * 2
                  + 2 * ts * H * 2      # y tiles, double-buffered, bf16
                  + 2 * ts * H * 4      # out tiles, double-buffered, f32
                  + H * 4)              # intro scratch
    vmem_limit = min(int(vmem_bytes) + (8 << 20), 48 << 20)

    return pl.pallas_call(
        intro_combiner_kernel,
        out_shape=jax.ShapeDtypeStruct((B, S, H), jnp.float32),
        grid=(B, n_s),
        in_specs=in_specs,
        out_specs=out_specs,
        scratch_shapes=[pltpu.VMEM((1, H), jnp.float32)],
        compiler_params=pltpu.CompilerParams(
            dimension_semantics=("parallel", "arbitrary"),
            vmem_limit_bytes=vmem_limit),
    )(x_flat, y_bf, wct, bc2, w2at)


def _reference(x, y, w1, b1, w2, b2):
    B, n_input, Hd = x.shape
    S = y.shape[1]
    out = x.reshape(B, n_input * Hd) @ w1.T + b1          # (B, H)
    out = jnp.broadcast_to(out[:, None, :], (B, S, Hd))   # repeat along seq
    iar = jnp.concatenate([y, out], axis=-1)              # (B, S, 2H)
    return iar @ w2.T + b2                                # (B, S, H)


if __name__ == "__main__":
    key = jax.random.PRNGKey(0)
    kx, ky, kw1, kb1, kw2, kb2 = jax.random.split(key, 6)

    B, n_input, S = 2, 3, 8

    x = jax.random.normal(kx, (B, n_input, H), dtype=jnp.float32)
    y = jax.random.normal(ky, (B, S, H), dtype=jnp.float32)

    # Deterministic synthetic parameters (xavier-uniform-like scaling).
    def xavier(k, shape):
        fan_in, fan_out = shape[1], shape[0]
        bound = (6.0 / (fan_in + fan_out)) ** 0.5
        return jax.random.uniform(k, shape, jnp.float32, -bound, bound)

    w1 = xavier(kw1, (H, n_input * H))
    b1 = jax.random.uniform(kb1, (H,), jnp.float32, -0.01, 0.01)
    w2 = xavier(kw2, (H, 2 * H))
    b2 = jax.random.uniform(kb2, (H,), jnp.float32, -0.01, 0.01)

    out = intro_sentence_combiner(x, y, w1, b1, w2, b2)
    out = jax.block_until_ready(out)

    ref = _reference(x, y, w1, b1, w2, b2)
    assert out.shape == (B, S, H)
    max_err = jnp.max(jnp.abs(out - ref))
    assert jnp.allclose(out, ref, rtol=2e-2, atol=2e-2), (
        f"mismatch vs reference (max abs err={max_err})")

    print("KERNEL_OK")
</pallas_src>

<mosaic_0001>
module attributes {stable_mosaic.version = 11 : i64} {
  func.func @intro_combiner_kernel(%arg0: i32, %arg1: i32, %arg2: memref<2x2304xf32, #tpu.memory_space<vmem>>, %arg3: memref<1x8x768xbf16, #tpu.memory_space<vmem>>, %arg4: memref<2304x768xf32, #tpu.memory_space<vmem>>, %arg5: memref<1x768xf32, #tpu.memory_space<vmem>>, %arg6: memref<768x768xbf16, #tpu.memory_space<vmem>>, %arg7: memref<1x8x768xf32, #tpu.memory_space<vmem>>, %arg8: memref<1x768xf32, #tpu.memory_space<vmem>>) attributes {dimension_semantics = [#tpu.dimension_semantics<parallel>, #tpu.dimension_semantics<arbitrary>], iteration_bounds = array<i64: 2, 1>, scalar_prefetch = 0 : i64, scratch_operands = 1 : i64, tpu.core_type = #tpu.core_type<tc>, window_params = [{pipeline_mode = #tpu.pipeline_mode<synchronous>, transform_indices = @transform_0, window_bounds = array<i64: 2, 2304>}, {transform_indices = @transform_1, window_bounds = array<i64: 1, 8, 768>}, {pipeline_mode = #tpu.pipeline_mode<synchronous>, transform_indices = @transform_2, window_bounds = array<i64: 2304, 768>}, {pipeline_mode = #tpu.pipeline_mode<synchronous>, transform_indices = @transform_3, window_bounds = array<i64: 1, 768>}, {pipeline_mode = #tpu.pipeline_mode<synchronous>, transform_indices = @transform_4, window_bounds = array<i64: 768, 768>}, {transform_indices = @transform_5, window_bounds = array<i64: 1, 8, 768>}]} {
    %c0_i32 = arith.constant 0 : i32
    %0 = arith.cmpi eq, %arg1, %c0_i32 : i32
    %1 = arith.extui %0 : i1 to i32
    %c0_i32_0 = arith.constant 0 : i32
    %2 = arith.cmpi ne, %1, %c0_i32_0 : i32
    scf.if %2 {
      %13 = arith.index_cast %arg0 : i32 to index
      %c0_10 = arith.constant 0 : index
      %14 = vector.load %arg2[%13, %c0_10] : memref<2x2304xf32, #tpu.memory_space<vmem>>, vector<1x2304xf32>
      %c0_11 = arith.constant 0 : index
      %c0_12 = arith.constant 0 : index
      %15 = vector.load %arg4[%c0_11, %c0_12] : memref<2304x768xf32, #tpu.memory_space<vmem>>, vector<2304x768xf32>
      %cst_13 = arith.constant dense<0.000000e+00> : vector<1x768xf32>
      %16 = tpu.matmul %14, %15, %cst_13 {dimension_numbers = #tpu.dot_dimension_numbers<[1], [0], [0], [1], [0, 0, 1, 1], [], []>} : vector<1x2304xf32>, vector<2304x768xf32>, vector<1x768xf32> -> vector<1x768xf32>
      %c0_14 = arith.constant 0 : index
      %c0_15 = arith.constant 0 : index
      %17 = vector.load %arg5[%c0_14, %c0_15] : memref<1x768xf32, #tpu.memory_space<vmem>>, vector<1x768xf32>
      %18 = arith.addf %16, %17 : vector<1x768xf32>
      %c0_16 = arith.constant 0 : index
      %c0_17 = arith.constant 0 : index
      %19 = vector.load %arg8[%c0_16, %c0_17] : memref<1x768xf32, #tpu.memory_space<vmem>>, vector<1x768xf32>
      tpu.vector_store %arg8[%c0_16, %c0_17], %18 {strides = array<i32>} : memref<1x768xf32, #tpu.memory_space<vmem>>, vector<1x768xf32>,
    } else {
    }
    %c0 = arith.constant 0 : index
    %c0_1 = arith.constant 0 : index
    %c0_2 = arith.constant 0 : index
    %3 = vector.load %arg3[%c0, %c0_1, %c0_2] : memref<1x8x768xbf16, #tpu.memory_space<vmem>>, vector<1x8x768xbf16>
    %4 = vector.shape_cast %3 : vector<1x8x768xbf16> to vector<8x768xbf16>
    %c0_3 = arith.constant 0 : index
    %c0_4 = arith.constant 0 : index
    %5 = vector.load %arg6[%c0_3, %c0_4] : memref<768x768xbf16, #tpu.memory_space<vmem>>, vector<768x768xbf16>
    %cst = arith.constant dense<0.000000e+00> : vector<8x768xf32>
    %6 = tpu.matmul %4, %5, %cst {dimension_numbers = #tpu.dot_dimension_numbers<[1], [0], [0], [1], [0, 0, 1, 1], [], []>} : vector<8x768xbf16>, vector<768x768xbf16>, vector<8x768xf32> -> vector<8x768xf32>
    %c0_5 = arith.constant 0 : index
    %c0_6 = arith.constant 0 : index
    %7 = vector.load %arg8[%c0_5, %c0_6] : memref<1x768xf32, #tpu.memory_space<vmem>>, vector<1x768xf32>
    %8 = vector.broadcast %7 : vector<1x768xf32> to vector<8x768xf32>
    %9 = arith.addf %6, %8 : vector<8x768xf32>
    %c0_7 = arith.constant 0 : index
    %c0_8 = arith.constant 0 : index
    %c0_9 = arith.constant 0 : index
    %10 = vector.load %arg7[%c0_7, %c0_8, %c0_9] : memref<1x8x768xf32, #tpu.memory_space<vmem>>, vector<1x8x768xf32>
    %11 = vector.shape_cast %10 : vector<1x8x768xf32> to vector<8x768xf32>
    %12 = vector.shape_cast %9 : vector<8x768xf32> to vector<1x8x768xf32>
    tpu.vector_store %arg7[%c0_7, %c0_8, %c0_9], %12 {strides = array<i32>} : memref<1x8x768xf32, #tpu.memory_space<vmem>>, vector<1x8x768xf32>,
    return
  }
  func.func @transform_0(%arg0: i32, %arg1: i32) -> (i32, i32) {
    %c0_i32 = arith.constant 0 : i32
    %c0_i32_0 = arith.constant 0 : i32
    %c0_i32_1 = arith.constant 0 : i32
    return %c0_i32, %c0_i32_0 : i32, i32
  }
  func.func @transform_1(%arg0: i32, %arg1: i32) -> (i32, i32, i32) {
    %c0_i32 = arith.constant 0 : i32
    %c0_i32_0 = arith.constant 0 : i32
    return %arg0, %arg1, %c0_i32 : i32, i32, i32
  }
  func.func @transform_2(%arg0: i32, %arg1: i32) -> (i32, i32) {
    %c0_i32 = arith.constant 0 : i32
    %c0_i32_0 = arith.constant 0 : i32
    %c0_i32_1 = arith.constant 0 : i32
    return %c0_i32, %c0_i32_0 : i32, i32
  }
  func.func @transform_3(%arg0: i32, %arg1: i32) -> (i32, i32) {
    %c0_i32 = arith.constant 0 : i32
    %c0_i32_0 = arith.constant 0 : i32
    %c0_i32_1 = arith.constant 0 : i32
    return %c0_i32, %c0_i32_0 : i32, i32
  }
  func.func @transform_4(%arg0: i32, %arg1: i32) -> (i32, i32) {
    %c0_i32 = arith.constant 0 : i32
    %c0_i32_0 = arith.constant 0 : i32
    %c0_i32_1 = arith.constant 0 : i32
    return %c0_i32, %c0_i32_0 : i32, i32
  }
  func.func @transform_5(%arg0: i32, %arg1: i32) -> (i32, i32, i32) {
    %c0_i32 = arith.constant 0 : i32
    %c0_i32_0 = arith.constant 0 : i32
    return %arg0, %arg1, %c0_i32 : i32, i32, i32
  }
}

</mosaic_0001>

<llo_original>
// kernel: tpu_custom_call.1
$region0: #{tpu_custom_call.1}
  #allocation0 [shape = 'u32[]', space=smem, size = 0x4, offset = 0x4, fixed_abs, tag = 'smem constant byte address 0x4 - core index']
  #allocation1 [shape = 'u32[144,128]{1,0:T(1,128)}', space=vmem, size = 0x12000, scoped, tag = 'internal scratch']
  #allocation2 [shape = 'f32[1,768]{1,0:T(1,128)}', space=vmem, size = 0xc00, scoped, tag = 'scratch operand']
  %s0 = inlined_call_operand.hbm [shape: f32[2,2304], index: 0, kind: input, shape index: {}]
  %s1 = inlined_call_operand.hbm [shape: bf16[2,8,768], index: 1, kind: input, shape index: {}]
  %s2 = inlined_call_operand.hbm [shape: f32[2304,768], index: 2, kind: input, shape index: {}]
  %s3 = inlined_call_operand.hbm [shape: f32[1,768], index: 3, kind: input, shape index: {}]
  %s4 = inlined_call_operand.hbm [shape: bf16[768,768], index: 4, kind: input, shape index: {}]
  %s5 = inlined_call_operand.hbm [shape: f32[2,8,768], index: 5, kind: output, shape index: {}]
  %s6 = sld [smem:[#allocation0]]
  $region77: #{tpu_custom_call.1} parent=0
    _
  %s8 = ssub.s32 1, %s6
  %s9 = scalar_select 0, %s8, %s6
  $region1: #{tpu_custom_call.1} parent=0
    #allocation3 [shape = 'u8[18432]{0}', space=vmem, size = 0x4800, scoped, tag = 'input window, operand 0, single buffered']
    #allocation4 [shape = 's32[2]{0}', space=sflag, size = 0x8, scoped, tag = 'scoped memory for tpu_custom_call.1']
    #allocation5 [shape = 's32[2]{0}', space=sflag, size = 0x8, scoped, tag = 'scoped memory for tpu_custom_call.1']
    #allocation6 [shape = 'u8[24576]{0}', space=vmem, size = 0x6000, scoped, tag = 'input window, operand 1']
    #allocation7 [shape = 's32[2]{0}', space=sflag, size = 0x8, scoped, tag = 'scoped memory for tpu_custom_call.1']
    #allocation8 [shape = 'u8[7077888]{0}', space=vmem, size = 0x6c0000, scoped, tag = 'input window, operand 2, single buffered']
    #allocation9 [shape = 'u8[3072]{0}', space=vmem, size = 0xc00, scoped, tag = 'input window, operand 3, single buffered']
    #allocation10 [shape = 's32[1]{0}', space=sflag, size = 0x4, scoped, tag = 'scoped memory for tpu_custom_call.1']
    #allocation11 [shape = 'u8[1179648]{0}', space=vmem, size = 0x120000, scoped, tag = 'input window, operand 4, single buffered']
    #allocation12 [shape = 'u8[49152]{0}', space=vmem, size = 0xc000, scoped, tag = 'output window, operand 0']
    %10 = vsyncpa [#allocation4], 0
    %11 = vsyncpa [#allocation7], 0
    %s12 = scalar_lea.sflag [#allocation7], 1
    %13 = vsyncpa %s12, 0
    %14 = vsyncpa [#allocation10], 0
    %15 = vsyncpa [#allocation5], 0
    %s16 = scalar_lea.sflag [#allocation5], 1
    %17 = vsyncpa %s16, 0
    loop: start=0, step=1, limit=4
    $region2: #{tpu_custom_call.1} parent=1 // loop_pre_header
      _
    $region3: #{tpu_custom_call.1} parent=1 // loop_header
      %s19 = sphi 0, %s23
      %p20 = scmp.ge.s32.totalorder %s19, 4
      %s26 = sphi 0, %s38
      %s27 = sphi 0, %s34
      %s28 = sphi 0, %s26
      %s29 = sphi 0, %s27
      %s30 = sphi 0, %s28
      %s31 = sphi 0, %s29
      %s39 = sphi 0, %s39
      %s41 = sphi 0, %s39
      %s42 = sphi 0, %s41
      %s56 = sphi 0, %s42
      %s64 = sphi 0, %s66
      %s67 = sphi 0, %s64
      %s68 = sphi 0, %s67
      %s84 = sphi 0, %s68
      %s88 = sphi 0, %s88
      %s90 = sphi 0, %s88
      %s91 = sphi 0, %s90
      %s105 = sphi 0, %s91
      %s109 = sphi 0, %s109
      %s111 = sphi 0, %s109
      %s112 = sphi 0, %s111
      %s126 = sphi 0, %s112
      %s130 = sphi 0, %s130
      %s132 = sphi 0, %s130
      %s133 = sphi 0, %s132
      %s147 = sphi 0, %s133
      %s155 = sphi 0, %s157
      %s158 = sphi 0, %s155
      %s159 = sphi 0, %s158
      %s175 = sphi 0, %s159
    $region4: #{tpu_custom_call.1} parent=1 // loop_header_branch
      %22 = sbr.rel (%p20) target = $region8
    $region5: #{tpu_custom_call.1} parent=1 // loop_body
      %s24 = ssub.s32 %s19, 1
      %s25 = ssub.s32 %s19, 2
      %s32 = sadd.s32 1, %s27
      %p33 = scmp.ge.s32.totalorder %s32, 1
      %s34 = scalar_select %p33, 0, %s32
      %s35 = sadd.s32 1, %s26
      %s36 = scalar_select %p33, %s35, %s26
      %p37 = scmp.ge.s32.totalorder %s36, 2
      %s38 = scalar_select %p37, 0, %s36
      %s40 = sadd.s32 %s39, 1
      %p43 = scmp.eq.s32.totalorder %s19, 1
      %p44 = scmp.ne.s32.totalorder %s39, %s41
      %p45 = scmp.eq.s32.totalorder %s19, 0
      %p46 = por %p44, %p45
      %p47 = scmp.ne.s32.totalorder %s39, %s41
      %p48 = scmp.eq.s32.totalorder %s24, 1
      %p49 = por %p47, %p48
      %p50 = scmp.ne.s32.totalorder %s41, %s42
      %p51 = scmp.eq.s32.totalorder %s24, 0
      %p52 = por %p50, %p51
      %p53 = scmp.ne.s32.totalorder %s41, %s42
      %p54 = scmp.eq.s32.totalorder %s25, 1
      %p55 = por %p53, %p54
      %p57 = scmp.ne.s32.totalorder %s42, %s56
      %p58 = scmp.eq.s32.totalorder %s25, 0
      %p59 = por %p57, %p58
      %s60 = ssub.s32 %s26, %s38
      %s61 = ssub.s32 %s27, %s34
      %s62 = sor.u32 %s60, %s61
      %p63 = scmp.eq.s32.totalorder %s62, 0
      %s65 = sadd.s32 %s64, 1
      %s66 = scalar_select %p63, %s64, %s65
      %p69 = pneg %p63
      %p70 = scmp.eq.s32.totalorder %s19, 1
      %p71 = por %p69, %p70
      %p72 = scmp.ne.s32.totalorder %s64, %s67
      %p73 = scmp.eq.s32.totalorder %s19, 0
      %p74 = por %p72, %p73
      %p75 = scmp.ne.s32.totalorder %s64, %s67
      %p76 = scmp.eq.s32.totalorder %s24, 1
      %p77 = por %p75, %p76
      %p78 = scmp.ne.s32.totalorder %s67, %s68
      %p79 = scmp.eq.s32.totalorder %s24, 0
      %p80 = por %p78, %p79
      %p81 = scmp.ne.s32.totalorder %s67, %s68
      %p82 = scmp.eq.s32.totalorder %s25, 1
      %p83 = por %p81, %p82
      %p85 = scmp.ne.s32.totalorder %s68, %s84
      %p86 = scmp.eq.s32.totalorder %s25, 0
      %p87 = por %p85, %p86
      %s89 = sadd.s32 %s88, 1
      %p92 = scmp.eq.s32.totalorder %s19, 1
      %p93 = scmp.ne.s32.totalorder %s88, %s90
      %p94 = scmp.eq.s32.totalorder %s19, 0
      %p95 = por %p93, %p94
      %p96 = scmp.ne.s32.totalorder %s88, %s90
      %p97 = scmp.eq.s32.totalorder %s24, 1
      %p98 = por %p96, %p97
      %p99 = scmp.ne.s32.totalorder %s90, %s91
      %p100 = scmp.eq.s32.totalorder %s24, 0
      %p101 = por %p99, %p100
      %p102 = scmp.ne.s32.totalorder %s90, %s91
      %p103 = scmp.eq.s32.totalorder %s25, 1
      %p104 = por %p102, %p103
      %p106 = scmp.ne.s32.totalorder %s91, %s105
      %p107 = scmp.eq.s32.totalorder %s25, 0
      %p108 = por %p106, %p107
      %s110 = sadd.s32 %s109, 1
      %p113 = scmp.eq.s32.totalorder %s19, 1
      %p114 = scmp.ne.s32.totalorder %s109, %s111
      %p115 = scmp.eq.s32.totalorder %s19, 0
      %p116 = por %p114, %p115
      %p117 = scmp.ne.s32.totalorder %s109, %s111
      %p118 = scmp.eq.s32.totalorder %s24, 1
      %p119 = por %p117, %p118
      %p120 = scmp.ne.s32.totalorder %s111, %s112
      %p121 = scmp.eq.s32.totalorder %s24, 0
      %p122 = por %p120, %p121
      %p123 = scmp.ne.s32.totalorder %s111, %s112
      %p124 = scmp.eq.s32.totalorder %s25, 1
      %p125 = por %p123, %p124
      %p127 = scmp.ne.s32.totalorder %s112, %s126
      %p128 = scmp.eq.s32.totalorder %s25, 0
      %p129 = por %p127, %p128
      %s131 = sadd.s32 %s130, 1
      %p134 = scmp.eq.s32.totalorder %s19, 1
      %p135 = scmp.ne.s32.totalorder %s130, %s132
      %p136 = scmp.eq.s32.totalorder %s19, 0
      %p137 = por %p135, %p136
      %p138 = scmp.ne.s32.totalorder %s130, %s132
      %p139 = scmp.eq.s32.totalorder %s24, 1
      %p140 = por %p138, %p139
      %p141 = scmp.ne.s32.totalorder %s132, %s133
      %p142 = scmp.eq.s32.totalorder %s24, 0
      %p143 = por %p141, %p142
      %p144 = scmp.ne.s32.totalorder %s132, %s133
      %p145 = scmp.eq.s32.totalorder %s25, 1
      %p146 = por %p144, %p145
      %p148 = scmp.ne.s32.totalorder %s133, %s147
      %p149 = scmp.eq.s32.totalorder %s25, 0
      %p150 = por %p148, %p149
      %s151 = ssub.s32 %s26, %s38
      %s152 = ssub.s32 %s27, %s34
      %s153 = sor.u32 %s151, %s152
      %p154 = scmp.eq.s32.totalorder %s153, 0
      %s156 = sadd.s32 %s155, 1
      %s157 = scalar_select %p154, %s155, %s156
      %p160 = pneg %p154
      %p161 = scmp.eq.s32.totalorder %s19, 1
      %p162 = por %p160, %p161
      %p163 = scmp.ne.s32.totalorder %s155, %s158
      %p164 = scmp.eq.s32.totalorder %s19, 0
      %p165 = por %p163, %p164
      %p166 = scmp.ne.s32.totalorder %s155, %s158
      %p167 = scmp.eq.s32.totalorder %s24, 1
      %p168 = por %p166, %p167
      %p169 = scmp.ne.s32.totalorder %s158, %s159
      %p170 = scmp.eq.s32.totalorder %s24, 0
      %p171 = por %p169, %p170
      %p172 = scmp.ne.s32.totalorder %s158, %s159
      %p173 = scmp.eq.s32.totalorder %s25, 1
      %p174 = por %p172, %p173
      %p176 = scmp.ne.s32.totalorder %s159, %s175
      %p177 = scmp.eq.s32.totalorder %s25, 0
      %p178 = por %p176, %p177
      %p179 = scmp.le.s32.totalorder 1, %s19
      %p180 = scmp.lt.s32.totalorder %s19, 3
      %p181 = pnand %p179, %p180
      %p182 = pneg %p181
      // Predicated region
      $region9: #{tpu_custom_call.1} parent=5 // pred_check
        _
      $region10: #{tpu_custom_call.1} parent=5 // pred_check_branch
        %184 = sbr.rel (%p181) target = $region12
      $region11: #{tpu_custom_call.1} parent=5 // pred_region
        %s185 = ssub.s32 %s19, 1
        // Predicated region
        $region13: #{tpu_custom_call.1} parent=11 // pred_check
          %p186 = pneg %p52
        $region14: #{tpu_custom_call.1} parent=11 // pred_check_branch
          %188 = sbr.rel (%p186) target = $region16
        $region15: #{tpu_custom_call.1} parent=11 // pred_region
          %s190 = ssub.s32 576, 576
          %191 = vsyncadd [#allocation4], %s190
          %s193 = sshll.u32 [#allocation3], 4
          %s194 = int_to_ptr.vmem [resolvable:$true] %s193
          %196 = dma.hbm_to_vmem [thread:$0]  %s0, 576, %s194, [#allocation4]
        $region16: #{tpu_custom_call.1} parent=11 // pred_fallthru
          _
        // Predicated region
        $region17: #{tpu_custom_call.1} parent=11 // pred_check
          %p197 = pneg %p101
        $region18: #{tpu_custom_call.1} parent=11 // pred_check_branch
          %199 = sbr.rel (%p197) target = $region20
        $region19: #{tpu_custom_call.1} parent=11 // pred_region
          %s201 = ssub.s32 221184, 221184
          %202 = vsyncadd [#allocation7], %s201
          %s203 = sshll.u32 [#allocation8], 4
          %s204 = int_to_ptr.vmem [resolvable:$true] %s203
          %209 = dma.hbm_to_vmem [thread:$0]  %s2, 221184, %s204, [#allocation7], 768, 768, 48
        $region20: #{tpu_custom_call.1} parent=11 // pred_fallthru
          _
        // Predicated region
        $region21: #{tpu_custom_call.1} parent=11 // pred_check
          %p210 = pneg %p122
        $region22: #{tpu_custom_call.1} parent=11 // pred_check_branch
          %212 = sbr.rel (%p210) target = $region24
        $region23: #{tpu_custom_call.1} parent=11 // pred_region
          %s214 = ssub.s32 96, 96
          %215 = vsyncadd [#allocation10], %s214
          %s217 = sshll.u32 [#allocation9], 4
          %s218 = int_to_ptr.vmem [resolvable:$true] %s217
          %220 = dma.hbm_to_vmem [thread:$0]  %s3, 96, %s218, [#allocation10]
        $region24: #{tpu_custom_call.1} parent=11 // pred_fallthru
          _
        // Predicated region
        $region25: #{tpu_custom_call.1} parent=11 // pred_check
          %p221 = pneg %p143
        $region26: #{tpu_custom_call.1} parent=11 // pred_check_branch
          %223 = sbr.rel (%p221) target = $region28
        $region27: #{tpu_custom_call.1} parent=11 // pred_region
          %s225 = ssub.s32 36864, 36864
          %226 = vsyncadd [#allocation10], %s225
          %s227 = sshll.u32 [#allocation11], 4
          %s228 = int_to_ptr.vmem [resolvable:$true] %s227
          %233 = dma.hbm_to_vmem [thread:$0]  %s4, 36864, %s228, [#allocation10], 384, 384, 24
        $region28: #{tpu_custom_call.1} parent=11 // pred_fallthru
          _
      $region12: #{tpu_custom_call.1} parent=5 // pred_fallthru
        _
      %p234 = scmp.lt.s32.totalorder %s19, 2
      // Predicated region
      $region29: #{tpu_custom_call.1} parent=5 // pred_check
        %p235 = pneg %p234
      $region30: #{tpu_custom_call.1} parent=5 // pred_check_branch
        %237 = sbr.rel (%p235) target = $region32
      $region31: #{tpu_custom_call.1} parent=5 // pred_region
        // Predicated region
        $region33: #{tpu_custom_call.1} parent=31 // pred_check
          %p238 = pneg %p74
        $region34: #{tpu_custom_call.1} parent=31 // pred_check_branch
          %240 = sbr.rel (%p238) target = $region36
        $region35: #{tpu_custom_call.1} parent=31 // pred_region
          %s241 = sand.u32 %s19, 1
          %s242 = scalar_lea.sflag [#allocation7], %s241
          %s243 = sand.u32 %s64, 1
          %s244 = smul.addr %s243, 24
          %s245 = scalar_lea.vmem [#allocation6], %s244
          %s247 = ssub.s32 384, 384
          %248 = vsyncadd %s242, %s247
          %s249 = smul.addr %s27, 6
          %s250 = smul.addr %s26, 6
          %s251 = sadd.s32 %s249, %s250
          %s252 = smul.addr %s251, 64
          %s253 = scalar_lea.hbm %s1, %s252
          %s255 = sshll.u32 %s245, 4
          %s256 = int_to_ptr.vmem [resolvable:$true] %s255
          %258 = dma.hbm_to_vmem [thread:$0]  %s253, 384, %s256, %s242
        $region36: #{tpu_custom_call.1} parent=31 // pred_fallthru
          _
      $region32: #{tpu_custom_call.1} parent=5 // pred_fallthru
        _
      %p259 = scmp.le.s32.totalorder 1, %s19
      %p260 = scmp.lt.s32.totalorder %s19, 3
      %p261 = pnand %p259, %p260
      %p262 = pneg %p261
      // Predicated region
      $region37: #{tpu_custom_call.1} parent=5 // pred_check
        _
      $region38: #{tpu_custom_call.1} parent=5 // pred_check_branch
        %264 = sbr.rel (%p261) target = $region40
      $region39: #{tpu_custom_call.1} parent=5 // pred_region
        %s265 = ssub.s32 %s19, 1
        // Predicated region
        $region41: #{tpu_custom_call.1} parent=39 // pred_check
          %p266 = pneg %p52
        $region42: #{tpu_custom_call.1} parent=39 // pred_check_branch
          %268 = sbr.rel (%p266) target = $region44
        $region43: #{tpu_custom_call.1} parent=39 // pred_region
          %269 = dma.done [#allocation4], 576
        $region44: #{tpu_custom_call.1} parent=39 // pred_fallthru
          _
        %s270 = sand.u32 %s24, 1
        %s271 = scalar_lea.sflag [#allocation7], %s270
        %s272 = sand.u32 %s67, 1
        %s273 = smul.addr %s272, 24
        %s274 = scalar_lea.vmem [#allocation6], %s273
        // Predicated region
        $region45: #{tpu_custom_call.1} parent=39 // pred_check
          %p275 = pneg %p80
        $region46: #{tpu_custom_call.1} parent=39 // pred_check_branch
          %277 = sbr.rel (%p275) target = $region48
        $region47: #{tpu_custom_call.1} parent=39 // pred_region
          %278 = dma.done %s271, 384
        $region48: #{tpu_custom_call.1} parent=39 // pred_fallthru
          _
        // Predicated region
        $region49: #{tpu_custom_call.1} parent=39 // pred_check
          %p279 = pneg %p101
        $region50: #{tpu_custom_call.1} parent=39 // pred_check_branch
          %281 = sbr.rel (%p279) target = $region52
        $region51: #{tpu_custom_call.1} parent=39 // pred_region
          %282 = dma.done [#allocation7], 221184
        $region52: #{tpu_custom_call.1} parent=39 // pred_fallthru
          _
        // Predicated region
        $region53: #{tpu_custom_call.1} parent=39 // pred_check
          %p283 = pneg %p122
        $region54: #{tpu_custom_call.1} parent=39 // pred_check_branch
          %285 = sbr.rel (%p283) target = $region56
        $region55: #{tpu_custom_call.1} parent=39 // pred_region
          %286 = dma.done [#allocation10], 96
        $region56: #{tpu_custom_call.1} parent=39 // pred_fallthru
          _
        // Predicated region
        $region57: #{tpu_custom_call.1} parent=39 // pred_check
          %p287 = pneg %p143
        $region58: #{tpu_custom_call.1} parent=39 // pred_check_branch
          %289 = sbr.rel (%p287) target = $region60
        $region59: #{tpu_custom_call.1} parent=39 // pred_region
          %290 = dma.done [#allocation10], 36864
        $region60: #{tpu_custom_call.1} parent=39 // pred_fallthru
          _
        %p291 = pneg %p52
        %p292 = pneg %p49
        %s293 = sand.u32 %s24, 1
        %s294 = scalar_lea.sflag [#allocation7], %s293
        %s295 = sand.u32 %s67, 1
        %s296 = smul.addr %s295, 24
        %s297 = scalar_lea.vmem [#allocation6], %s296
        %p298 = pneg %p80
        %p299 = pneg %p77
        %p300 = pneg %p101
        %p301 = pneg %p98
        %p302 = pneg %p122
        %p303 = pneg %p119
        %p304 = pneg %p143
        %p305 = pneg %p140
        %p306 = pneg %p171
        %p307 = pneg %p168
        %s308 = sand.u32 %s158, 1
        %s309 = scalar_lea.sflag [#allocation5], %s308
        %s310 = sand.u32 %s158, 1
        %s311 = smul.addr %s310, 48
        %s312 = scalar_lea.vmem [#allocation12], %s311
        %p313 = scmp.eq.s32.totalorder %s29, 0
        // Predicated region
        $region61: #{tpu_custom_call.1} parent=39 // pred_check
          %p314 = pneg %p313
        $region62: #{tpu_custom_call.1} parent=39 // pred_check_branch
          %316 = sbr.rel (%p314) target = $region64
        $region63: #{tpu_custom_call.1} parent=39 // pred_region
          %s317 = sshra.s32 %s28, 1
          %s318 = sand.u32 %s28, 1
          %s319 = sshra.s32 %s28, 1
          %s320 = sand.u32 %s28, 1
          %s321 = smul.u32 %s317, 18
          %s322 = smul.u32 %s321, 2
          %s323 = sadd.s32 %s322, %s320
          %s324 = scalar_lea.vmem [#allocation3], %s323
          %v325 = vld [vmem:[%s324] ss:$2 sm:$0xff]
          %s326 = sadd.s32 %s321, 8
          %s327 = smul.u32 %s326, 2
          %s328 = sadd.s32 %s327, %s320
          %s329 = scalar_lea.vmem [#allocation3], %s328
          %v330 = vld [vmem:[%s329] ss:$2 sm:$0xff]
          %s331 = sadd.s32 %s321, 16
          %s332 = smul.u32 %s331, 2
          %s333 = sadd.s32 %s332, %s320
          %s334 = scalar_lea.vmem [#allocation3], %s333
          %v335 = vld [vmem:[%s334] ss:$2 sm:$0x3]
          %v336 = vld [vmem:[#allocation8] sm:$0xff]
          %v337 = vld [vmem:[#allocation8 + $0x8] sm:$0xff]
          %v338 = vld [vmem:[#allocation8 + $0x10] sm:$0xff]
          %v339 = vld [vmem:[#allocation8 + $0x18] sm:$0xff]
          %v340 = vld [vmem:[#allocation8 + $0x20] sm:$0xff]
          %v341 = vld [vmem:[#allocation8 + $0x28] sm:$0xff]
          %v342 = vld [vmem:[#allocation8 + $0x30] sm:$0xff]
          %v343 = vld [vmem:[#allocation8 + $0x38] sm:$0xff]
          %v344 = vld [vmem:[#allocation8 + $0x40] sm:$0xff]
          %v345 = vld [vmem:[#allocation8 + $0x48] sm:$0xff]
          %v346 = vld [vmem:[#allocation8 + $0x50] sm:$0xff]
          %v347 = vld [vmem:[#allocation8 + $0x58] sm:$0xff]
          %v348 = vld [vmem:[#allocation8 + $0x60] sm:$0xff]
          %v349 = vld [vmem:[#allocation8 + $0x68] sm:$0xff]
          %v350 = vld [vmem:[#allocation8 + $0x70] sm:$0xff]
          %v351 = vld [vmem:[#allocation8 + $0x78] sm:$0xff]
          %v352 = vld [vmem:[#allocation8 + $0x80] sm:$0xff]
          %v353 = vld [vmem:[#allocation8 + $0x88] sm:$0xff]
          %v354 = vld [vmem:[#allocation8 + $0x90] sm:$0xff]
          %v355 = vld [vmem:[#allocation8 + $0x98] sm:$0xff]
          %v356 = vld [vmem:[#allocation8 + $0xa0] sm:$0xff]
          %v357 = vld [vmem:[#allocation8 + $0xa8] sm:$0xff]
          %v358 = vld [vmem:[#allocation8 + $0xb0] sm:$0xff]
          %v359 = vld [vmem:[#allocation8 + $0xb8] sm:$0xff]
          %v360 = vld [vmem:[#allocation8 + $0xc0] sm:$0xff]
          %v361 = vld [vmem:[#allocation8 + $0xc8] sm:$0xff]
          %v362 = vld [vmem:[#allocation8 + $0xd0] sm:$0xff]
          %v363 = vld [vmem:[#allocation8 + $0xd8] sm:$0xff]
          %v364 = vld [vmem:[#allocation8 + $0xe0] sm:$0xff]
          %v365 = vld [vmem:[#allocation8 + $0xe8] sm:$0xff]
          %v366 = vld [vmem:[#allocation8 + $0xf0] sm:$0xff]
          %v367 = vld [vmem:[#allocation8 + $0xf8] sm:$0xff]
          %v368 = vld [vmem:[#allocation8 + $0x100] sm:$0xff]
          %v369 = vld [vmem:[#allocation8 + $0x108] sm:$0xff]
          %v370 = vld [vmem:[#allocation8 + $0x110] sm:$0xff]
          %v371 = vld [vmem:[#allocation8 + $0x118] sm:$0xff]
          %v372 = vld [vmem:[#allocation8 + $0x120] sm:$0xff]
          %v373 = vld [vmem:[#allocation8 + $0x128] sm:$0xff]
          %v374 = vld [vmem:[#allocation8 + $0x130] sm:$0xff]
          %v375 = vld [vmem:[#allocation8 + $0x138] sm:$0xff]
          %v376 = vld [vmem:[#allocation8 + $0x140] sm:$0xff]
          %v377 = vld [vmem:[#allocation8 + $0x148] sm:$0xff]
          %v378 = vld [vmem:[#allocation8 + $0x150] sm:$0xff]
          %v379 = vld [vmem:[#allocation8 + $0x158] sm:$0xff]
          %v380 = vld [vmem:[#allocation8 + $0x160] sm:$0xff]
          %v381 = vld [vmem:[#allocation8 + $0x168] sm:$0xff]
          %v382 = vld [vmem:[#allocation8 + $0x170] sm:$0xff]
          %v383 = vld [vmem:[#allocation8 + $0x178] sm:$0xff]
          %v384 = vld [vmem:[#allocation8 + $0x180] sm:$0xff]
          %v385 = vld [vmem:[#allocation8 + $0x188] sm:$0xff]
          %v386 = vld [vmem:[#allocation8 + $0x190] sm:$0xff]
          %v387 = vld [vmem:[#allocation8 + $0x198] sm:$0xff]
          %v388 = vld [vmem:[#allocation8 + $0x1a0] sm:$0xff]
          %v389 = vld [vmem:[#allocation8 + $0x1a8] sm:$0xff]
          %v390 = vld [vmem:[#allocation8 + $0x1b0] sm:$0xff]
          %v391 = vld [vmem:[#allocation8 + $0x1b8] sm:$0xff]
          %v392 = vld [vmem:[#allocation8 + $0x1c0] sm:$0xff]
          %v393 = vld [vmem:[#allocation8 + $0x1c8] sm:$0xff]
          %v394 = vld [vmem:[#allocation8 + $0x1d0] sm:$0xff]
          %v395 = vld [vmem:[#allocation8 + $0x1d8] sm:$0xff]
          %v396 = vld [vmem:[#allocation8 + $0x1e0] sm:$0xff]
          %v397 = vld [vmem:[#allocation8 + $0x1e8] sm:$0xff]
          %v398 = vld [vmem:[#allocation8 + $0x1f0] sm:$0xff]
          %v399 = vld [vmem:[#allocation8 + $0x1f8] sm:$0xff]
          %v400 = vld [vmem:[#allocation8 + $0x200] sm:$0xff]
          %v401 = vld [vmem:[#allocation8 + $0x208] sm:$0xff]
          %v402 = vld [vmem:[#allocation8 + $0x210] sm:$0xff]
          %v403 = vld [vmem:[#allocation8 + $0x218] sm:$0xff]
          %v404 = vld [vmem:[#allocation8 + $0x220] sm:$0xff]
          %v405 = vld [vmem:[#allocation8 + $0x228] sm:$0xff]
          %v406 = vld [vmem:[#allocation8 + $0x230] sm:$0xff]
          %v407 = vld [vmem:[#allocation8 + $0x238] sm:$0xff]
          %v408 = vld [vmem:[#allocation8 + $0x240] sm:$0xff]
          %v409 = vld [vmem:[#allocation8 + $0x248] sm:$0xff]
          %v410 = vld [vmem:[#allocation8 + $0x250] sm:$0xff]
          %v411 = vld [vmem:[#allocation8 + $0x258] sm:$0xff]
          %v412 = vld [vmem:[#allocation8 + $0x260] sm:$0xff]
          %v413 = vld [vmem:[#allocation8 + $0x268] sm:$0xff]
          %v414 = vld [vmem:[#allocation8 + $0x270] sm:$0xff]
          %v415 = vld [vmem:[#allocation8 + $0x278] sm:$0xff]
          %v416 = vld [vmem:[#allocation8 + $0x280] sm:$0xff]
          %v417 = vld [vmem:[#allocation8 + $0x288] sm:$0xff]
          %v418 = vld [vmem:[#allocation8 + $0x290] sm:$0xff]
          %v419 = vld [vmem:[#allocation8 + $0x298] sm:$0xff]
          %v420 = vld [vmem:[#allocation8 + $0x2a0] sm:$0xff]
          %v421 = vld [vmem:[#allocation8 + $0x2a8] sm:$0xff]
          %v422 = vld [vmem:[#allocation8 + $0x2b0] sm:$0xff]
          %v423 = vld [vmem:[#allocation8 + $0x2b8] sm:$0xff]
          %v424 = vld [vmem:[#allocation8 + $0x2c0] sm:$0xff]
          %v425 = vld [vmem:[#allocation8 + $0x2c8] sm:$0xff]
          %v426 = vld [vmem:[#allocation8 + $0x2d0] sm:$0xff]
          %v427 = vld [vmem:[#allocation8 + $0x2d8] sm:$0xff]
          %v428 = vld [vmem:[#allocation8 + $0x2e0] sm:$0xff]
          %v429 = vld [vmem:[#allocation8 + $0x2e8] sm:$0xff]
          %v430 = vld [vmem:[#allocation8 + $0x2f0] sm:$0xff]
          %v431 = vld [vmem:[#allocation8 + $0x2f8] sm:$0xff]
          %v432 = vld [vmem:[#allocation8 + $0x300] sm:$0xff]
          %v433 = vld [vmem:[#allocation8 + $0x308] sm:$0xff]
          %v434 = vld [vmem:[#allocation8 + $0x310] sm:$0xff]
          %v435 = vld [vmem:[#allocation8 + $0x318] sm:$0xff]
          %v436 = vld [vmem:[#allocation8 + $0x320] sm:$0xff]
          %v437 = vld [vmem:[#allocation8 + $0x328] sm:$0xff]
          %v438 = vld [vmem:[#allocation8 + $0x330] sm:$0xff]
          %v439 = vld [vmem:[#allocation8 + $0x338] sm:$0xff]
          %v440 = vld [vmem:[#allocation8 + $0x340] sm:$0xff]
          %v441 = vld [vmem:[#allocation8 + $0x348] sm:$0xff]
          %v442 = vld [vmem:[#allocation8 + $0x350] sm:$0xff]
          %v443 = vld [vmem:[#allocation8 + $0x358] sm:$0xff]
          %v444 = vld [vmem:[#allocation8 + $0x360] sm:$0xff]
          %v445 = vld [vmem:[#allocation8 + $0x368] sm:$0xff]
          %v446 = vld [vmem:[#allocation8 + $0x370] sm:$0xff]
          %v447 = vld [vmem:[#allocation8 + $0x378] sm:$0xff]
          %v448 = vld [vmem:[#allocation8 + $0x380] sm:$0xff]
          %v449 = vld [vmem:[#allocation8 + $0x388] sm:$0xff]
          %v450 = vld [vmem:[#allocation8 + $0x390] sm:$0xff]
          %v451 = vld [vmem:[#allocation8 + $0x398] sm:$0xff]
          %v452 = vld [vmem:[#allocation8 + $0x3a0] sm:$0xff]
          %v453 = vld [vmem:[#allocation8 + $0x3a8] sm:$0xff]
          %v454 = vld [vmem:[#allocation8 + $0x3b0] sm:$0xff]
          %v455 = vld [vmem:[#allocation8 + $0x3b8] sm:$0xff]
          %v456 = vld [vmem:[#allocation8 + $0x3c0] sm:$0xff]
          %v457 = vld [vmem:[#allocation8 + $0x3c8] sm:$0xff]
          %v458 = vld [vmem:[#allocation8 + $0x3d0] sm:$0xff]
          %v459 = vld [vmem:[#allocation8 + $0x3d8] sm:$0xff]
          %v460 = vld [vmem:[#allocation8 + $0x3e0] sm:$0xff]
          %v461 = vld [vmem:[#allocation8 + $0x3e8] sm:$0xff]
          %v462 = vld [vmem:[#allocation8 + $0x3f0] sm:$0xff]
          %v463 = vld [vmem:[#allocation8 + $0x3f8] sm:$0xff]
          %v464 = vld [vmem:[#allocation8 + $0x400] sm:$0xff]
          %v465 = vld [vmem:[#allocation8 + $0x408] sm:$0xff]
          %v466 = vld [vmem:[#allocation8 + $0x410] sm:$0xff]
          %v467 = vld [vmem:[#allocation8 + $0x418] sm:$0xff]
          %v468 = vld [vmem:[#allocation8 + $0x420] sm:$0xff]
          %v469 = vld [vmem:[#allocation8 + $0x428] sm:$0xff]
          %v470 = vld [vmem:[#allocation8 + $0x430] sm:$0xff]
          %v471 = vld [vmem:[#allocation8 + $0x438] sm:$0xff]
          %v472 = vld [vmem:[#allocation8 + $0x440] sm:$0xff]
          %v473 = vld [vmem:[#allocation8 + $0x448] sm:$0xff]
          %v474 = vld [vmem:[#allocation8 + $0x450] sm:$0xff]
          %v475 = vld [vmem:[#allocation8 + $0x458] sm:$0xff]
          %v476 = vld [vmem:[#allocation8 + $0x460] sm:$0xff]
          %v477 = vld [vmem:[#allocation8 + $0x468] sm:$0xff]
          %v478 = vld [vmem:[#allocation8 + $0x470] sm:$0xff]
          %v479 = vld [vmem:[#allocation8 + $0x478] sm:$0xff]
          %v480 = vld [vmem:[#allocation8 + $0x480] sm:$0xff]
          %v481 = vld [vmem:[#allocation8 + $0x488] sm:$0xff]
          %v482 = vld [vmem:[#allocation8 + $0x490] sm:$0xff]
          %v483 = vld [vmem:[#allocation8 + $0x498] sm:$0xff]
          %v484 = vld [vmem:[#allocation8 + $0x4a0] sm:$0xff]
          %v485 = vld [vmem:[#allocation8 + $0x4a8] sm:$0xff]
          %v486 = vld [vmem:[#allocation8 + $0x4b0] sm:$0xff]
          %v487 = vld [vmem:[#allocation8 + $0x4b8] sm:$0xff]
          %v488 = vld [vmem:[#allocation8 + $0x4c0] sm:$0xff]
          %v489 = vld [vmem:[#allocation8 + $0x4c8] sm:$0xff]
          %v490 = vld [vmem:[#allocation8 + $0x4d0] sm:$0xff]
          %v491 = vld [vmem:[#allocation8 + $0x4d8] sm:$0xff]
          %v492 = vld [vmem:[#allocation8 + $0x4e0] sm:$0xff]
          %v493 = vld [vmem:[#allocation8 + $0x4e8] sm:$0xff]
          %v494 = vld [vmem:[#allocation8 + $0x4f0] sm:$0xff]
          %v495 = vld [vmem:[#allocation8 + $0x4f8] sm:$0xff]
          %v496 = vld [vmem:[#allocation8 + $0x500] sm:$0xff]
          %v497 = vld [vmem:[#allocation8 + $0x508] sm:$0xff]
          %v498 = vld [vmem:[#allocation8 + $0x510] sm:$0xff]
          %v499 = vld [vmem:[#allocation8 + $0x518] sm:$0xff]
          %v500 = vld [vmem:[#allocation8 + $0x520] sm:$0xff]
          %v501 = vld [vmem:[#allocation8 + $0x528] sm:$0xff]
          %v502 = vld [vmem:[#allocation8 + $0x530] sm:$0xff]
          %v503 = vld [vmem:[#allocation8 + $0x538] sm:$0xff]
          %v504 = vld [vmem:[#allocation8 + $0x540] sm:$0xff]
          %v505 = vld [vmem:[#allocation8 + $0x548] sm:$0xff]
          %v506 = vld [vmem:[#allocation8 + $0x550] sm:$0xff]
          %v507 = vld [vmem:[#allocation8 + $0x558] sm:$0xff]
          %v508 = vld [vmem:[#allocation8 + $0x560] sm:$0xff]
          %v509 = vld [vmem:[#allocation8 + $0x568] sm:$0xff]
          %v510 = vld [vmem:[#allocation8 + $0x570] sm:$0xff]
          %v511 = vld [vmem:[#allocation8 + $0x578] sm:$0xff]
          %v512 = vld [vmem:[#allocation8 + $0x580] sm:$0xff]
          %v513 = vld [vmem:[#allocation8 + $0x588] sm:$0xff]
          %v514 = vld [vmem:[#allocation8 + $0x590] sm:$0xff]
          %v515 = vld [vmem:[#allocation8 + $0x598] sm:$0xff]
          %v516 = vld [vmem:[#allocation8 + $0x5a0] sm:$0xff]
          %v517 = vld [vmem:[#allocation8 + $0x5a8] sm:$0xff]
          %v518 = vld [vmem:[#allocation8 + $0x5b0] sm:$0xff]
          %v519 = vld [vmem:[#allocation8 + $0x5b8] sm:$0xff]
          %v520 = vld [vmem:[#allocation8 + $0x5c0] sm:$0xff]
          %v521 = vld [vmem:[#allocation8 + $0x5c8] sm:$0xff]
          %v522 = vld [vmem:[#allocation8 + $0x5d0] sm:$0xff]
          %v523 = vld [vmem:[#allocation8 + $0x5d8] sm:$0xff]
          %v524 = vld [vmem:[#allocation8 + $0x5e0] sm:$0xff]
          %v525 = vld [vmem:[#allocation8 + $0x5e8] sm:$0xff]
          %v526 = vld [vmem:[#allocation8 + $0x5f0] sm:$0xff]
          %v527 = vld [vmem:[#allocation8 + $0x5f8] sm:$0xff]
          %v528 = vld [vmem:[#allocation8 + $0x600] sm:$0xff]
          %v529 = vld [vmem:[#allocation8 + $0x608] sm:$0xff]
          %v530 = vld [vmem:[#allocation8 + $0x610] sm:$0xff]
          %v531 = vld [vmem:[#allocation8 + $0x618] sm:$0xff]
          %v532 = vld [vmem:[#allocation8 + $0x620] sm:$0xff]
          %v533 = vld [vmem:[#allocation8 + $0x628] sm:$0xff]
          %v534 = vld [vmem:[#allocation8 + $0x630] sm:$0xff]
          %v535 = vld [vmem:[#allocation8 + $0x638] sm:$0xff]
          %v536 = vld [vmem:[#allocation8 + $0x640] sm:$0xff]
          %v537 = vld [vmem:[#allocation8 + $0x648] sm:$0xff]
          %v538 = vld [vmem:[#allocation8 + $0x650] sm:$0xff]
          %v539 = vld [vmem:[#allocation8 + $0x658] sm:$0xff]
          %v540 = vld [vmem:[#allocation8 + $0x660] sm:$0xff]
          %v541 = vld [vmem:[#allocation8 + $0x668] sm:$0xff]
          %v542 = vld [vmem:[#allocation8 + $0x670] sm:$0xff]
          %v543 = vld [vmem:[#allocation8 + $0x678] sm:$0xff]
          %v544 = vld [vmem:[#allocation8 + $0x680] sm:$0xff]
          %v545 = vld [vmem:[#allocation8 + $0x688] sm:$0xff]
          %v546 = vld [vmem:[#allocation8 + $0x690] sm:$0xff]
          %v547 = vld [vmem:[#allocation8 + $0x698] sm:$0xff]
          %v548 = vld [vmem:[#allocation8 + $0x6a0] sm:$0xff]
          %v549 = vld [vmem:[#allocation8 + $0x6a8] sm:$0xff]
          %v550 = vld [vmem:[#allocation8 + $0x6b0] sm:$0xff]
          %v551 = vld [vmem:[#allocation8 + $0x6b8] sm:$0xff]
          %v552 = vld [vmem:[#allocation8 + $0x6c0] sm:$0xff]
          %v553 = vld [vmem:[#allocation8 + $0x6c8] sm:$0xff]
          %v554 = vld [vmem:[#allocation8 + $0x6d0] sm:$0xff]
          %v555 = vld [vmem:[#allocation8 + $0x6d8] sm:$0xff]
          %v556 = vld [vmem:[#allocation8 + $0x6e0] sm:$0xff]
          %v557 = vld [vmem:[#allocation8 + $0x6e8] sm:$0xff]
          %v558 = vld [vmem:[#allocation8 + $0x6f0] sm:$0xff]
          %v559 = vld [vmem:[#allocation8 + $0x6f8] sm:$0xff]
          %v560 = vld [vmem:[#allocation8 + $0x700] sm:$0xff]
          %v561 = vld [vmem:[#allocation8 + $0x708] sm:$0xff]
          %v562 = vld [vmem:[#allocation8 + $0x710] sm:$0xff]
          %v563 = vld [vmem:[#allocation8 + $0x718] sm:$0xff]
          %v564 = vld [vmem:[#allocation8 + $0x720] sm:$0xff]
          %v565 = vld [vmem:[#allocation8 + $0x728] sm:$0xff]
          %v566 = vld [vmem:[#allocation8 + $0x730] sm:$0xff]
          %v567 = vld [vmem:[#allocation8 + $0x738] sm:$0xff]
          %v568 = vld [vmem:[#allocation8 + $0x740] sm:$0xff]
          %v569 = vld [vmem:[#allocation8 + $0x748] sm:$0xff]
          %v570 = vld [vmem:[#allocation8 + $0x750] sm:$0xff]
          %v571 = vld [vmem:[#allocation8 + $0x758] sm:$0xff]
          %v572 = vld [vmem:[#allocation8 + $0x760] sm:$0xff]
          %v573 = vld [vmem:[#allocation8 + $0x768] sm:$0xff]
          %v574 = vld [vmem:[#allocation8 + $0x770] sm:$0xff]
          %v575 = vld [vmem:[#allocation8 + $0x778] sm:$0xff]
          %v576 = vld [vmem:[#allocation8 + $0x780] sm:$0xff]
          %v577 = vld [vmem:[#allocation8 + $0x788] sm:$0xff]
          %v578 = vld [vmem:[#allocation8 + $0x790] sm:$0xff]
          %v579 = vld [vmem:[#allocation8 + $0x798] sm:$0xff]
          %v580 = vld [vmem:[#allocation8 + $0x7a0] sm:$0xff]
          %v581 = vld [vmem:[#allocation8 + $0x7a8] sm:$0xff]
          %v582 = vld [vmem:[#allocation8 + $0x7b0] sm:$0xff]
          %v583 = vld [vmem:[#allocation8 + $0x7b8] sm:$0xff]
          %v584 = vld [vmem:[#allocation8 + $0x7c0] sm:$0xff]
          %v585 = vld [vmem:[#allocation8 + $0x7c8] sm:$0xff]
          %v586 = vld [vmem:[#allocation8 + $0x7d0] sm:$0xff]
          %v587 = vld [vmem:[#allocation8 + $0x7d8] sm:$0xff]
          %v588 = vld [vmem:[#allocation8 + $0x7e0] sm:$0xff]
          %v589 = vld [vmem:[#allocation8 + $0x7e8] sm:$0xff]
          %v590 = vld [vmem:[#allocation8 + $0x7f0] sm:$0xff]
          %v591 = vld [vmem:[#allocation8 + $0x7f8] sm:$0xff]
          %v592 = vld [vmem:[#allocation8 + $0x800] sm:$0xff]
          %v593 = vld [vmem:[#allocation8 + $0x808] sm:$0xff]
          %v594 = vld [vmem:[#allocation8 + $0x810] sm:$0xff]
          %v595 = vld [vmem:[#allocation8 + $0x818] sm:$0xff]
          %v596 = vld [vmem:[#allocation8 + $0x820] sm:$0xff]
          %v597 = vld [vmem:[#allocation8 + $0x828] sm:$0xff]
          %v598 = vld [vmem:[#allocation8 + $0x830] sm:$0xff]
          %v599 = vld [vmem:[#allocation8 + $0x838] sm:$0xff]
          %v600 = vld [vmem:[#allocation8 + $0x840] sm:$0xff]
          %v601 = vld [vmem:[#allocation8 + $0x848] sm:$0xff]
          %v602 = vld [vmem:[#allocation8 + $0x850] sm:$0xff]
          %v603 = vld [vmem:[#allocation8 + $0x858] sm:$0xff]
          %v604 = vld [vmem:[#allocation8 + $0x860] sm:$0xff]
          %v605 = vld [vmem:[#allocation8 + $0x868] sm:$0xff]
          %v606 = vld [vmem:[#allocation8 + $0x870] sm:$0xff]
          %v607 = vld [vmem:[#allocation8 + $0x878] sm:$0xff]
          %v608 = vld [vmem:[#allocation8 + $0x880] sm:$0xff]
          %v609 = vld [vmem:[#allocation8 + $0x888] sm:$0xff]
          %v610 = vld [vmem:[#allocation8 + $0x890] sm:$0xff]
          %v611 = vld [vmem:[#allocation8 + $0x898] sm:$0xff]
          %v612 = vld [vmem:[#allocation8 + $0x8a0] sm:$0xff]
          %v613 = vld [vmem:[#allocation8 + $0x8a8] sm:$0xff]
          %v614 = vld [vmem:[#allocation8 + $0x8b0] sm:$0xff]
          %v615 = vld [vmem:[#allocation8 + $0x8b8] sm:$0xff]
          %v616 = vld [vmem:[#allocation8 + $0x8c0] sm:$0xff]
          %v617 = vld [vmem:[#allocation8 + $0x8c8] sm:$0xff]
          %v618 = vld [vmem:[#allocation8 + $0x8d0] sm:$0xff]
          %v619 = vld [vmem:[#allocation8 + $0x8d8] sm:$0xff]
          %v620 = vld [vmem:[#allocation8 + $0x8e0] sm:$0xff]
          %v621 = vld [vmem:[#allocation8 + $0x8e8] sm:$0xff]
          %v622 = vld [vmem:[#allocation8 + $0x8f0] sm:$0xff]
          %v623 = vld [vmem:[#allocation8 + $0x8f8] sm:$0xff]
          %v624 = vld [vmem:[#allocation8 + $0x900] sm:$0xff]
          %v625 = vld [vmem:[#allocation8 + $0x908] sm:$0xff]
          %v626 = vld [vmem:[#allocation8 + $0x910] sm:$0xff]
          %v627 = vld [vmem:[#allocation8 + $0x918] sm:$0xff]
          %v628 = vld [vmem:[#allocation8 + $0x920] sm:$0xff]
          %v629 = vld [vmem:[#allocation8 + $0x928] sm:$0xff]
          %v630 = vld [vmem:[#allocation8 + $0x930] sm:$0xff]
          %v631 = vld [vmem:[#allocation8 + $0x938] sm:$0xff]
          %v632 = vld [vmem:[#allocation8 + $0x940] sm:$0xff]
          %v633 = vld [vmem:[#allocation8 + $0x948] sm:$0xff]
          %v634 = vld [vmem:[#allocation8 + $0x950] sm:$0xff]
          %v635 = vld [vmem:[#allocation8 + $0x958] sm:$0xff]
          %v636 = vld [vmem:[#allocation8 + $0x960] sm:$0xff]
          %v637 = vld [vmem:[#allocation8 + $0x968] sm:$0xff]
          %v638 = vld [vmem:[#allocation8 + $0x970] sm:$0xff]
          %v639 = vld [vmem:[#allocation8 + $0x978] sm:$0xff]
          %v640 = vld [vmem:[#allocation8 + $0x980] sm:$0xff]
          %v641 = vld [vmem:[#allocation8 + $0x988] sm:$0xff]
          %v642 = vld [vmem:[#allocation8 + $0x990] sm:$0xff]
          %v643 = vld [vmem:[#allocation8 + $0x998] sm:$0xff]
          %v644 = vld [vmem:[#allocation8 + $0x9a0] sm:$0xff]
          %v645 = vld [vmem:[#allocation8 + $0x9a8] sm:$0xff]
          %v646 = vld [vmem:[#allocation8 + $0x9b0] sm:$0xff]
          %v647 = vld [vmem:[#allocation8 + $0x9b8] sm:$0xff]
          %v648 = vld [vmem:[#allocation8 + $0x9c0] sm:$0xff]
          %v649 = vld [vmem:[#allocation8 + $0x9c8] sm:$0xff]
          %v650 = vld [vmem:[#allocation8 + $0x9d0] sm:$0xff]
          %v651 = vld [vmem:[#allocation8 + $0x9d8] sm:$0xff]
          %v652 = vld [vmem:[#allocation8 + $0x9e0] sm:$0xff]
          %v653 = vld [vmem:[#allocation8 + $0x9e8] sm:$0xff]
          %v654 = vld [vmem:[#allocation8 + $0x9f0] sm:$0xff]
          %v655 = vld [vmem:[#allocation8 + $0x9f8] sm:$0xff]
          %v656 = vld [vmem:[#allocation8 + $0xa00] sm:$0xff]
          %v657 = vld [vmem:[#allocation8 + $0xa08] sm:$0xff]
          %v658 = vld [vmem:[#allocation8 + $0xa10] sm:$0xff]
          %v659 = vld [vmem:[#allocation8 + $0xa18] sm:$0xff]
          %v660 = vld [vmem:[#allocation8 + $0xa20] sm:$0xff]
          %v661 = vld [vmem:[#allocation8 + $0xa28] sm:$0xff]
          %v662 = vld [vmem:[#allocation8 + $0xa30] sm:$0xff]
          %v663 = vld [vmem:[#allocation8 + $0xa38] sm:$0xff]
          %v664 = vld [vmem:[#allocation8 + $0xa40] sm:$0xff]
          %v665 = vld [vmem:[#allocation8 + $0xa48] sm:$0xff]
          %v666 = vld [vmem:[#allocation8 + $0xa50] sm:$0xff]
          %v667 = vld [vmem:[#allocation8 + $0xa58] sm:$0xff]
          %v668 = vld [vmem:[#allocation8 + $0xa60] sm:$0xff]
          %v669 = vld [vmem:[#allocation8 + $0xa68] sm:$0xff]
          %v670 = vld [vmem:[#allocation8 + $0xa70] sm:$0xff]
          %v671 = vld [vmem:[#allocation8 + $0xa78] sm:$0xff]
          %v672 = vld [vmem:[#allocation8 + $0xa80] sm:$0xff]
          %v673 = vld [vmem:[#allocation8 + $0xa88] sm:$0xff]
          %v674 = vld [vmem:[#allocation8 + $0xa90] sm:$0xff]
          %v675 = vld [vmem:[#allocation8 + $0xa98] sm:$0xff]
          %v676 = vld [vmem:[#allocation8 + $0xaa0] sm:$0xff]
          %v677 = vld [vmem:[#allocation8 + $0xaa8] sm:$0xff]
          %v678 = vld [vmem:[#allocation8 + $0xab0] sm:$0xff]
          %v679 = vld [vmem:[#allocation8 + $0xab8] sm:$0xff]
          %v680 = vld [vmem:[#allocation8 + $0xac0] sm:$0xff]
          %v681 = vld [vmem:[#allocation8 + $0xac8] sm:$0xff]
          %v682 = vld [vmem:[#allocation8 + $0xad0] sm:$0xff]
          %v683 = vld [vmem:[#allocation8 + $0xad8] sm:$0xff]
          %v684 = vld [vmem:[#allocation8 + $0xae0] sm:$0xff]
          %v685 = vld [vmem:[#allocation8 + $0xae8] sm:$0xff]
          %v686 = vld [vmem:[#allocation8 + $0xaf0] sm:$0xff]
          %v687 = vld [vmem:[#allocation8 + $0xaf8] sm:$0xff]
          %v688 = vld [vmem:[#allocation8 + $0xb00] sm:$0xff]
          %v689 = vld [vmem:[#allocation8 + $0xb08] sm:$0xff]
          %v690 = vld [vmem:[#allocation8 + $0xb10] sm:$0xff]
          %v691 = vld [vmem:[#allocation8 + $0xb18] sm:$0xff]
          %v692 = vld [vmem:[#allocation8 + $0xb20] sm:$0xff]
          %v693 = vld [vmem:[#allocation8 + $0xb28] sm:$0xff]
          %v694 = vld [vmem:[#allocation8 + $0xb30] sm:$0xff]
          %v695 = vld [vmem:[#allocation8 + $0xb38] sm:$0xff]
          %v696 = vld [vmem:[#allocation8 + $0xb40] sm:$0xff]
          %v697 = vld [vmem:[#allocation8 + $0xb48] sm:$0xff]
          %v698 = vld [vmem:[#allocation8 + $0xb50] sm:$0xff]
          %v699 = vld [vmem:[#allocation8 + $0xb58] sm:$0xff]
          %v700 = vld [vmem:[#allocation8 + $0xb60] sm:$0xff]
          %v701 = vld [vmem:[#allocation8 + $0xb68] sm:$0xff]
          %v702 = vld [vmem:[#allocation8 + $0xb70] sm:$0xff]
          %v703 = vld [vmem:[#allocation8 + $0xb78] sm:$0xff]
          %v704 = vld [vmem:[#allocation8 + $0xb80] sm:$0xff]
          %v705 = vld [vmem:[#allocation8 + $0xb88] sm:$0xff]
          %v706 = vld [vmem:[#allocation8 + $0xb90] sm:$0xff]
          %v707 = vld [vmem:[#allocation8 + $0xb98] sm:$0xff]
          %v708 = vld [vmem:[#allocation8 + $0xba0] sm:$0xff]
          %v709 = vld [vmem:[#allocation8 + $0xba8] sm:$0xff]
          %v710 = vld [vmem:[#allocation8 + $0xbb0] sm:$0xff]
          %v711 = vld [vmem:[#allocation8 + $0xbb8] sm:$0xff]
          %v712 = vld [vmem:[#allocation8 + $0xbc0] sm:$0xff]
          %v713 = vld [vmem:[#allocation8 + $0xbc8] sm:$0xff]
          %v714 = vld [vmem:[#allocation8 + $0xbd0] sm:$0xff]
          %v715 = vld [vmem:[#allocation8 + $0xbd8] sm:$0xff]
          %v716 = vld [vmem:[#allocation8 + $0xbe0] sm:$0xff]
          %v717 = vld [vmem:[#allocation8 + $0xbe8] sm:$0xff]
          %v718 = vld [vmem:[#allocation8 + $0xbf0] sm:$0xff]
          %v719 = vld [vmem:[#allocation8 + $0xbf8] sm:$0xff]
          %v720 = vld [vmem:[#allocation8 + $0xc00] sm:$0xff]
          %v721 = vld [vmem:[#allocation8 + $0xc08] sm:$0xff]
          %v722 = vld [vmem:[#allocation8 + $0xc10] sm:$0xff]
          %v723 = vld [vmem:[#allocation8 + $0xc18] sm:$0xff]
          %v724 = vld [vmem:[#allocation8 + $0xc20] sm:$0xff]
          %v725 = vld [vmem:[#allocation8 + $0xc28] sm:$0xff]
          %v726 = vld [vmem:[#allocation8 + $0xc30] sm:$0xff]
          %v727 = vld [vmem:[#allocation8 + $0xc38] sm:$0xff]
          %v728 = vld [vmem:[#allocation8 + $0xc40] sm:$0xff]
          %v729 = vld [vmem:[#allocation8 + $0xc48] sm:$0xff]
          %v730 = vld [vmem:[#allocation8 + $0xc50] sm:$0xff]
          %v731 = vld [vmem:[#allocation8 + $0xc58] sm:$0xff]
          %v732 = vld [vmem:[#allocation8 + $0xc60] sm:$0xff]
          %v733 = vld [vmem:[#allocation8 + $0xc68] sm:$0xff]
          %v734 = vld [vmem:[#allocation8 + $0xc70] sm:$0xff]
          %v735 = vld [vmem:[#allocation8 + $0xc78] sm:$0xff]
          %v736 = vld [vmem:[#allocation8 + $0xc80] sm:$0xff]
          %v737 = vld [vmem:[#allocation8 + $0xc88] sm:$0xff]
          %v738 = vld [vmem:[#allocation8 + $0xc90] sm:$0xff]
          %v739 = vld [vmem:[#allocation8 + $0xc98] sm:$0xff]
          %v740 = vld [vmem:[#allocation8 + $0xca0] sm:$0xff]
          %v741 = vld [vmem:[#allocation8 + $0xca8] sm:$0xff]
          %v742 = vld [vmem:[#allocation8 + $0xcb0] sm:$0xff]
          %v743 = vld [vmem:[#allocation8 + $0xcb8] sm:$0xff]
          %v744 = vld [vmem:[#allocation8 + $0xcc0] sm:$0xff]
          %v745 = vld [vmem:[#allocation8 + $0xcc8] sm:$0xff]
          %v746 = vld [vmem:[#allocation8 + $0xcd0] sm:$0xff]
          %v747 = vld [vmem:[#allocation8 + $0xcd8] sm:$0xff]
          %v748 = vld [vmem:[#allocation8 + $0xce0] sm:$0xff]
          %v749 = vld [vmem:[#allocation8 + $0xce8] sm:$0xff]
          %v750 = vld [vmem:[#allocation8 + $0xcf0] sm:$0xff]
          %v751 = vld [vmem:[#allocation8 + $0xcf8] sm:$0xff]
          %v752 = vld [vmem:[#allocation8 + $0xd00] sm:$0xff]
          %v753 = vld [vmem:[#allocation8 + $0xd08] sm:$0xff]
          %v754 = vld [vmem:[#allocation8 + $0xd10] sm:$0xff]
          %v755 = vld [vmem:[#allocation8 + $0xd18] sm:$0xff]
          %v756 = vld [vmem:[#allocation8 + $0xd20] sm:$0xff]
          %v757 = vld [vmem:[#allocation8 + $0xd28] sm:$0xff]
          %v758 = vld [vmem:[#allocation8 + $0xd30] sm:$0xff]
          %v759 = vld [vmem:[#allocation8 + $0xd38] sm:$0xff]
          %v760 = vld [vmem:[#allocation8 + $0xd40] sm:$0xff]
          %v761 = vld [vmem:[#allocation8 + $0xd48] sm:$0xff]
          %v762 = vld [vmem:[#allocation8 + $0xd50] sm:$0xff]
          %v763 = vld [vmem:[#allocation8 + $0xd58] sm:$0xff]
          %v764 = vld [vmem:[#allocation8 + $0xd60] sm:$0xff]
          %v765 = vld [vmem:[#allocation8 + $0xd68] sm:$0xff]
          %v766 = vld [vmem:[#allocation8 + $0xd70] sm:$0xff]
          %v767 = vld [vmem:[#allocation8 + $0xd78] sm:$0xff]
          %v768 = vld [vmem:[#allocation8 + $0xd80] sm:$0xff]
          %v769 = vld [vmem:[#allocation8 + $0xd88] sm:$0xff]
          %v770 = vld [vmem:[#allocation8 + $0xd90] sm:$0xff]
          %v771 = vld [vmem:[#allocation8 + $0xd98] sm:$0xff]
          %v772 = vld [vmem:[#allocation8 + $0xda0] sm:$0xff]
          %v773 = vld [vmem:[#allocation8 + $0xda8] sm:$0xff]
          %v774 = vld [vmem:[#allocation8 + $0xdb0] sm:$0xff]
          %v775 = vld [vmem:[#allocation8 + $0xdb8] sm:$0xff]
          %v776 = vld [vmem:[#allocation8 + $0xdc0] sm:$0xff]
          %v777 = vld [vmem:[#allocation8 + $0xdc8] sm:$0xff]
          %v778 = vld [vmem:[#allocation8 + $0xdd0] sm:$0xff]
          %v779 = vld [vmem:[#allocation8 + $0xdd8] sm:$0xff]
          %v780 = vld [vmem:[#allocation8 + $0xde0] sm:$0xff]
          %v781 = vld [vmem:[#allocation8 + $0xde8] sm:$0xff]
          %v782 = vld [vmem:[#allocation8 + $0xdf0] sm:$0xff]
          %v783 = vld [vmem:[#allocation8 + $0xdf8] sm:$0xff]
          %v784 = vld [vmem:[#allocation8 + $0xe00] sm:$0xff]
          %v785 = vld [vmem:[#allocation8 + $0xe08] sm:$0xff]
          %v786 = vld [vmem:[#allocation8 + $0xe10] sm:$0xff]
          %v787 = vld [vmem:[#allocation8 + $0xe18] sm:$0xff]
          %v788 = vld [vmem:[#allocation8 + $0xe20] sm:$0xff]
          %v789 = vld [vmem:[#allocation8 + $0xe28] sm:$0xff]
          %v790 = vld [vmem:[#allocation8 + $0xe30] sm:$0xff]
          %v791 = vld [vmem:[#allocation8 + $0xe38] sm:$0xff]
          %v792 = vld [vmem:[#allocation8 + $0xe40] sm:$0xff]
          %v793 = vld [vmem:[#allocation8 + $0xe48] sm:$0xff]
          %v794 = vld [vmem:[#allocation8 + $0xe50] sm:$0xff]
          %v795 = vld [vmem:[#allocation8 + $0xe58] sm:$0xff]
          %v796 = vld [vmem:[#allocation8 + $0xe60] sm:$0xff]
          %v797 = vld [vmem:[#allocation8 + $0xe68] sm:$0xff]
          %v798 = vld [vmem:[#allocation8 + $0xe70] sm:$0xff]
          %v799 = vld [vmem:[#allocation8 + $0xe78] sm:$0xff]
          %v800 = vld [vmem:[#allocation8 + $0xe80] sm:$0xff]
          %v801 = vld [vmem:[#allocation8 + $0xe88] sm:$0xff]
          %v802 = vld [vmem:[#allocation8 + $0xe90] sm:$0xff]
          %v803 = vld [vmem:[#allocation8 + $0xe98] sm:$0xff]
          %v804 = vld [vmem:[#allocation8 + $0xea0] sm:$0xff]
          %v805 = vld [vmem:[#allocation8 + $0xea8] sm:$0xff]
          %v806 = vld [vmem:[#allocation8 + $0xeb0] sm:$0xff]
          %v807 = vld [vmem:[#allocation8 + $0xeb8] sm:$0xff]
          %v808 = vld [vmem:[#allocation8 + $0xec0] sm:$0xff]
          %v809 = vld [vmem:[#allocation8 + $0xec8] sm:$0xff]
          %v810 = vld [vmem:[#allocation8 + $0xed0] sm:$0xff]
          %v811 = vld [vmem:[#allocation8 + $0xed8] sm:$0xff]
          %v812 = vld [vmem:[#allocation8 + $0xee0] sm:$0xff]
          %v813 = vld [vmem:[#allocation8 + $0xee8] sm:$0xff]
          %v814 = vld [vmem:[#allocation8 + $0xef0] sm:$0xff]
          %v815 = vld [vmem:[#allocation8 + $0xef8] sm:$0xff]
          %v816 = vld [vmem:[#allocation8 + $0xf00] sm:$0xff]
          %v817 = vld [vmem:[#allocation8 + $0xf08] sm:$0xff]
          %v818 = vld [vmem:[#allocation8 + $0xf10] sm:$0xff]
          %v819 = vld [vmem:[#allocation8 + $0xf18] sm:$0xff]
          %v820 = vld [vmem:[#allocation8 + $0xf20] sm:$0xff]
          %v821 = vld [vmem:[#allocation8 + $0xf28] sm:$0xff]
          %v822 = vld [vmem:[#allocation8 + $0xf30] sm:$0xff]
          %v823 = vld [vmem:[#allocation8 + $0xf38] sm:$0xff]
          %v824 = vld [vmem:[#allocation8 + $0xf40] sm:$0xff]
          %v825 = vld [vmem:[#allocation8 + $0xf48] sm:$0xff]
          %v826 = vld [vmem:[#allocation8 + $0xf50] sm:$0xff]
          %v827 = vld [vmem:[#allocation8 + $0xf58] sm:$0xff]
          %v828 = vld [vmem:[#allocation8 + $0xf60] sm:$0xff]
          %v829 = vld [vmem:[#allocation8 + $0xf68] sm:$0xff]
          %v830 = vld [vmem:[#allocation8 + $0xf70] sm:$0xff]
          %v831 = vld [vmem:[#allocation8 + $0xf78] sm:$0xff]
          %v832 = vld [vmem:[#allocation8 + $0xf80] sm:$0xff]
          %v833 = vld [vmem:[#allocation8 + $0xf88] sm:$0xff]
          %v834 = vld [vmem:[#allocation8 + $0xf90] sm:$0xff]
          %v835 = vld [vmem:[#allocation8 + $0xf98] sm:$0xff]
          %v836 = vld [vmem:[#allocation8 + $0xfa0] sm:$0xff]
          %v837 = vld [vmem:[#allocation8 + $0xfa8] sm:$0xff]
          %v838 = vld [vmem:[#allocation8 + $0xfb0] sm:$0xff]
          %v839 = vld [vmem:[#allocation8 + $0xfb8] sm:$0xff]
          %v840 = vld [vmem:[#allocation8 + $0xfc0] sm:$0xff]
          %v841 = vld [vmem:[#allocation8 + $0xfc8] sm:$0xff]
          %v842 = vld [vmem:[#allocation8 + $0xfd0] sm:$0xff]
          %v843 = vld [vmem:[#allocation8 + $0xfd8] sm:$0xff]
          %v844 = vld [vmem:[#allocation8 + $0xfe0] sm:$0xff]
          %v845 = vld [vmem:[#allocation8 + $0xfe8] sm:$0xff]
          %v846 = vld [vmem:[#allocation8 + $0xff0] sm:$0xff]
          %v847 = vld [vmem:[#allocation8 + $0xff8] sm:$0xff]
          %v848 = vld [vmem:[#allocation8 + $0x1000] sm:$0xff]
          %v849 = vld [vmem:[#allocation8 + $0x1008] sm:$0xff]
          %v850 = vld [vmem:[#allocation8 + $0x1010] sm:$0xff]
          %v851 = vld [vmem:[#allocation8 + $0x1018] sm:$0xff]
          %v852 = vld [vmem:[#allocation8 + $0x1020] sm:$0xff]
          %v853 = vld [vmem:[#allocation8 + $0x1028] sm:$0xff]
          %v854 = vld [vmem:[#allocation8 + $0x1030] sm:$0xff]
          %v855 = vld [vmem:[#allocation8 + $0x1038] sm:$0xff]
          %v856 = vld [vmem:[#allocation8 + $0x1040] sm:$0xff]
          %v857 = vld [vmem:[#allocation8 + $0x1048] sm:$0xff]
          %v858 = vld [vmem:[#allocation8 + $0x1050] sm:$0xff]
          %v859 = vld [vmem:[#allocation8 + $0x1058] sm:$0xff]
          %v860 = vld [vmem:[#allocation8 + $0x1060] sm:$0xff]
          %v861 = vld [vmem:[#allocation8 + $0x1068] sm:$0xff]
          %v862 = vld [vmem:[#allocation8 + $0x1070] sm:$0xff]
          %v863 = vld [vmem:[#allocation8 + $0x1078] sm:$0xff]
          %v864 = vld [vmem:[#allocation8 + $0x1080] sm:$0xff]
          %v865 = vld [vmem:[#allocation8 + $0x1088] sm:$0xff]
          %v866 = vld [vmem:[#allocation8 + $0x1090] sm:$0xff]
          %v867 = vld [vmem:[#allocation8 + $0x1098] sm:$0xff]
          %v868 = vld [vmem:[#allocation8 + $0x10a0] sm:$0xff]
          %v869 = vld [vmem:[#allocation8 + $0x10a8] sm:$0xff]
          %v870 = vld [vmem:[#allocation8 + $0x10b0] sm:$0xff]
          %v871 = vld [vmem:[#allocation8 + $0x10b8] sm:$0xff]
          %v872 = vld [vmem:[#allocation8 + $0x10c0] sm:$0xff]
          %v873 = vld [vmem:[#allocation8 + $0x10c8] sm:$0xff]
          %v874 = vld [vmem:[#allocation8 + $0x10d0] sm:$0xff]
          %v875 = vld [vmem:[#allocation8 + $0x10d8] sm:$0xff]
          %v876 = vld [vmem:[#allocation8 + $0x10e0] sm:$0xff]
          %v877 = vld [vmem:[#allocation8 + $0x10e8] sm:$0xff]
          %v878 = vld [vmem:[#allocation8 + $0x10f0] sm:$0xff]
          %v879 = vld [vmem:[#allocation8 + $0x10f8] sm:$0xff]
          %v880 = vld [vmem:[#allocation8 + $0x1100] sm:$0xff]
          %v881 = vld [vmem:[#allocation8 + $0x1108] sm:$0xff]
          %v882 = vld [vmem:[#allocation8 + $0x1110] sm:$0xff]
          %v883 = vld [vmem:[#allocation8 + $0x1118] sm:$0xff]
          %v884 = vld [vmem:[#allocation8 + $0x1120] sm:$0xff]
          %v885 = vld [vmem:[#allocation8 + $0x1128] sm:$0xff]
          %v886 = vld [vmem:[#allocation8 + $0x1130] sm:$0xff]
          %v887 = vld [vmem:[#allocation8 + $0x1138] sm:$0xff]
          %v888 = vld [vmem:[#allocation8 + $0x1140] sm:$0xff]
          %v889 = vld [vmem:[#allocation8 + $0x1148] sm:$0xff]
          %v890 = vld [vmem:[#allocation8 + $0x1150] sm:$0xff]
          %v891 = vld [vmem:[#allocation8 + $0x1158] sm:$0xff]
          %v892 = vld [vmem:[#allocation8 + $0x1160] sm:$0xff]
          %v893 = vld [vmem:[#allocation8 + $0x1168] sm:$0xff]
          %v894 = vld [vmem:[#allocation8 + $0x1170] sm:$0xff]
          %v895 = vld [vmem:[#allocation8 + $0x1178] sm:$0xff]
          %v896 = vld [vmem:[#allocation8 + $0x1180] sm:$0xff]
          %v897 = vld [vmem:[#allocation8 + $0x1188] sm:$0xff]
          %v898 = vld [vmem:[#allocation8 + $0x1190] sm:$0xff]
          %v899 = vld [vmem:[#allocation8 + $0x1198] sm:$0xff]
          %v900 = vld [vmem:[#allocation8 + $0x11a0] sm:$0xff]
          %v901 = vld [vmem:[#allocation8 + $0x11a8] sm:$0xff]
          %v902 = vld [vmem:[#allocation8 + $0x11b0] sm:$0xff]
          %v903 = vld [vmem:[#allocation8 + $0x11b8] sm:$0xff]
          %v904 = vld [vmem:[#allocation8 + $0x11c0] sm:$0xff]
          %v905 = vld [vmem:[#allocation8 + $0x11c8] sm:$0xff]
          %v906 = vld [vmem:[#allocation8 + $0x11d0] sm:$0xff]
          %v907 = vld [vmem:[#allocation8 + $0x11d8] sm:$0xff]
          %v908 = vld [vmem:[#allocation8 + $0x11e0] sm:$0xff]
          %v909 = vld [vmem:[#allocation8 + $0x11e8] sm:$0xff]
          %v910 = vld [vmem:[#allocation8 + $0x11f0] sm:$0xff]
          %v911 = vld [vmem:[#allocation8 + $0x11f8] sm:$0xff]
          %v912 = vld [vmem:[#allocation8 + $0x1200] sm:$0xff]
          %v913 = vld [vmem:[#allocation8 + $0x1208] sm:$0xff]
          %v914 = vld [vmem:[#allocation8 + $0x1210] sm:$0xff]
          %v915 = vld [vmem:[#allocation8 + $0x1218] sm:$0xff]
          %v916 = vld [vmem:[#allocation8 + $0x1220] sm:$0xff]
          %v917 = vld [vmem:[#allocation8 + $0x1228] sm:$0xff]
          %v918 = vld [vmem:[#allocation8 + $0x1230] sm:$0xff]
          %v919 = vld [vmem:[#allocation8 + $0x1238] sm:$0xff]
          %v920 = vld [vmem:[#allocation8 + $0x1240] sm:$0xff]
          %v921 = vld [vmem:[#allocation8 + $0x1248] sm:$0xff]
          %v922 = vld [vmem:[#allocation8 + $0x1250] sm:$0xff]
          %v923 = vld [vmem:[#allocation8 + $0x1258] sm:$0xff]
          %v924 = vld [vmem:[#allocation8 + $0x1260] sm:$0xff]
          %v925 = vld [vmem:[#allocation8 + $0x1268] sm:$0xff]
          %v926 = vld [vmem:[#allocation8 + $0x1270] sm:$0xff]
          %v927 = vld [vmem:[#allocation8 + $0x1278] sm:$0xff]
          %v928 = vld [vmem:[#allocation8 + $0x1280] sm:$0xff]
          %v929 = vld [vmem:[#allocation8 + $0x1288] sm:$0xff]
          %v930 = vld [vmem:[#allocation8 + $0x1290] sm:$0xff]
          %v931 = vld [vmem:[#allocation8 + $0x1298] sm:$0xff]
          %v932 = vld [vmem:[#allocation8 + $0x12a0] sm:$0xff]
          %v933 = vld [vmem:[#allocation8 + $0x12a8] sm:$0xff]
          %v934 = vld [vmem:[#allocation8 + $0x12b0] sm:$0xff]
          %v935 = vld [vmem:[#allocation8 + $0x12b8] sm:$0xff]
          %v936 = vld [vmem:[#allocation8 + $0x12c0] sm:$0xff]
          %v937 = vld [vmem:[#allocation8 + $0x12c8] sm:$0xff]
          %v938 = vld [vmem:[#allocation8 + $0x12d0] sm:$0xff]
          %v939 = vld [vmem:[#allocation8 + $0x12d8] sm:$0xff]
          %v940 = vld [vmem:[#allocation8 + $0x12e0] sm:$0xff]
          %v941 = vld [vmem:[#allocation8 + $0x12e8] sm:$0xff]
          %v942 = vld [vmem:[#allocation8 + $0x12f0] sm:$0xff]
          %v943 = vld [vmem:[#allocation8 + $0x12f8] sm:$0xff]
          %v944 = vld [vmem:[#allocation8 + $0x1300] sm:$0xff]
          %v945 = vld [vmem:[#allocation8 + $0x1308] sm:$0xff]
          %v946 = vld [vmem:[#allocation8 + $0x1310] sm:$0xff]
          %v947 = vld [vmem:[#allocation8 + $0x1318] sm:$0xff]
          %v948 = vld [vmem:[#allocation8 + $0x1320] sm:$0xff]
          %v949 = vld [vmem:[#allocation8 + $0x1328] sm:$0xff]
          %v950 = vld [vmem:[#allocation8 + $0x1330] sm:$0xff]
          %v951 = vld [vmem:[#allocation8 + $0x1338] sm:$0xff]
          %v952 = vld [vmem:[#allocation8 + $0x1340] sm:$0xff]
          %v953 = vld [vmem:[#allocation8 + $0x1348] sm:$0xff]
          %v954 = vld [vmem:[#allocation8 + $0x1350] sm:$0xff]
          %v955 = vld [vmem:[#allocation8 + $0x1358] sm:$0xff]
          %v956 = vld [vmem:[#allocation8 + $0x1360] sm:$0xff]
          %v957 = vld [vmem:[#allocation8 + $0x1368] sm:$0xff]
          %v958 = vld [vmem:[#allocation8 + $0x1370] sm:$0xff]
          %v959 = vld [vmem:[#allocation8 + $0x1378] sm:$0xff]
          %v960 = vld [vmem:[#allocation8 + $0x1380] sm:$0xff]
          %v961 = vld [vmem:[#allocation8 + $0x1388] sm:$0xff]
          %v962 = vld [vmem:[#allocation8 + $0x1390] sm:$0xff]
          %v963 = vld [vmem:[#allocation8 + $0x1398] sm:$0xff]
          %v964 = vld [vmem:[#allocation8 + $0x13a0] sm:$0xff]
          %v965 = vld [vmem:[#allocation8 + $0x13a8] sm:$0xff]
          %v966 = vld [vmem:[#allocation8 + $0x13b0] sm:$0xff]
          %v967 = vld [vmem:[#allocation8 + $0x13b8] sm:$0xff]
          %v968 = vld [vmem:[#allocation8 + $0x13c0] sm:$0xff]
          %v969 = vld [vmem:[#allocation8 + $0x13c8] sm:$0xff]
          %v970 = vld [vmem:[#allocation8 + $0x13d0] sm:$0xff]
          %v971 = vld [vmem:[#allocation8 + $0x13d8] sm:$0xff]
          %v972 = vld [vmem:[#allocation8 + $0x13e0] sm:$0xff]
          %v973 = vld [vmem:[#allocation8 + $0x13e8] sm:$0xff]
          %v974 = vld [vmem:[#allocation8 + $0x13f0] sm:$0xff]
          %v975 = vld [vmem:[#allocation8 + $0x13f8] sm:$0xff]
          %v976 = vld [vmem:[#allocation8 + $0x1400] sm:$0xff]
          %v977 = vld [vmem:[#allocation8 + $0x1408] sm:$0xff]
          %v978 = vld [vmem:[#allocation8 + $0x1410] sm:$0xff]
          %v979 = vld [vmem:[#allocation8 + $0x1418] sm:$0xff]
          %v980 = vld [vmem:[#allocation8 + $0x1420] sm:$0xff]
          %v981 = vld [vmem:[#allocation8 + $0x1428] sm:$0xff]
          %v982 = vld [vmem:[#allocation8 + $0x1430] sm:$0xff]
          %v983 = vld [vmem:[#allocation8 + $0x1438] sm:$0xff]
          %v984 = vld [vmem:[#allocation8 + $0x1440] sm:$0xff]
          %v985 = vld [vmem:[#allocation8 + $0x1448] sm:$0xff]
          %v986 = vld [vmem:[#allocation8 + $0x1450] sm:$0xff]
          %v987 = vld [vmem:[#allocation8 + $0x1458] sm:$0xff]
          %v988 = vld [vmem:[#allocation8 + $0x1460] sm:$0xff]
          %v989 = vld [vmem:[#allocation8 + $0x1468] sm:$0xff]
          %v990 = vld [vmem:[#allocation8 + $0x1470] sm:$0xff]
          %v991 = vld [vmem:[#allocation8 + $0x1478] sm:$0xff]
          %v992 = vld [vmem:[#allocation8 + $0x1480] sm:$0xff]
          %v993 = vld [vmem:[#allocation8 + $0x1488] sm:$0xff]
          %v994 = vld [vmem:[#allocation8 + $0x1490] sm:$0xff]
          %v995 = vld [vmem:[#allocation8 + $0x1498] sm:$0xff]
          %v996 = vld [vmem:[#allocation8 + $0x14a0] sm:$0xff]
          %v997 = vld [vmem:[#allocation8 + $0x14a8] sm:$0xff]
          %v998 = vld [vmem:[#allocation8 + $0x14b0] sm:$0xff]
          %v999 = vld [vmem:[#allocation8 + $0x14b8] sm:$0xff]
          %v1000 = vld [vmem:[#allocation8 + $0x14c0] sm:$0xff]
          %v1001 = vld [vmem:[#allocation8 + $0x14c8] sm:$0xff]
          %v1002 = vld [vmem:[#allocation8 + $0x14d0] sm:$0xff]
          %v1003 = vld [vmem:[#allocation8 + $0x14d8] sm:$0xff]
          %v1004 = vld [vmem:[#allocation8 + $0x14e0] sm:$0xff]
          %v1005 = vld [vmem:[#allocation8 + $0x14e8] sm:$0xff]
          %v1006 = vld [vmem:[#allocation8 + $0x14f0] sm:$0xff]
          %v1007 = vld [vmem:[#allocation8 + $0x14f8] sm:$0xff]
          %v1008 = vld [vmem:[#allocation8 + $0x1500] sm:$0xff]
          %v1009 = vld [vmem:[#allocation8 + $0x1508] sm:$0xff]
          %v1010 = vld [vmem:[#allocation8 + $0x1510] sm:$0xff]
          %v1011 = vld [vmem:[#allocation8 + $0x1518] sm:$0xff]
          %v1012 = vld [vmem:[#allocation8 + $0x1520] sm:$0xff]
          %v1013 = vld [vmem:[#allocation8 + $0x1528] sm:$0xff]
          %v1014 = vld [vmem:[#allocation8 + $0x1530] sm:$0xff]
          %v1015 = vld [vmem:[#allocation8 + $0x1538] sm:$0xff]
          %v1016 = vld [vmem:[#allocation8 + $0x1540] sm:$0xff]
          %v1017 = vld [vmem:[#allocation8 + $0x1548] sm:$0xff]
          %v1018 = vld [vmem:[#allocation8 + $0x1550] sm:$0xff]
          %v1019 = vld [vmem:[#allocation8 + $0x1558] sm:$0xff]
          %v1020 = vld [vmem:[#allocation8 + $0x1560] sm:$0xff]
          %v1021 = vld [vmem:[#allocation8 + $0x1568] sm:$0xff]
          %v1022 = vld [vmem:[#allocation8 + $0x1570] sm:$0xff]
          %v1023 = vld [vmem:[#allocation8 + $0x1578] sm:$0xff]
          %v1024 = vld [vmem:[#allocation8 + $0x1580] sm:$0xff]
          %v1025 = vld [vmem:[#allocation8 + $0x1588] sm:$0xff]
          %v1026 = vld [vmem:[#allocation8 + $0x1590] sm:$0xff]
          %v1027 = vld [vmem:[#allocation8 + $0x1598] sm:$0xff]
          %v1028 = vld [vmem:[#allocation8 + $0x15a0] sm:$0xff]
          %v1029 = vld [vmem:[#allocation8 + $0x15a8] sm:$0xff]
          %v1030 = vld [vmem:[#allocation8 + $0x15b0] sm:$0xff]
          %v1031 = vld [vmem:[#allocation8 + $0x15b8] sm:$0xff]
          %v1032 = vld [vmem:[#allocation8 + $0x15c0] sm:$0xff]
          %v1033 = vld [vmem:[#allocation8 + $0x15c8] sm:$0xff]
          %v1034 = vld [vmem:[#allocation8 + $0x15d0] sm:$0xff]
          %v1035 = vld [vmem:[#allocation8 + $0x15d8] sm:$0xff]
          %v1036 = vld [vmem:[#allocation8 + $0x15e0] sm:$0xff]
          %v1037 = vld [vmem:[#allocation8 + $0x15e8] sm:$0xff]
          %v1038 = vld [vmem:[#allocation8 + $0x15f0] sm:$0xff]
          %v1039 = vld [vmem:[#allocation8 + $0x15f8] sm:$0xff]
          %v1040 = vld [vmem:[#allocation8 + $0x1600] sm:$0xff]
          %v1041 = vld [vmem:[#allocation8 + $0x1608] sm:$0xff]
          %v1042 = vld [vmem:[#allocation8 + $0x1610] sm:$0xff]
          %v1043 = vld [vmem:[#allocation8 + $0x1618] sm:$0xff]
          %v1044 = vld [vmem:[#allocation8 + $0x1620] sm:$0xff]
          %v1045 = vld [vmem:[#allocation8 + $0x1628] sm:$0xff]
          %v1046 = vld [vmem:[#allocation8 + $0x1630] sm:$0xff]
          %v1047 = vld [vmem:[#allocation8 + $0x1638] sm:$0xff]
          %v1048 = vld [vmem:[#allocation8 + $0x1640] sm:$0xff]
          %v1049 = vld [vmem:[#allocation8 + $0x1648] sm:$0xff]
          %v1050 = vld [vmem:[#allocation8 + $0x1650] sm:$0xff]
          %v1051 = vld [vmem:[#allocation8 + $0x1658] sm:$0xff]
          %v1052 = vld [vmem:[#allocation8 + $0x1660] sm:$0xff]
          %v1053 = vld [vmem:[#allocation8 + $0x1668] sm:$0xff]
          %v1054 = vld [vmem:[#allocation8 + $0x1670] sm:$0xff]
          %v1055 = vld [vmem:[#allocation8 + $0x1678] sm:$0xff]
          %v1056 = vld [vmem:[#allocation8 + $0x1680] sm:$0xff]
          %v1057 = vld [vmem:[#allocation8 + $0x1688] sm:$0xff]
          %v1058 = vld [vmem:[#allocation8 + $0x1690] sm:$0xff]
          %v1059 = vld [vmem:[#allocation8 + $0x1698] sm:$0xff]
          %v1060 = vld [vmem:[#allocation8 + $0x16a0] sm:$0xff]
          %v1061 = vld [vmem:[#allocation8 + $0x16a8] sm:$0xff]
          %v1062 = vld [vmem:[#allocation8 + $0x16b0] sm:$0xff]
          %v1063 = vld [vmem:[#allocation8 + $0x16b8] sm:$0xff]
          %v1064 = vld [vmem:[#allocation8 + $0x16c0] sm:$0xff]
          %v1065 = vld [vmem:[#allocation8 + $0x16c8] sm:$0xff]
          %v1066 = vld [vmem:[#allocation8 + $0x16d0] sm:$0xff]
          %v1067 = vld [vmem:[#allocation8 + $0x16d8] sm:$0xff]
          %v1068 = vld [vmem:[#allocation8 + $0x16e0] sm:$0xff]
          %v1069 = vld [vmem:[#allocation8 + $0x16e8] sm:$0xff]
          %v1070 = vld [vmem:[#allocation8 + $0x16f0] sm:$0xff]
          %v1071 = vld [vmem:[#allocation8 + $0x16f8] sm:$0xff]
          %v1072 = vld [vmem:[#allocation8 + $0x1700] sm:$0xff]
          %v1073 = vld [vmem:[#allocation8 + $0x1708] sm:$0xff]
          %v1074 = vld [vmem:[#allocation8 + $0x1710] sm:$0xff]
          %v1075 = vld [vmem:[#allocation8 + $0x1718] sm:$0xff]
          %v1076 = vld [vmem:[#allocation8 + $0x1720] sm:$0xff]
          %v1077 = vld [vmem:[#allocation8 + $0x1728] sm:$0xff]
          %v1078 = vld [vmem:[#allocation8 + $0x1730] sm:$0xff]
          %v1079 = vld [vmem:[#allocation8 + $0x1738] sm:$0xff]
          %v1080 = vld [vmem:[#allocation8 + $0x1740] sm:$0xff]
          %v1081 = vld [vmem:[#allocation8 + $0x1748] sm:$0xff]
          %v1082 = vld [vmem:[#allocation8 + $0x1750] sm:$0xff]
          %v1083 = vld [vmem:[#allocation8 + $0x1758] sm:$0xff]
          %v1084 = vld [vmem:[#allocation8 + $0x1760] sm:$0xff]
          %v1085 = vld [vmem:[#allocation8 + $0x1768] sm:$0xff]
          %v1086 = vld [vmem:[#allocation8 + $0x1770] sm:$0xff]
          %v1087 = vld [vmem:[#allocation8 + $0x1778] sm:$0xff]
          %v1088 = vld [vmem:[#allocation8 + $0x1780] sm:$0xff]
          %v1089 = vld [vmem:[#allocation8 + $0x1788] sm:$0xff]
          %v1090 = vld [vmem:[#allocation8 + $0x1790] sm:$0xff]
          %v1091 = vld [vmem:[#allocation8 + $0x1798] sm:$0xff]
          %v1092 = vld [vmem:[#allocation8 + $0x17a0] sm:$0xff]
          %v1093 = vld [vmem:[#allocation8 + $0x17a8] sm:$0xff]
          %v1094 = vld [vmem:[#allocation8 + $0x17b0] sm:$0xff]
          %v1095 = vld [vmem:[#allocation8 + $0x17b8] sm:$0xff]
          %v1096 = vld [vmem:[#allocation8 + $0x17c0] sm:$0xff]
          %v1097 = vld [vmem:[#allocation8 + $0x17c8] sm:$0xff]
          %v1098 = vld [vmem:[#allocation8 + $0x17d0] sm:$0xff]
          %v1099 = vld [vmem:[#allocation8 + $0x17d8] sm:$0xff]
          %v1100 = vld [vmem:[#allocation8 + $0x17e0] sm:$0xff]
          %v1101 = vld [vmem:[#allocation8 + $0x17e8] sm:$0xff]
          %v1102 = vld [vmem:[#allocation8 + $0x17f0] sm:$0xff]
          %v1103 = vld [vmem:[#allocation8 + $0x17f8] sm:$0xff]
          %v1104 = vld [vmem:[#allocation8 + $0x1800] sm:$0xff]
          %v1105 = vld [vmem:[#allocation8 + $0x1808] sm:$0xff]
          %v1106 = vld [vmem:[#allocation8 + $0x1810] sm:$0xff]
          %v1107 = vld [vmem:[#allocation8 + $0x1818] sm:$0xff]
          %v1108 = vld [vmem:[#allocation8 + $0x1820] sm:$0xff]
          %v1109 = vld [vmem:[#allocation8 + $0x1828] sm:$0xff]
          %v1110 = vld [vmem:[#allocation8 + $0x1830] sm:$0xff]
          %v1111 = vld [vmem:[#allocation8 + $0x1838] sm:$0xff]
          %v1112 = vld [vmem:[#allocation8 + $0x1840] sm:$0xff]
          %v1113 = vld [vmem:[#allocation8 + $0x1848] sm:$0xff]
          %v1114 = vld [vmem:[#allocation8 + $0x1850] sm:$0xff]
          %v1115 = vld [vmem:[#allocation8 + $0x1858] sm:$0xff]
          %v1116 = vld [vmem:[#allocation8 + $0x1860] sm:$0xff]
          %v1117 = vld [vmem:[#allocation8 + $0x1868] sm:$0xff]
          %v1118 = vld [vmem:[#allocation8 + $0x1870] sm:$0xff]
          %v1119 = vld [vmem:[#allocation8 + $0x1878] sm:$0xff]
          %v1120 = vld [vmem:[#allocation8 + $0x1880] sm:$0xff]
          %v1121 = vld [vmem:[#allocation8 + $0x1888] sm:$0xff]
          %v1122 = vld [vmem:[#allocation8 + $0x1890] sm:$0xff]
          %v1123 = vld [vmem:[#allocation8 + $0x1898] sm:$0xff]
          %v1124 = vld [vmem:[#allocation8 + $0x18a0] sm:$0xff]
          %v1125 = vld [vmem:[#allocation8 + $0x18a8] sm:$0xff]
          %v1126 = vld [vmem:[#allocation8 + $0x18b0] sm:$0xff]
          %v1127 = vld [vmem:[#allocation8 + $0x18b8] sm:$0xff]
          %v1128 = vld [vmem:[#allocation8 + $0x18c0] sm:$0xff]
          %v1129 = vld [vmem:[#allocation8 + $0x18c8] sm:$0xff]
          %v1130 = vld [vmem:[#allocation8 + $0x18d0] sm:$0xff]
          %v1131 = vld [vmem:[#allocation8 + $0x18d8] sm:$0xff]
          %v1132 = vld [vmem:[#allocation8 + $0x18e0] sm:$0xff]
          %v1133 = vld [vmem:[#allocation8 + $0x18e8] sm:$0xff]
          %v1134 = vld [vmem:[#allocation8 + $0x18f0] sm:$0xff]
          %v1135 = vld [vmem:[#allocation8 + $0x18f8] sm:$0xff]
          %v1136 = vld [vmem:[#allocation8 + $0x1900] sm:$0xff]
          %v1137 = vld [vmem:[#allocation8 + $0x1908] sm:$0xff]
          %v1138 = vld [vmem:[#allocation8 + $0x1910] sm:$0xff]
          %v1139 = vld [vmem:[#allocation8 + $0x1918] sm:$0xff]
          %v1140 = vld [vmem:[#allocation8 + $0x1920] sm:$0xff]
          %v1141 = vld [vmem:[#allocation8 + $0x1928] sm:$0xff]
          %v1142 = vld [vmem:[#allocation8 + $0x1930] sm:$0xff]
          %v1143 = vld [vmem:[#allocation8 + $0x1938] sm:$0xff]
          %v1144 = vld [vmem:[#allocation8 + $0x1940] sm:$0xff]
          %v1145 = vld [vmem:[#allocation8 + $0x1948] sm:$0xff]
          %v1146 = vld [vmem:[#allocation8 + $0x1950] sm:$0xff]
          %v1147 = vld [vmem:[#allocation8 + $0x1958] sm:$0xff]
          %v1148 = vld [vmem:[#allocation8 + $0x1960] sm:$0xff]
          %v1149 = vld [vmem:[#allocation8 + $0x1968] sm:$0xff]
          %v1150 = vld [vmem:[#allocation8 + $0x1970] sm:$0xff]
          %v1151 = vld [vmem:[#allocation8 + $0x1978] sm:$0xff]
          %v1152 = vld [vmem:[#allocation8 + $0x1980] sm:$0xff]
          %v1153 = vld [vmem:[#allocation8 + $0x1988] sm:$0xff]
          %v1154 = vld [vmem:[#allocation8 + $0x1990] sm:$0xff]
          %v1155 = vld [vmem:[#allocation8 + $0x1998] sm:$0xff]
          %v1156 = vld [vmem:[#allocation8 + $0x19a0] sm:$0xff]
          %v1157 = vld [vmem:[#allocation8 + $0x19a8] sm:$0xff]
          %v1158 = vld [vmem:[#allocation8 + $0x19b0] sm:$0xff]
          %v1159 = vld [vmem:[#allocation8 + $0x19b8] sm:$0xff]
          %v1160 = vld [vmem:[#allocation8 + $0x19c0] sm:$0xff]
          %v1161 = vld [vmem:[#allocation8 + $0x19c8] sm:$0xff]
          %v1162 = vld [vmem:[#allocation8 + $0x19d0] sm:$0xff]
          %v1163 = vld [vmem:[#allocation8 + $0x19d8] sm:$0xff]
          %v1164 = vld [vmem:[#allocation8 + $0x19e0] sm:$0xff]
          %v1165 = vld [vmem:[#allocation8 + $0x19e8] sm:$0xff]
          %v1166 = vld [vmem:[#allocation8 + $0x19f0] sm:$0xff]
          %v1167 = vld [vmem:[#allocation8 + $0x19f8] sm:$0xff]
          %v1168 = vld [vmem:[#allocation8 + $0x1a00] sm:$0xff]
          %v1169 = vld [vmem:[#allocation8 + $0x1a08] sm:$0xff]
          %v1170 = vld [vmem:[#allocation8 + $0x1a10] sm:$0xff]
          %v1171 = vld [vmem:[#allocation8 + $0x1a18] sm:$0xff]
          %v1172 = vld [vmem:[#allocation8 + $0x1a20] sm:$0xff]
          %v1173 = vld [vmem:[#allocation8 + $0x1a28] sm:$0xff]
          %v1174 = vld [vmem:[#allocation8 + $0x1a30] sm:$0xff]
          %v1175 = vld [vmem:[#allocation8 + $0x1a38] sm:$0xff]
          %v1176 = vld [vmem:[#allocation8 + $0x1a40] sm:$0xff]
          %v1177 = vld [vmem:[#allocation8 + $0x1a48] sm:$0xff]
          %v1178 = vld [vmem:[#allocation8 + $0x1a50] sm:$0xff]
          %v1179 = vld [vmem:[#allocation8 + $0x1a58] sm:$0xff]
          %v1180 = vld [vmem:[#allocation8 + $0x1a60] sm:$0xff]
          %v1181 = vld [vmem:[#allocation8 + $0x1a68] sm:$0xff]
          %v1182 = vld [vmem:[#allocation8 + $0x1a70] sm:$0xff]
          %v1183 = vld [vmem:[#allocation8 + $0x1a78] sm:$0xff]
          %v1184 = vld [vmem:[#allocation8 + $0x1a80] sm:$0xff]
          %v1185 = vld [vmem:[#allocation8 + $0x1a88] sm:$0xff]
          %v1186 = vld [vmem:[#allocation8 + $0x1a90] sm:$0xff]
          %v1187 = vld [vmem:[#allocation8 + $0x1a98] sm:$0xff]
          %v1188 = vld [vmem:[#allocation8 + $0x1aa0] sm:$0xff]
          %v1189 = vld [vmem:[#allocation8 + $0x1aa8] sm:$0xff]
          %v1190 = vld [vmem:[#allocation8 + $0x1ab0] sm:$0xff]
          %v1191 = vld [vmem:[#allocation8 + $0x1ab8] sm:$0xff]
          %v1192 = vld [vmem:[#allocation8 + $0x1ac0] sm:$0xff]
          %v1193 = vld [vmem:[#allocation8 + $0x1ac8] sm:$0xff]
          %v1194 = vld [vmem:[#allocation8 + $0x1ad0] sm:$0xff]
          %v1195 = vld [vmem:[#allocation8 + $0x1ad8] sm:$0xff]
          %v1196 = vld [vmem:[#allocation8 + $0x1ae0] sm:$0xff]
          %v1197 = vld [vmem:[#allocation8 + $0x1ae8] sm:$0xff]
          %v1198 = vld [vmem:[#allocation8 + $0x1af0] sm:$0xff]
          %v1199 = vld [vmem:[#allocation8 + $0x1af8] sm:$0xff]
          %v1200 = vld [vmem:[#allocation8 + $0x1b00] sm:$0xff]
          %v1201 = vld [vmem:[#allocation8 + $0x1b08] sm:$0xff]
          %v1202 = vld [vmem:[#allocation8 + $0x1b10] sm:$0xff]
          %v1203 = vld [vmem:[#allocation8 + $0x1b18] sm:$0xff]
          %v1204 = vld [vmem:[#allocation8 + $0x1b20] sm:$0xff]
          %v1205 = vld [vmem:[#allocation8 + $0x1b28] sm:$0xff]
          %v1206 = vld [vmem:[#allocation8 + $0x1b30] sm:$0xff]
          %v1207 = vld [vmem:[#allocation8 + $0x1b38] sm:$0xff]
          %v1208 = vld [vmem:[#allocation8 + $0x1b40] sm:$0xff]
          %v1209 = vld [vmem:[#allocation8 + $0x1b48] sm:$0xff]
          %v1210 = vld [vmem:[#allocation8 + $0x1b50] sm:$0xff]
          %v1211 = vld [vmem:[#allocation8 + $0x1b58] sm:$0xff]
          %v1212 = vld [vmem:[#allocation8 + $0x1b60] sm:$0xff]
          %v1213 = vld [vmem:[#allocation8 + $0x1b68] sm:$0xff]
          %v1214 = vld [vmem:[#allocation8 + $0x1b70] sm:$0xff]
          %v1215 = vld [vmem:[#allocation8 + $0x1b78] sm:$0xff]
          %v1216 = vld [vmem:[#allocation8 + $0x1b80] sm:$0xff]
          %v1217 = vld [vmem:[#allocation8 + $0x1b88] sm:$0xff]
          %v1218 = vld [vmem:[#allocation8 + $0x1b90] sm:$0xff]
          %v1219 = vld [vmem:[#allocation8 + $0x1b98] sm:$0xff]
          %v1220 = vld [vmem:[#allocation8 + $0x1ba0] sm:$0xff]
          %v1221 = vld [vmem:[#allocation8 + $0x1ba8] sm:$0xff]
          %v1222 = vld [vmem:[#allocation8 + $0x1bb0] sm:$0xff]
          %v1223 = vld [vmem:[#allocation8 + $0x1bb8] sm:$0xff]
          %v1224 = vld [vmem:[#allocation8 + $0x1bc0] sm:$0xff]
          %v1225 = vld [vmem:[#allocation8 + $0x1bc8] sm:$0xff]
          %v1226 = vld [vmem:[#allocation8 + $0x1bd0] sm:$0xff]
          %v1227 = vld [vmem:[#allocation8 + $0x1bd8] sm:$0xff]
          %v1228 = vld [vmem:[#allocation8 + $0x1be0] sm:$0xff]
          %v1229 = vld [vmem:[#allocation8 + $0x1be8] sm:$0xff]
          %v1230 = vld [vmem:[#allocation8 + $0x1bf0] sm:$0xff]
          %v1231 = vld [vmem:[#allocation8 + $0x1bf8] sm:$0xff]
          %v1232 = vld [vmem:[#allocation8 + $0x1c00] sm:$0xff]
          %v1233 = vld [vmem:[#allocation8 + $0x1c08] sm:$0xff]
          %v1234 = vld [vmem:[#allocation8 + $0x1c10] sm:$0xff]
          %v1235 = vld [vmem:[#allocation8 + $0x1c18] sm:$0xff]
          %v1236 = vld [vmem:[#allocation8 + $0x1c20] sm:$0xff]
          %v1237 = vld [vmem:[#allocation8 + $0x1c28] sm:$0xff]
          %v1238 = vld [vmem:[#allocation8 + $0x1c30] sm:$0xff]
          %v1239 = vld [vmem:[#allocation8 + $0x1c38] sm:$0xff]
          %v1240 = vld [vmem:[#allocation8 + $0x1c40] sm:$0xff]
          %v1241 = vld [vmem:[#allocation8 + $0x1c48] sm:$0xff]
          %v1242 = vld [vmem:[#allocation8 + $0x1c50] sm:$0xff]
          %v1243 = vld [vmem:[#allocation8 + $0x1c58] sm:$0xff]
          %v1244 = vld [vmem:[#allocation8 + $0x1c60] sm:$0xff]
          %v1245 = vld [vmem:[#allocation8 + $0x1c68] sm:$0xff]
          %v1246 = vld [vmem:[#allocation8 + $0x1c70] sm:$0xff]
          %v1247 = vld [vmem:[#allocation8 + $0x1c78] sm:$0xff]
          %v1248 = vld [vmem:[#allocation8 + $0x1c80] sm:$0xff]
          %v1249 = vld [vmem:[#allocation8 + $0x1c88] sm:$0xff]
          %v1250 = vld [vmem:[#allocation8 + $0x1c90] sm:$0xff]
          %v1251 = vld [vmem:[#allocation8 + $0x1c98] sm:$0xff]
          %v1252 = vld [vmem:[#allocation8 + $0x1ca0] sm:$0xff]
          %v1253 = vld [vmem:[#allocation8 + $0x1ca8] sm:$0xff]
          %v1254 = vld [vmem:[#allocation8 + $0x1cb0] sm:$0xff]
          %v1255 = vld [vmem:[#allocation8 + $0x1cb8] sm:$0xff]
          %v1256 = vld [vmem:[#allocation8 + $0x1cc0] sm:$0xff]
          %v1257 = vld [vmem:[#allocation8 + $0x1cc8] sm:$0xff]
          %v1258 = vld [vmem:[#allocation8 + $0x1cd0] sm:$0xff]
          %v1259 = vld [vmem:[#allocation8 + $0x1cd8] sm:$0xff]
          %v1260 = vld [vmem:[#allocation8 + $0x1ce0] sm:$0xff]
          %v1261 = vld [vmem:[#allocation8 + $0x1ce8] sm:$0xff]
          %v1262 = vld [vmem:[#allocation8 + $0x1cf0] sm:$0xff]
          %v1263 = vld [vmem:[#allocation8 + $0x1cf8] sm:$0xff]
          %v1264 = vld [vmem:[#allocation8 + $0x1d00] sm:$0xff]
          %v1265 = vld [vmem:[#allocation8 + $0x1d08] sm:$0xff]
          %v1266 = vld [vmem:[#allocation8 + $0x1d10] sm:$0xff]
          %v1267 = vld [vmem:[#allocation8 + $0x1d18] sm:$0xff]
          %v1268 = vld [vmem:[#allocation8 + $0x1d20] sm:$0xff]
          %v1269 = vld [vmem:[#allocation8 + $0x1d28] sm:$0xff]
          %v1270 = vld [vmem:[#allocation8 + $0x1d30] sm:$0xff]
          %v1271 = vld [vmem:[#allocation8 + $0x1d38] sm:$0xff]
          %v1272 = vld [vmem:[#allocation8 + $0x1d40] sm:$0xff]
          %v1273 = vld [vmem:[#allocation8 + $0x1d48] sm:$0xff]
          %v1274 = vld [vmem:[#allocation8 + $0x1d50] sm:$0xff]
          %v1275 = vld [vmem:[#allocation8 + $0x1d58] sm:$0xff]
          %v1276 = vld [vmem:[#allocation8 + $0x1d60] sm:$0xff]
          %v1277 = vld [vmem:[#allocation8 + $0x1d68] sm:$0xff]
          %v1278 = vld [vmem:[#allocation8 + $0x1d70] sm:$0xff]
          %v1279 = vld [vmem:[#allocation8 + $0x1d78] sm:$0xff]
          %v1280 = vld [vmem:[#allocation8 + $0x1d80] sm:$0xff]
          %v1281 = vld [vmem:[#allocation8 + $0x1d88] sm:$0xff]
          %v1282 = vld [vmem:[#allocation8 + $0x1d90] sm:$0xff]
          %v1283 = vld [vmem:[#allocation8 + $0x1d98] sm:$0xff]
          %v1284 = vld [vmem:[#allocation8 + $0x1da0] sm:$0xff]
          %v1285 = vld [vmem:[#allocation8 + $0x1da8] sm:$0xff]
          %v1286 = vld [vmem:[#allocation8 + $0x1db0] sm:$0xff]
          %v1287 = vld [vmem:[#allocation8 + $0x1db8] sm:$0xff]
          %v1288 = vld [vmem:[#allocation8 + $0x1dc0] sm:$0xff]
          %v1289 = vld [vmem:[#allocation8 + $0x1dc8] sm:$0xff]
          %v1290 = vld [vmem:[#allocation8 + $0x1dd0] sm:$0xff]
          %v1291 = vld [vmem:[#allocation8 + $0x1dd8] sm:$0xff]
          %v1292 = vld [vmem:[#allocation8 + $0x1de0] sm:$0xff]
          %v1293 = vld [vmem:[#allocation8 + $0x1de8] sm:$0xff]
          %v1294 = vld [vmem:[#allocation8 + $0x1df0] sm:$0xff]
          %v1295 = vld [vmem:[#allocation8 + $0x1df8] sm:$0xff]
          %v1296 = vld [vmem:[#allocation8 + $0x1e00] sm:$0xff]
          %v1297 = vld [vmem:[#allocation8 + $0x1e08] sm:$0xff]
          %v1298 = vld [vmem:[#allocation8 + $0x1e10] sm:$0xff]
          %v1299 = vld [vmem:[#allocation8 + $0x1e18] sm:$0xff]
          %v1300 = vld [vmem:[#allocation8 + $0x1e20] sm:$0xff]
          %v1301 = vld [vmem:[#allocation8 + $0x1e28] sm:$0xff]
          %v1302 = vld [vmem:[#allocation8 + $0x1e30] sm:$0xff]
          %v1303 = vld [vmem:[#allocation8 + $0x1e38] sm:$0xff]
          %v1304 = vld [vmem:[#allocation8 + $0x1e40] sm:$0xff]
          %v1305 = vld [vmem:[#allocation8 + $0x1e48] sm:$0xff]
          %v1306 = vld [vmem:[#allocation8 + $0x1e50] sm:$0xff]
          %v1307 = vld [vmem:[#allocation8 + $0x1e58] sm:$0xff]
          %v1308 = vld [vmem:[#allocation8 + $0x1e60] sm:$0xff]
          %v1309 = vld [vmem:[#allocation8 + $0x1e68] sm:$0xff]
          %v1310 = vld [vmem:[#allocation8 + $0x1e70] sm:$0xff]
          %v1311 = vld [vmem:[#allocation8 + $0x1e78] sm:$0xff]
          %v1312 = vld [vmem:[#allocation8 + $0x1e80] sm:$0xff]
          %v1313 = vld [vmem:[#allocation8 + $0x1e88] sm:$0xff]
          %v1314 = vld [vmem:[#allocation8 + $0x1e90] sm:$0xff]
          %v1315 = vld [vmem:[#allocation8 + $0x1e98] sm:$0xff]
          %v1316 = vld [vmem:[#allocation8 + $0x1ea0] sm:$0xff]
          %v1317 = vld [vmem:[#allocation8 + $0x1ea8] sm:$0xff]
          %v1318 = vld [vmem:[#allocation8 + $0x1eb0] sm:$0xff]
          %v1319 = vld [vmem:[#allocation8 + $0x1eb8] sm:$0xff]
          %v1320 = vld [vmem:[#allocation8 + $0x1ec0] sm:$0xff]
          %v1321 = vld [vmem:[#allocation8 + $0x1ec8] sm:$0xff]
          %v1322 = vld [vmem:[#allocation8 + $0x1ed0] sm:$0xff]
          %v1323 = vld [vmem:[#allocation8 + $0x1ed8] sm:$0xff]
          %v1324 = vld [vmem:[#allocation8 + $0x1ee0] sm:$0xff]
          %v1325 = vld [vmem:[#allocation8 + $0x1ee8] sm:$0xff]
          %v1326 = vld [vmem:[#allocation8 + $0x1ef0] sm:$0xff]
          %v1327 = vld [vmem:[#allocation8 + $0x1ef8] sm:$0xff]
          %v1328 = vld [vmem:[#allocation8 + $0x1f00] sm:$0xff]
          %v1329 = vld [vmem:[#allocation8 + $0x1f08] sm:$0xff]
          %v1330 = vld [vmem:[#allocation8 + $0x1f10] sm:$0xff]
          %v1331 = vld [vmem:[#allocation8 + $0x1f18] sm:$0xff]
          %v1332 = vld [vmem:[#allocation8 + $0x1f20] sm:$0xff]
          %v1333 = vld [vmem:[#allocation8 + $0x1f28] sm:$0xff]
          %v1334 = vld [vmem:[#allocation8 + $0x1f30] sm:$0xff]
          %v1335 = vld [vmem:[#allocation8 + $0x1f38] sm:$0xff]
          %v1336 = vld [vmem:[#allocation8 + $0x1f40] sm:$0xff]
          %v1337 = vld [vmem:[#allocation8 + $0x1f48] sm:$0xff]
          %v1338 = vld [vmem:[#allocation8 + $0x1f50] sm:$0xff]
          %v1339 = vld [vmem:[#allocation8 + $0x1f58] sm:$0xff]
          %v1340 = vld [vmem:[#allocation8 + $0x1f60] sm:$0xff]
          %v1341 = vld [vmem:[#allocation8 + $0x1f68] sm:$0xff]
          %v1342 = vld [vmem:[#allocation8 + $0x1f70] sm:$0xff]
          %v1343 = vld [vmem:[#allocation8 + $0x1f78] sm:$0xff]
          %v1344 = vld [vmem:[#allocation8 + $0x1f80] sm:$0xff]
          %v1345 = vld [vmem:[#allocation8 + $0x1f88] sm:$0xff]
          %v1346 = vld [vmem:[#allocation8 + $0x1f90] sm:$0xff]
          %v1347 = vld [vmem:[#allocation8 + $0x1f98] sm:$0xff]
          %v1348 = vld [vmem:[#allocation8 + $0x1fa0] sm:$0xff]
          %v1349 = vld [vmem:[#allocation8 + $0x1fa8] sm:$0xff]
          %v1350 = vld [vmem:[#allocation8 + $0x1fb0] sm:$0xff]
          %v1351 = vld [vmem:[#allocation8 + $0x1fb8] sm:$0xff]
          %v1352 = vld [vmem:[#allocation8 + $0x1fc0] sm:$0xff]
          %v1353 = vld [vmem:[#allocation8 + $0x1fc8] sm:$0xff]
          %v1354 = vld [vmem:[#allocation8 + $0x1fd0] sm:$0xff]
          %v1355 = vld [vmem:[#allocation8 + $0x1fd8] sm:$0xff]
          %v1356 = vld [vmem:[#allocation8 + $0x1fe0] sm:$0xff]
          %v1357 = vld [vmem:[#allocation8 + $0x1fe8] sm:$0xff]
          %v1358 = vld [vmem:[#allocation8 + $0x1ff0] sm:$0xff]
          %v1359 = vld [vmem:[#allocation8 + $0x1ff8] sm:$0xff]
          %v1360 = vld [vmem:[#allocation8 + $0x2000] sm:$0xff]
          %v1361 = vld [vmem:[#allocation8 + $0x2008] sm:$0xff]
          %v1362 = vld [vmem:[#allocation8 + $0x2010] sm:$0xff]
          %v1363 = vld [vmem:[#allocation8 + $0x2018] sm:$0xff]
          %v1364 = vld [vmem:[#allocation8 + $0x2020] sm:$0xff]
          %v1365 = vld [vmem:[#allocation8 + $0x2028] sm:$0xff]
          %v1366 = vld [vmem:[#allocation8 + $0x2030] sm:$0xff]
          %v1367 = vld [vmem:[#allocation8 + $0x2038] sm:$0xff]
          %v1368 = vld [vmem:[#allocation8 + $0x2040] sm:$0xff]
          %v1369 = vld [vmem:[#allocation8 + $0x2048] sm:$0xff]
          %v1370 = vld [vmem:[#allocation8 + $0x2050] sm:$0xff]
          %v1371 = vld [vmem:[#allocation8 + $0x2058] sm:$0xff]
          %v1372 = vld [vmem:[#allocation8 + $0x2060] sm:$0xff]
          %v1373 = vld [vmem:[#allocation8 + $0x2068] sm:$0xff]
          %v1374 = vld [vmem:[#allocation8 + $0x2070] sm:$0xff]
          %v1375 = vld [vmem:[#allocation8 + $0x2078] sm:$0xff]
          %v1376 = vld [vmem:[#allocation8 + $0x2080] sm:$0xff]
          %v1377 = vld [vmem:[#allocation8 + $0x2088] sm:$0xff]
          %v1378 = vld [vmem:[#allocation8 + $0x2090] sm:$0xff]
          %v1379 = vld [vmem:[#allocation8 + $0x2098] sm:$0xff]
          %v1380 = vld [vmem:[#allocation8 + $0x20a0] sm:$0xff]
          %v1381 = vld [vmem:[#allocation8 + $0x20a8] sm:$0xff]
          %v1382 = vld [vmem:[#allocation8 + $0x20b0] sm:$0xff]
          %v1383 = vld [vmem:[#allocation8 + $0x20b8] sm:$0xff]
          %v1384 = vld [vmem:[#allocation8 + $0x20c0] sm:$0xff]
          %v1385 = vld [vmem:[#allocation8 + $0x20c8] sm:$0xff]
          %v1386 = vld [vmem:[#allocation8 + $0x20d0] sm:$0xff]
          %v1387 = vld [vmem:[#allocation8 + $0x20d8] sm:$0xff]
          %v1388 = vld [vmem:[#allocation8 + $0x20e0] sm:$0xff]
          %v1389 = vld [vmem:[#allocation8 + $0x20e8] sm:$0xff]
          %v1390 = vld [vmem:[#allocation8 + $0x20f0] sm:$0xff]
          %v1391 = vld [vmem:[#allocation8 + $0x20f8] sm:$0xff]
          %v1392 = vld [vmem:[#allocation8 + $0x2100] sm:$0xff]
          %v1393 = vld [vmem:[#allocation8 + $0x2108] sm:$0xff]
          %v1394 = vld [vmem:[#allocation8 + $0x2110] sm:$0xff]
          %v1395 = vld [vmem:[#allocation8 + $0x2118] sm:$0xff]
          %v1396 = vld [vmem:[#allocation8 + $0x2120] sm:$0xff]
          %v1397 = vld [vmem:[#allocation8 + $0x2128] sm:$0xff]
          %v1398 = vld [vmem:[#allocation8 + $0x2130] sm:$0xff]
          %v1399 = vld [vmem:[#allocation8 + $0x2138] sm:$0xff]
          %v1400 = vld [vmem:[#allocation8 + $0x2140] sm:$0xff]
          %v1401 = vld [vmem:[#allocation8 + $0x2148] sm:$0xff]
          %v1402 = vld [vmem:[#allocation8 + $0x2150] sm:$0xff]
          %v1403 = vld [vmem:[#allocation8 + $0x2158] sm:$0xff]
          %v1404 = vld [vmem:[#allocation8 + $0x2160] sm:$0xff]
          %v1405 = vld [vmem:[#allocation8 + $0x2168] sm:$0xff]
          %v1406 = vld [vmem:[#allocation8 + $0x2170] sm:$0xff]
          %v1407 = vld [vmem:[#allocation8 + $0x2178] sm:$0xff]
          %v1408 = vld [vmem:[#allocation8 + $0x2180] sm:$0xff]
          %v1409 = vld [vmem:[#allocation8 + $0x2188] sm:$0xff]
          %v1410 = vld [vmem:[#allocation8 + $0x2190] sm:$0xff]
          %v1411 = vld [vmem:[#allocation8 + $0x2198] sm:$0xff]
          %v1412 = vld [vmem:[#allocation8 + $0x21a0] sm:$0xff]
          %v1413 = vld [vmem:[#allocation8 + $0x21a8] sm:$0xff]
          %v1414 = vld [vmem:[#allocation8 + $0x21b0] sm:$0xff]
          %v1415 = vld [vmem:[#allocation8 + $0x21b8] sm:$0xff]
          %v1416 = vld [vmem:[#allocation8 + $0x21c0] sm:$0xff]
          %v1417 = vld [vmem:[#allocation8 + $0x21c8] sm:$0xff]
          %v1418 = vld [vmem:[#allocation8 + $0x21d0] sm:$0xff]
          %v1419 = vld [vmem:[#allocation8 + $0x21d8] sm:$0xff]
          %v1420 = vld [vmem:[#allocation8 + $0x21e0] sm:$0xff]
          %v1421 = vld [vmem:[#allocation8 + $0x21e8] sm:$0xff]
          %v1422 = vld [vmem:[#allocation8 + $0x21f0] sm:$0xff]
          %v1423 = vld [vmem:[#allocation8 + $0x21f8] sm:$0xff]
          %v1424 = vld [vmem:[#allocation8 + $0x2200] sm:$0xff]
          %v1425 = vld [vmem:[#allocation8 + $0x2208] sm:$0xff]
          %v1426 = vld [vmem:[#allocation8 + $0x2210] sm:$0xff]
          %v1427 = vld [vmem:[#allocation8 + $0x2218] sm:$0xff]
          %v1428 = vld [vmem:[#allocation8 + $0x2220] sm:$0xff]
          %v1429 = vld [vmem:[#allocation8 + $0x2228] sm:$0xff]
          %v1430 = vld [vmem:[#allocation8 + $0x2230] sm:$0xff]
          %v1431 = vld [vmem:[#allocation8 + $0x2238] sm:$0xff]
          %v1432 = vld [vmem:[#allocation8 + $0x2240] sm:$0xff]
          %v1433 = vld [vmem:[#allocation8 + $0x2248] sm:$0xff]
          %v1434 = vld [vmem:[#allocation8 + $0x2250] sm:$0xff]
          %v1435 = vld [vmem:[#allocation8 + $0x2258] sm:$0xff]
          %v1436 = vld [vmem:[#allocation8 + $0x2260] sm:$0xff]
          %v1437 = vld [vmem:[#allocation8 + $0x2268] sm:$0xff]
          %v1438 = vld [vmem:[#allocation8 + $0x2270] sm:$0xff]
          %v1439 = vld [vmem:[#allocation8 + $0x2278] sm:$0xff]
          %v1440 = vld [vmem:[#allocation8 + $0x2280] sm:$0xff]
          %v1441 = vld [vmem:[#allocation8 + $0x2288] sm:$0xff]
          %v1442 = vld [vmem:[#allocation8 + $0x2290] sm:$0xff]
          %v1443 = vld [vmem:[#allocation8 + $0x2298] sm:$0xff]
          %v1444 = vld [vmem:[#allocation8 + $0x22a0] sm:$0xff]
          %v1445 = vld [vmem:[#allocation8 + $0x22a8] sm:$0xff]
          %v1446 = vld [vmem:[#allocation8 + $0x22b0] sm:$0xff]
          %v1447 = vld [vmem:[#allocation8 + $0x22b8] sm:$0xff]
          %v1448 = vld [vmem:[#allocation8 + $0x22c0] sm:$0xff]
          %v1449 = vld [vmem:[#allocation8 + $0x22c8] sm:$0xff]
          %v1450 = vld [vmem:[#allocation8 + $0x22d0] sm:$0xff]
          %v1451 = vld [vmem:[#allocation8 + $0x22d8] sm:$0xff]
          %v1452 = vld [vmem:[#allocation8 + $0x22e0] sm:$0xff]
          %v1453 = vld [vmem:[#allocation8 + $0x22e8] sm:$0xff]
          %v1454 = vld [vmem:[#allocation8 + $0x22f0] sm:$0xff]
          %v1455 = vld [vmem:[#allocation8 + $0x22f8] sm:$0xff]
          %v1456 = vld [vmem:[#allocation8 + $0x2300] sm:$0xff]
          %v1457 = vld [vmem:[#allocation8 + $0x2308] sm:$0xff]
          %v1458 = vld [vmem:[#allocation8 + $0x2310] sm:$0xff]
          %v1459 = vld [vmem:[#allocation8 + $0x2318] sm:$0xff]
          %v1460 = vld [vmem:[#allocation8 + $0x2320] sm:$0xff]
          %v1461 = vld [vmem:[#allocation8 + $0x2328] sm:$0xff]
          %v1462 = vld [vmem:[#allocation8 + $0x2330] sm:$0xff]
          %v1463 = vld [vmem:[#allocation8 + $0x2338] sm:$0xff]
          %v1464 = vld [vmem:[#allocation8 + $0x2340] sm:$0xff]
          %v1465 = vld [vmem:[#allocation8 + $0x2348] sm:$0xff]
          %v1466 = vld [vmem:[#allocation8 + $0x2350] sm:$0xff]
          %v1467 = vld [vmem:[#allocation8 + $0x2358] sm:$0xff]
          %v1468 = vld [vmem:[#allocation8 + $0x2360] sm:$0xff]
          %v1469 = vld [vmem:[#allocation8 + $0x2368] sm:$0xff]
          %v1470 = vld [vmem:[#allocation8 + $0x2370] sm:$0xff]
          %v1471 = vld [vmem:[#allocation8 + $0x2378] sm:$0xff]
          %v1472 = vld [vmem:[#allocation8 + $0x2380] sm:$0xff]
          %v1473 = vld [vmem:[#allocation8 + $0x2388] sm:$0xff]
          %v1474 = vld [vmem:[#allocation8 + $0x2390] sm:$0xff]
          %v1475 = vld [vmem:[#allocation8 + $0x2398] sm:$0xff]
          %v1476 = vld [vmem:[#allocation8 + $0x23a0] sm:$0xff]
          %v1477 = vld [vmem:[#allocation8 + $0x23a8] sm:$0xff]
          %v1478 = vld [vmem:[#allocation8 + $0x23b0] sm:$0xff]
          %v1479 = vld [vmem:[#allocation8 + $0x23b8] sm:$0xff]
          %v1480 = vld [vmem:[#allocation8 + $0x23c0] sm:$0xff]
          %v1481 = vld [vmem:[#allocation8 + $0x23c8] sm:$0xff]
          %v1482 = vld [vmem:[#allocation8 + $0x23d0] sm:$0xff]
          %v1483 = vld [vmem:[#allocation8 + $0x23d8] sm:$0xff]
          %v1484 = vld [vmem:[#allocation8 + $0x23e0] sm:$0xff]
          %v1485 = vld [vmem:[#allocation8 + $0x23e8] sm:$0xff]
          %v1486 = vld [vmem:[#allocation8 + $0x23f0] sm:$0xff]
          %v1487 = vld [vmem:[#allocation8 + $0x23f8] sm:$0xff]
          %v1488 = vld [vmem:[#allocation8 + $0x2400] sm:$0xff]
          %v1489 = vld [vmem:[#allocation8 + $0x2408] sm:$0xff]
          %v1490 = vld [vmem:[#allocation8 + $0x2410] sm:$0xff]
          %v1491 = vld [vmem:[#allocation8 + $0x2418] sm:$0xff]
          %v1492 = vld [vmem:[#allocation8 + $0x2420] sm:$0xff]
          %v1493 = vld [vmem:[#allocation8 + $0x2428] sm:$0xff]
          %v1494 = vld [vmem:[#allocation8 + $0x2430] sm:$0xff]
          %v1495 = vld [vmem:[#allocation8 + $0x2438] sm:$0xff]
          %v1496 = vld [vmem:[#allocation8 + $0x2440] sm:$0xff]
          %v1497 = vld [vmem:[#allocation8 + $0x2448] sm:$0xff]
          %v1498 = vld [vmem:[#allocation8 + $0x2450] sm:$0xff]
          %v1499 = vld [vmem:[#allocation8 + $0x2458] sm:$0xff]
          %v1500 = vld [vmem:[#allocation8 + $0x2460] sm:$0xff]
          %v1501 = vld [vmem:[#allocation8 + $0x2468] sm:$0xff]
          %v1502 = vld [vmem:[#allocation8 + $0x2470] sm:$0xff]
          %v1503 = vld [vmem:[#allocation8 + $0x2478] sm:$0xff]
          %v1504 = vld [vmem:[#allocation8 + $0x2480] sm:$0xff]
          %v1505 = vld [vmem:[#allocation8 + $0x2488] sm:$0xff]
          %v1506 = vld [vmem:[#allocation8 + $0x2490] sm:$0xff]
          %v1507 = vld [vmem:[#allocation8 + $0x2498] sm:$0xff]
          %v1508 = vld [vmem:[#allocation8 + $0x24a0] sm:$0xff]
          %v1509 = vld [vmem:[#allocation8 + $0x24a8] sm:$0xff]
          %v1510 = vld [vmem:[#allocation8 + $0x24b0] sm:$0xff]
          %v1511 = vld [vmem:[#allocation8 + $0x24b8] sm:$0xff]
          %v1512 = vld [vmem:[#allocation8 + $0x24c0] sm:$0xff]
          %v1513 = vld [vmem:[#allocation8 + $0x24c8] sm:$0xff]
          %v1514 = vld [vmem:[#allocation8 + $0x24d0] sm:$0xff]
          %v1515 = vld [vmem:[#allocation8 + $0x24d8] sm:$0xff]
          %v1516 = vld [vmem:[#allocation8 + $0x24e0] sm:$0xff]
          %v1517 = vld [vmem:[#allocation8 + $0x24e8] sm:$0xff]
          %v1518 = vld [vmem:[#allocation8 + $0x24f0] sm:$0xff]
          %v1519 = vld [vmem:[#allocation8 + $0x24f8] sm:$0xff]
          %v1520 = vld [vmem:[#allocation8 + $0x2500] sm:$0xff]
          %v1521 = vld [vmem:[#allocation8 + $0x2508] sm:$0xff]
          %v1522 = vld [vmem:[#allocation8 + $0x2510] sm:$0xff]
          %v1523 = vld [vmem:[#allocation8 + $0x2518] sm:$0xff]
          %v1524 = vld [vmem:[#allocation8 + $0x2520] sm:$0xff]
          %v1525 = vld [vmem:[#allocation8 + $0x2528] sm:$0xff]
          %v1526 = vld [vmem:[#allocation8 + $0x2530] sm:$0xff]
          %v1527 = vld [vmem:[#allocation8 + $0x2538] sm:$0xff]
          %v1528 = vld [vmem:[#allocation8 + $0x2540] sm:$0xff]
          %v1529 = vld [vmem:[#allocation8 + $0x2548] sm:$0xff]
          %v1530 = vld [vmem:[#allocation8 + $0x2550] sm:$0xff]
          %v1531 = vld [vmem:[#allocation8 + $0x2558] sm:$0xff]
          %v1532 = vld [vmem:[#allocation8 + $0x2560] sm:$0xff]
          %v1533 = vld [vmem:[#allocation8 + $0x2568] sm:$0xff]
          %v1534 = vld [vmem:[#allocation8 + $0x2570] sm:$0xff]
          %v1535 = vld [vmem:[#allocation8 + $0x2578] sm:$0xff]
          %v1536 = vld [vmem:[#allocation8 + $0x2580] sm:$0xff]
          %v1537 = vld [vmem:[#allocation8 + $0x2588] sm:$0xff]
          %v1538 = vld [vmem:[#allocation8 + $0x2590] sm:$0xff]
          %v1539 = vld [vmem:[#allocation8 + $0x2598] sm:$0xff]
          %v1540 = vld [vmem:[#allocation8 + $0x25a0] sm:$0xff]
          %v1541 = vld [vmem:[#allocation8 + $0x25a8] sm:$0xff]
          %v1542 = vld [vmem:[#allocation8 + $0x25b0] sm:$0xff]
          %v1543 = vld [vmem:[#allocation8 + $0x25b8] sm:$0xff]
          %v1544 = vld [vmem:[#allocation8 + $0x25c0] sm:$0xff]
          %v1545 = vld [vmem:[#allocation8 + $0x25c8] sm:$0xff]
          %v1546 = vld [vmem:[#allocation8 + $0x25d0] sm:$0xff]
          %v1547 = vld [vmem:[#allocation8 + $0x25d8] sm:$0xff]
          %v1548 = vld [vmem:[#allocation8 + $0x25e0] sm:$0xff]
          %v1549 = vld [vmem:[#allocation8 + $0x25e8] sm:$0xff]
          %v1550 = vld [vmem:[#allocation8 + $0x25f0] sm:$0xff]
          %v1551 = vld [vmem:[#allocation8 + $0x25f8] sm:$0xff]
          %v1552 = vld [vmem:[#allocation8 + $0x2600] sm:$0xff]
          %v1553 = vld [vmem:[#allocation8 + $0x2608] sm:$0xff]
          %v1554 = vld [vmem:[#allocation8 + $0x2610] sm:$0xff]
          %v1555 = vld [vmem:[#allocation8 + $0x2618] sm:$0xff]
          %v1556 = vld [vmem:[#allocation8 + $0x2620] sm:$0xff]
          %v1557 = vld [vmem:[#allocation8 + $0x2628] sm:$0xff]
          %v1558 = vld [vmem:[#allocation8 + $0x2630] sm:$0xff]
          %v1559 = vld [vmem:[#allocation8 + $0x2638] sm:$0xff]
          %v1560 = vld [vmem:[#allocation8 + $0x2640] sm:$0xff]
          %v1561 = vld [vmem:[#allocation8 + $0x2648] sm:$0xff]
          %v1562 = vld [vmem:[#allocation8 + $0x2650] sm:$0xff]
          %v1563 = vld [vmem:[#allocation8 + $0x2658] sm:$0xff]
          %v1564 = vld [vmem:[#allocation8 + $0x2660] sm:$0xff]
          %v1565 = vld [vmem:[#allocation8 + $0x2668] sm:$0xff]
          %v1566 = vld [vmem:[#allocation8 + $0x2670] sm:$0xff]
          %v1567 = vld [vmem:[#allocation8 + $0x2678] sm:$0xff]
          %v1568 = vld [vmem:[#allocation8 + $0x2680] sm:$0xff]
          %v1569 = vld [vmem:[#allocation8 + $0x2688] sm:$0xff]
          %v1570 = vld [vmem:[#allocation8 + $0x2690] sm:$0xff]
          %v1571 = vld [vmem:[#allocation8 + $0x2698] sm:$0xff]
          %v1572 = vld [vmem:[#allocation8 + $0x26a0] sm:$0xff]
          %v1573 = vld [vmem:[#allocation8 + $0x26a8] sm:$0xff]
          %v1574 = vld [vmem:[#allocation8 + $0x26b0] sm:$0xff]
          %v1575 = vld [vmem:[#allocation8 + $0x26b8] sm:$0xff]
          %v1576 = vld [vmem:[#allocation8 + $0x26c0] sm:$0xff]
          %v1577 = vld [vmem:[#allocation8 + $0x26c8] sm:$0xff]
          %v1578 = vld [vmem:[#allocation8 + $0x26d0] sm:$0xff]
          %v1579 = vld [vmem:[#allocation8 + $0x26d8] sm:$0xff]
          %v1580 = vld [vmem:[#allocation8 + $0x26e0] sm:$0xff]
          %v1581 = vld [vmem:[#allocation8 + $0x26e8] sm:$0xff]
          %v1582 = vld [vmem:[#allocation8 + $0x26f0] sm:$0xff]
          %v1583 = vld [vmem:[#allocation8 + $0x26f8] sm:$0xff]
          %v1584 = vld [vmem:[#allocation8 + $0x2700] sm:$0xff]
          %v1585 = vld [vmem:[#allocation8 + $0x2708] sm:$0xff]
          %v1586 = vld [vmem:[#allocation8 + $0x2710] sm:$0xff]
          %v1587 = vld [vmem:[#allocation8 + $0x2718] sm:$0xff]
          %v1588 = vld [vmem:[#allocation8 + $0x2720] sm:$0xff]
          %v1589 = vld [vmem:[#allocation8 + $0x2728] sm:$0xff]
          %v1590 = vld [vmem:[#allocation8 + $0x2730] sm:$0xff]
          %v1591 = vld [vmem:[#allocation8 + $0x2738] sm:$0xff]
          %v1592 = vld [vmem:[#allocation8 + $0x2740] sm:$0xff]
          %v1593 = vld [vmem:[#allocation8 + $0x2748] sm:$0xff]
          %v1594 = vld [vmem:[#allocation8 + $0x2750] sm:$0xff]
          %v1595 = vld [vmem:[#allocation8 + $0x2758] sm:$0xff]
          %v1596 = vld [vmem:[#allocation8 + $0x2760] sm:$0xff]
          %v1597 = vld [vmem:[#allocation8 + $0x2768] sm:$0xff]
          %v1598 = vld [vmem:[#allocation8 + $0x2770] sm:$0xff]
          %v1599 = vld [vmem:[#allocation8 + $0x2778] sm:$0xff]
          %v1600 = vld [vmem:[#allocation8 + $0x2780] sm:$0xff]
          %v1601 = vld [vmem:[#allocation8 + $0x2788] sm:$0xff]
          %v1602 = vld [vmem:[#allocation8 + $0x2790] sm:$0xff]
          %v1603 = vld [vmem:[#allocation8 + $0x2798] sm:$0xff]
          %v1604 = vld [vmem:[#allocation8 + $0x27a0] sm:$0xff]
          %v1605 = vld [vmem:[#allocation8 + $0x27a8] sm:$0xff]
          %v1606 = vld [vmem:[#allocation8 + $0x27b0] sm:$0xff]
          %v1607 = vld [vmem:[#allocation8 + $0x27b8] sm:$0xff]
          %v1608 = vld [vmem:[#allocation8 + $0x27c0] sm:$0xff]
          %v1609 = vld [vmem:[#allocation8 + $0x27c8] sm:$0xff]
          %v1610 = vld [vmem:[#allocation8 + $0x27d0] sm:$0xff]
          %v1611 = vld [vmem:[#allocation8 + $0x27d8] sm:$0xff]
          %v1612 = vld [vmem:[#allocation8 + $0x27e0] sm:$0xff]
          %v1613 = vld [vmem:[#allocation8 + $0x27e8] sm:$0xff]
          %v1614 = vld [vmem:[#allocation8 + $0x27f0] sm:$0xff]
          %v1615 = vld [vmem:[#allocation8 + $0x27f8] sm:$0xff]
          %v1616 = vld [vmem:[#allocation8 + $0x2800] sm:$0xff]
          %v1617 = vld [vmem:[#allocation8 + $0x2808] sm:$0xff]
          %v1618 = vld [vmem:[#allocation8 + $0x2810] sm:$0xff]
          %v1619 = vld [vmem:[#allocation8 + $0x2818] sm:$0xff]
          %v1620 = vld [vmem:[#allocation8 + $0x2820] sm:$0xff]
          %v1621 = vld [vmem:[#allocation8 + $0x2828] sm:$0xff]
          %v1622 = vld [vmem:[#allocation8 + $0x2830] sm:$0xff]
          %v1623 = vld [vmem:[#allocation8 + $0x2838] sm:$0xff]
          %v1624 = vld [vmem:[#allocation8 + $0x2840] sm:$0xff]
          %v1625 = vld [vmem:[#allocation8 + $0x2848] sm:$0xff]
          %v1626 = vld [vmem:[#allocation8 + $0x2850] sm:$0xff]
          %v1627 = vld [vmem:[#allocation8 + $0x2858] sm:$0xff]
          %v1628 = vld [vmem:[#allocation8 + $0x2860] sm:$0xff]
          %v1629 = vld [vmem:[#allocation8 + $0x2868] sm:$0xff]
          %v1630 = vld [vmem:[#allocation8 + $0x2870] sm:$0xff]
          %v1631 = vld [vmem:[#allocation8 + $0x2878] sm:$0xff]
          %v1632 = vld [vmem:[#allocation8 + $0x2880] sm:$0xff]
          %v1633 = vld [vmem:[#allocation8 + $0x2888] sm:$0xff]
          %v1634 = vld [vmem:[#allocation8 + $0x2890] sm:$0xff]
          %v1635 = vld [vmem:[#allocation8 + $0x2898] sm:$0xff]
          %v1636 = vld [vmem:[#allocation8 + $0x28a0] sm:$0xff]
          %v1637 = vld [vmem:[#allocation8 + $0x28a8] sm:$0xff]
          %v1638 = vld [vmem:[#allocation8 + $0x28b0] sm:$0xff]
          %v1639 = vld [vmem:[#allocation8 + $0x28b8] sm:$0xff]
          %v1640 = vld [vmem:[#allocation8 + $0x28c0] sm:$0xff]
          %v1641 = vld [vmem:[#allocation8 + $0x28c8] sm:$0xff]
          %v1642 = vld [vmem:[#allocation8 + $0x28d0] sm:$0xff]
          %v1643 = vld [vmem:[#allocation8 + $0x28d8] sm:$0xff]
          %v1644 = vld [vmem:[#allocation8 + $0x28e0] sm:$0xff]
          %v1645 = vld [vmem:[#allocation8 + $0x28e8] sm:$0xff]
          %v1646 = vld [vmem:[#allocation8 + $0x28f0] sm:$0xff]
          %v1647 = vld [vmem:[#allocation8 + $0x28f8] sm:$0xff]
          %v1648 = vld [vmem:[#allocation8 + $0x2900] sm:$0xff]
          %v1649 = vld [vmem:[#allocation8 + $0x2908] sm:$0xff]
          %v1650 = vld [vmem:[#allocation8 + $0x2910] sm:$0xff]
          %v1651 = vld [vmem:[#allocation8 + $0x2918] sm:$0xff]
          %v1652 = vld [vmem:[#allocation8 + $0x2920] sm:$0xff]
          %v1653 = vld [vmem:[#allocation8 + $0x2928] sm:$0xff]
          %v1654 = vld [vmem:[#allocation8 + $0x2930] sm:$0xff]
          %v1655 = vld [vmem:[#allocation8 + $0x2938] sm:$0xff]
          %v1656 = vld [vmem:[#allocation8 + $0x2940] sm:$0xff]
          %v1657 = vld [vmem:[#allocation8 + $0x2948] sm:$0xff]
          %v1658 = vld [vmem:[#allocation8 + $0x2950] sm:$0xff]
          %v1659 = vld [vmem:[#allocation8 + $0x2958] sm:$0xff]
          %v1660 = vld [vmem:[#allocation8 + $0x2960] sm:$0xff]
          %v1661 = vld [vmem:[#allocation8 + $0x2968] sm:$0xff]
          %v1662 = vld [vmem:[#allocation8 + $0x2970] sm:$0xff]
          %v1663 = vld [vmem:[#allocation8 + $0x2978] sm:$0xff]
          %v1664 = vld [vmem:[#allocation8 + $0x2980] sm:$0xff]
          %v1665 = vld [vmem:[#allocation8 + $0x2988] sm:$0xff]
          %v1666 = vld [vmem:[#allocation8 + $0x2990] sm:$0xff]
          %v1667 = vld [vmem:[#allocation8 + $0x2998] sm:$0xff]
          %v1668 = vld [vmem:[#allocation8 + $0x29a0] sm:$0xff]
          %v1669 = vld [vmem:[#allocation8 + $0x29a8] sm:$0xff]
          %v1670 = vld [vmem:[#allocation8 + $0x29b0] sm:$0xff]
          %v1671 = vld [vmem:[#allocation8 + $0x29b8] sm:$0xff]
          %v1672 = vld [vmem:[#allocation8 + $0x29c0] sm:$0xff]
          %v1673 = vld [vmem:[#allocation8 + $0x29c8] sm:$0xff]
          %v1674 = vld [vmem:[#allocation8 + $0x29d0] sm:$0xff]
          %v1675 = vld [vmem:[#allocation8 + $0x29d8] sm:$0xff]
          %v1676 = vld [vmem:[#allocation8 + $0x29e0] sm:$0xff]
          %v1677 = vld [vmem:[#allocation8 + $0x29e8] sm:$0xff]
          %v1678 = vld [vmem:[#allocation8 + $0x29f0] sm:$0xff]
          %v1679 = vld [vmem:[#allocation8 + $0x29f8] sm:$0xff]
          %v1680 = vld [vmem:[#allocation8 + $0x2a00] sm:$0xff]
          %v1681 = vld [vmem:[#allocation8 + $0x2a08] sm:$0xff]
          %v1682 = vld [vmem:[#allocation8 + $0x2a10] sm:$0xff]
          %v1683 = vld [vmem:[#allocation8 + $0x2a18] sm:$0xff]
          %v1684 = vld [vmem:[#allocation8 + $0x2a20] sm:$0xff]
          %v1685 = vld [vmem:[#allocation8 + $0x2a28] sm:$0xff]
          %v1686 = vld [vmem:[#allocation8 + $0x2a30] sm:$0xff]
          %v1687 = vld [vmem:[#allocation8 + $0x2a38] sm:$0xff]
          %v1688 = vld [vmem:[#allocation8 + $0x2a40] sm:$0xff]
          %v1689 = vld [vmem:[#allocation8 + $0x2a48] sm:$0xff]
          %v1690 = vld [vmem:[#allocation8 + $0x2a50] sm:$0xff]
          %v1691 = vld [vmem:[#allocation8 + $0x2a58] sm:$0xff]
          %v1692 = vld [vmem:[#allocation8 + $0x2a60] sm:$0xff]
          %v1693 = vld [vmem:[#allocation8 + $0x2a68] sm:$0xff]
          %v1694 = vld [vmem:[#allocation8 + $0x2a70] sm:$0xff]
          %v1695 = vld [vmem:[#allocation8 + $0x2a78] sm:$0xff]
          %v1696 = vld [vmem:[#allocation8 + $0x2a80] sm:$0xff]
          %v1697 = vld [vmem:[#allocation8 + $0x2a88] sm:$0xff]
          %v1698 = vld [vmem:[#allocation8 + $0x2a90] sm:$0xff]
          %v1699 = vld [vmem:[#allocation8 + $0x2a98] sm:$0xff]
          %v1700 = vld [vmem:[#allocation8 + $0x2aa0] sm:$0xff]
          %v1701 = vld [vmem:[#allocation8 + $0x2aa8] sm:$0xff]
          %v1702 = vld [vmem:[#allocation8 + $0x2ab0] sm:$0xff]
          %v1703 = vld [vmem:[#allocation8 + $0x2ab8] sm:$0xff]
          %v1704 = vld [vmem:[#allocation8 + $0x2ac0] sm:$0xff]
          %v1705 = vld [vmem:[#allocation8 + $0x2ac8] sm:$0xff]
          %v1706 = vld [vmem:[#allocation8 + $0x2ad0] sm:$0xff]
          %v1707 = vld [vmem:[#allocation8 + $0x2ad8] sm:$0xff]
          %v1708 = vld [vmem:[#allocation8 + $0x2ae0] sm:$0xff]
          %v1709 = vld [vmem:[#allocation8 + $0x2ae8] sm:$0xff]
          %v1710 = vld [vmem:[#allocation8 + $0x2af0] sm:$0xff]
          %v1711 = vld [vmem:[#allocation8 + $0x2af8] sm:$0xff]
          %v1712 = vld [vmem:[#allocation8 + $0x2b00] sm:$0xff]
          %v1713 = vld [vmem:[#allocation8 + $0x2b08] sm:$0xff]
          %v1714 = vld [vmem:[#allocation8 + $0x2b10] sm:$0xff]
          %v1715 = vld [vmem:[#allocation8 + $0x2b18] sm:$0xff]
          %v1716 = vld [vmem:[#allocation8 + $0x2b20] sm:$0xff]
          %v1717 = vld [vmem:[#allocation8 + $0x2b28] sm:$0xff]
          %v1718 = vld [vmem:[#allocation8 + $0x2b30] sm:$0xff]
          %v1719 = vld [vmem:[#allocation8 + $0x2b38] sm:$0xff]
          %v1720 = vld [vmem:[#allocation8 + $0x2b40] sm:$0xff]
          %v1721 = vld [vmem:[#allocation8 + $0x2b48] sm:$0xff]
          %v1722 = vld [vmem:[#allocation8 + $0x2b50] sm:$0xff]
          %v1723 = vld [vmem:[#allocation8 + $0x2b58] sm:$0xff]
          %v1724 = vld [vmem:[#allocation8 + $0x2b60] sm:$0xff]
          %v1725 = vld [vmem:[#allocation8 + $0x2b68] sm:$0xff]
          %v1726 = vld [vmem:[#allocation8 + $0x2b70] sm:$0xff]
          %v1727 = vld [vmem:[#allocation8 + $0x2b78] sm:$0xff]
          %v1728 = vld [vmem:[#allocation8 + $0x2b80] sm:$0xff]
          %v1729 = vld [vmem:[#allocation8 + $0x2b88] sm:$0xff]
          %v1730 = vld [vmem:[#allocation8 + $0x2b90] sm:$0xff]
          %v1731 = vld [vmem:[#allocation8 + $0x2b98] sm:$0xff]
          %v1732 = vld [vmem:[#allocation8 + $0x2ba0] sm:$0xff]
          %v1733 = vld [vmem:[#allocation8 + $0x2ba8] sm:$0xff]
          %v1734 = vld [vmem:[#allocation8 + $0x2bb0] sm:$0xff]
          %v1735 = vld [vmem:[#allocation8 + $0x2bb8] sm:$0xff]
          %v1736 = vld [vmem:[#allocation8 + $0x2bc0] sm:$0xff]
          %v1737 = vld [vmem:[#allocation8 + $0x2bc8] sm:$0xff]
          %v1738 = vld [vmem:[#allocation8 + $0x2bd0] sm:$0xff]
          %v1739 = vld [vmem:[#allocation8 + $0x2bd8] sm:$0xff]
          %v1740 = vld [vmem:[#allocation8 + $0x2be0] sm:$0xff]
          %v1741 = vld [vmem:[#allocation8 + $0x2be8] sm:$0xff]
          %v1742 = vld [vmem:[#allocation8 + $0x2bf0] sm:$0xff]
          %v1743 = vld [vmem:[#allocation8 + $0x2bf8] sm:$0xff]
          %v1744 = vld [vmem:[#allocation8 + $0x2c00] sm:$0xff]
          %v1745 = vld [vmem:[#allocation8 + $0x2c08] sm:$0xff]
          %v1746 = vld [vmem:[#allocation8 + $0x2c10] sm:$0xff]
          %v1747 = vld [vmem:[#allocation8 + $0x2c18] sm:$0xff]
          %v1748 = vld [vmem:[#allocation8 + $0x2c20] sm:$0xff]
          %v1749 = vld [vmem:[#allocation8 + $0x2c28] sm:$0xff]
          %v1750 = vld [vmem:[#allocation8 + $0x2c30] sm:$0xff]
          %v1751 = vld [vmem:[#allocation8 + $0x2c38] sm:$0xff]
          %v1752 = vld [vmem:[#allocation8 + $0x2c40] sm:$0xff]
          %v1753 = vld [vmem:[#allocation8 + $0x2c48] sm:$0xff]
          %v1754 = vld [vmem:[#allocation8 + $0x2c50] sm:$0xff]
          %v1755 = vld [vmem:[#allocation8 + $0x2c58] sm:$0xff]
          %v1756 = vld [vmem:[#allocation8 + $0x2c60] sm:$0xff]
          %v1757 = vld [vmem:[#allocation8 + $0x2c68] sm:$0xff]
          %v1758 = vld [vmem:[#allocation8 + $0x2c70] sm:$0xff]
          %v1759 = vld [vmem:[#allocation8 + $0x2c78] sm:$0xff]
          %v1760 = vld [vmem:[#allocation8 + $0x2c80] sm:$0xff]
          %v1761 = vld [vmem:[#allocation8 + $0x2c88] sm:$0xff]
          %v1762 = vld [vmem:[#allocation8 + $0x2c90] sm:$0xff]
          %v1763 = vld [vmem:[#allocation8 + $0x2c98] sm:$0xff]
          %v1764 = vld [vmem:[#allocation8 + $0x2ca0] sm:$0xff]
          %v1765 = vld [vmem:[#allocation8 + $0x2ca8] sm:$0xff]
          %v1766 = vld [vmem:[#allocation8 + $0x2cb0] sm:$0xff]
          %v1767 = vld [vmem:[#allocation8 + $0x2cb8] sm:$0xff]
          %v1768 = vld [vmem:[#allocation8 + $0x2cc0] sm:$0xff]
          %v1769 = vld [vmem:[#allocation8 + $0x2cc8] sm:$0xff]
          %v1770 = vld [vmem:[#allocation8 + $0x2cd0] sm:$0xff]
          %v1771 = vld [vmem:[#allocation8 + $0x2cd8] sm:$0xff]
          %v1772 = vld [vmem:[#allocation8 + $0x2ce0] sm:$0xff]
          %v1773 = vld [vmem:[#allocation8 + $0x2ce8] sm:$0xff]
          %v1774 = vld [vmem:[#allocation8 + $0x2cf0] sm:$0xff]
          %v1775 = vld [vmem:[#allocation8 + $0x2cf8] sm:$0xff]
          %v1776 = vld [vmem:[#allocation8 + $0x2d00] sm:$0xff]
          %v1777 = vld [vmem:[#allocation8 + $0x2d08] sm:$0xff]
          %v1778 = vld [vmem:[#allocation8 + $0x2d10] sm:$0xff]
          %v1779 = vld [vmem:[#allocation8 + $0x2d18] sm:$0xff]
          %v1780 = vld [vmem:[#allocation8 + $0x2d20] sm:$0xff]
          %v1781 = vld [vmem:[#allocation8 + $0x2d28] sm:$0xff]
          %v1782 = vld [vmem:[#allocation8 + $0x2d30] sm:$0xff]
          %v1783 = vld [vmem:[#allocation8 + $0x2d38] sm:$0xff]
          %v1784 = vld [vmem:[#allocation8 + $0x2d40] sm:$0xff]
          %v1785 = vld [vmem:[#allocation8 + $0x2d48] sm:$0xff]
          %v1786 = vld [vmem:[#allocation8 + $0x2d50] sm:$0xff]
          %v1787 = vld [vmem:[#allocation8 + $0x2d58] sm:$0xff]
          %v1788 = vld [vmem:[#allocation8 + $0x2d60] sm:$0xff]
          %v1789 = vld [vmem:[#allocation8 + $0x2d68] sm:$0xff]
          %v1790 = vld [vmem:[#allocation8 + $0x2d70] sm:$0xff]
          %v1791 = vld [vmem:[#allocation8 + $0x2d78] sm:$0xff]
          %v1792 = vld [vmem:[#allocation8 + $0x2d80] sm:$0xff]
          %v1793 = vld [vmem:[#allocation8 + $0x2d88] sm:$0xff]
          %v1794 = vld [vmem:[#allocation8 + $0x2d90] sm:$0xff]
          %v1795 = vld [vmem:[#allocation8 + $0x2d98] sm:$0xff]
          %v1796 = vld [vmem:[#allocation8 + $0x2da0] sm:$0xff]
          %v1797 = vld [vmem:[#allocation8 + $0x2da8] sm:$0xff]
          %v1798 = vld [vmem:[#allocation8 + $0x2db0] sm:$0xff]
          %v1799 = vld [vmem:[#allocation8 + $0x2db8] sm:$0xff]
          %v1800 = vld [vmem:[#allocation8 + $0x2dc0] sm:$0xff]
          %v1801 = vld [vmem:[#allocation8 + $0x2dc8] sm:$0xff]
          %v1802 = vld [vmem:[#allocation8 + $0x2dd0] sm:$0xff]
          %v1803 = vld [vmem:[#allocation8 + $0x2dd8] sm:$0xff]
          %v1804 = vld [vmem:[#allocation8 + $0x2de0] sm:$0xff]
          %v1805 = vld [vmem:[#allocation8 + $0x2de8] sm:$0xff]
          %v1806 = vld [vmem:[#allocation8 + $0x2df0] sm:$0xff]
          %v1807 = vld [vmem:[#allocation8 + $0x2df8] sm:$0xff]
          %v1808 = vld [vmem:[#allocation8 + $0x2e00] sm:$0xff]
          %v1809 = vld [vmem:[#allocation8 + $0x2e08] sm:$0xff]
          %v1810 = vld [vmem:[#allocation8 + $0x2e10] sm:$0xff]
          %v1811 = vld [vmem:[#allocation8 + $0x2e18] sm:$0xff]
          %v1812 = vld [vmem:[#allocation8 + $0x2e20] sm:$0xff]
          %v1813 = vld [vmem:[#allocation8 + $0x2e28] sm:$0xff]
          %v1814 = vld [vmem:[#allocation8 + $0x2e30] sm:$0xff]
          %v1815 = vld [vmem:[#allocation8 + $0x2e38] sm:$0xff]
          %v1816 = vld [vmem:[#allocation8 + $0x2e40] sm:$0xff]
          %v1817 = vld [vmem:[#allocation8 + $0x2e48] sm:$0xff]
          %v1818 = vld [vmem:[#allocation8 + $0x2e50] sm:$0xff]
          %v1819 = vld [vmem:[#allocation8 + $0x2e58] sm:$0xff]
          %v1820 = vld [vmem:[#allocation8 + $0x2e60] sm:$0xff]
          %v1821 = vld [vmem:[#allocation8 + $0x2e68] sm:$0xff]
          %v1822 = vld [vmem:[#allocation8 + $0x2e70] sm:$0xff]
          %v1823 = vld [vmem:[#allocation8 + $0x2e78] sm:$0xff]
          %v1824 = vld [vmem:[#allocation8 + $0x2e80] sm:$0xff]
          %v1825 = vld [vmem:[#allocation8 + $0x2e88] sm:$0xff]
          %v1826 = vld [vmem:[#allocation8 + $0x2e90] sm:$0xff]
          %v1827 = vld [vmem:[#allocation8 + $0x2e98] sm:$0xff]
          %v1828 = vld [vmem:[#allocation8 + $0x2ea0] sm:$0xff]
          %v1829 = vld [vmem:[#allocation8 + $0x2ea8] sm:$0xff]
          %v1830 = vld [vmem:[#allocation8 + $0x2eb0] sm:$0xff]
          %v1831 = vld [vmem:[#allocation8 + $0x2eb8] sm:$0xff]
          %v1832 = vld [vmem:[#allocation8 + $0x2ec0] sm:$0xff]
          %v1833 = vld [vmem:[#allocation8 + $0x2ec8] sm:$0xff]
          %v1834 = vld [vmem:[#allocation8 + $0x2ed0] sm:$0xff]
          %v1835 = vld [vmem:[#allocation8 + $0x2ed8] sm:$0xff]
          %v1836 = vld [vmem:[#allocation8 + $0x2ee0] sm:$0xff]
          %v1837 = vld [vmem:[#allocation8 + $0x2ee8] sm:$0xff]
          %v1838 = vld [vmem:[#allocation8 + $0x2ef0] sm:$0xff]
          %v1839 = vld [vmem:[#allocation8 + $0x2ef8] sm:$0xff]
          %v1840 = vld [vmem:[#allocation8 + $0x2f00] sm:$0xff]
          %v1841 = vld [vmem:[#allocation8 + $0x2f08] sm:$0xff]
          %v1842 = vld [vmem:[#allocation8 + $0x2f10] sm:$0xff]
          %v1843 = vld [vmem:[#allocation8 + $0x2f18] sm:$0xff]
          %v1844 = vld [vmem:[#allocation8 + $0x2f20] sm:$0xff]
          %v1845 = vld [vmem:[#allocation8 + $0x2f28] sm:$0xff]
          %v1846 = vld [vmem:[#allocation8 + $0x2f30] sm:$0xff]
          %v1847 = vld [vmem:[#allocation8 + $0x2f38] sm:$0xff]
          %v1848 = vld [vmem:[#allocation8 + $0x2f40] sm:$0xff]
          %v1849 = vld [vmem:[#allocation8 + $0x2f48] sm:$0xff]
          %v1850 = vld [vmem:[#allocation8 + $0x2f50] sm:$0xff]
          %v1851 = vld [vmem:[#allocation8 + $0x2f58] sm:$0xff]
          %v1852 = vld [vmem:[#allocation8 + $0x2f60] sm:$0xff]
          %v1853 = vld [vmem:[#allocation8 + $0x2f68] sm:$0xff]
          %v1854 = vld [vmem:[#allocation8 + $0x2f70] sm:$0xff]
          %v1855 = vld [vmem:[#allocation8 + $0x2f78] sm:$0xff]
          %v1856 = vld [vmem:[#allocation8 + $0x2f80] sm:$0xff]
          %v1857 = vld [vmem:[#allocation8 + $0x2f88] sm:$0xff]
          %v1858 = vld [vmem:[#allocation8 + $0x2f90] sm:$0xff]
          %v1859 = vld [vmem:[#allocation8 + $0x2f98] sm:$0xff]
          %v1860 = vld [vmem:[#allocation8 + $0x2fa0] sm:$0xff]
          %v1861 = vld [vmem:[#allocation8 + $0x2fa8] sm:$0xff]
          %v1862 = vld [vmem:[#allocation8 + $0x2fb0] sm:$0xff]
          %v1863 = vld [vmem:[#allocation8 + $0x2fb8] sm:$0xff]
          %v1864 = vld [vmem:[#allocation8 + $0x2fc0] sm:$0xff]
          %v1865 = vld [vmem:[#allocation8 + $0x2fc8] sm:$0xff]
          %v1866 = vld [vmem:[#allocation8 + $0x2fd0] sm:$0xff]
          %v1867 = vld [vmem:[#allocation8 + $0x2fd8] sm:$0xff]
          %v1868 = vld [vmem:[#allocation8 + $0x2fe0] sm:$0xff]
          %v1869 = vld [vmem:[#allocation8 + $0x2fe8] sm:$0xff]
          %v1870 = vld [vmem:[#allocation8 + $0x2ff0] sm:$0xff]
          %v1871 = vld [vmem:[#allocation8 + $0x2ff8] sm:$0xff]
          %v1872 = vld [vmem:[#allocation8 + $0x3000] sm:$0xff]
          %v1873 = vld [vmem:[#allocation8 + $0x3008] sm:$0xff]
          %v1874 = vld [vmem:[#allocation8 + $0x3010] sm:$0xff]
          %v1875 = vld [vmem:[#allocation8 + $0x3018] sm:$0xff]
          %v1876 = vld [vmem:[#allocation8 + $0x3020] sm:$0xff]
          %v1877 = vld [vmem:[#allocation8 + $0x3028] sm:$0xff]
          %v1878 = vld [vmem:[#allocation8 + $0x3030] sm:$0xff]
          %v1879 = vld [vmem:[#allocation8 + $0x3038] sm:$0xff]
          %v1880 = vld [vmem:[#allocation8 + $0x3040] sm:$0xff]
          %v1881 = vld [vmem:[#allocation8 + $0x3048] sm:$0xff]
          %v1882 = vld [vmem:[#allocation8 + $0x3050] sm:$0xff]
          %v1883 = vld [vmem:[#allocation8 + $0x3058] sm:$0xff]
          %v1884 = vld [vmem:[#allocation8 + $0x3060] sm:$0xff]
          %v1885 = vld [vmem:[#allocation8 + $0x3068] sm:$0xff]
          %v1886 = vld [vmem:[#allocation8 + $0x3070] sm:$0xff]
          %v1887 = vld [vmem:[#allocation8 + $0x3078] sm:$0xff]
          %v1888 = vld [vmem:[#allocation8 + $0x3080] sm:$0xff]
          %v1889 = vld [vmem:[#allocation8 + $0x3088] sm:$0xff]
          %v1890 = vld [vmem:[#allocation8 + $0x3090] sm:$0xff]
          %v1891 = vld [vmem:[#allocation8 + $0x3098] sm:$0xff]
          %v1892 = vld [vmem:[#allocation8 + $0x30a0] sm:$0xff]
          %v1893 = vld [vmem:[#allocation8 + $0x30a8] sm:$0xff]
          %v1894 = vld [vmem:[#allocation8 + $0x30b0] sm:$0xff]
          %v1895 = vld [vmem:[#allocation8 + $0x30b8] sm:$0xff]
          %v1896 = vld [vmem:[#allocation8 + $0x30c0] sm:$0xff]
          %v1897 = vld [vmem:[#allocation8 + $0x30c8] sm:$0xff]
          %v1898 = vld [vmem:[#allocation8 + $0x30d0] sm:$0xff]
          %v1899 = vld [vmem:[#allocation8 + $0x30d8] sm:$0xff]
          %v1900 = vld [vmem:[#allocation8 + $0x30e0] sm:$0xff]
          %v1901 = vld [vmem:[#allocation8 + $0x30e8] sm:$0xff]
          %v1902 = vld [vmem:[#allocation8 + $0x30f0] sm:$0xff]
          %v1903 = vld [vmem:[#allocation8 + $0x30f8] sm:$0xff]
          %v1904 = vld [vmem:[#allocation8 + $0x3100] sm:$0xff]
          %v1905 = vld [vmem:[#allocation8 + $0x3108] sm:$0xff]
          %v1906 = vld [vmem:[#allocation8 + $0x3110] sm:$0xff]
          %v1907 = vld [vmem:[#allocation8 + $0x3118] sm:$0xff]
          %v1908 = vld [vmem:[#allocation8 + $0x3120] sm:$0xff]
          %v1909 = vld [vmem:[#allocation8 + $0x3128] sm:$0xff]
          %v1910 = vld [vmem:[#allocation8 + $0x3130] sm:$0xff]
          %v1911 = vld [vmem:[#allocation8 + $0x3138] sm:$0xff]
          %v1912 = vld [vmem:[#allocation8 + $0x3140] sm:$0xff]
          %v1913 = vld [vmem:[#allocation8 + $0x3148] sm:$0xff]
          %v1914 = vld [vmem:[#allocation8 + $0x3150] sm:$0xff]
          %v1915 = vld [vmem:[#allocation8 + $0x3158] sm:$0xff]
          %v1916 = vld [vmem:[#allocation8 + $0x3160] sm:$0xff]
          %v1917 = vld [vmem:[#allocation8 + $0x3168] sm:$0xff]
          %v1918 = vld [vmem:[#allocation8 + $0x3170] sm:$0xff]
          %v1919 = vld [vmem:[#allocation8 + $0x3178] sm:$0xff]
          %v1920 = vld [vmem:[#allocation8 + $0x3180] sm:$0xff]
          %v1921 = vld [vmem:[#allocation8 + $0x3188] sm:$0xff]
          %v1922 = vld [vmem:[#allocation8 + $0x3190] sm:$0xff]
          %v1923 = vld [vmem:[#allocation8 + $0x3198] sm:$0xff]
          %v1924 = vld [vmem:[#allocation8 + $0x31a0] sm:$0xff]
          %v1925 = vld [vmem:[#allocation8 + $0x31a8] sm:$0xff]
          %v1926 = vld [vmem:[#allocation8 + $0x31b0] sm:$0xff]
          %v1927 = vld [vmem:[#allocation8 + $0x31b8] sm:$0xff]
          %v1928 = vld [vmem:[#allocation8 + $0x31c0] sm:$0xff]
          %v1929 = vld [vmem:[#allocation8 + $0x31c8] sm:$0xff]
          %v1930 = vld [vmem:[#allocation8 + $0x31d0] sm:$0xff]
          %v1931 = vld [vmem:[#allocation8 + $0x31d8] sm:$0xff]
          %v1932 = vld [vmem:[#allocation8 + $0x31e0] sm:$0xff]
          %v1933 = vld [vmem:[#allocation8 + $0x31e8] sm:$0xff]
          %v1934 = vld [vmem:[#allocation8 + $0x31f0] sm:$0xff]
          %v1935 = vld [vmem:[#allocation8 + $0x31f8] sm:$0xff]
          %v1936 = vld [vmem:[#allocation8 + $0x3200] sm:$0xff]
          %v1937 = vld [vmem:[#allocation8 + $0x3208] sm:$0xff]
          %v1938 = vld [vmem:[#allocation8 + $0x3210] sm:$0xff]
          %v1939 = vld [vmem:[#allocation8 + $0x3218] sm:$0xff]
          %v1940 = vld [vmem:[#allocation8 + $0x3220] sm:$0xff]
          %v1941 = vld [vmem:[#allocation8 + $0x3228] sm:$0xff]
          %v1942 = vld [vmem:[#allocation8 + $0x3230] sm:$0xff]
          %v1943 = vld [vmem:[#allocation8 + $0x3238] sm:$0xff]
          %v1944 = vld [vmem:[#allocation8 + $0x3240] sm:$0xff]
          %v1945 = vld [vmem:[#allocation8 + $0x3248] sm:$0xff]
          %v1946 = vld [vmem:[#allocation8 + $0x3250] sm:$0xff]
          %v1947 = vld [vmem:[#allocation8 + $0x3258] sm:$0xff]
          %v1948 = vld [vmem:[#allocation8 + $0x3260] sm:$0xff]
          %v1949 = vld [vmem:[#allocation8 + $0x3268] sm:$0xff]
          %v1950 = vld [vmem:[#allocation8 + $0x3270] sm:$0xff]
          %v1951 = vld [vmem:[#allocation8 + $0x3278] sm:$0xff]
          %v1952 = vld [vmem:[#allocation8 + $0x3280] sm:$0xff]
          %v1953 = vld [vmem:[#allocation8 + $0x3288] sm:$0xff]
          %v1954 = vld [vmem:[#allocation8 + $0x3290] sm:$0xff]
          %v1955 = vld [vmem:[#allocation8 + $0x3298] sm:$0xff]
          %v1956 = vld [vmem:[#allocation8 + $0x32a0] sm:$0xff]
          %v1957 = vld [vmem:[#allocation8 + $0x32a8] sm:$0xff]
          %v1958 = vld [vmem:[#allocation8 + $0x32b0] sm:$0xff]
          %v1959 = vld [vmem:[#allocation8 + $0x32b8] sm:$0xff]
          %v1960 = vld [vmem:[#allocation8 + $0x32c0] sm:$0xff]
          %v1961 = vld [vmem:[#allocation8 + $0x32c8] sm:$0xff]
          %v1962 = vld [vmem:[#allocation8 + $0x32d0] sm:$0xff]
          %v1963 = vld [vmem:[#allocation8 + $0x32d8] sm:$0xff]
          %v1964 = vld [vmem:[#allocation8 + $0x32e0] sm:$0xff]
          %v1965 = vld [vmem:[#allocation8 + $0x32e8] sm:$0xff]
          %v1966 = vld [vmem:[#allocation8 + $0x32f0] sm:$0xff]
          %v1967 = vld [vmem:[#allocation8 + $0x32f8] sm:$0xff]
          %v1968 = vld [vmem:[#allocation8 + $0x3300] sm:$0xff]
          %v1969 = vld [vmem:[#allocation8 + $0x3308] sm:$0xff]
          %v1970 = vld [vmem:[#allocation8 + $0x3310] sm:$0xff]
          %v1971 = vld [vmem:[#allocation8 + $0x3318] sm:$0xff]
          %v1972 = vld [vmem:[#allocation8 + $0x3320] sm:$0xff]
          %v1973 = vld [vmem:[#allocation8 + $0x3328] sm:$0xff]
          %v1974 = vld [vmem:[#allocation8 + $0x3330] sm:$0xff]
          %v1975 = vld [vmem:[#allocation8 + $0x3338] sm:$0xff]
          %v1976 = vld [vmem:[#allocation8 + $0x3340] sm:$0xff]
          %v1977 = vld [vmem:[#allocation8 + $0x3348] sm:$0xff]
          %v1978 = vld [vmem:[#allocation8 + $0x3350] sm:$0xff]
          %v1979 = vld [vmem:[#allocation8 + $0x3358] sm:$0xff]
          %v1980 = vld [vmem:[#allocation8 + $0x3360] sm:$0xff]
          %v1981 = vld [vmem:[#allocation8 + $0x3368] sm:$0xff]
          %v1982 = vld [vmem:[#allocation8 + $0x3370] sm:$0xff]
          %v1983 = vld [vmem:[#allocation8 + $0x3378] sm:$0xff]
          %v1984 = vld [vmem:[#allocation8 + $0x3380] sm:$0xff]
          %v1985 = vld [vmem:[#allocation8 + $0x3388] sm:$0xff]
          %v1986 = vld [vmem:[#allocation8 + $0x3390] sm:$0xff]
          %v1987 = vld [vmem:[#allocation8 + $0x3398] sm:$0xff]
          %v1988 = vld [vmem:[#allocation8 + $0x33a0] sm:$0xff]
          %v1989 = vld [vmem:[#allocation8 + $0x33a8] sm:$0xff]
          %v1990 = vld [vmem:[#allocation8 + $0x33b0] sm:$0xff]
          %v1991 = vld [vmem:[#allocation8 + $0x33b8] sm:$0xff]
          %v1992 = vld [vmem:[#allocation8 + $0x33c0] sm:$0xff]
          %v1993 = vld [vmem:[#allocation8 + $0x33c8] sm:$0xff]
          %v1994 = vld [vmem:[#allocation8 + $0x33d0] sm:$0xff]
          %v1995 = vld [vmem:[#allocation8 + $0x33d8] sm:$0xff]
          %v1996 = vld [vmem:[#allocation8 + $0x33e0] sm:$0xff]
          %v1997 = vld [vmem:[#allocation8 + $0x33e8] sm:$0xff]
          %v1998 = vld [vmem:[#allocation8 + $0x33f0] sm:$0xff]
          %v1999 = vld [vmem:[#allocation8 + $0x33f8] sm:$0xff]
          %v2000 = vld [vmem:[#allocation8 + $0x3400] sm:$0xff]
          %v2001 = vld [vmem:[#allocation8 + $0x3408] sm:$0xff]
          %v2002 = vld [vmem:[#allocation8 + $0x3410] sm:$0xff]
          %v2003 = vld [vmem:[#allocation8 + $0x3418] sm:$0xff]
          %v2004 = vld [vmem:[#allocation8 + $0x3420] sm:$0xff]
          %v2005 = vld [vmem:[#allocation8 + $0x3428] sm:$0xff]
          %v2006 = vld [vmem:[#allocation8 + $0x3430] sm:$0xff]
          %v2007 = vld [vmem:[#allocation8 + $0x3438] sm:$0xff]
          %v2008 = vld [vmem:[#allocation8 + $0x3440] sm:$0xff]
          %v2009 = vld [vmem:[#allocation8 + $0x3448] sm:$0xff]
          %v2010 = vld [vmem:[#allocation8 + $0x3450] sm:$0xff]
          %v2011 = vld [vmem:[#allocation8 + $0x3458] sm:$0xff]
          %v2012 = vld [vmem:[#allocation8 + $0x3460] sm:$0xff]
          %v2013 = vld [vmem:[#allocation8 + $0x3468] sm:$0xff]
          %v2014 = vld [vmem:[#allocation8 + $0x3470] sm:$0xff]
          %v2015 = vld [vmem:[#allocation8 + $0x3478] sm:$0xff]
          %v2016 = vld [vmem:[#allocation8 + $0x3480] sm:$0xff]
          %v2017 = vld [vmem:[#allocation8 + $0x3488] sm:$0xff]
          %v2018 = vld [vmem:[#allocation8 + $0x3490] sm:$0xff]
          %v2019 = vld [vmem:[#allocation8 + $0x3498] sm:$0xff]
          %v2020 = vld [vmem:[#allocation8 + $0x34a0] sm:$0xff]
          %v2021 = vld [vmem:[#allocation8 + $0x34a8] sm:$0xff]
          %v2022 = vld [vmem:[#allocation8 + $0x34b0] sm:$0xff]
          %v2023 = vld [vmem:[#allocation8 + $0x34b8] sm:$0xff]
          %v2024 = vld [vmem:[#allocation8 + $0x34c0] sm:$0xff]
          %v2025 = vld [vmem:[#allocation8 + $0x34c8] sm:$0xff]
          %v2026 = vld [vmem:[#allocation8 + $0x34d0] sm:$0xff]
          %v2027 = vld [vmem:[#allocation8 + $0x34d8] sm:$0xff]
          %v2028 = vld [vmem:[#allocation8 + $0x34e0] sm:$0xff]
          %v2029 = vld [vmem:[#allocation8 + $0x34e8] sm:$0xff]
          %v2030 = vld [vmem:[#allocation8 + $0x34f0] sm:$0xff]
          %v2031 = vld [vmem:[#allocation8 + $0x34f8] sm:$0xff]
          %v2032 = vld [vmem:[#allocation8 + $0x3500] sm:$0xff]
          %v2033 = vld [vmem:[#allocation8 + $0x3508] sm:$0xff]
          %v2034 = vld [vmem:[#allocation8 + $0x3510] sm:$0xff]
          %v2035 = vld [vmem:[#allocation8 + $0x3518] sm:$0xff]
          %v2036 = vld [vmem:[#allocation8 + $0x3520] sm:$0xff]
          %v2037 = vld [vmem:[#allocation8 + $0x3528] sm:$0xff]
          %v2038 = vld [vmem:[#allocation8 + $0x3530] sm:$0xff]
          %v2039 = vld [vmem:[#allocation8 + $0x3538] sm:$0xff]
          %v2040 = vld [vmem:[#allocation8 + $0x3540] sm:$0xff]
          %v2041 = vld [vmem:[#allocation8 + $0x3548] sm:$0xff]
          %v2042 = vld [vmem:[#allocation8 + $0x3550] sm:$0xff]
          %v2043 = vld [vmem:[#allocation8 + $0x3558] sm:$0xff]
          %v2044 = vld [vmem:[#allocation8 + $0x3560] sm:$0xff]
          %v2045 = vld [vmem:[#allocation8 + $0x3568] sm:$0xff]
          %v2046 = vld [vmem:[#allocation8 + $0x3570] sm:$0xff]
          %v2047 = vld [vmem:[#allocation8 + $0x3578] sm:$0xff]
          %v2048 = vld [vmem:[#allocation8 + $0x3580] sm:$0xff]
          %v2049 = vld [vmem:[#allocation8 + $0x3588] sm:$0xff]
          %v2050 = vld [vmem:[#allocation8 + $0x3590] sm:$0xff]
          %v2051 = vld [vmem:[#allocation8 + $0x3598] sm:$0xff]
          %v2052 = vld [vmem:[#allocation8 + $0x35a0] sm:$0xff]
          %v2053 = vld [vmem:[#allocation8 + $0x35a8] sm:$0xff]
          %v2054 = vld [vmem:[#allocation8 + $0x35b0] sm:$0xff]
          %v2055 = vld [vmem:[#allocation8 + $0x35b8] sm:$0xff]
          %v2056 = vld [vmem:[#allocation8 + $0x35c0] sm:$0xff]
          %v2057 = vld [vmem:[#allocation8 + $0x35c8] sm:$0xff]
          %v2058 = vld [vmem:[#allocation8 + $0x35d0] sm:$0xff]
          %v2059 = vld [vmem:[#allocation8 + $0x35d8] sm:$0xff]
          %v2060 = vld [vmem:[#allocation8 + $0x35e0] sm:$0xff]
          %v2061 = vld [vmem:[#allocation8 + $0x35e8] sm:$0xff]
          %v2062 = vld [vmem:[#allocation8 + $0x35f0] sm:$0xff]
          %v2063 = vld [vmem:[#allocation8 + $0x35f8] sm:$0xff]
          %v2064 = vld [vmem:[#allocation9] sm:$0x3f]
          %v2068 = vlaneseq
          %v2069 = vshrl.u32 %v2068, 7
          %v2070 = vsub.s32 0, %v2069
          %v2071 = vrot.slane %v325, %v2070
          %v2072 = vlaneseq
          %v2073 = vshrl.u32 %v2072, 7
          %v2074 = vsub.s32 1, %v2073
          %v2075 = vrot.slane %v325, %v2074
          %v2076 = vlaneseq
          %v2077 = vshrl.u32 %v2076, 7
          %v2078 = vsub.s32 2, %v2077
          %v2079 = vrot.slane %v325, %v2078
          %v2080 = vlaneseq
          %v2081 = vshrl.u32 %v2080, 7
          %v2082 = vsub.s32 3, %v2081
          %v2083 = vrot.slane %v325, %v2082
          %v2084 = vlaneseq
          %v2085 = vshrl.u32 %v2084, 7
          %v2086 = vsub.s32 4, %v2085
          %v2087 = vrot.slane %v325, %v2086
          %v2088 = vlaneseq
          %v2089 = vshrl.u32 %v2088, 7
          %v2090 = vsub.s32 5, %v2089
          %v2091 = vrot.slane %v325, %v2090
          %v2092 = vlaneseq
          %v2093 = vshrl.u32 %v2092, 7
          %v2094 = vsub.s32 6, %v2093
          %v2095 = vrot.slane %v325, %v2094
          %v2096 = vlaneseq
          %v2097 = vshrl.u32 %v2096, 7
          %v2098 = vsub.s32 7, %v2097
          %v2099 = vrot.slane %v325, %v2098
          %v2100 = vlaneseq
          %v2101 = vshrl.u32 %v2100, 7
          %v2102 = vsub.s32 0, %v2101
          %v2103 = vrot.slane %v330, %v2102
          %v2104 = vlaneseq
          %v2105 = vshrl.u32 %v2104, 7
          %v2106 = vsub.s32 1, %v2105
          %v2107 = vrot.slane %v330, %v2106
          %v2108 = vlaneseq
          %v2109 = vshrl.u32 %v2108, 7
          %v2110 = vsub.s32 2, %v2109
          %v2111 = vrot.slane %v330, %v2110
          %v2112 = vlaneseq
          %v2113 = vshrl.u32 %v2112, 7
          %v2114 = vsub.s32 3, %v2113
          %v2115 = vrot.slane %v330, %v2114
          %v2116 = vlaneseq
          %v2117 = vshrl.u32 %v2116, 7
          %v2118 = vsub.s32 4, %v2117
          %v2119 = vrot.slane %v330, %v2118
          %v2120 = vlaneseq
          %v2121 = vshrl.u32 %v2120, 7
          %v2122 = vsub.s32 5, %v2121
          %v2123 = vrot.slane %v330, %v2122
          %v2124 = vlaneseq
          %v2125 = vshrl.u32 %v2124, 7
          %v2126 = vsub.s32 6, %v2125
          %v2127 = vrot.slane %v330, %v2126
          %v2128 = vlaneseq
          %v2129 = vshrl.u32 %v2128, 7
          %v2130 = vsub.s32 7, %v2129
          %v2131 = vrot.slane %v330, %v2130
          %v2132 = vlaneseq
          %v2133 = vshrl.u32 %v2132, 7
          %v2134 = vsub.s32 0, %v2133
          %v2135 = vrot.slane %v335, %v2134
          %v2136 = vlaneseq
          %v2137 = vshrl.u32 %v2136, 7
          %v2138 = vsub.s32 1, %v2137
          %v2139 = vrot.slane %v335, %v2138
          %v2159 = vlaneseq
          %v2160 = vshrl.u32 %v2159, 7
          %v2161 = vsub.s32 0, %v2160
          %v2162 = vrot.slane %v2064, %v2161
          %v2163 = vlaneseq
          %v2164 = vshrl.u32 %v2163, 7
          %v2165 = vsub.s32 1, %v2164
          %v2166 = vrot.slane %v2064, %v2165
          %v2167 = vlaneseq
          %v2168 = vshrl.u32 %v2167, 7
          %v2169 = vsub.s32 2, %v2168
          %v2170 = vrot.slane %v2064, %v2169
          %v2171 = vlaneseq
          %v2172 = vshrl.u32 %v2171, 7
          %v2173 = vsub.s32 3, %v2172
          %v2174 = vrot.slane %v2064, %v2173
          %v2175 = vlaneseq
          %v2176 = vshrl.u32 %v2175, 7
          %v2177 = vsub.s32 4, %v2176
          %v2178 = vrot.slane %v2064, %v2177
          %v2179 = vlaneseq
          %v2180 = vshrl.u32 %v2179, 7
          %v2181 = vsub.s32 5, %v2180
          %v2182 = vrot.slane %v2064, %v2181
          %2189 = vmatprep.subr.mxu0 %v337
          %2190 = vmatpush1.msra.mxu0 %v336
          %2191 = vmatprep.subr.mxu0 %v343
          %2192 = vmatpush1.msra.mxu0 %v342
          %2193 = vmatprep.subr.mxu0 %v349
          %2194 = vmatpush1.msra.mxu0 %v348
          %2195 = vmatprep.subr.mxu0 %v355
          %2196 = vmatpush1.msra.mxu0 %v354
          %2197 = vmatprep.subr.mxu0 %v361
          %2198 = vmatpush1.msra.mxu0 %v360
          %2199 = vmatprep.subr.mxu0 %v367
          %2200 = vmatpush1.msra.mxu0 %v366
          %2201 = vmatprep.subr.mxu0 %v373
          %2202 = vmatpush1.msra.mxu0 %v372
          %2203 = vmatprep.subr.mxu0 %v379
          %2204 = vmatpush1.msra.mxu0 %v378
          %2205 = vmatprep.subr.mxu0 %v385
          %2206 = vmatpush1.msra.mxu0 %v384
          %2207 = vmatprep.subr.mxu0 %v391
          %2208 = vmatpush1.msra.mxu0 %v390
          %2209 = vmatprep.subr.mxu0 %v397
          %2210 = vmatpush1.msra.mxu0 %v396
          %2211 = vmatprep.subr.mxu0 %v403
          %2212 = vmatpush1.msra.mxu0 %v402
          %2213 = vmatprep.subr.mxu0 %v409
          %2214 = vmatpush1.msra.mxu0 %v408
          %2215 = vmatprep.subr.mxu0 %v415
          %2216 = vmatpush1.msra.mxu0 %v414
          %2217 = vmatprep.subr.mxu0 %v421
          %2218 = vmatpush1.msra.mxu0 %v420
          %2219 = vmatprep.subr.mxu0 %v427
          %2220 = vmatpush1.msra.mxu0 %v426
          %2221 = vmatprep.subr.mxu0 %v433
          %2222 = vmatpush1.msra.mxu0 %v432
          %2223 = vmatprep.subr.mxu0 %v439
          %2224 = vmatpush1.msra.mxu0 %v438
          %2225 = vmatprep.subr.mxu0 %v445
          %2226 = vmatpush1.msra.mxu0 %v444
          %2227 = vmatprep.subr.mxu0 %v451
          %2228 = vmatpush1.msra.mxu0 %v450
          %2229 = vmatprep.subr.mxu0 %v457
          %2230 = vmatpush1.msra.mxu0 %v456
          %2231 = vmatprep.subr.mxu0 %v463
          %2232 = vmatpush1.msra.mxu0 %v462
          %2233 = vmatprep.subr.mxu0 %v469
          %2234 = vmatpush1.msra.mxu0 %v468
          %2235 = vmatprep.subr.mxu0 %v475
          %2236 = vmatpush1.msra.mxu0 %v474
          %2237 = vmatprep.subr.mxu0 %v481
          %2238 = vmatpush1.msra.mxu0 %v480
          %2239 = vmatprep.subr.mxu0 %v487
          %2240 = vmatpush1.msra.mxu0 %v486
          %2241 = vmatprep.subr.mxu0 %v493
          %2242 = vmatpush1.msra.mxu0 %v492
          %2243 = vmatprep.subr.mxu0 %v499
          %2244 = vmatpush1.msra.mxu0 %v498
          %2245 = vmatprep.subr.mxu0 %v505
          %2246 = vmatpush1.msra.mxu0 %v504
          %2247 = vmatprep.subr.mxu0 %v511
          %2248 = vmatpush1.msra.mxu0 %v510
          %2249 = vmatprep.subr.mxu0 %v517
          %2250 = vmatpush1.msra.mxu0 %v516
          %2251 = vmatprep.subr.mxu0 %v523
          %2252 = vmatpush1.msra.mxu0 %v522
          %2253 = vmatprep.mubr.f32.mxu0 %v2075
          %2254 = vmatmul.mubr.f32.gmra.mrb[0].mxu0 %v2071
          %v2255 = vpop.f32.mrb[0].mxu0
          %v2256 = vadd.f32 %v2162, %v2255
          %v2257 = vpop.f32.mrb[0].mxu0
          %v2258 = vadd.f32 %v2166, %v2257
          %2259 = vdwg.mxu0
          %2260 = vmatprep.subr.mxu0 %v529
          %2261 = vmatpush1.msra.mxu0 %v528
          %2262 = vmatprep.subr.mxu0 %v535
          %2263 = vmatpush1.msra.mxu0 %v534
          %2264 = vmatprep.subr.mxu0 %v541
          %2265 = vmatpush1.msra.mxu0 %v540
          %2266 = vmatprep.subr.mxu0 %v547
          %2267 = vmatpush1.msra.mxu0 %v546
          %2268 = vmatprep.subr.mxu0 %v553
          %2269 = vmatpush1.msra.mxu0 %v552
          %2270 = vmatprep.subr.mxu0 %v559
          %2271 = vmatpush1.msra.mxu0 %v558
          %2272 = vmatprep.subr.mxu0 %v565
          %2273 = vmatpush1.msra.mxu0 %v564
          %2274 = vmatprep.subr.mxu0 %v571
          %2275 = vmatpush1.msra.mxu0 %v570
          %2276 = vmatprep.subr.mxu0 %v577
          %2277 = vmatpush1.msra.mxu0 %v576
          %2278 = vmatprep.subr.mxu0 %v583
          %2279 = vmatpush1.msra.mxu0 %v582
          %2280 = vmatprep.subr.mxu0 %v589
          %2281 = vmatpush1.msra.mxu0 %v588
          %2282 = vmatprep.subr.mxu0 %v595
          %2283 = vmatpush1.msra.mxu0 %v594
          %2284 = vmatprep.subr.mxu0 %v601
          %2285 = vmatpush1.msra.mxu0 %v600
          %2286 = vmatprep.subr.mxu0 %v607
          %2287 = vmatpush1.msra.mxu0 %v606
          %2288 = vmatprep.subr.mxu0 %v613
          %2289 = vmatpush1.msra.mxu0 %v612
          %2290 = vmatprep.subr.mxu0 %v619
          %2291 = vmatpush1.msra.mxu0 %v618
          %2292 = vmatprep.subr.mxu0 %v625
          %2293 = vmatpush1.msra.mxu0 %v624
          %2294 = vmatprep.subr.mxu0 %v631
          %2295 = vmatpush1.msra.mxu0 %v630
          %2296 = vmatprep.subr.mxu0 %v637
          %2297 = vmatpush1.msra.mxu0 %v636
          %2298 = vmatprep.subr.mxu0 %v643
          %2299 = vmatpush1.msra.mxu0 %v642
          %2300 = vmatprep.subr.mxu0 %v649
          %2301 = vmatpush1.msra.mxu0 %v648
          %2302 = vmatprep.subr.mxu0 %v655
          %2303 = vmatpush1.msra.mxu0 %v654
          %2304 = vmatprep.subr.mxu0 %v661
          %2305 = vmatpush1.msra.mxu0 %v660
          %2306 = vmatprep.subr.mxu0 %v667
          %2307 = vmatpush1.msra.mxu0 %v666
          %2308 = vmatprep.subr.mxu0 %v673
          %2309 = vmatpush1.msra.mxu0 %v672
          %2310 = vmatprep.subr.mxu0 %v679
          %2311 = vmatpush1.msra.mxu0 %v678
          %2312 = vmatprep.subr.mxu0 %v685
          %2313 = vmatpush1.msra.mxu0 %v684
          %2314 = vmatprep.subr.mxu0 %v691
          %2315 = vmatpush1.msra.mxu0 %v690
          %2316 = vmatprep.subr.mxu0 %v697
          %2317 = vmatpush1.msra.mxu0 %v696
          %2318 = vmatprep.subr.mxu0 %v703
          %2319 = vmatpush1.msra.mxu0 %v702
          %2320 = vmatprep.subr.mxu0 %v709
          %2321 = vmatpush1.msra.mxu0 %v708
          %2322 = vmatprep.subr.mxu0 %v715
          %2323 = vmatpush1.msra.mxu0 %v714
          %2324 = vmatprep.mubr.f32.mxu0 %v2083
          %2325 = vmatmul.mubr.f32.gmra.mrb[0].mxu0 %v2079
          %v2326 = vpop.f32.mrb[0].mxu0
          %v2327 = vadd.f32 %v2256, %v2326
          %v2328 = vpop.f32.mrb[0].mxu0
          %v2329 = vadd.f32 %v2258, %v2328
          %2330 = vdwg.mxu0
          %2331 = vmatprep.subr.mxu0 %v721
          %2332 = vmatpush1.msra.mxu0 %v720
          %2333 = vmatprep.subr.mxu0 %v727
          %2334 = vmatpush1.msra.mxu0 %v726
          %2335 = vmatprep.subr.mxu0 %v733
          %2336 = vmatpush1.msra.mxu0 %v732
          %2337 = vmatprep.subr.mxu0 %v739
          %2338 = vmatpush1.msra.mxu0 %v738
          %2339 = vmatprep.subr.mxu0 %v745
          %2340 = vmatpush1.msra.mxu0 %v744
          %2341 = vmatprep.subr.mxu0 %v751
          %2342 = vmatpush1.msra.mxu0 %v750
          %2343 = vmatprep.subr.mxu0 %v757
          %2344 = vmatpush1.msra.mxu0 %v756
          %2345 = vmatprep.subr.mxu0 %v763
          %2346 = vmatpush1.msra.mxu0 %v762
          %2347 = vmatprep.subr.mxu0 %v769
          %2348 = vmatpush1.msra.mxu0 %v768
          %2349 = vmatprep.subr.mxu0 %v775
          %2350 = vmatpush1.msra.mxu0 %v774
          %2351 = vmatprep.subr.mxu0 %v781
          %2352 = vmatpush1.msra.mxu0 %v780
          %2353 = vmatprep.subr.mxu0 %v787
          %2354 = vmatpush1.msra.mxu0 %v786
          %2355 = vmatprep.subr.mxu0 %v793
          %2356 = vmatpush1.msra.mxu0 %v792
          %2357 = vmatprep.subr.mxu0 %v799
          %2358 = vmatpush1.msra.mxu0 %v798
          %2359 = vmatprep.subr.mxu0 %v805
          %2360 = vmatpush1.msra.mxu0 %v804
          %2361 = vmatprep.subr.mxu0 %v811
          %2362 = vmatpush1.msra.mxu0 %v810
          %2363 = vmatprep.subr.mxu0 %v817
          %2364 = vmatpush1.msra.mxu0 %v816
          %2365 = vmatprep.subr.mxu0 %v823
          %2366 = vmatpush1.msra.mxu0 %v822
          %2367 = vmatprep.subr.mxu0 %v829
          %2368 = vmatpush1.msra.mxu0 %v828
          %2369 = vmatprep.subr.mxu0 %v835
          %2370 = vmatpush1.msra.mxu0 %v834
          %2371 = vmatprep.subr.mxu0 %v841
          %2372 = vmatpush1.msra.mxu0 %v840
          %2373 = vmatprep.subr.mxu0 %v847
          %2374 = vmatpush1.msra.mxu0 %v846
          %2375 = vmatprep.subr.mxu0 %v853
          %2376 = vmatpush1.msra.mxu0 %v852
          %2377 = vmatprep.subr.mxu0 %v859
          %2378 = vmatpush1.msra.mxu0 %v858
          %2379 = vmatprep.subr.mxu0 %v865
          %2380 = vmatpush1.msra.mxu0 %v864
          %2381 = vmatprep.subr.mxu0 %v871
          %2382 = vmatpush1.msra.mxu0 %v870
          %2383 = vmatprep.subr.mxu0 %v877
          %2384 = vmatpush1.msra.mxu0 %v876
          %2385 = vmatprep.subr.mxu0 %v883
          %2386 = vmatpush1.msra.mxu0 %v882
          %2387 = vmatprep.subr.mxu0 %v889
          %2388 = vmatpush1.msra.mxu0 %v888
          %2389 = vmatprep.subr.mxu0 %v895
          %2390 = vmatpush1.msra.mxu0 %v894
          %2391 = vmatprep.subr.mxu0 %v901
          %2392 = vmatpush1.msra.mxu0 %v900
          %2393 = vmatprep.subr.mxu0 %v907
          %2394 = vmatpush1.msra.mxu0 %v906
          %2395 = vmatprep.mubr.f32.mxu0 %v2091
          %2396 = vmatmul.mubr.f32.gmra.mrb[0].mxu0 %v2087
          %v2397 = vpop.f32.mrb[0].mxu0
          %v2398 = vadd.f32 %v2327, %v2397
          %v2399 = vpop.f32.mrb[0].mxu0
          %v2400 = vadd.f32 %v2329, %v2399
          %2401 = vdwg.mxu0
          %2402 = vmatprep.subr.mxu0 %v913
          %2403 = vmatpush1.msra.mxu0 %v912
          %2404 = vmatprep.subr.mxu0 %v919
          %2405 = vmatpush1.msra.mxu0 %v918
          %2406 = vmatprep.subr.mxu0 %v925
          %2407 = vmatpush1.msra.mxu0 %v924
          %2408 = vmatprep.subr.mxu0 %v931
          %2409 = vmatpush1.msra.mxu0 %v930
          %2410 = vmatprep.subr.mxu0 %v937
          %2411 = vmatpush1.msra.mxu0 %v936
          %2412 = vmatprep.subr.mxu0 %v943
          %2413 = vmatpush1.msra.mxu0 %v942
          %2414 = vmatprep.subr.mxu0 %v949
          %2415 = vmatpush1.msra.mxu0 %v948
          %2416 = vmatprep.subr.mxu0 %v955
          %2417 = vmatpush1.msra.mxu0 %v954
          %2418 = vmatprep.subr.mxu0 %v961
          %2419 = vmatpush1.msra.mxu0 %v960
          %2420 = vmatprep.subr.mxu0 %v967
          %2421 = vmatpush1.msra.mxu0 %v966
          %2422 = vmatprep.subr.mxu0 %v973
          %2423 = vmatpush1.msra.mxu0 %v972
          %2424 = vmatprep.subr.mxu0 %v979
          %2425 = vmatpush1.msra.mxu0 %v978
          %2426 = vmatprep.subr.mxu0 %v985
          %2427 = vmatpush1.msra.mxu0 %v984
          %2428 = vmatprep.subr.mxu0 %v991
          %2429 = vmatpush1.msra.mxu0 %v990
          %2430 = vmatprep.subr.mxu0 %v997
          %2431 = vmatpush1.msra.mxu0 %v996
          %2432 = vmatprep.subr.mxu0 %v1003
          %2433 = vmatpush1.msra.mxu0 %v1002
          %2434 = vmatprep.subr.mxu0 %v1009
          %2435 = vmatpush1.msra.mxu0 %v1008
          %2436 = vmatprep.subr.mxu0 %v1015
          %2437 = vmatpush1.msra.mxu0 %v1014
          %2438 = vmatprep.subr.mxu0 %v1021
          %2439 = vmatpush1.msra.mxu0 %v1020
          %2440 = vmatprep.subr.mxu0 %v1027
          %2441 = vmatpush1.msra.mxu0 %v1026
          %2442 = vmatprep.subr.mxu0 %v1033
          %2443 = vmatpush1.msra.mxu0 %v1032
          %2444 = vmatprep.subr.mxu0 %v1039
          %2445 = vmatpush1.msra.mxu0 %v1038
          %2446 = vmatprep.subr.mxu0 %v1045
          %2447 = vmatpush1.msra.mxu0 %v1044
          %2448 = vmatprep.subr.mxu0 %v1051
          %2449 = vmatpush1.msra.mxu0 %v1050
          %2450 = vmatprep.subr.mxu0 %v1057
          %2451 = vmatpush1.msra.mxu0 %v1056
          %2452 = vmatprep.subr.mxu0 %v1063
          %2453 = vmatpush1.msra.mxu0 %v1062
          %2454 = vmatprep.subr.mxu0 %v1069
          %2455 = vmatpush1.msra.mxu0 %v1068
          %2456 = vmatprep.subr.mxu0 %v1075
          %2457 = vmatpush1.msra.mxu0 %v1074
          %2458 = vmatprep.subr.mxu0 %v1081
          %2459 = vmatpush1.msra.mxu0 %v1080
          %2460 = vmatprep.subr.mxu0 %v1087
          %2461 = vmatpush1.msra.mxu0 %v1086
          %2462 = vmatprep.subr.mxu0 %v1093
          %2463 = vmatpush1.msra.mxu0 %v1092
          %2464 = vmatprep.subr.mxu0 %v1099
          %2465 = vmatpush1.msra.mxu0 %v1098
          %2466 = vmatprep.mubr.f32.mxu0 %v2099
          %2467 = vmatmul.mubr.f32.gmra.mrb[0].mxu0 %v2095
          %v2468 = vpop.f32.mrb[0].mxu0
          %v2469 = vadd.f32 %v2398, %v2468
          %v2470 = vpop.f32.mrb[0].mxu0
          %v2471 = vadd.f32 %v2400, %v2470
          %2472 = vdwg.mxu0
          %2473 = vmatprep.subr.mxu0 %v1105
          %2474 = vmatpush1.msra.mxu0 %v1104
          %2475 = vmatprep.subr.mxu0 %v1111
          %2476 = vmatpush1.msra.mxu0 %v1110
          %2477 = vmatprep.subr.mxu0 %v1117
          %2478 = vmatpush1.msra.mxu0 %v1116
          %2479 = vmatprep.subr.mxu0 %v1123
          %2480 = vmatpush1.msra.mxu0 %v1122
          %2481 = vmatprep.subr.mxu0 %v1129
          %2482 = vmatpush1.msra.mxu0 %v1128
          %2483 = vmatprep.subr.mxu0 %v1135
          %2484 = vmatpush1.msra.mxu0 %v1134
          %2485 = vmatprep.subr.mxu0 %v1141
          %2486 = vmatpush1.msra.mxu0 %v1140
          %2487 = vmatprep.subr.mxu0 %v1147
          %2488 = vmatpush1.msra.mxu0 %v1146
          %2489 = vmatprep.subr.mxu0 %v1153
          %2490 = vmatpush1.msra.mxu0 %v1152
          %2491 = vmatprep.subr.mxu0 %v1159
          %2492 = vmatpush1.msra.mxu0 %v1158
          %2493 = vmatprep.subr.mxu0 %v1165
          %2494 = vmatpush1.msra.mxu0 %v1164
          %2495 = vmatprep.subr.mxu0 %v1171
          %2496 = vmatpush1.msra.mxu0 %v1170
          %2497 = vmatprep.subr.mxu0 %v1177
          %2498 = vmatpush1.msra.mxu0 %v1176
          %2499 = vmatprep.subr.mxu0 %v1183
          %2500 = vmatpush1.msra.mxu0 %v1182
          %2501 = vmatprep.subr.mxu0 %v1189
          %2502 = vmatpush1.msra.mxu0 %v1188
          %2503 = vmatprep.subr.mxu0 %v1195
          %2504 = vmatpush1.msra.mxu0 %v1194
          %2505 = vmatprep.subr.mxu0 %v1201
          %2506 = vmatpush1.msra.mxu0 %v1200
          %2507 = vmatprep.subr.mxu0 %v1207
          %2508 = vmatpush1.msra.mxu0 %v1206
          %2509 = vmatprep.subr.mxu0 %v1213
          %2510 = vmatpush1.msra.mxu0 %v1212
          %2511 = vmatprep.subr.mxu0 %v1219
          %2512 = vmatpush1.msra.mxu0 %v1218
          %2513 = vmatprep.subr.mxu0 %v1225
          %2514 = vmatpush1.msra.mxu0 %v1224
          %2515 = vmatprep.subr.mxu0 %v1231
          %2516 = vmatpush1.msra.mxu0 %v1230
          %2517 = vmatprep.subr.mxu0 %v1237
          %2518 = vmatpush1.msra.mxu0 %v1236
          %2519 = vmatprep.subr.mxu0 %v1243
          %2520 = vmatpush1.msra.mxu0 %v1242
          %2521 = vmatprep.subr.mxu0 %v1249
          %2522 = vmatpush1.msra.mxu0 %v1248
          %2523 = vmatprep.subr.mxu0 %v1255
          %2524 = vmatpush1.msra.mxu0 %v1254
          %2525 = vmatprep.subr.mxu0 %v1261
          %2526 = vmatpush1.msra.mxu0 %v1260
          %2527 = vmatprep.subr.mxu0 %v1267
          %2528 = vmatpush1.msra.mxu0 %v1266
          %2529 = vmatprep.subr.mxu0 %v1273
          %2530 = vmatpush1.msra.mxu0 %v1272
          %2531 = vmatprep.subr.mxu0 %v1279
          %2532 = vmatpush1.msra.mxu0 %v1278
          %2533 = vmatprep.subr.mxu0 %v1285
          %2534 = vmatpush1.msra.mxu0 %v1284
          %2535 = vmatprep.subr.mxu0 %v1291
          %2536 = vmatpush1.msra.mxu0 %v1290
          %2537 = vmatprep.mubr.f32.mxu0 %v2107
          %2538 = vmatmul.mubr.f32.gmra.mrb[0].mxu0 %v2103
          %v2539 = vpop.f32.mrb[0].mxu0
          %v2540 = vadd.f32 %v2469, %v2539
          %v2541 = vpop.f32.mrb[0].mxu0
          %v2542 = vadd.f32 %v2471, %v2541
          %2543 = vdwg.mxu0
          %2544 = vmatprep.subr.mxu0 %v1297
          %2545 = vmatpush1.msra.mxu0 %v1296
          %2546 = vmatprep.subr.mxu0 %v1303
          %2547 = vmatpush1.msra.mxu0 %v1302
          %2548 = vmatprep.subr.mxu0 %v1309
          %2549 = vmatpush1.msra.mxu0 %v1308
          %2550 = vmatprep.subr.mxu0 %v1315
          %2551 = vmatpush1.msra.mxu0 %v1314
          %2552 = vmatprep.subr.mxu0 %v1321
          %2553 = vmatpush1.msra.mxu0 %v1320
          %2554 = vmatprep.subr.mxu0 %v1327
          %2555 = vmatpush1.msra.mxu0 %v1326
          %2556 = vmatprep.subr.mxu0 %v1333
          %2557 = vmatpush1.msra.mxu0 %v1332
          %2558 = vmatprep.subr.mxu0 %v1339
          %2559 = vmatpush1.msra.mxu0 %v1338
          %2560 = vmatprep.subr.mxu0 %v1345
          %2561 = vmatpush1.msra.mxu0 %v1344
          %2562 = vmatprep.subr.mxu0 %v1351
          %2563 = vmatpush1.msra.mxu0 %v1350
          %2564 = vmatprep.subr.mxu0 %v1357
          %2565 = vmatpush1.msra.mxu0 %v1356
          %2566 = vmatprep.subr.mxu0 %v1363
          %2567 = vmatpush1.msra.mxu0 %v1362
          %2568 = vmatprep.subr.mxu0 %v1369
          %2569 = vmatpush1.msra.mxu0 %v1368
          %2570 = vmatprep.subr.mxu0 %v1375
          %2571 = vmatpush1.msra.mxu0 %v1374
          %2572 = vmatprep.subr.mxu0 %v1381
          %2573 = vmatpush1.msra.mxu0 %v1380
          %2574 = vmatprep.subr.mxu0 %v1387
          %2575 = vmatpush1.msra.mxu0 %v1386
          %2576 = vmatprep.subr.mxu0 %v1393
          %2577 = vmatpush1.msra.mxu0 %v1392
          %2578 = vmatprep.subr.mxu0 %v1399
          %2579 = vmatpush1.msra.mxu0 %v1398
          %2580 = vmatprep.subr.mxu0 %v1405
          %2581 = vmatpush1.msra.mxu0 %v1404
          %2582 = vmatprep.subr.mxu0 %v1411
          %2583 = vmatpush1.msra.mxu0 %v1410
          %2584 = vmatprep.subr.mxu0 %v1417
          %2585 = vmatpush1.msra.mxu0 %v1416
          %2586 = vmatprep.subr.mxu0 %v1423
          %2587 = vmatpush1.msra.mxu0 %v1422
          %2588 = vmatprep.subr.mxu0 %v1429
          %2589 = vmatpush1.msra.mxu0 %v1428
          %2590 = vmatprep.subr.mxu0 %v1435
          %2591 = vmatpush1.msra.mxu0 %v1434
          %2592 = vmatprep.subr.mxu0 %v1441
          %2593 = vmatpush1.msra.mxu0 %v1440
          %2594 = vmatprep.subr.mxu0 %v1447
          %2595 = vmatpush1.msra.mxu0 %v1446
          %2596 = vmatprep.subr.mxu0 %v1453
          %2597 = vmatpush1.msra.mxu0 %v1452
          %2598 = vmatprep.subr.mxu0 %v1459
          %2599 = vmatpush1.msra.mxu0 %v1458
          %2600 = vmatprep.subr.mxu0 %v1465
          %2601 = vmatpush1.msra.mxu0 %v1464
          %2602 = vmatprep.subr.mxu0 %v1471
          %2603 = vmatpush1.msra.mxu0 %v1470
          %2604 = vmatprep.subr.mxu0 %v1477
          %2605 = vmatpush1.msra.mxu0 %v1476
          %2606 = vmatprep.subr.mxu0 %v1483
          %2607 = vmatpush1.msra.mxu0 %v1482
          %2608 = vmatprep.mubr.f32.mxu0 %v2115
          %2609 = vmatmul.mubr.f32.gmra.mrb[0].mxu0 %v2111
          %v2610 = vpop.f32.mrb[0].mxu0
          %v2611 = vadd.f32 %v2540, %v2610
          %v2612 = vpop.f32.mrb[0].mxu0
          %v2613 = vadd.f32 %v2542, %v2612
          %2614 = vdwg.mxu0
          %2615 = vmatprep.subr.mxu0 %v1489
          %2616 = vmatpush1.msra.mxu0 %v1488
          %2617 = vmatprep.subr.mxu0 %v1495
          %2618 = vmatpush1.msra.mxu0 %v1494
          %2619 = vmatprep.subr.mxu0 %v1501
          %2620 = vmatpush1.msra.mxu0 %v1500
          %2621 = vmatprep.subr.mxu0 %v1507
          %2622 = vmatpush1.msra.mxu0 %v1506
          %2623 = vmatprep.subr.mxu0 %v1513
          %2624 = vmatpush1.msra.mxu0 %v1512
          %2625 = vmatprep.subr.mxu0 %v1519
          %2626 = vmatpush1.msra.mxu0 %v1518
          %2627 = vmatprep.subr.mxu0 %v1525
          %2628 = vmatpush1.msra.mxu0 %v1524
          %2629 = vmatprep.subr.mxu0 %v1531
          %2630 = vmatpush1.msra.mxu0 %v1530
          %2631 = vmatprep.subr.mxu0 %v1537
          %2632 = vmatpush1.msra.mxu0 %v1536
          %2633 = vmatprep.subr.mxu0 %v1543
          %2634 = vmatpush1.msra.mxu0 %v1542
          %2635 = vmatprep.subr.mxu0 %v1549
          %2636 = vmatpush1.msra.mxu0 %v1548
          %2637 = vmatprep.subr.mxu0 %v1555
          %2638 = vmatpush1.msra.mxu0 %v1554
          %2639 = vmatprep.subr.mxu0 %v1561
          %2640 = vmatpush1.msra.mxu0 %v1560
          %2641 = vmatprep.subr.mxu0 %v1567
          %2642 = vmatpush1.msra.mxu0 %v1566
          %2643 = vmatprep.subr.mxu0 %v1573
          %2644 = vmatpush1.msra.mxu0 %v1572
          %2645 = vmatprep.subr.mxu0 %v1579
          %2646 = vmatpush1.msra.mxu0 %v1578
          %2647 = vmatprep.subr.mxu0 %v1585
          %2648 = vmatpush1.msra.mxu0 %v1584
          %2649 = vmatprep.subr.mxu0 %v1591
          %2650 = vmatpush1.msra.mxu0 %v1590
          %2651 = vmatprep.subr.mxu0 %v1597
          %2652 = vmatpush1.msra.mxu0 %v1596
          %2653 = vmatprep.subr.mxu0 %v1603
          %2654 = vmatpush1.msra.mxu0 %v1602
          %2655 = vmatprep.subr.mxu0 %v1609
          %2656 = vmatpush1.msra.mxu0 %v1608
          %2657 = vmatprep.subr.mxu0 %v1615
          %2658 = vmatpush1.msra.mxu0 %v1614
          %2659 = vmatprep.subr.mxu0 %v1621
          %2660 = vmatpush1.msra.mxu0 %v1620
          %2661 = vmatprep.subr.mxu0 %v1627
          %2662 = vmatpush1.msra.mxu0 %v1626
          %2663 = vmatprep.subr.mxu0 %v1633
          %2664 = vmatpush1.msra.mxu0 %v1632
          %2665 = vmatprep.subr.mxu0 %v1639
          %2666 = vmatpush1.msra.mxu0 %v1638
          %2667 = vmatprep.subr.mxu0 %v1645
          %2668 = vmatpush1.msra.mxu0 %v1644
          %2669 = vmatprep.subr.mxu0 %v1651
          %2670 = vmatpush1.msra.mxu0 %v1650
          %2671 = vmatprep.subr.mxu0 %v1657
          %2672 = vmatpush1.msra.mxu0 %v1656
          %2673 = vmatprep.subr.mxu0 %v1663
          %2674 = vmatpush1.msra.mxu0 %v1662
          %2675 = vmatprep.subr.mxu0 %v1669
          %2676 = vmatpush1.msra.mxu0 %v1668
          %2677 = vmatprep.subr.mxu0 %v1675
          %2678 = vmatpush1.msra.mxu0 %v1674
          %2679 = vmatprep.mubr.f32.mxu0 %v2123
          %2680 = vmatmul.mubr.f32.gmra.mrb[0].mxu0 %v2119
          %v2681 = vpop.f32.mrb[0].mxu0
          %v2682 = vadd.f32 %v2611, %v2681
          %v2683 = vpop.f32.mrb[0].mxu0
          %v2684 = vadd.f32 %v2613, %v2683
          %2685 = vdwg.mxu0
          %2686 = vmatprep.subr.mxu0 %v1681
          %2687 = vmatpush1.msra.mxu0 %v1680
          %2688 = vmatprep.subr.mxu0 %v1687
          %2689 = vmatpush1.msra.mxu0 %v1686
          %2690 = vmatprep.subr.mxu0 %v1693
          %2691 = vmatpush1.msra.mxu0 %v1692
          %2692 = vmatprep.subr.mxu0 %v1699
          %2693 = vmatpush1.msra.mxu0 %v1698
          %2694 = vmatprep.subr.mxu0 %v1705
          %2695 = vmatpush1.msra.mxu0 %v1704
          %2696 = vmatprep.subr.mxu0 %v1711
          %2697 = vmatpush1.msra.mxu0 %v1710
          %2698 = vmatprep.subr.mxu0 %v1717
          %2699 = vmatpush1.msra.mxu0 %v1716
          %2700 = vmatprep.subr.mxu0 %v1723
          %2701 = vmatpush1.msra.mxu0 %v1722
          %2702 = vmatprep.subr.mxu0 %v1729
          %2703 = vmatpush1.msra.mxu0 %v1728
          %2704 = vmatprep.subr.mxu0 %v1735
          %2705 = vmatpush1.msra.mxu0 %v1734
          %2706 = vmatprep.subr.mxu0 %v1741
          %2707 = vmatpush1.msra.mxu0 %v1740
          %2708 = vmatprep.subr.mxu0 %v1747
          %2709 = vmatpush1.msra.mxu0 %v1746
          %2710 = vmatprep.subr.mxu0 %v1753
          %2711 = vmatpush1.msra.mxu0 %v1752
          %2712 = vmatprep.subr.mxu0 %v1759
          %2713 = vmatpush1.msra.mxu0 %v1758
          %2714 = vmatprep.subr.mxu0 %v1765
          %2715 = vmatpush1.msra.mxu0 %v1764
          %2716 = vmatprep.subr.mxu0 %v1771
          %2717 = vmatpush1.msra.mxu0 %v1770
          %2718 = vmatprep.subr.mxu0 %v1777
          %2719 = vmatpush1.msra.mxu0 %v1776
          %2720 = vmatprep.subr.mxu0 %v1783
          %2721 = vmatpush1.msra.mxu0 %v1782
          %2722 = vmatprep.subr.mxu0 %v1789
          %2723 = vmatpush1.msra.mxu0 %v1788
          %2724 = vmatprep.subr.mxu0 %v1795
          %2725 = vmatpush1.msra.mxu0 %v1794
          %2726 = vmatprep.subr.mxu0 %v1801
          %2727 = vmatpush1.msra.mxu0 %v1800
          %2728 = vmatprep.subr.mxu0 %v1807
          %2729 = vmatpush1.msra.mxu0 %v1806
          %2730 = vmatprep.subr.mxu0 %v1813
          %2731 = vmatpush1.msra.mxu0 %v1812
          %2732 = vmatprep.subr.mxu0 %v1819
          %2733 = vmatpush1.msra.mxu0 %v1818
          %2734 = vmatprep.subr.mxu0 %v1825
          %2735 = vmatpush1.msra.mxu0 %v1824
          %2736 = vmatprep.subr.mxu0 %v1831
          %2737 = vmatpush1.msra.mxu0 %v1830
          %2738 = vmatprep.subr.mxu0 %v1837
          %2739 = vmatpush1.msra.mxu0 %v1836
          %2740 = vmatprep.subr.mxu0 %v1843
          %2741 = vmatpush1.msra.mxu0 %v1842
          %2742 = vmatprep.subr.mxu0 %v1849
          %2743 = vmatpush1.msra.mxu0 %v1848
          %2744 = vmatprep.subr.mxu0 %v1855
          %2745 = vmatpush1.msra.mxu0 %v1854
          %2746 = vmatprep.subr.mxu0 %v1861
          %2747 = vmatpush1.msra.mxu0 %v1860
          %2748 = vmatprep.subr.mxu0 %v1867
          %2749 = vmatpush1.msra.mxu0 %v1866
          %2750 = vmatprep.mubr.f32.mxu0 %v2131
          %2751 = vmatmul.mubr.f32.gmra.mrb[0].mxu0 %v2127
          %v2752 = vpop.f32.mrb[0].mxu0
          %v2753 = vadd.f32 %v2682, %v2752
          %v2754 = vpop.f32.mrb[0].mxu0
          %v2755 = vadd.f32 %v2684, %v2754
          %2756 = vdwg.mxu0
          %2757 = vmatprep.subr.mxu0 %v1873
          %2758 = vmatpush1.msra.mxu0 %v1872
          %2759 = vmatprep.subr.mxu0 %v1879
          %2760 = vmatpush1.msra.mxu0 %v1878
          %2761 = vmatprep.subr.mxu0 %v1885
          %2762 = vmatpush1.msra.mxu0 %v1884
          %2763 = vmatprep.subr.mxu0 %v1891
          %2764 = vmatpush1.msra.mxu0 %v1890
          %2765 = vmatprep.subr.mxu0 %v1897
          %2766 = vmatpush1.msra.mxu0 %v1896
          %2767 = vmatprep.subr.mxu0 %v1903
          %2768 = vmatpush1.msra.mxu0 %v1902
          %2769 = vmatprep.subr.mxu0 %v1909
          %2770 = vmatpush1.msra.mxu0 %v1908
          %2771 = vmatprep.subr.mxu0 %v1915
          %2772 = vmatpush1.msra.mxu0 %v1914
          %2773 = vmatprep.subr.mxu0 %v1921
          %2774 = vmatpush1.msra.mxu0 %v1920
          %2775 = vmatprep.subr.mxu0 %v1927
          %2776 = vmatpush1.msra.mxu0 %v1926
          %2777 = vmatprep.subr.mxu0 %v1933
          %2778 = vmatpush1.msra.mxu0 %v1932
          %2779 = vmatprep.subr.mxu0 %v1939
          %2780 = vmatpush1.msra.mxu0 %v1938
          %2781 = vmatprep.subr.mxu0 %v1945
          %2782 = vmatpush1.msra.mxu0 %v1944
          %2783 = vmatprep.subr.mxu0 %v1951
          %2784 = vmatpush1.msra.mxu0 %v1950
          %2785 = vmatprep.subr.mxu0 %v1957
          %2786 = vmatpush1.msra.mxu0 %v1956
          %2787 = vmatprep.subr.mxu0 %v1963
          %2788 = vmatpush1.msra.mxu0 %v1962
          %2789 = vmatprep.subr.mxu0 %v1969
          %2790 = vmatpush1.msra.mxu0 %v1968
          %2791 = vmatprep.subr.mxu0 %v1975
          %2792 = vmatpush1.msra.mxu0 %v1974
          %2793 = vmatprep.subr.mxu0 %v1981
          %2794 = vmatpush1.msra.mxu0 %v1980
          %2795 = vmatprep.subr.mxu0 %v1987
          %2796 = vmatpush1.msra.mxu0 %v1986
          %2797 = vmatprep.subr.mxu0 %v1993
          %2798 = vmatpush1.msra.mxu0 %v1992
          %2799 = vmatprep.subr.mxu0 %v1999
          %2800 = vmatpush1.msra.mxu0 %v1998
          %2801 = vmatprep.subr.mxu0 %v2005
          %2802 = vmatpush1.msra.mxu0 %v2004
          %2803 = vmatprep.subr.mxu0 %v2011
          %2804 = vmatpush1.msra.mxu0 %v2010
          %2805 = vmatprep.subr.mxu0 %v2017
          %2806 = vmatpush1.msra.mxu0 %v2016
          %2807 = vmatprep.subr.mxu0 %v2023
          %2808 = vmatpush1.msra.mxu0 %v2022
          %2809 = vmatprep.subr.mxu0 %v2029
          %2810 = vmatpush1.msra.mxu0 %v2028
          %2811 = vmatprep.subr.mxu0 %v2035
          %2812 = vmatpush1.msra.mxu0 %v2034
          %2813 = vmatprep.subr.mxu0 %v2041
          %2814 = vmatpush1.msra.mxu0 %v2040
          %2815 = vmatprep.subr.mxu0 %v2047
          %2816 = vmatpush1.msra.mxu0 %v2046
          %2817 = vmatprep.subr.mxu0 %v2053
          %2818 = vmatpush1.msra.mxu0 %v2052
          %2819 = vmatprep.subr.mxu0 %v2059
          %2820 = vmatpush1.msra.mxu0 %v2058
          %2821 = vmatprep.mubr.f32.mxu0 %v2139
          %2822 = vmatmul.mubr.f32.gmra.mrb[0].mxu0 %v2135
          %v2823 = vpop.f32.mrb[0].mxu0
          %v2824 = vadd.f32 %v2753, %v2823
          %v2825 = vpop.f32.mrb[0].mxu0
          %v2826 = vadd.f32 %v2755, %v2825
          %2827 = vdwg.mxu0
          %2828 = vmatprep.subr.mxu0 %v339
          %2829 = vmatpush1.msra.mxu0 %v338
          %2830 = vmatprep.subr.mxu0 %v345
          %2831 = vmatpush1.msra.mxu0 %v344
          %2832 = vmatprep.subr.mxu0 %v351
          %2833 = vmatpush1.msra.mxu0 %v350
          %2834 = vmatprep.subr.mxu0 %v357
          %2835 = vmatpush1.msra.mxu0 %v356
          %2836 = vmatprep.subr.mxu0 %v363
          %2837 = vmatpush1.msra.mxu0 %v362
          %2838 = vmatprep.subr.mxu0 %v369
          %2839 = vmatpush1.msra.mxu0 %v368
          %2840 = vmatprep.subr.mxu0 %v375
          %2841 = vmatpush1.msra.mxu0 %v374
          %2842 = vmatprep.subr.mxu0 %v381
          %2843 = vmatpush1.msra.mxu0 %v380
          %2844 = vmatprep.subr.mxu0 %v387
          %2845 = vmatpush1.msra.mxu0 %v386
          %2846 = vmatprep.subr.mxu0 %v393
          %2847 = vmatpush1.msra.mxu0 %v392
          %2848 = vmatprep.subr.mxu0 %v399
          %2849 = vmatpush1.msra.mxu0 %v398
          %2850 = vmatprep.subr.mxu0 %v405
          %2851 = vmatpush1.msra.mxu0 %v404
          %2852 = vmatprep.subr.mxu0 %v411
          %2853 = vmatpush1.msra.mxu0 %v410
          %2854 = vmatprep.subr.mxu0 %v417
          %2855 = vmatpush1.msra.mxu0 %v416
          %2856 = vmatprep.subr.mxu0 %v423
          %2857 = vmatpush1.msra.mxu0 %v422
          %2858 = vmatprep.subr.mxu0 %v429
          %2859 = vmatpush1.msra.mxu0 %v428
          %2860 = vmatprep.subr.mxu0 %v435
          %2861 = vmatpush1.msra.mxu0 %v434
          %2862 = vmatprep.subr.mxu0 %v441
          %2863 = vmatpush1.msra.mxu0 %v440
          %2864 = vmatprep.subr.mxu0 %v447
          %2865 = vmatpush1.msra.mxu0 %v446
          %2866 = vmatprep.subr.mxu0 %v453
          %2867 = vmatpush1.msra.mxu0 %v452
          %2868 = vmatprep.subr.mxu0 %v459
          %2869 = vmatpush1.msra.mxu0 %v458
          %2870 = vmatprep.subr.mxu0 %v465
          %2871 = vmatpush1.msra.mxu0 %v464
          %2872 = vmatprep.subr.mxu0 %v471
          %2873 = vmatpush1.msra.mxu0 %v470
          %2874 = vmatprep.subr.mxu0 %v477
          %2875 = vmatpush1.msra.mxu0 %v476
          %2876 = vmatprep.subr.mxu0 %v483
          %2877 = vmatpush1.msra.mxu0 %v482
          %2878 = vmatprep.subr.mxu0 %v489
          %2879 = vmatpush1.msra.mxu0 %v488
          %2880 = vmatprep.subr.mxu0 %v495
          %2881 = vmatpush1.msra.mxu0 %v494
          %2882 = vmatprep.subr.mxu0 %v501
          %2883 = vmatpush1.msra.mxu0 %v500
          %2884 = vmatprep.subr.mxu0 %v507
          %2885 = vmatpush1.msra.mxu0 %v506
          %2886 = vmatprep.subr.mxu0 %v513
          %2887 = vmatpush1.msra.mxu0 %v512
          %2888 = vmatprep.subr.mxu0 %v519
          %2889 = vmatpush1.msra.mxu0 %v518
          %2890 = vmatprep.subr.mxu0 %v525
          %2891 = vmatpush1.msra.mxu0 %v524
          %2892 = vmatprep.mubr.f32.mxu0 %v2075
          %2893 = vmatmul.mubr.f32.gmra.mrb[0].mxu0 %v2071
          %v2894 = vpop.f32.mrb[0].mxu0
          %v2895 = vadd.f32 %v2170, %v2894
          %v2896 = vpop.f32.mrb[0].mxu0
          %v2897 = vadd.f32 %v2174, %v2896
          %2898 = vdwg.mxu0
          %2899 = vmatprep.subr.mxu0 %v531
          %2900 = vmatpush1.msra.mxu0 %v530
          %2901 = vmatprep.subr.mxu0 %v537
          %2902 = vmatpush1.msra.mxu0 %v536
          %2903 = vmatprep.subr.mxu0 %v543
          %2904 = vmatpush1.msra.mxu0 %v542
          %2905 = vmatprep.subr.mxu0 %v549
          %2906 = vmatpush1.msra.mxu0 %v548
          %2907 = vmatprep.subr.mxu0 %v555
          %2908 = vmatpush1.msra.mxu0 %v554
          %2909 = vmatprep.subr.mxu0 %v561
          %2910 = vmatpush1.msra.mxu0 %v560
          %2911 = vmatprep.subr.mxu0 %v567
          %2912 = vmatpush1.msra.mxu0 %v566
          %2913 = vmatprep.subr.mxu0 %v573
          %2914 = vmatpush1.msra.mxu0 %v572
          %2915 = vmatprep.subr.mxu0 %v579
          %2916 = vmatpush1.msra.mxu0 %v578
          %2917 = vmatprep.subr.mxu0 %v585
          %2918 = vmatpush1.msra.mxu0 %v584
          %2919 = vmatprep.subr.mxu0 %v591
          %2920 = vmatpush1.msra.mxu0 %v590
          %2921 = vmatprep.subr.mxu0 %v597
          %2922 = vmatpush1.msra.mxu0 %v596
          %2923 = vmatprep.subr.mxu0 %v603
          %2924 = vmatpush1.msra.mxu0 %v602
          %2925 = vmatprep.subr.mxu0 %v609
          %2926 = vmatpush1.msra.mxu0 %v608
          %2927 = vmatprep.subr.mxu0 %v615
          %2928 = vmatpush1.msra.mxu0 %v614
          %2929 = vmatprep.subr.mxu0 %v621
          %2930 = vmatpush1.msra.mxu0 %v620
          %2931 = vmatprep.subr.mxu0 %v627
          %2932 = vmatpush1.msra.mxu0 %v626
          %2933 = vmatprep.subr.mxu0 %v633
          %2934 = vmatpush1.msra.mxu0 %v632
          %2935 = vmatprep.subr.mxu0 %v639
          %2936 = vmatpush1.msra.mxu0 %v638
          %2937 = vmatprep.subr.mxu0 %v645
          %2938 = vmatpush1.msra.mxu0 %v644
          %2939 = vmatprep.subr.mxu0 %v651
          %2940 = vmatpush1.msra.mxu0 %v650
          %2941 = vmatprep.subr.mxu0 %v657
          %2942 = vmatpush1.msra.mxu0 %v656
          %2943 = vmatprep.subr.mxu0 %v663
          %2944 = vmatpush1.msra.mxu0 %v662
          %2945 = vmatprep.subr.mxu0 %v669
          %2946 = vmatpush1.msra.mxu0 %v668
          %2947 = vmatprep.subr.mxu0 %v675
          %2948 = vmatpush1.msra.mxu0 %v674
          %2949 = vmatprep.subr.mxu0 %v681
          %2950 = vmatpush1.msra.mxu0 %v680
          %2951 = vmatprep.subr.mxu0 %v687
          %2952 = vmatpush1.msra.mxu0 %v686
          %2953 = vmatprep.subr.mxu0 %v693
          %2954 = vmatpush1.msra.mxu0 %v692
          %2955 = vmatprep.subr.mxu0 %v699
          %2956 = vmatpush1.msra.mxu0 %v698
          %2957 = vmatprep.subr.mxu0 %v705
          %2958 = vmatpush1.msra.mxu0 %v704
          %2959 = vmatprep.subr.mxu0 %v711
          %2960 = vmatpush1.msra.mxu0 %v710
          %2961 = vmatprep.subr.mxu0 %v717
          %2962 = vmatpush1.msra.mxu0 %v716
          %2963 = vmatprep.mubr.f32.mxu0 %v2083
          %2964 = vmatmul.mubr.f32.gmra.mrb[0].mxu0 %v2079
          %v2965 = vpop.f32.mrb[0].mxu0
          %v2966 = vadd.f32 %v2895, %v2965
          %v2967 = vpop.f32.mrb[0].mxu0
          %v2968 = vadd.f32 %v2897, %v2967
          %2969 = vdwg.mxu0
          %2970 = vmatprep.subr.mxu0 %v723
          %2971 = vmatpush1.msra.mxu0 %v722
          %2972 = vmatprep.subr.mxu0 %v729
          %2973 = vmatpush1.msra.mxu0 %v728
          %2974 = vmatprep.subr.mxu0 %v735
          %2975 = vmatpush1.msra.mxu0 %v734
          %2976 = vmatprep.subr.mxu0 %v741
          %2977 = vmatpush1.msra.mxu0 %v740
          %2978 = vmatprep.subr.mxu0 %v747
          %2979 = vmatpush1.msra.mxu0 %v746
          %2980 = vmatprep.subr.mxu0 %v753
          %2981 = vmatpush1.msra.mxu0 %v752
          %2982 = vmatprep.subr.mxu0 %v759
          %2983 = vmatpush1.msra.mxu0 %v758
          %2984 = vmatprep.subr.mxu0 %v765
          %2985 = vmatpush1.msra.mxu0 %v764
          %2986 = vmatprep.subr.mxu0 %v771
          %2987 = vmatpush1.msra.mxu0 %v770
          %2988 = vmatprep.subr.mxu0 %v777
          %2989 = vmatpush1.msra.mxu0 %v776
          %2990 = vmatprep.subr.mxu0 %v783
          %2991 = vmatpush1.msra.mxu0 %v782
          %2992 = vmatprep.subr.mxu0 %v789
          %2993 = vmatpush1.msra.mxu0 %v788
          %2994 = vmatprep.subr.mxu0 %v795
          %2995 = vmatpush1.msra.mxu0 %v794
          %2996 = vmatprep.subr.mxu0 %v801
          %2997 = vmatpush1.msra.mxu0 %v800
          %2998 = vmatprep.subr.mxu0 %v807
          %2999 = vmatpush1.msra.mxu0 %v806
          %3000 = vmatprep.subr.mxu0 %v813
          %3001 = vmatpush1.msra.mxu0 %v812
          %3002 = vmatprep.subr.mxu0 %v819
          %3003 = vmatpush1.msra.mxu0 %v818
          %3004 = vmatprep.subr.mxu0 %v825
          %3005 = vmatpush1.msra.mxu0 %v824
          %3006 = vmatprep.subr.mxu0 %v831
          %3007 = vmatpush1.msra.mxu0 %v830
          %3008 = vmatprep.subr.mxu0 %v837
          %3009 = vmatpush1.msra.mxu0 %v836
          %3010 = vmatprep.subr.mxu0 %v843
          %3011 = vmatpush1.msra.mxu0 %v842
          %3012 = vmatprep.subr.mxu0 %v849
          %3013 = vmatpush1.msra.mxu0 %v848
          %3014 = vmatprep.subr.mxu0 %v855
          %3015 = vmatpush1.msra.mxu0 %v854
          %3016 = vmatprep.subr.mxu0 %v861
          %3017 = vmatpush1.msra.mxu0 %v860
          %3018 = vmatprep.subr.mxu0 %v867
          %3019 = vmatpush1.msra.mxu0 %v866
          %3020 = vmatprep.subr.mxu0 %v873
          %3021 = vmatpush1.msra.mxu0 %v872
          %3022 = vmatprep.subr.mxu0 %v879
          %3023 = vmatpush1.msra.mxu0 %v878
          %3024 = vmatprep.subr.mxu0 %v885
          %3025 = vmatpush1.msra.mxu0 %v884
          %3026 = vmatprep.subr.mxu0 %v891
          %3027 = vmatpush1.msra.mxu0 %v890
          %3028 = vmatprep.subr.mxu0 %v897
          %3029 = vmatpush1.msra.mxu0 %v896
          %3030 = vmatprep.subr.mxu0 %v903
          %3031 = vmatpush1.msra.mxu0 %v902
          %3032 = vmatprep.subr.mxu0 %v909
          %3033 = vmatpush1.msra.mxu0 %v908
          %3034 = vmatprep.mubr.f32.mxu0 %v2091
          %3035 = vmatmul.mubr.f32.gmra.mrb[0].mxu0 %v2087
          %v3036 = vpop.f32.mrb[0].mxu0
          %v3037 = vadd.f32 %v2966, %v3036
          %v3038 = vpop.f32.mrb[0].mxu0
          %v3039 = vadd.f32 %v2968, %v3038
          %3040 = vdwg.mxu0
          %3041 = vmatprep.subr.mxu0 %v915
          %3042 = vmatpush1.msra.mxu0 %v914
          %3043 = vmatprep.subr.mxu0 %v921
          %3044 = vmatpush1.msra.mxu0 %v920
          %3045 = vmatprep.subr.mxu0 %v927
          %3046 = vmatpush1.msra.mxu0 %v926
          %3047 = vmatprep.subr.mxu0 %v933
          %3048 = vmatpush1.msra.mxu0 %v932
          %3049 = vmatprep.subr.mxu0 %v939
          %3050 = vmatpush1.msra.mxu0 %v938
          %3051 = vmatprep.subr.mxu0 %v945
          %3052 = vmatpush1.msra.mxu0 %v944
          %3053 = vmatprep.subr.mxu0 %v951
          %3054 = vmatpush1.msra.mxu0 %v950
          %3055 = vmatprep.subr.mxu0 %v957
          %3056 = vmatpush1.msra.mxu0 %v956
          %3057 = vmatprep.subr.mxu0 %v963
          %3058 = vmatpush1.msra.mxu0 %v962
          %3059 = vmatprep.subr.mxu0 %v969
          %3060 = vmatpush1.msra.mxu0 %v968
          %3061 = vmatprep.subr.mxu0 %v975
          %3062 = vmatpush1.msra.mxu0 %v974
          %3063 = vmatprep.subr.mxu0 %v981
          %3064 = vmatpush1.msra.mxu0 %v980
          %3065 = vmatprep.subr.mxu0 %v987
          %3066 = vmatpush1.msra.mxu0 %v986
          %3067 = vmatprep.subr.mxu0 %v993
          %3068 = vmatpush1.msra.mxu0 %v992
          %3069 = vmatprep.subr.mxu0 %v999
          %3070 = vmatpush1.msra.mxu0 %v998
          %3071 = vmatprep.subr.mxu0 %v1005
          %3072 = vmatpush1.msra.mxu0 %v1004
          %3073 = vmatprep.subr.mxu0 %v1011
          %3074 = vmatpush1.msra.mxu0 %v1010
          %3075 = vmatprep.subr.mxu0 %v1017
          %3076 = vmatpush1.msra.mxu0 %v1016
          %3077 = vmatprep.subr.mxu0 %v1023
          %3078 = vmatpush1.msra.mxu0 %v1022
          %3079 = vmatprep.subr.mxu0 %v1029
          %3080 = vmatpush1.msra.mxu0 %v1028
          %3081 = vmatprep.subr.mxu0 %v1035
          %3082 = vmatpush1.msra.mxu0 %v1034
          %3083 = vmatprep.subr.mxu0 %v1041
          %3084 = vmatpush1.msra.mxu0 %v1040
          %3085 = vmatprep.subr.mxu0 %v1047
          %3086 = vmatpush1.msra.mxu0 %v1046
          %3087 = vmatprep.subr.mxu0 %v1053
          %3088 = vmatpush1.msra.mxu0 %v1052
          %3089 = vmatprep.subr.mxu0 %v1059
          %3090 = vmatpush1.msra.mxu0 %v1058
          %3091 = vmatprep.subr.mxu0 %v1065
          %3092 = vmatpush1.msra.mxu0 %v1064
          %3093 = vmatprep.subr.mxu0 %v1071
          %3094 = vmatpush1.msra.mxu0 %v1070
          %3095 = vmatprep.subr.mxu0 %v1077
          %3096 = vmatpush1.msra.mxu0 %v1076
          %3097 = vmatprep.subr.mxu0 %v1083
          %3098 = vmatpush1.msra.mxu0 %v1082
          %3099 = vmatprep.subr.mxu0 %v1089
          %3100 = vmatpush1.msra.mxu0 %v1088
          %3101 = vmatprep.subr.mxu0 %v1095
          %3102 = vmatpush1.msra.mxu0 %v1094
          %3103 = vmatprep.subr.mxu0 %v1101
          %3104 = vmatpush1.msra.mxu0 %v1100
          %3105 = vmatprep.mubr.f32.mxu0 %v2099
          %3106 = vmatmul.mubr.f32.gmra.mrb[0].mxu0 %v2095
          %v3107 = vpop.f32.mrb[0].mxu0
          %v3108 = vadd.f32 %v3037, %v3107
          %v3109 = vpop.f32.mrb[0].mxu0
          %v3110 = vadd.f32 %v3039, %v3109
          %3111 = vdwg.mxu0
          %3112 = vmatprep.subr.mxu0 %v1107
          %3113 = vmatpush1.msra.mxu0 %v1106
          %3114 = vmatprep.subr.mxu0 %v1113
          %3115 = vmatpush1.msra.mxu0 %v1112
          %3116 = vmatprep.subr.mxu0 %v1119
          %3117 = vmatpush1.msra.mxu0 %v1118
          %3118 = vmatprep.subr.mxu0 %v1125
          %3119 = vmatpush1.msra.mxu0 %v1124
          %3120 = vmatprep.subr.mxu0 %v1131
          %3121 = vmatpush1.msra.mxu0 %v1130
          %3122 = vmatprep.subr.mxu0 %v1137
          %3123 = vmatpush1.msra.mxu0 %v1136
          %3124 = vmatprep.subr.mxu0 %v1143
          %3125 = vmatpush1.msra.mxu0 %v1142
          %3126 = vmatprep.subr.mxu0 %v1149
          %3127 = vmatpush1.msra.mxu0 %v1148
          %3128 = vmatprep.subr.mxu0 %v1155
          %3129 = vmatpush1.msra.mxu0 %v1154
          %3130 = vmatprep.subr.mxu0 %v1161
          %3131 = vmatpush1.msra.mxu0 %v1160
          %3132 = vmatprep.subr.mxu0 %v1167
          %3133 = vmatpush1.msra.mxu0 %v1166
          %3134 = vmatprep.subr.mxu0 %v1173
          %3135 = vmatpush1.msra.mxu0 %v1172
          %3136 = vmatprep.subr.mxu0 %v1179
          %3137 = vmatpush1.msra.mxu0 %v1178
          %3138 = vmatprep.subr.mxu0 %v1185
          %3139 = vmatpush1.msra.mxu0 %v1184
          %3140 = vmatprep.subr.mxu0 %v1191
          %3141 = vmatpush1.msra.mxu0 %v1190
          %3142 = vmatprep.subr.mxu0 %v1197
          %3143 = vmatpush1.msra.mxu0 %v1196
          %3144 = vmatprep.subr.mxu0 %v1203
          %3145 = vmatpush1.msra.mxu0 %v1202
          %3146 = vmatprep.subr.mxu0 %v1209
          %3147 = vmatpush1.msra.mxu0 %v1208
          %3148 = vmatprep.subr.mxu0 %v1215
          %3149 = vmatpush1.msra.mxu0 %v1214
          %3150 = vmatprep.subr.mxu0 %v1221
          %3151 = vmatpush1.msra.mxu0 %v1220
          %3152 = vmatprep.subr.mxu0 %v1227
          %3153 = vmatpush1.msra.mxu0 %v1226
          %3154 = vmatprep.subr.mxu0 %v1233
          %3155 = vmatpush1.msra.mxu0 %v1232
          %3156 = vmatprep.subr.mxu0 %v1239
          %3157 = vmatpush1.msra.mxu0 %v1238
          %3158 = vmatprep.subr.mxu0 %v1245
          %3159 = vmatpush1.msra.mxu0 %v1244
          %3160 = vmatprep.subr.mxu0 %v1251
          %3161 = vmatpush1.msra.mxu0 %v1250
          %3162 = vmatprep.subr.mxu0 %v1257
          %3163 = vmatpush1.msra.mxu0 %v1256
          %3164 = vmatprep.subr.mxu0 %v1263
          %3165 = vmatpush1.msra.mxu0 %v1262
          %3166 = vmatprep.subr.mxu0 %v1269
          %3167 = vmatpush1.msra.mxu0 %v1268
          %3168 = vmatprep.subr.mxu0 %v1275
          %3169 = vmatpush1.msra.mxu0 %v1274
          %3170 = vmatprep.subr.mxu0 %v1281
          %3171 = vmatpush1.msra.mxu0 %v1280
          %3172 = vmatprep.subr.mxu0 %v1287
          %3173 = vmatpush1.msra.mxu0 %v1286
          %3174 = vmatprep.subr.mxu0 %v1293
          %3175 = vmatpush1.msra.mxu0 %v1292
          %3176 = vmatprep.mubr.f32.mxu0 %v2107
          %3177 = vmatmul.mubr.f32.gmra.mrb[0].mxu0 %v2103
          %v3178 = vpop.f32.mrb[0].mxu0
          %v3179 = vadd.f32 %v3108, %v3178
          %v3180 = vpop.f32.mrb[0].mxu0
          %v3181 = vadd.f32 %v3110, %v3180
          %3182 = vdwg.mxu0
          %3183 = vmatprep.subr.mxu0 %v1299
          %3184 = vmatpush1.msra.mxu0 %v1298
          %3185 = vmatprep.subr.mxu0 %v1305
          %3186 = vmatpush1.msra.mxu0 %v1304
          %3187 = vmatprep.subr.mxu0 %v1311
          %3188 = vmatpush1.msra.mxu0 %v1310
          %3189 = vmatprep.subr.mxu0 %v1317
          %3190 = vmatpush1.msra.mxu0 %v1316
          %3191 = vmatprep.subr.mxu0 %v1323
          %3192 = vmatpush1.msra.mxu0 %v1322
          %3193 = vmatprep.subr.mxu0 %v1329
          %3194 = vmatpush1.msra.mxu0 %v1328
          %3195 = vmatprep.subr.mxu0 %v1335
          %3196 = vmatpush1.msra.mxu0 %v1334
          %3197 = vmatprep.subr.mxu0 %v1341
          %3198 = vmatpush1.msra.mxu0 %v1340
          %3199 = vmatprep.subr.mxu0 %v1347
          %3200 = vmatpush1.msra.mxu0 %v1346
          %3201 = vmatprep.subr.mxu0 %v1353
          %3202 = vmatpush1.msra.mxu0 %v1352
          %3203 = vmatprep.subr.mxu0 %v1359
          %3204 = vmatpush1.msra.mxu0 %v1358
          %3205 = vmatprep.subr.mxu0 %v1365
          %3206 = vmatpush1.msra.mxu0 %v1364
          %3207 = vmatprep.subr.mxu0 %v1371
          %3208 = vmatpush1.msra.mxu0 %v1370
          %3209 = vmatprep.subr.mxu0 %v1377
          %3210 = vmatpush1.msra.mxu0 %v1376
          %3211 = vmatprep.subr.mxu0 %v1383
          %3212 = vmatpush1.msra.mxu0 %v1382
          %3213 = vmatprep.subr.mxu0 %v1389
          %3214 = vmatpush1.msra.mxu0 %v1388
          %3215 = vmatprep.subr.mxu0 %v1395
          %3216 = vmatpush1.msra.mxu0 %v1394
          %3217 = vmatprep.subr.mxu0 %v1401
          %3218 = vmatpush1.msra.mxu0 %v1400
          %3219 = vmatprep.subr.mxu0 %v1407
          %3220 = vmatpush1.msra.mxu0 %v1406
          %3221 = vmatprep.subr.mxu0 %v1413
          %3222 = vmatpush1.msra.mxu0 %v1412
          %3223 = vmatprep.subr.mxu0 %v1419
          %3224 = vmatpush1.msra.mxu0 %v1418
          %3225 = vmatprep.subr.mxu0 %v1425
          %3226 = vmatpush1.msra.mxu0 %v1424
          %3227 = vmatprep.subr.mxu0 %v1431
          %3228 = vmatpush1.msra.mxu0 %v1430
          %3229 = vmatprep.subr.mxu0 %v1437
          %3230 = vmatpush1.msra.mxu0 %v1436
          %3231 = vmatprep.subr.mxu0 %v1443
          %3232 = vmatpush1.msra.mxu0 %v1442
          %3233 = vmatprep.subr.mxu0 %v1449
          %3234 = vmatpush1.msra.mxu0 %v1448
          %3235 = vmatprep.subr.mxu0 %v1455
          %3236 = vmatpush1.msra.mxu0 %v1454
          %3237 = vmatprep.subr.mxu0 %v1461
          %3238 = vmatpush1.msra.mxu0 %v1460
          %3239 = vmatprep.subr.mxu0 %v1467
          %3240 = vmatpush1.msra.mxu0 %v1466
          %3241 = vmatprep.subr.mxu0 %v1473
          %3242 = vmatpush1.msra.mxu0 %v1472
          %3243 = vmatprep.subr.mxu0 %v1479
          %3244 = vmatpush1.msra.mxu0 %v1478
          %3245 = vmatprep.subr.mxu0 %v1485
          %3246 = vmatpush1.msra.mxu0 %v1484
          %3247 = vmatprep.mubr.f32.mxu0 %v2115
          %3248 = vmatmul.mubr.f32.gmra.mrb[0].mxu0 %v2111
          %v3249 = vpop.f32.mrb[0].mxu0
          %v3250 = vadd.f32 %v3179, %v3249
          %v3251 = vpop.f32.mrb[0].mxu0
          %v3252 = vadd.f32 %v3181, %v3251
          %3253 = vdwg.mxu0
          %3254 = vmatprep.subr.mxu0 %v1491
          %3255 = vmatpush1.msra.mxu0 %v1490
          %3256 = vmatprep.subr.mxu0 %v1497
          %3257 = vmatpush1.msra.mxu0 %v1496
          %3258 = vmatprep.subr.mxu0 %v1503
          %3259 = vmatpush1.msra.mxu0 %v1502
          %3260 = vmatprep.subr.mxu0 %v1509
          %3261 = vmatpush1.msra.mxu0 %v1508
          %3262 = vmatprep.subr.mxu0 %v1515
          %3263 = vmatpush1.msra.mxu0 %v1514
          %3264 = vmatprep.subr.mxu0 %v1521
          %3265 = vmatpush1.msra.mxu0 %v1520
          %3266 = vmatprep.subr.mxu0 %v1527
          %3267 = vmatpush1.msra.mxu0 %v1526
          %3268 = vmatprep.subr.mxu0 %v1533
          %3269 = vmatpush1.msra.mxu0 %v1532
          %3270 = vmatprep.subr.mxu0 %v1539
          %3271 = vmatpush1.msra.mxu0 %v1538
          %3272 = vmatprep.subr.mxu0 %v1545
          %3273 = vmatpush1.msra.mxu0 %v1544
          %3274 = vmatprep.subr.mxu0 %v1551
          %3275 = vmatpush1.msra.mxu0 %v1550
          %3276 = vmatprep.subr.mxu0 %v1557
          %3277 = vmatpush1.msra.mxu0 %v1556
          %3278 = vmatprep.subr.mxu0 %v1563
          %3279 = vmatpush1.msra.mxu0 %v1562
          %3280 = vmatprep.subr.mxu0 %v1569
          %3281 = vmatpush1.msra.mxu0 %v1568
          %3282 = vmatprep.subr.mxu0 %v1575
          %3283 = vmatpush1.msra.mxu0 %v1574
          %3284 = vmatprep.subr.mxu0 %v1581
          %3285 = vmatpush1.msra.mxu0 %v1580
          %3286 = vmatprep.subr.mxu0 %v1587
          %3287 = vmatpush1.msra.mxu0 %v1586
          %3288 = vmatprep.subr.mxu0 %v1593
          %3289 = vmatpush1.msra.mxu0 %v1592
          %3290 = vmatprep.subr.mxu0 %v1599
          %3291 = vmatpush1.msra.mxu0 %v1598
          %3292 = vmatprep.subr.mxu0 %v1605
          %3293 = vmatpush1.msra.mxu0 %v1604
          %3294 = vmatprep.subr.mxu0 %v1611
          %3295 = vmatpush1.msra.mxu0 %v1610
          %3296 = vmatprep.subr.mxu0 %v1617
          %3297 = vmatpush1.msra.mxu0 %v1616
          %3298 = vmatprep.subr.mxu0 %v1623
          %3299 = vmatpush1.msra.mxu0 %v1622
          %3300 = vmatprep.subr.mxu0 %v1629
          %3301 = vmatpush1.msra.mxu0 %v1628
          %3302 = vmatprep.subr.mxu0 %v1635
          %3303 = vmatpush1.msra.mxu0 %v1634
          %3304 = vmatprep.subr.mxu0 %v1641
          %3305 = vmatpush1.msra.mxu0 %v1640
          %3306 = vmatprep.subr.mxu0 %v1647
          %3307 = vmatpush1.msra.mxu0 %v1646
          %3308 = vmatprep.subr.mxu0 %v1653
          %3309 = vmatpush1.msra.mxu0 %v1652
          %3310 = vmatprep.subr.mxu0 %v1659
          %3311 = vmatpush1.msra.mxu0 %v1658
          %3312 = vmatprep.subr.mxu0 %v1665
          %3313 = vmatpush1.msra.mxu0 %v1664
          %3314 = vmatprep.subr.mxu0 %v1671
          %3315 = vmatpush1.msra.mxu0 %v1670
          %3316 = vmatprep.subr.mxu0 %v1677
          %3317 = vmatpush1.msra.mxu0 %v1676
          %3318 = vmatprep.mubr.f32.mxu0 %v2123
          %3319 = vmatmul.mubr.f32.gmra.mrb[0].mxu0 %v2119
          %v3320 = vpop.f32.mrb[0].mxu0
          %v3321 = vadd.f32 %v3250, %v3320
          %v3322 = vpop.f32.mrb[0].mxu0
          %v3323 = vadd.f32 %v3252, %v3322
          %3324 = vdwg.mxu0
          %3325 = vmatprep.subr.mxu0 %v1683
          %3326 = vmatpush1.msra.mxu0 %v1682
          %3327 = vmatprep.subr.mxu0 %v1689
          %3328 = vmatpush1.msra.mxu0 %v1688
          %3329 = vmatprep.subr.mxu0 %v1695
          %3330 = vmatpush1.msra.mxu0 %v1694
          %3331 = vmatprep.subr.mxu0 %v1701
          %3332 = vmatpush1.msra.mxu0 %v1700
          %3333 = vmatprep.subr.mxu0 %v1707
          %3334 = vmatpush1.msra.mxu0 %v1706
          %3335 = vmatprep.subr.mxu0 %v1713
          %3336 = vmatpush1.msra.mxu0 %v1712
          %3337 = vmatprep.subr.mxu0 %v1719
          %3338 = vmatpush1.msra.mxu0 %v1718
          %3339 = vmatprep.subr.mxu0 %v1725
          %3340 = vmatpush1.msra.mxu0 %v1724
          %3341 = vmatprep.subr.mxu0 %v1731
          %3342 = vmatpush1.msra.mxu0 %v1730
          %3343 = vmatprep.subr.mxu0 %v1737
          %3344 = vmatpush1.msra.mxu0 %v1736
          %3345 = vmatprep.subr.mxu0 %v1743
          %3346 = vmatpush1.msra.mxu0 %v1742
          %3347 = vmatprep.subr.mxu0 %v1749
          %3348 = vmatpush1.msra.mxu0 %v1748
          %3349 = vmatprep.subr.mxu0 %v1755
          %3350 = vmatpush1.msra.mxu0 %v1754
          %3351 = vmatprep.subr.mxu0 %v1761
          %3352 = vmatpush1.msra.mxu0 %v1760
          %3353 = vmatprep.subr.mxu0 %v1767
          %3354 = vmatpush1.msra.mxu0 %v1766
          %3355 = vmatprep.subr.mxu0 %v1773
          %3356 = vmatpush1.msra.mxu0 %v1772
          %3357 = vmatprep.subr.mxu0 %v1779
          %3358 = vmatpush1.msra.mxu0 %v1778
          %3359 = vmatprep.subr.mxu0 %v1785
          %3360 = vmatpush1.msra.mxu0 %v1784
          %3361 = vmatprep.subr.mxu0 %v1791
          %3362 = vmatpush1.msra.mxu0 %v1790
          %3363 = vmatprep.subr.mxu0 %v1797
          %3364 = vmatpush1.msra.mxu0 %v1796
          %3365 = vmatprep.subr.mxu0 %v1803
          %3366 = vmatpush1.msra.mxu0 %v1802
          %3367 = vmatprep.subr.mxu0 %v1809
          %3368 = vmatpush1.msra.mxu0 %v1808
          %3369 = vmatprep.subr.mxu0 %v1815
          %3370 = vmatpush1.msra.mxu0 %v1814
          %3371 = vmatprep.subr.mxu0 %v1821
          %3372 = vmatpush1.msra.mxu0 %v1820
          %3373 = vmatprep.subr.mxu0 %v1827
          %3374 = vmatpush1.msra.mxu0 %v1826
          %3375 = vmatprep.subr.mxu0 %v1833
          %3376 = vmatpush1.msra.mxu0 %v1832
          %3377 = vmatprep.subr.mxu0 %v1839
          %3378 = vmatpush1.msra.mxu0 %v1838
          %3379 = vmatprep.subr.mxu0 %v1845
          %3380 = vmatpush1.msra.mxu0 %v1844
          %3381 = vmatprep.subr.mxu0 %v1851
          %3382 = vmatpush1.msra.mxu0 %v1850
          %3383 = vmatprep.subr.mxu0 %v1857
          %3384 = vmatpush1.msra.mxu0 %v1856
          %3385 = vmatprep.subr.mxu0 %v1863
          %3386 = vmatpush1.msra.mxu0 %v1862
          %3387 = vmatprep.subr.mxu0 %v1869
          %3388 = vmatpush1.msra.mxu0 %v1868
          %3389 = vmatprep.mubr.f32.mxu0 %v2131
          %3390 = vmatmul.mubr.f32.gmra.mrb[0].mxu0 %v2127
          %v3391 = vpop.f32.mrb[0].mxu0
          %v3392 = vadd.f32 %v3321, %v3391
          %v3393 = vpop.f32.mrb[0].mxu0
          %v3394 = vadd.f32 %v3323, %v3393
          %3395 = vdwg.mxu0
          %3396 = vmatprep.subr.mxu0 %v1875
          %3397 = vmatpush1.msra.mxu0 %v1874
          %3398 = vmatprep.subr.mxu0 %v1881
          %3399 = vmatpush1.msra.mxu0 %v1880
          %3400 = vmatprep.subr.mxu0 %v1887
          %3401 = vmatpush1.msra.mxu0 %v1886
          %3402 = vmatprep.subr.mxu0 %v1893
          %3403 = vmatpush1.msra.mxu0 %v1892
          %3404 = vmatprep.subr.mxu0 %v1899
          %3405 = vmatpush1.msra.mxu0 %v1898
          %3406 = vmatprep.subr.mxu0 %v1905
          %3407 = vmatpush1.msra.mxu0 %v1904
          %3408 = vmatprep.subr.mxu0 %v1911
          %3409 = vmatpush1.msra.mxu0 %v1910
          %3410 = vmatprep.subr.mxu0 %v1917
          %3411 = vmatpush1.msra.mxu0 %v1916
          %3412 = vmatprep.subr.mxu0 %v1923
          %3413 = vmatpush1.msra.mxu0 %v1922
          %3414 = vmatprep.subr.mxu0 %v1929
          %3415 = vmatpush1.msra.mxu0 %v1928
          %3416 = vmatprep.subr.mxu0 %v1935
          %3417 = vmatpush1.msra.mxu0 %v1934
          %3418 = vmatprep.subr.mxu0 %v1941
          %3419 = vmatpush1.msra.mxu0 %v1940
          %3420 = vmatprep.subr.mxu0 %v1947
          %3421 = vmatpush1.msra.mxu0 %v1946
          %3422 = vmatprep.subr.mxu0 %v1953
          %3423 = vmatpush1.msra.mxu0 %v1952
          %3424 = vmatprep.subr.mxu0 %v1959
          %3425 = vmatpush1.msra.mxu0 %v1958
          %3426 = vmatprep.subr.mxu0 %v1965
          %3427 = vmatpush1.msra.mxu0 %v1964
          %3428 = vmatprep.subr.mxu0 %v1971
          %3429 = vmatpush1.msra.mxu0 %v1970
          %3430 = vmatprep.subr.mxu0 %v1977
          %3431 = vmatpush1.msra.mxu0 %v1976
          %3432 = vmatprep.subr.mxu0 %v1983
          %3433 = vmatpush1.msra.mxu0 %v1982
          %3434 = vmatprep.subr.mxu0 %v1989
          %3435 = vmatpush1.msra.mxu0 %v1988
          %3436 = vmatprep.subr.mxu0 %v1995
          %3437 = vmatpush1.msra.mxu0 %v1994
          %3438 = vmatprep.subr.mxu0 %v2001
          %3439 = vmatpush1.msra.mxu0 %v2000
          %3440 = vmatprep.subr.mxu0 %v2007
          %3441 = vmatpush1.msra.mxu0 %v2006
          %3442 = vmatprep.subr.mxu0 %v2013
          %3443 = vmatpush1.msra.mxu0 %v2012
          %3444 = vmatprep.subr.mxu0 %v2019
          %3445 = vmatpush1.msra.mxu0 %v2018
          %3446 = vmatprep.subr.mxu0 %v2025
          %3447 = vmatpush1.msra.mxu0 %v2024
          %3448 = vmatprep.subr.mxu0 %v2031
          %3449 = vmatpush1.msra.mxu0 %v2030
          %3450 = vmatprep.subr.mxu0 %v2037
          %3451 = vmatpush1.msra.mxu0 %v2036
          %3452 = vmatprep.subr.mxu0 %v2043
          %3453 = vmatpush1.msra.mxu0 %v2042
          %3454 = vmatprep.subr.mxu0 %v2049
          %3455 = vmatpush1.msra.mxu0 %v2048
          %3456 = vmatprep.subr.mxu0 %v2055
          %3457 = vmatpush1.msra.mxu0 %v2054
          %3458 = vmatprep.subr.mxu0 %v2061
          %3459 = vmatpush1.msra.mxu0 %v2060
          %3460 = vmatprep.mubr.f32.mxu0 %v2139
          %3461 = vmatmul.mubr.f32.gmra.mrb[0].mxu0 %v2135
          %v3462 = vpop.f32.mrb[0].mxu0
          %v3463 = vadd.f32 %v3392, %v3462
          %v3464 = vpop.f32.mrb[0].mxu0
          %v3465 = vadd.f32 %v3394, %v3464
          %3466 = vdwg.mxu0
          %3467 = vmatprep.subr.mxu0 %v341
          %3468 = vmatpush1.msra.mxu0 %v340
          %3469 = vmatprep.subr.mxu0 %v347
          %3470 = vmatpush1.msra.mxu0 %v346
          %3471 = vmatprep.subr.mxu0 %v353
          %3472 = vmatpush1.msra.mxu0 %v352
          %3473 = vmatprep.subr.mxu0 %v359
          %3474 = vmatpush1.msra.mxu0 %v358
          %3475 = vmatprep.subr.mxu0 %v365
          %3476 = vmatpush1.msra.mxu0 %v364
          %3477 = vmatprep.subr.mxu0 %v371
          %3478 = vmatpush1.msra.mxu0 %v370
          %3479 = vmatprep.subr.mxu0 %v377
          %3480 = vmatpush1.msra.mxu0 %v376
          %3481 = vmatprep.subr.mxu0 %v383
          %3482 = vmatpush1.msra.mxu0 %v382
          %3483 = vmatprep.subr.mxu0 %v389
          %3484 = vmatpush1.msra.mxu0 %v388
          %3485 = vmatprep.subr.mxu0 %v395
          %3486 = vmatpush1.msra.mxu0 %v394
          %3487 = vmatprep.subr.mxu0 %v401
          %3488 = vmatpush1.msra.mxu0 %v400
          %3489 = vmatprep.subr.mxu0 %v407
          %3490 = vmatpush1.msra.mxu0 %v406
          %3491 = vmatprep.subr.mxu0 %v413
          %3492 = vmatpush1.msra.mxu0 %v412
          %3493 = vmatprep.subr.mxu0 %v419
          %3494 = vmatpush1.msra.mxu0 %v418
          %3495 = vmatprep.subr.mxu0 %v425
          %3496 = vmatpush1.msra.mxu0 %v424
          %3497 = vmatprep.subr.mxu0 %v431
          %3498 = vmatpush1.msra.mxu0 %v430
          %3499 = vmatprep.subr.mxu0 %v437
          %3500 = vmatpush1.msra.mxu0 %v436
          %3501 = vmatprep.subr.mxu0 %v443
          %3502 = vmatpush1.msra.mxu0 %v442
          %3503 = vmatprep.subr.mxu0 %v449
          %3504 = vmatpush1.msra.mxu0 %v448
          %3505 = vmatprep.subr.mxu0 %v455
          %3506 = vmatpush1.msra.mxu0 %v454
          %3507 = vmatprep.subr.mxu0 %v461
          %3508 = vmatpush1.msra.mxu0 %v460
          %3509 = vmatprep.subr.mxu0 %v467
          %3510 = vmatpush1.msra.mxu0 %v466
          %3511 = vmatprep.subr.mxu0 %v473
          %3512 = vmatpush1.msra.mxu0 %v472
          %3513 = vmatprep.subr.mxu0 %v479
          %3514 = vmatpush1.msra.mxu0 %v478
          %3515 = vmatprep.subr.mxu0 %v485
          %3516 = vmatpush1.msra.mxu0 %v484
          %3517 = vmatprep.subr.mxu0 %v491
          %3518 = vmatpush1.msra.mxu0 %v490
          %3519 = vmatprep.subr.mxu0 %v497
          %3520 = vmatpush1.msra.mxu0 %v496
          %3521 = vmatprep.subr.mxu0 %v503
          %3522 = vmatpush1.msra.mxu0 %v502
          %3523 = vmatprep.subr.mxu0 %v509
          %3524 = vmatpush1.msra.mxu0 %v508
          %3525 = vmatprep.subr.mxu0 %v515
          %3526 = vmatpush1.msra.mxu0 %v514
          %3527 = vmatprep.subr.mxu0 %v521
          %3528 = vmatpush1.msra.mxu0 %v520
          %3529 = vmatprep.subr.mxu0 %v527
          %3530 = vmatpush1.msra.mxu0 %v526
          %3531 = vmatprep.mubr.f32.mxu0 %v2075
          %3532 = vmatmul.mubr.f32.gmra.mrb[0].mxu0 %v2071
          %v3533 = vpop.f32.mrb[0].mxu0
          %v3534 = vadd.f32 %v2178, %v3533
          %v3535 = vpop.f32.mrb[0].mxu0
          %v3536 = vadd.f32 %v2182, %v3535
          %3537 = vdwg.mxu0
          %3538 = vmatprep.subr.mxu0 %v533
          %3539 = vmatpush1.msra.mxu0 %v532
          %3540 = vmatprep.subr.mxu0 %v539
          %3541 = vmatpush1.msra.mxu0 %v538
          %3542 = vmatprep.subr.mxu0 %v545
          %3543 = vmatpush1.msra.mxu0 %v544
          %3544 = vmatprep.subr.mxu0 %v551
          %3545 = vmatpush1.msra.mxu0 %v550
          %3546 = vmatprep.subr.mxu0 %v557
          %3547 = vmatpush1.msra.mxu0 %v556
          %3548 = vmatprep.subr.mxu0 %v563
          %3549 = vmatpush1.msra.mxu0 %v562
          %3550 = vmatprep.subr.mxu0 %v569
          %3551 = vmatpush1.msra.mxu0 %v568
          %3552 = vmatprep.subr.mxu0 %v575
          %3553 = vmatpush1.msra.mxu0 %v574
          %3554 = vmatprep.subr.mxu0 %v581
          %3555 = vmatpush1.msra.mxu0 %v580
          %3556 = vmatprep.subr.mxu0 %v587
          %3557 = vmatpush1.msra.mxu0 %v586
          %3558 = vmatprep.subr.mxu0 %v593
          %3559 = vmatpush1.msra.mxu0 %v592
          %3560 = vmatprep.subr.mxu0 %v599
          %3561 = vmatpush1.msra.mxu0 %v598
          %3562 = vmatprep.subr.mxu0 %v605
          %3563 = vmatpush1.msra.mxu0 %v604
          %3564 = vmatprep.subr.mxu0 %v611
          %3565 = vmatpush1.msra.mxu0 %v610
          %3566 = vmatprep.subr.mxu0 %v617
          %3567 = vmatpush1.msra.mxu0 %v616
          %3568 = vmatprep.subr.mxu0 %v623
          %3569 = vmatpush1.msra.mxu0 %v622
          %3570 = vmatprep.subr.mxu0 %v629
          %3571 = vmatpush1.msra.mxu0 %v628
          %3572 = vmatprep.subr.mxu0 %v635
          %3573 = vmatpush1.msra.mxu0 %v634
          %3574 = vmatprep.subr.mxu0 %v641
          %3575 = vmatpush1.msra.mxu0 %v640
          %3576 = vmatprep.subr.mxu0 %v647
          %3577 = vmatpush1.msra.mxu0 %v646
          %3578 = vmatprep.subr.mxu0 %v653
          %3579 = vmatpush1.msra.mxu0 %v652
          %3580 = vmatprep.subr.mxu0 %v659
          %3581 = vmatpush1.msra.mxu0 %v658
          %3582 = vmatprep.subr.mxu0 %v665
          %3583 = vmatpush1.msra.mxu0 %v664
          %3584 = vmatprep.subr.mxu0 %v671
          %3585 = vmatpush1.msra.mxu0 %v670
          %3586 = vmatprep.subr.mxu0 %v677
          %3587 = vmatpush1.msra.mxu0 %v676
          %3588 = vmatprep.subr.mxu0 %v683
          %3589 = vmatpush1.msra.mxu0 %v682
          %3590 = vmatprep.subr.mxu0 %v689
          %3591 = vmatpush1.msra.mxu0 %v688
          %3592 = vmatprep.subr.mxu0 %v695
          %3593 = vmatpush1.msra.mxu0 %v694
          %3594 = vmatprep.subr.mxu0 %v701
          %3595 = vmatpush1.msra.mxu0 %v700
          %3596 = vmatprep.subr.mxu0 %v707
          %3597 = vmatpush1.msra.mxu0 %v706
          %3598 = vmatprep.subr.mxu0 %v713
          %3599 = vmatpush1.msra.mxu0 %v712
          %3600 = vmatprep.subr.mxu0 %v719
          %3601 = vmatpush1.msra.mxu0 %v718
          %3602 = vmatprep.mubr.f32.mxu0 %v2083
          %3603 = vmatmul.mubr.f32.gmra.mrb[0].mxu0 %v2079
          %v3604 = vpop.f32.mrb[0].mxu0
          %v3605 = vadd.f32 %v3534, %v3604
          %v3606 = vpop.f32.mrb[0].mxu0
          %v3607 = vadd.f32 %v3536, %v3606
          %3608 = vdwg.mxu0
          %3609 = vmatprep.subr.mxu0 %v725
          %3610 = vmatpush1.msra.mxu0 %v724
          %3611 = vmatprep.subr.mxu0 %v731
          %3612 = vmatpush1.msra.mxu0 %v730
          %3613 = vmatprep.subr.mxu0 %v737
          %3614 = vmatpush1.msra.mxu0 %v736
          %3615 = vmatprep.subr.mxu0 %v743
          %3616 = vmatpush1.msra.mxu0 %v742
          %3617 = vmatprep.subr.mxu0 %v749
          %3618 = vmatpush1.msra.mxu0 %v748
          %3619 = vmatprep.subr.mxu0 %v755
          %3620 = vmatpush1.msra.mxu0 %v754
          %3621 = vmatprep.subr.mxu0 %v761
          %3622 = vmatpush1.msra.mxu0 %v760
          %3623 = vmatprep.subr.mxu0 %v767
          %3624 = vmatpush1.msra.mxu0 %v766
          %3625 = vmatprep.subr.mxu0 %v773
          %3626 = vmatpush1.msra.mxu0 %v772
          %3627 = vmatprep.subr.mxu0 %v779
          %3628 = vmatpush1.msra.mxu0 %v778
          %3629 = vmatprep.subr.mxu0 %v785
          %3630 = vmatpush1.msra.mxu0 %v784
          %3631 = vmatprep.subr.mxu0 %v791
          %3632 = vmatpush1.msra.mxu0 %v790
          %3633 = vmatprep.subr.mxu0 %v797
          %3634 = vmatpush1.msra.mxu0 %v796
          %3635 = vmatprep.subr.mxu0 %v803
          %3636 = vmatpush1.msra.mxu0 %v802
          %3637 = vmatprep.subr.mxu0 %v809
          %3638 = vmatpush1.msra.mxu0 %v808
          %3639 = vmatprep.subr.mxu0 %v815
          %3640 = vmatpush1.msra.mxu0 %v814
          %3641 = vmatprep.subr.mxu0 %v821
          %3642 = vmatpush1.msra.mxu0 %v820
          %3643 = vmatprep.subr.mxu0 %v827
          %3644 = vmatpush1.msra.mxu0 %v826
          %3645 = vmatprep.subr.mxu0 %v833
          %3646 = vmatpush1.msra.mxu0 %v832
          %3647 = vmatprep.subr.mxu0 %v839
          %3648 = vmatpush1.msra.mxu0 %v838
          %3649 = vmatprep.subr.mxu0 %v845
          %3650 = vmatpush1.msra.mxu0 %v844
          %3651 = vmatprep.subr.mxu0 %v851
          %3652 = vmatpush1.msra.mxu0 %v850
          %3653 = vmatprep.subr.mxu0 %v857
          %3654 = vmatpush1.msra.mxu0 %v856
          %3655 = vmatprep.subr.mxu0 %v863
          %3656 = vmatpush1.msra.mxu0 %v862
          %3657 = vmatprep.subr.mxu0 %v869
          %3658 = vmatpush1.msra.mxu0 %v868
          %3659 = vmatprep.subr.mxu0 %v875
          %3660 = vmatpush1.msra.mxu0 %v874
          %3661 = vmatprep.subr.mxu0 %v881
          %3662 = vmatpush1.msra.mxu0 %v880
          %3663 = vmatprep.subr.mxu0 %v887
          %3664 = vmatpush1.msra.mxu0 %v886
          %3665 = vmatprep.subr.mxu0 %v893
          %3666 = vmatpush1.msra.mxu0 %v892
          %3667 = vmatprep.subr.mxu0 %v899
          %3668 = vmatpush1.msra.mxu0 %v898
          %3669 = vmatprep.subr.mxu0 %v905
          %3670 = vmatpush1.msra.mxu0 %v904
          %3671 = vmatprep.subr.mxu0 %v911
          %3672 = vmatpush1.msra.mxu0 %v910
          %3673 = vmatprep.mubr.f32.mxu0 %v2091
          %3674 = vmatmul.mubr.f32.gmra.mrb[0].mxu0 %v2087
          %v3675 = vpop.f32.mrb[0].mxu0
          %v3676 = vadd.f32 %v3605, %v3675
          %v3677 = vpop.f32.mrb[0].mxu0
          %v3678 = vadd.f32 %v3607, %v3677
          %3679 = vdwg.mxu0
          %3680 = vmatprep.subr.mxu0 %v917
          %3681 = vmatpush1.msra.mxu0 %v916
          %3682 = vmatprep.subr.mxu0 %v923
          %3683 = vmatpush1.msra.mxu0 %v922
          %3684 = vmatprep.subr.mxu0 %v929
          %3685 = vmatpush1.msra.mxu0 %v928
          %3686 = vmatprep.subr.mxu0 %v935
          %3687 = vmatpush1.msra.mxu0 %v934
          %3688 = vmatprep.subr.mxu0 %v941
          %3689 = vmatpush1.msra.mxu0 %v940
          %3690 = vmatprep.subr.mxu0 %v947
          %3691 = vmatpush1.msra.mxu0 %v946
          %3692 = vmatprep.subr.mxu0 %v953
          %3693 = vmatpush1.msra.mxu0 %v952
          %3694 = vmatprep.subr.mxu0 %v959
          %3695 = vmatpush1.msra.mxu0 %v958
          %3696 = vmatprep.subr.mxu0 %v965
          %3697 = vmatpush1.msra.mxu0 %v964
          %3698 = vmatprep.subr.mxu0 %v971
          %3699 = vmatpush1.msra.mxu0 %v970
          %3700 = vmatprep.subr.mxu0 %v977
          %3701 = vmatpush1.msra.mxu0 %v976
          %3702 = vmatprep.subr.mxu0 %v983
          %3703 = vmatpush1.msra.mxu0 %v982
          %3704 = vmatprep.subr.mxu0 %v989
          %3705 = vmatpush1.msra.mxu0 %v988
          %3706 = vmatprep.subr.mxu0 %v995
          %3707 = vmatpush1.msra.mxu0 %v994
          %3708 = vmatprep.subr.mxu0 %v1001
          %3709 = vmatpush1.msra.mxu0 %v1000
          %3710 = vmatprep.subr.mxu0 %v1007
          %3711 = vmatpush1.msra.mxu0 %v1006
          %3712 = vmatprep.subr.mxu0 %v1013
          %3713 = vmatpush1.msra.mxu0 %v1012
          %3714 = vmatprep.subr.mxu0 %v1019
          %3715 = vmatpush1.msra.mxu0 %v1018
          %3716 = vmatprep.subr.mxu0 %v1025
          %3717 = vmatpush1.msra.mxu0 %v1024
          %3718 = vmatprep.subr.mxu0 %v1031
          %3719 = vmatpush1.msra.mxu0 %v1030
          %3720 = vmatprep.subr.mxu0 %v1037
          %3721 = vmatpush1.msra.mxu0 %v1036
          %3722 = vmatprep.subr.mxu0 %v1043
          %3723 = vmatpush1.msra.mxu0 %v1042
          %3724 = vmatprep.subr.mxu0 %v1049
          %3725 = vmatpush1.msra.mxu0 %v1048
          %3726 = vmatprep.subr.mxu0 %v1055
          %3727 = vmatpush1.msra.mxu0 %v1054
          %3728 = vmatprep.subr.mxu0 %v1061
          %3729 = vmatpush1.msra.mxu0 %v1060
          %3730 = vmatprep.subr.mxu0 %v1067
          %3731 = vmatpush1.msra.mxu0 %v1066
          %3732 = vmatprep.subr.mxu0 %v1073
          %3733 = vmatpush1.msra.mxu0 %v1072
          %3734 = vmatprep.subr.mxu0 %v1079
          %3735 = vmatpush1.msra.mxu0 %v1078
          %3736 = vmatprep.subr.mxu0 %v1085
          %3737 = vmatpush1.msra.mxu0 %v1084
          %3738 = vmatprep.subr.mxu0 %v1091
          %3739 = vmatpush1.msra.mxu0 %v1090
          %3740 = vmatprep.subr.mxu0 %v1097
          %3741 = vmatpush1.msra.mxu0 %v1096
          %3742 = vmatprep.subr.mxu0 %v1103
          %3743 = vmatpush1.msra.mxu0 %v1102
          %3744 = vmatprep.mubr.f32.mxu0 %v2099
          %3745 = vmatmul.mubr.f32.gmra.mrb[0].mxu0 %v2095
          %v3746 = vpop.f32.mrb[0].mxu0
          %v3747 = vadd.f32 %v3676, %v3746
          %v3748 = vpop.f32.mrb[0].mxu0
          %v3749 = vadd.f32 %v3678, %v3748
          %3750 = vdwg.mxu0
          %3751 = vmatprep.subr.mxu0 %v1109
          %3752 = vmatpush1.msra.mxu0 %v1108
          %3753 = vmatprep.subr.mxu0 %v1115
          %3754 = vmatpush1.msra.mxu0 %v1114
          %3755 = vmatprep.subr.mxu0 %v1121
          %3756 = vmatpush1.msra.mxu0 %v1120
          %3757 = vmatprep.subr.mxu0 %v1127
          %3758 = vmatpush1.msra.mxu0 %v1126
          %3759 = vmatprep.subr.mxu0 %v1133
          %3760 = vmatpush1.msra.mxu0 %v1132
          %3761 = vmatprep.subr.mxu0 %v1139
          %3762 = vmatpush1.msra.mxu0 %v1138
          %3763 = vmatprep.subr.mxu0 %v1145
          %3764 = vmatpush1.msra.mxu0 %v1144
          %3765 = vmatprep.subr.mxu0 %v1151
          %3766 = vmatpush1.msra.mxu0 %v1150
          %3767 = vmatprep.subr.mxu0 %v1157
          %3768 = vmatpush1.msra.mxu0 %v1156
          %3769 = vmatprep.subr.mxu0 %v1163
          %3770 = vmatpush1.msra.mxu0 %v1162
          %3771 = vmatprep.subr.mxu0 %v1169
          %3772 = vmatpush1.msra.mxu0 %v1168
          %3773 = vmatprep.subr.mxu0 %v1175
          %3774 = vmatpush1.msra.mxu0 %v1174
          %3775 = vmatprep.subr.mxu0 %v1181
          %3776 = vmatpush1.msra.mxu0 %v1180
          %3777 = vmatprep.subr.mxu0 %v1187
          %3778 = vmatpush1.msra.mxu0 %v1186
          %3779 = vmatprep.subr.mxu0 %v1193
          %3780 = vmatpush1.msra.mxu0 %v1192
          %3781 = vmatprep.subr.mxu0 %v1199
          %3782 = vmatpush1.msra.mxu0 %v1198
          %3783 = vmatprep.subr.mxu0 %v1205
          %3784 = vmatpush1.msra.mxu0 %v1204
          %3785 = vmatprep.subr.mxu0 %v1211
          %3786 = vmatpush1.msra.mxu0 %v1210
          %3787 = vmatprep.subr.mxu0 %v1217
          %3788 = vmatpush1.msra.mxu0 %v1216
          %3789 = vmatprep.subr.mxu0 %v1223
          %3790 = vmatpush1.msra.mxu0 %v1222
          %3791 = vmatprep.subr.mxu0 %v1229
          %3792 = vmatpush1.msra.mxu0 %v1228
          %3793 = vmatprep.subr.mxu0 %v1235
          %3794 = vmatpush1.msra.mxu0 %v1234
          %3795 = vmatprep.subr.mxu0 %v1241
          %3796 = vmatpush1.msra.mxu0 %v1240
          %3797 = vmatprep.subr.mxu0 %v1247
          %3798 = vmatpush1.msra.mxu0 %v1246
          %3799 = vmatprep.subr.mxu0 %v1253
          %3800 = vmatpush1.msra.mxu0 %v1252
          %3801 = vmatprep.subr.mxu0 %v1259
          %3802 = vmatpush1.msra.mxu0 %v1258
          %3803 = vmatprep.subr.mxu0 %v1265
          %3804 = vmatpush1.msra.mxu0 %v1264
          %3805 = vmatprep.subr.mxu0 %v1271
          %3806 = vmatpush1.msra.mxu0 %v1270
          %3807 = vmatprep.subr.mxu0 %v1277
          %3808 = vmatpush1.msra.mxu0 %v1276
          %3809 = vmatprep.subr.mxu0 %v1283
          %3810 = vmatpush1.msra.mxu0 %v1282
          %3811 = vmatprep.subr.mxu0 %v1289
          %3812 = vmatpush1.msra.mxu0 %v1288
          %3813 = vmatprep.subr.mxu0 %v1295
          %3814 = vmatpush1.msra.mxu0 %v1294
          %3815 = vmatprep.mubr.f32.mxu0 %v2107
          %3816 = vmatmul.mubr.f32.gmra.mrb[0].mxu0 %v2103
          %v3817 = vpop.f32.mrb[0].mxu0
          %v3818 = vadd.f32 %v3747, %v3817
          %v3819 = vpop.f32.mrb[0].mxu0
          %v3820 = vadd.f32 %v3749, %v3819
          %3821 = vdwg.mxu0
          %3822 = vmatprep.subr.mxu0 %v1301
          %3823 = vmatpush1.msra.mxu0 %v1300
          %3824 = vmatprep.subr.mxu0 %v1307
          %3825 = vmatpush1.msra.mxu0 %v1306
          %3826 = vmatprep.subr.mxu0 %v1313
          %3827 = vmatpush1.msra.mxu0 %v1312
          %3828 = vmatprep.subr.mxu0 %v1319
          %3829 = vmatpush1.msra.mxu0 %v1318
          %3830 = vmatprep.subr.mxu0 %v1325
          %3831 = vmatpush1.msra.mxu0 %v1324
          %3832 = vmatprep.subr.mxu0 %v1331
          %3833 = vmatpush1.msra.mxu0 %v1330
          %3834 = vmatprep.subr.mxu0 %v1337
          %3835 = vmatpush1.msra.mxu0 %v1336
          %3836 = vmatprep.subr.mxu0 %v1343
          %3837 = vmatpush1.msra.mxu0 %v1342
          %3838 = vmatprep.subr.mxu0 %v1349
          %3839 = vmatpush1.msra.mxu0 %v1348
          %3840 = vmatprep.subr.mxu0 %v1355
          %3841 = vmatpush1.msra.mxu0 %v1354
          %3842 = vmatprep.subr.mxu0 %v1361
          %3843 = vmatpush1.msra.mxu0 %v1360
          %3844 = vmatprep.subr.mxu0 %v1367
          %3845 = vmatpush1.msra.mxu0 %v1366
          %3846 = vmatprep.subr.mxu0 %v1373
          %3847 = vmatpush1.msra.mxu0 %v1372
          %3848 = vmatprep.subr.mxu0 %v1379
          %3849 = vmatpush1.msra.mxu0 %v1378
          %3850 = vmatprep.subr.mxu0 %v1385
          %3851 = vmatpush1.msra.mxu0 %v1384
          %3852 = vmatprep.subr.mxu0 %v1391
          %3853 = vmatpush1.msra.mxu0 %v1390
          %3854 = vmatprep.subr.mxu0 %v1397
          %3855 = vmatpush1.msra.mxu0 %v1396
          %3856 = vmatprep.subr.mxu0 %v1403
          %3857 = vmatpush1.msra.mxu0 %v1402
          %3858 = vmatprep.subr.mxu0 %v1409
          %3859 = vmatpush1.msra.mxu0 %v1408
          %3860 = vmatprep.subr.mxu0 %v1415
          %3861 = vmatpush1.msra.mxu0 %v1414
          %3862 = vmatprep.subr.mxu0 %v1421
          %3863 = vmatpush1.msra.mxu0 %v1420
          %3864 = vmatprep.subr.mxu0 %v1427
          %3865 = vmatpush1.msra.mxu0 %v1426
          %3866 = vmatprep.subr.mxu0 %v1433
          %3867 = vmatpush1.msra.mxu0 %v1432
          %3868 = vmatprep.subr.mxu0 %v1439
          %3869 = vmatpush1.msra.mxu0 %v1438
          %3870 = vmatprep.subr.mxu0 %v1445
          %3871 = vmatpush1.msra.mxu0 %v1444
          %3872 = vmatprep.subr.mxu0 %v1451
          %3873 = vmatpush1.msra.mxu0 %v1450
          %3874 = vmatprep.subr.mxu0 %v1457
          %3875 = vmatpush1.msra.mxu0 %v1456
          %3876 = vmatprep.subr.mxu0 %v1463
          %3877 = vmatpush1.msra.mxu0 %v1462
          %3878 = vmatprep.subr.mxu0 %v1469
          %3879 = vmatpush1.msra.mxu0 %v1468
          %3880 = vmatprep.subr.mxu0 %v1475
          %3881 = vmatpush1.msra.mxu0 %v1474
          %3882 = vmatprep.subr.mxu0 %v1481
          %3883 = vmatpush1.msra.mxu0 %v1480
          %3884 = vmatprep.subr.mxu0 %v1487
          %3885 = vmatpush1.msra.mxu0 %v1486
          %3886 = vmatprep.mubr.f32.mxu0 %v2115
          %3887 = vmatmul.mubr.f32.gmra.mrb[0].mxu0 %v2111
          %v3888 = vpop.f32.mrb[0].mxu0
          %v3889 = vadd.f32 %v3818, %v3888
          %v3890 = vpop.f32.mrb[0].mxu0
          %v3891 = vadd.f32 %v3820, %v3890
          %3892 = vdwg.mxu0
          %3893 = vmatprep.subr.mxu0 %v1493
          %3894 = vmatpush1.msra.mxu0 %v1492
          %3895 = vmatprep.subr.mxu0 %v1499
          %3896 = vmatpush1.msra.mxu0 %v1498
          %3897 = vmatprep.subr.mxu0 %v1505
          %3898 = vmatpush1.msra.mxu0 %v1504
          %3899 = vmatprep.subr.mxu0 %v1511
          %3900 = vmatpush1.msra.mxu0 %v1510
          %3901 = vmatprep.subr.mxu0 %v1517
          %3902 = vmatpush1.msra.mxu0 %v1516
          %3903 = vmatprep.subr.mxu0 %v1523
          %3904 = vmatpush1.msra.mxu0 %v1522
          %3905 = vmatprep.subr.mxu0 %v1529
          %3906 = vmatpush1.msra.mxu0 %v1528
          %3907 = vmatprep.subr.mxu0 %v1535
          %3908 = vmatpush1.msra.mxu0 %v1534
          %3909 = vmatprep.subr.mxu0 %v1541
          %3910 = vmatpush1.msra.mxu0 %v1540
          %3911 = vmatprep.subr.mxu0 %v1547
          %3912 = vmatpush1.msra.mxu0 %v1546
          %3913 = vmatprep.subr.mxu0 %v1553
          %3914 = vmatpush1.msra.mxu0 %v1552
          %3915 = vmatprep.subr.mxu0 %v1559
          %3916 = vmatpush1.msra.mxu0 %v1558
          %3917 = vmatprep.subr.mxu0 %v1565
          %3918 = vmatpush1.msra.mxu0 %v1564
          %3919 = vmatprep.subr.mxu0 %v1571
          %3920 = vmatpush1.msra.mxu0 %v1570
          %3921 = vmatprep.subr.mxu0 %v1577
          %3922 = vmatpush1.msra.mxu0 %v1576
          %3923 = vmatprep.subr.mxu0 %v1583
          %3924 = vmatpush1.msra.mxu0 %v1582
          %3925 = vmatprep.subr.mxu0 %v1589
          %3926 = vmatpush1.msra.mxu0 %v1588
          %3927 = vmatprep.subr.mxu0 %v1595
          %3928 = vmatpush1.msra.mxu0 %v1594
          %3929 = vmatprep.subr.mxu0 %v1601
          %3930 = vmatpush1.msra.mxu0 %v1600
          %3931 = vmatprep.subr.mxu0 %v1607
          %3932 = vmatpush1.msra.mxu0 %v1606
          %3933 = vmatprep.subr.mxu0 %v1613
          %3934 = vmatpush1.msra.mxu0 %v1612
          %3935 = vmatprep.subr.mxu0 %v1619
          %3936 = vmatpush1.msra.mxu0 %v1618
          %3937 = vmatprep.subr.mxu0 %v1625
          %3938 = vmatpush1.msra.mxu0 %v1624
          %3939 = vmatprep.subr.mxu0 %v1631
          %3940 = vmatpush1.msra.mxu0 %v1630
          %3941 = vmatprep.subr.mxu0 %v1637
          %3942 = vmatpush1.msra.mxu0 %v1636
          %3943 = vmatprep.subr.mxu0 %v1643
          %3944 = vmatpush1.msra.mxu0 %v1642
          %3945 = vmatprep.subr.mxu0 %v1649
          %3946 = vmatpush1.msra.mxu0 %v1648
          %3947 = vmatprep.subr.mxu0 %v1655
          %3948 = vmatpush1.msra.mxu0 %v1654
          %3949 = vmatprep.subr.mxu0 %v1661
          %3950 = vmatpush1.msra.mxu0 %v1660
          %3951 = vmatprep.subr.mxu0 %v1667
          %3952 = vmatpush1.msra.mxu0 %v1666
          %3953 = vmatprep.subr.mxu0 %v1673
          %3954 = vmatpush1.msra.mxu0 %v1672
          %3955 = vmatprep.subr.mxu0 %v1679
          %3956 = vmatpush1.msra.mxu0 %v1678
          %3957 = vmatprep.mubr.f32.mxu0 %v2123
          %3958 = vmatmul.mubr.f32.gmra.mrb[0].mxu0 %v2119
          %v3959 = vpop.f32.mrb[0].mxu0
          %v3960 = vadd.f32 %v3889, %v3959
          %v3961 = vpop.f32.mrb[0].mxu0
          %v3962 = vadd.f32 %v3891, %v3961
          %3963 = vdwg.mxu0
          %3964 = vmatprep.subr.mxu0 %v1685
          %3965 = vmatpush1.msra.mxu0 %v1684
          %3966 = vmatprep.subr.mxu0 %v1691
          %3967 = vmatpush1.msra.mxu0 %v1690
          %3968 = vmatprep.subr.mxu0 %v1697
          %3969 = vmatpush1.msra.mxu0 %v1696
          %3970 = vmatprep.subr.mxu0 %v1703
          %3971 = vmatpush1.msra.mxu0 %v1702
          %3972 = vmatprep.subr.mxu0 %v1709
          %3973 = vmatpush1.msra.mxu0 %v1708
          %3974 = vmatprep.subr.mxu0 %v1715
          %3975 = vmatpush1.msra.mxu0 %v1714
          %3976 = vmatprep.subr.mxu0 %v1721
          %3977 = vmatpush1.msra.mxu0 %v1720
          %3978 = vmatprep.subr.mxu0 %v1727
          %3979 = vmatpush1.msra.mxu0 %v1726
          %3980 = vmatprep.subr.mxu0 %v1733
          %3981 = vmatpush1.msra.mxu0 %v1732
          %3982 = vmatprep.subr.mxu0 %v1739
          %3983 = vmatpush1.msra.mxu0 %v1738
          %3984 = vmatprep.subr.mxu0 %v1745
          %3985 = vmatpush1.msra.mxu0 %v1744
          %3986 = vmatprep.subr.mxu0 %v1751
          %3987 = vmatpush1.msra.mxu0 %v1750
          %3988 = vmatprep.subr.mxu0 %v1757
          %3989 = vmatpush1.msra.mxu0 %v1756
          %3990 = vmatprep.subr.mxu0 %v1763
          %3991 = vmatpush1.msra.mxu0 %v1762
          %3992 = vmatprep.subr.mxu0 %v1769
          %3993 = vmatpush1.msra.mxu0 %v1768
          %3994 = vmatprep.subr.mxu0 %v1775
          %3995 = vmatpush1.msra.mxu0 %v1774
          %3996 = vmatprep.subr.mxu0 %v1781
          %3997 = vmatpush1.msra.mxu0 %v1780
          %3998 = vmatprep.subr.mxu0 %v1787
          %3999 = vmatpush1.msra.mxu0 %v1786
          %4000 = vmatprep.subr.mxu0 %v1793
          %4001 = vmatpush1.msra.mxu0 %v1792
          %4002 = vmatprep.subr.mxu0 %v1799
          %4003 = vmatpush1.msra.mxu0 %v1798
          %4004 = vmatprep.subr.mxu0 %v1805
          %4005 = vmatpush1.msra.mxu0 %v1804
          %4006 = vmatprep.subr.mxu0 %v1811
          %4007 = vmatpush1.msra.mxu0 %v1810
          %4008 = vmatprep.subr.mxu0 %v1817
          %4009 = vmatpush1.msra.mxu0 %v1816
          %4010 = vmatprep.subr.mxu0 %v1823
          %4011 = vmatpush1.msra.mxu0 %v1822
          %4012 = vmatprep.subr.mxu0 %v1829
          %4013 = vmatpush1.msra.mxu0 %v1828
          %4014 = vmatprep.subr.mxu0 %v1835
          %4015 = vmatpush1.msra.mxu0 %v1834
          %4016 = vmatprep.subr.mxu0 %v1841
          %4017 = vmatpush1.msra.mxu0 %v1840
          %4018 = vmatprep.subr.mxu0 %v1847
          %4019 = vmatpush1.msra.mxu0 %v1846
          %4020 = vmatprep.subr.mxu0 %v1853
          %4021 = vmatpush1.msra.mxu0 %v1852
          %4022 = vmatprep.subr.mxu0 %v1859
          %4023 = vmatpush1.msra.mxu0 %v1858
          %4024 = vmatprep.subr.mxu0 %v1865
          %4025 = vmatpush1.msra.mxu0 %v1864
          %4026 = vmatprep.subr.mxu0 %v1871
          %4027 = vmatpush1.msra.mxu0 %v1870
          %4028 = vmatprep.mubr.f32.mxu0 %v2131
          %4029 = vmatmul.mubr.f32.gmra.mrb[0].mxu0 %v2127
          %v4030 = vpop.f32.mrb[0].mxu0
          %v4031 = vadd.f32 %v3960, %v4030
          %v4032 = vpop.f32.mrb[0].mxu0
          %v4033 = vadd.f32 %v3962, %v4032
          %4034 = vdwg.mxu0
          %4035 = vmatprep.subr.mxu0 %v1877
          %4036 = vmatpush1.msra.mxu0 %v1876
          %4037 = vmatprep.subr.mxu0 %v1883
          %4038 = vmatpush1.msra.mxu0 %v1882
          %4039 = vmatprep.subr.mxu0 %v1889
          %4040 = vmatpush1.msra.mxu0 %v1888
          %4041 = vmatprep.subr.mxu0 %v1895
          %4042 = vmatpush1.msra.mxu0 %v1894
          %4043 = vmatprep.subr.mxu0 %v1901
          %4044 = vmatpush1.msra.mxu0 %v1900
          %4045 = vmatprep.subr.mxu0 %v1907
          %4046 = vmatpush1.msra.mxu0 %v1906
          %4047 = vmatprep.subr.mxu0 %v1913
          %4048 = vmatpush1.msra.mxu0 %v1912
          %4049 = vmatprep.subr.mxu0 %v1919
          %4050 = vmatpush1.msra.mxu0 %v1918
          %4051 = vmatprep.subr.mxu0 %v1925
          %4052 = vmatpush1.msra.mxu0 %v1924
          %4053 = vmatprep.subr.mxu0 %v1931
          %4054 = vmatpush1.msra.mxu0 %v1930
          %4055 = vmatprep.subr.mxu0 %v1937
          %4056 = vmatpush1.msra.mxu0 %v1936
          %4057 = vmatprep.subr.mxu0 %v1943
          %4058 = vmatpush1.msra.mxu0 %v1942
          %4059 = vmatprep.subr.mxu0 %v1949
          %4060 = vmatpush1.msra.mxu0 %v1948
          %4061 = vmatprep.subr.mxu0 %v1955
          %4062 = vmatpush1.msra.mxu0 %v1954
          %4063 = vmatprep.subr.mxu0 %v1961
          %4064 = vmatpush1.msra.mxu0 %v1960
          %4065 = vmatprep.subr.mxu0 %v1967
          %4066 = vmatpush1.msra.mxu0 %v1966
          %4067 = vmatprep.subr.mxu0 %v1973
          %4068 = vmatpush1.msra.mxu0 %v1972
          %4069 = vmatprep.subr.mxu0 %v1979
          %4070 = vmatpush1.msra.mxu0 %v1978
          %4071 = vmatprep.subr.mxu0 %v1985
          %4072 = vmatpush1.msra.mxu0 %v1984
          %4073 = vmatprep.subr.mxu0 %v1991
          %4074 = vmatpush1.msra.mxu0 %v1990
          %4075 = vmatprep.subr.mxu0 %v1997
          %4076 = vmatpush1.msra.mxu0 %v1996
          %4077 = vmatprep.subr.mxu0 %v2003
          %4078 = vmatpush1.msra.mxu0 %v2002
          %4079 = vmatprep.subr.mxu0 %v2009
          %4080 = vmatpush1.msra.mxu0 %v2008
          %4081 = vmatprep.subr.mxu0 %v2015
          %4082 = vmatpush1.msra.mxu0 %v2014
          %4083 = vmatprep.subr.mxu0 %v2021
          %4084 = vmatpush1.msra.mxu0 %v2020
          %4085 = vmatprep.subr.mxu0 %v2027
          %4086 = vmatpush1.msra.mxu0 %v2026
          %4087 = vmatprep.subr.mxu0 %v2033
          %4088 = vmatpush1.msra.mxu0 %v2032
          %4089 = vmatprep.subr.mxu0 %v2039
          %4090 = vmatpush1.msra.mxu0 %v2038
          %4091 = vmatprep.subr.mxu0 %v2045
          %4092 = vmatpush1.msra.mxu0 %v2044
          %4093 = vmatprep.subr.mxu0 %v2051
          %4094 = vmatpush1.msra.mxu0 %v2050
          %4095 = vmatprep.subr.mxu0 %v2057
          %4096 = vmatpush1.msra.mxu0 %v2056
          %4097 = vmatprep.subr.mxu0 %v2063
          %4098 = vmatpush1.msra.mxu0 %v2062
          %4099 = vmatprep.mubr.f32.mxu0 %v2139
          %4100 = vmatmul.mubr.f32.gmra.mrb[0].mxu0 %v2135
          %v4101 = vpop.f32.mrb[0].mxu0
          %v4102 = vadd.f32 %v4031, %v4101
          %v4103 = vpop.f32.mrb[0].mxu0
          %v4104 = vadd.f32 %v4033, %v4103
          %4105 = vdwg.mxu0
          %v4112 = vcombine.low %v2824, %v2826
          %v4113 = vcombine.low %v3463, %v3465
          %v4114 = vcombine.low %v4102, %v4104
          %v4116 = vunpack.c.l.s4 1966171168
          %v4117 = vunpack.c.0.s8 %v4116
          %v4118 = vlaneseq
          %v4119 = vshrl.u32 %v4118, 7
          %v4120 = vsub.s32 %v4117, %v4119
          %v4121 = vrot.slane %v4112, %v4120
          %v4123 = vunpack.c.l.s4 1966171168
          %v4124 = vunpack.c.0.s8 %v4123
          %v4125 = vlaneseq
          %v4126 = vshrl.u32 %v4125, 7
          %v4127 = vsub.s32 %v4124, %v4126
          %v4128 = vrot.slane %v4113, %v4127
          %v4130 = vunpack.c.l.s4 1966171168
          %v4131 = vunpack.c.0.s8 %v4130
          %v4132 = vlaneseq
          %v4133 = vshrl.u32 %v4132, 7
          %v4134 = vsub.s32 %v4131, %v4133
          %v4135 = vrot.slane %v4114, %v4134
          %v4136 = vcombine.low %v4121, %v4128
          %v4138 = vunpack.c.l.s4 1966171168
          %v4139 = vunpack.c.0.s8 %v4138
          %v4140 = vlaneseq
          %v4141 = vshrl.u32 %v4140, 7
          %v4142 = vsub.s32 %v4139, %v4141
          %v4143 = vrot.slane %v4136, %v4142
          %v4145 = vunpack.c.l.s4 1966171168
          %v4146 = vunpack.c.0.s8 %v4145
          %v4147 = vlaneseq
          %v4148 = vshrl.u32 %v4147, 7
          %v4149 = vsub.s32 %v4146, %v4148
          %v4150 = vrot.slane %v4135, %v4149
          %v4151 = vcombine.low %v4143, %v4150
          %v4153 = vlaneseq
          %vm4154 = vcmp.ge.s32.totalorder %v4153, 0
          %vm4155 = vcmp.lt.s32.totalorder %v4153, 768
          %vm4156 = vmand %vm4154, %vm4155
          %4157 = vst.msk [vmem:[#allocation2] sm:$0x3f] %vm4156, %v4151
        $region64: #{tpu_custom_call.1} parent=39 // pred_fallthru
          _
        %v4158 = vld [vmem:[%s274] sm:$0xff]
        %v4159 = vld [vmem:[%s274 + $0x8] sm:$0xff]
        %v4160 = vld [vmem:[%s274 + $0x10] sm:$0xff]
        %v4161 = vld [vmem:[#allocation11] sm:$0xff]
        %v4162 = vld [vmem:[#allocation11 + $0x8] sm:$0xff]
        %v4163 = vld [vmem:[#allocation11 + $0x10] sm:$0xff]
        %v4164 = vld [vmem:[#allocation11 + $0x18] sm:$0xff]
        %v4165 = vld [vmem:[#allocation11 + $0x20] sm:$0xff]
        %v4166 = vld [vmem:[#allocation11 + $0x28] sm:$0xff]
        %v4167 = vld [vmem:[#allocation11 + $0x30] sm:$0xff]
        %v4168 = vld [vmem:[#allocation11 + $0x38] sm:$0xff]
        %v4169 = vld [vmem:[#allocation11 + $0x40] sm:$0xff]
        %v4170 = vld [vmem:[#allocation11 + $0x48] sm:$0xff]
        %v4171 = vld [vmem:[#allocation11 + $0x50] sm:$0xff]
        %v4172 = vld [vmem:[#allocation11 + $0x58] sm:$0xff]
        %v4173 = vld [vmem:[#allocation11 + $0x60] sm:$0xff]
        %v4174 = vld [vmem:[#allocation11 + $0x68] sm:$0xff]
        %v4175 = vld [vmem:[#allocation11 + $0x70] sm:$0xff]
        %v4176 = vld [vmem:[#allocation11 + $0x78] sm:$0xff]
        %v4177 = vld [vmem:[#allocation11 + $0x80] sm:$0xff]
        %v4178 = vld [vmem:[#allocation11 + $0x88] sm:$0xff]
        %v4179 = vld [vmem:[#allocation11 + $0x90] sm:$0xff]
        %v4180 = vld [vmem:[#allocation11 + $0x98] sm:$0xff]
        %v4181 = vld [vmem:[#allocation11 + $0xa0] sm:$0xff]
        %v4182 = vld [vmem:[#allocation11 + $0xa8] sm:$0xff]
        %v4183 = vld [vmem:[#allocation11 + $0xb0] sm:$0xff]
        %v4184 = vld [vmem:[#allocation11 + $0xb8] sm:$0xff]
        %v4185 = vld [vmem:[#allocation11 + $0xc0] sm:$0xff]
        %v4186 = vld [vmem:[#allocation11 + $0xc8] sm:$0xff]
        %v4187 = vld [vmem:[#allocation11 + $0xd0] sm:$0xff]
        %v4188 = vld [vmem:[#allocation11 + $0xd8] sm:$0xff]
        %v4189 = vld [vmem:[#allocation11 + $0xe0] sm:$0xff]
        %v4190 = vld [vmem:[#allocation11 + $0xe8] sm:$0xff]
        %v4191 = vld [vmem:[#allocation11 + $0xf0] sm:$0xff]
        %v4192 = vld [vmem:[#allocation11 + $0xf8] sm:$0xff]
        %v4193 = vld [vmem:[#allocation11 + $0x100] sm:$0xff]
        %v4194 = vld [vmem:[#allocation11 + $0x108] sm:$0xff]
        %v4195 = vld [vmem:[#allocation11 + $0x110] sm:$0xff]
        %v4196 = vld [vmem:[#allocation11 + $0x118] sm:$0xff]
        %v4197 = vld [vmem:[#allocation11 + $0x120] sm:$0xff]
        %v4198 = vld [vmem:[#allocation11 + $0x128] sm:$0xff]
        %v4199 = vld [vmem:[#allocation11 + $0x130] sm:$0xff]
        %v4200 = vld [vmem:[#allocation11 + $0x138] sm:$0xff]
        %v4201 = vld [vmem:[#allocation11 + $0x140] sm:$0xff]
        %v4202 = vld [vmem:[#allocation11 + $0x148] sm:$0xff]
        %v4203 = vld [vmem:[#allocation11 + $0x150] sm:$0xff]
        %v4204 = vld [vmem:[#allocation11 + $0x158] sm:$0xff]
        %v4205 = vld [vmem:[#allocation11 + $0x160] sm:$0xff]
        %v4206 = vld [vmem:[#allocation11 + $0x168] sm:$0xff]
        %v4207 = vld [vmem:[#allocation11 + $0x170] sm:$0xff]
        %v4208 = vld [vmem:[#allocation11 + $0x178] sm:$0xff]
        %v4209 = vld [vmem:[#allocation11 + $0x180] sm:$0xff]
        %v4210 = vld [vmem:[#allocation11 + $0x188] sm:$0xff]
        %v4211 = vld [vmem:[#allocation11 + $0x190] sm:$0xff]
        %v4212 = vld [vmem:[#allocation11 + $0x198] sm:$0xff]
        %v4213 = vld [vmem:[#allocation11 + $0x1a0] sm:$0xff]
        %v4214 = vld [vmem:[#allocation11 + $0x1a8] sm:$0xff]
        %v4215 = vld [vmem:[#allocation11 + $0x1b0] sm:$0xff]
        %v4216 = vld [vmem:[#allocation11 + $0x1b8] sm:$0xff]
        %v4217 = vld [vmem:[#allocation11 + $0x1c0] sm:$0xff]
        %v4218 = vld [vmem:[#allocation11 + $0x1c8] sm:$0xff]
        %v4219 = vld [vmem:[#allocation11 + $0x1d0] sm:$0xff]
        %v4220 = vld [vmem:[#allocation11 + $0x1d8] sm:$0xff]
        %v4221 = vld [vmem:[#allocation11 + $0x1e0] sm:$0xff]
        %v4222 = vld [vmem:[#allocation11 + $0x1e8] sm:$0xff]
        %v4223 = vld [vmem:[#allocation11 + $0x1f0] sm:$0xff]
        %v4224 = vld [vmem:[#allocation11 + $0x1f8] sm:$0xff]
        %v4225 = vld [vmem:[#allocation11 + $0x200] sm:$0xff]
        %v4226 = vld [vmem:[#allocation11 + $0x208] sm:$0xff]
        %v4227 = vld [vmem:[#allocation11 + $0x210] sm:$0xff]
        %v4228 = vld [vmem:[#allocation11 + $0x218] sm:$0xff]
        %v4229 = vld [vmem:[#allocation11 + $0x220] sm:$0xff]
        %v4230 = vld [vmem:[#allocation11 + $0x228] sm:$0xff]
        %v4231 = vld [vmem:[#allocation11 + $0x230] sm:$0xff]
        %v4232 = vld [vmem:[#allocation11 + $0x238] sm:$0xff]
        %v4233 = vld [vmem:[#allocation11 + $0x240] sm:$0xff]
        %v4234 = vld [vmem:[#allocation11 + $0x248] sm:$0xff]
        %v4235 = vld [vmem:[#allocation11 + $0x250] sm:$0xff]
        %v4236 = vld [vmem:[#allocation11 + $0x258] sm:$0xff]
        %v4237 = vld [vmem:[#allocation11 + $0x260] sm:$0xff]
        %v4238 = vld [vmem:[#allocation11 + $0x268] sm:$0xff]
        %v4239 = vld [vmem:[#allocation11 + $0x270] sm:$0xff]
        %v4240 = vld [vmem:[#allocation11 + $0x278] sm:$0xff]
        %v4241 = vld [vmem:[#allocation11 + $0x280] sm:$0xff]
        %v4242 = vld [vmem:[#allocation11 + $0x288] sm:$0xff]
        %v4243 = vld [vmem:[#allocation11 + $0x290] sm:$0xff]
        %v4244 = vld [vmem:[#allocation11 + $0x298] sm:$0xff]
        %v4245 = vld [vmem:[#allocation11 + $0x2a0] sm:$0xff]
        %v4246 = vld [vmem:[#allocation11 + $0x2a8] sm:$0xff]
        %v4247 = vld [vmem:[#allocation11 + $0x2b0] sm:$0xff]
        %v4248 = vld [vmem:[#allocation11 + $0x2b8] sm:$0xff]
        %v4249 = vld [vmem:[#allocation11 + $0x2c0] sm:$0xff]
        %v4250 = vld [vmem:[#allocation11 + $0x2c8] sm:$0xff]
        %v4251 = vld [vmem:[#allocation11 + $0x2d0] sm:$0xff]
        %v4252 = vld [vmem:[#allocation11 + $0x2d8] sm:$0xff]
        %v4253 = vld [vmem:[#allocation11 + $0x2e0] sm:$0xff]
        %v4254 = vld [vmem:[#allocation11 + $0x2e8] sm:$0xff]
        %v4255 = vld [vmem:[#allocation11 + $0x2f0] sm:$0xff]
        %v4256 = vld [vmem:[#allocation11 + $0x2f8] sm:$0xff]
        %v4257 = vld [vmem:[#allocation11 + $0x300] sm:$0xff]
        %v4258 = vld [vmem:[#allocation11 + $0x308] sm:$0xff]
        %v4259 = vld [vmem:[#allocation11 + $0x310] sm:$0xff]
        %v4260 = vld [vmem:[#allocation11 + $0x318] sm:$0xff]
        %v4261 = vld [vmem:[#allocation11 + $0x320] sm:$0xff]
        %v4262 = vld [vmem:[#allocation11 + $0x328] sm:$0xff]
        %v4263 = vld [vmem:[#allocation11 + $0x330] sm:$0xff]
        %v4264 = vld [vmem:[#allocation11 + $0x338] sm:$0xff]
        %v4265 = vld [vmem:[#allocation11 + $0x340] sm:$0xff]
        %v4266 = vld [vmem:[#allocation11 + $0x348] sm:$0xff]
        %v4267 = vld [vmem:[#allocation11 + $0x350] sm:$0xff]
        %v4268 = vld [vmem:[#allocation11 + $0x358] sm:$0xff]
        %v4269 = vld [vmem:[#allocation11 + $0x360] sm:$0xff]
        %v4270 = vld [vmem:[#allocation11 + $0x368] sm:$0xff]
        %v4271 = vld [vmem:[#allocation11 + $0x370] sm:$0xff]
        %v4272 = vld [vmem:[#allocation11 + $0x378] sm:$0xff]
        %v4273 = vld [vmem:[#allocation11 + $0x380] sm:$0xff]
        %v4274 = vld [vmem:[#allocation11 + $0x388] sm:$0xff]
        %v4275 = vld [vmem:[#allocation11 + $0x390] sm:$0xff]
        %v4276 = vld [vmem:[#allocation11 + $0x398] sm:$0xff]
        %v4277 = vld [vmem:[#allocation11 + $0x3a0] sm:$0xff]
        %v4278 = vld [vmem:[#allocation11 + $0x3a8] sm:$0xff]
        %v4279 = vld [vmem:[#allocation11 + $0x3b0] sm:$0xff]
        %v4280 = vld [vmem:[#allocation11 + $0x3b8] sm:$0xff]
        %v4281 = vld [vmem:[#allocation11 + $0x3c0] sm:$0xff]
        %v4282 = vld [vmem:[#allocation11 + $0x3c8] sm:$0xff]
        %v4283 = vld [vmem:[#allocation11 + $0x3d0] sm:$0xff]
        %v4284 = vld [vmem:[#allocation11 + $0x3d8] sm:$0xff]
        %v4285 = vld [vmem:[#allocation11 + $0x3e0] sm:$0xff]
        %v4286 = vld [vmem:[#allocation11 + $0x3e8] sm:$0xff]
        %v4287 = vld [vmem:[#allocation11 + $0x3f0] sm:$0xff]
        %v4288 = vld [vmem:[#allocation11 + $0x3f8] sm:$0xff]
        %v4289 = vld [vmem:[#allocation11 + $0x400] sm:$0xff]
        %v4290 = vld [vmem:[#allocation11 + $0x408] sm:$0xff]
        %v4291 = vld [vmem:[#allocation11 + $0x410] sm:$0xff]
        %v4292 = vld [vmem:[#allocation11 + $0x418] sm:$0xff]
        %v4293 = vld [vmem:[#allocation11 + $0x420] sm:$0xff]
        %v4294 = vld [vmem:[#allocation11 + $0x428] sm:$0xff]
        %v4295 = vld [vmem:[#allocation11 + $0x430] sm:$0xff]
        %v4296 = vld [vmem:[#allocation11 + $0x438] sm:$0xff]
        %v4297 = vld [vmem:[#allocation11 + $0x440] sm:$0xff]
        %v4298 = vld [vmem:[#allocation11 + $0x448] sm:$0xff]
        %v4299 = vld [vmem:[#allocation11 + $0x450] sm:$0xff]
        %v4300 = vld [vmem:[#allocation11 + $0x458] sm:$0xff]
        %v4301 = vld [vmem:[#allocation11 + $0x460] sm:$0xff]
        %v4302 = vld [vmem:[#allocation11 + $0x468] sm:$0xff]
        %v4303 = vld [vmem:[#allocation11 + $0x470] sm:$0xff]
        %v4304 = vld [vmem:[#allocation11 + $0x478] sm:$0xff]
        %v4305 = vld [vmem:[#allocation11 + $0x480] sm:$0xff]
        %v4306 = vld [vmem:[#allocation11 + $0x488] sm:$0xff]
        %v4307 = vld [vmem:[#allocation11 + $0x490] sm:$0xff]
        %v4308 = vld [vmem:[#allocation11 + $0x498] sm:$0xff]
        %v4309 = vld [vmem:[#allocation11 + $0x4a0] sm:$0xff]
        %v4310 = vld [vmem:[#allocation11 + $0x4a8] sm:$0xff]
        %v4311 = vld [vmem:[#allocation11 + $0x4b0] sm:$0xff]
        %v4312 = vld [vmem:[#allocation11 + $0x4b8] sm:$0xff]
        %v4313 = vld [vmem:[#allocation11 + $0x4c0] sm:$0xff]
        %v4314 = vld [vmem:[#allocation11 + $0x4c8] sm:$0xff]
        %v4315 = vld [vmem:[#allocation11 + $0x4d0] sm:$0xff]
        %v4316 = vld [vmem:[#allocation11 + $0x4d8] sm:$0xff]
        %v4317 = vld [vmem:[#allocation11 + $0x4e0] sm:$0xff]
        %v4318 = vld [vmem:[#allocation11 + $0x4e8] sm:$0xff]
        %v4319 = vld [vmem:[#allocation11 + $0x4f0] sm:$0xff]
        %v4320 = vld [vmem:[#allocation11 + $0x4f8] sm:$0xff]
        %v4321 = vld [vmem:[#allocation11 + $0x500] sm:$0xff]
        %v4322 = vld [vmem:[#allocation11 + $0x508] sm:$0xff]
        %v4323 = vld [vmem:[#allocation11 + $0x510] sm:$0xff]
        %v4324 = vld [vmem:[#allocation11 + $0x518] sm:$0xff]
        %v4325 = vld [vmem:[#allocation11 + $0x520] sm:$0xff]
        %v4326 = vld [vmem:[#allocation11 + $0x528] sm:$0xff]
        %v4327 = vld [vmem:[#allocation11 + $0x530] sm:$0xff]
        %v4328 = vld [vmem:[#allocation11 + $0x538] sm:$0xff]
        %v4329 = vld [vmem:[#allocation11 + $0x540] sm:$0xff]
        %v4330 = vld [vmem:[#allocation11 + $0x548] sm:$0xff]
        %v4331 = vld [vmem:[#allocation11 + $0x550] sm:$0xff]
        %v4332 = vld [vmem:[#allocation11 + $0x558] sm:$0xff]
        %v4333 = vld [vmem:[#allocation11 + $0x560] sm:$0xff]
        %v4334 = vld [vmem:[#allocation11 + $0x568] sm:$0xff]
        %v4335 = vld [vmem:[#allocation11 + $0x570] sm:$0xff]
        %v4336 = vld [vmem:[#allocation11 + $0x578] sm:$0xff]
        %v4337 = vld [vmem:[#allocation11 + $0x580] sm:$0xff]
        %v4338 = vld [vmem:[#allocation11 + $0x588] sm:$0xff]
        %v4339 = vld [vmem:[#allocation11 + $0x590] sm:$0xff]
        %v4340 = vld [vmem:[#allocation11 + $0x598] sm:$0xff]
        %v4341 = vld [vmem:[#allocation11 + $0x5a0] sm:$0xff]
        %v4342 = vld [vmem:[#allocation11 + $0x5a8] sm:$0xff]
        %v4343 = vld [vmem:[#allocation11 + $0x5b0] sm:$0xff]
        %v4344 = vld [vmem:[#allocation11 + $0x5b8] sm:$0xff]
        %v4345 = vld [vmem:[#allocation11 + $0x5c0] sm:$0xff]
        %v4346 = vld [vmem:[#allocation11 + $0x5c8] sm:$0xff]
        %v4347 = vld [vmem:[#allocation11 + $0x5d0] sm:$0xff]
        %v4348 = vld [vmem:[#allocation11 + $0x5d8] sm:$0xff]
        %v4349 = vld [vmem:[#allocation11 + $0x5e0] sm:$0xff]
        %v4350 = vld [vmem:[#allocation11 + $0x5e8] sm:$0xff]
        %v4351 = vld [vmem:[#allocation11 + $0x5f0] sm:$0xff]
        %v4352 = vld [vmem:[#allocation11 + $0x5f8] sm:$0xff]
        %v4353 = vld [vmem:[#allocation11 + $0x600] sm:$0xff]
        %v4354 = vld [vmem:[#allocation11 + $0x608] sm:$0xff]
        %v4355 = vld [vmem:[#allocation11 + $0x610] sm:$0xff]
        %v4356 = vld [vmem:[#allocation11 + $0x618] sm:$0xff]
        %v4357 = vld [vmem:[#allocation11 + $0x620] sm:$0xff]
        %v4358 = vld [vmem:[#allocation11 + $0x628] sm:$0xff]
        %v4359 = vld [vmem:[#allocation11 + $0x630] sm:$0xff]
        %v4360 = vld [vmem:[#allocation11 + $0x638] sm:$0xff]
        %v4361 = vld [vmem:[#allocation11 + $0x640] sm:$0xff]
        %v4362 = vld [vmem:[#allocation11 + $0x648] sm:$0xff]
        %v4363 = vld [vmem:[#allocation11 + $0x650] sm:$0xff]
        %v4364 = vld [vmem:[#allocation11 + $0x658] sm:$0xff]
        %v4365 = vld [vmem:[#allocation11 + $0x660] sm:$0xff]
        %v4366 = vld [vmem:[#allocation11 + $0x668] sm:$0xff]
        %v4367 = vld [vmem:[#allocation11 + $0x670] sm:$0xff]
        %v4368 = vld [vmem:[#allocation11 + $0x678] sm:$0xff]
        %v4369 = vld [vmem:[#allocation11 + $0x680] sm:$0xff]
        %v4370 = vld [vmem:[#allocation11 + $0x688] sm:$0xff]
        %v4371 = vld [vmem:[#allocation11 + $0x690] sm:$0xff]
        %v4372 = vld [vmem:[#allocation11 + $0x698] sm:$0xff]
        %v4373 = vld [vmem:[#allocation11 + $0x6a0] sm:$0xff]
        %v4374 = vld [vmem:[#allocation11 + $0x6a8] sm:$0xff]
        %v4375 = vld [vmem:[#allocation11 + $0x6b0] sm:$0xff]
        %v4376 = vld [vmem:[#allocation11 + $0x6b8] sm:$0xff]
        %v4377 = vld [vmem:[#allocation11 + $0x6c0] sm:$0xff]
        %v4378 = vld [vmem:[#allocation11 + $0x6c8] sm:$0xff]
        %v4379 = vld [vmem:[#allocation11 + $0x6d0] sm:$0xff]
        %v4380 = vld [vmem:[#allocation11 + $0x6d8] sm:$0xff]
        %v4381 = vld [vmem:[#allocation11 + $0x6e0] sm:$0xff]
        %v4382 = vld [vmem:[#allocation11 + $0x6e8] sm:$0xff]
        %v4383 = vld [vmem:[#allocation11 + $0x6f0] sm:$0xff]
        %v4384 = vld [vmem:[#allocation11 + $0x6f8] sm:$0xff]
        %v4385 = vld [vmem:[#allocation11 + $0x700] sm:$0xff]
        %v4386 = vld [vmem:[#allocation11 + $0x708] sm:$0xff]
        %v4387 = vld [vmem:[#allocation11 + $0x710] sm:$0xff]
        %v4388 = vld [vmem:[#allocation11 + $0x718] sm:$0xff]
        %v4389 = vld [vmem:[#allocation11 + $0x720] sm:$0xff]
        %v4390 = vld [vmem:[#allocation11 + $0x728] sm:$0xff]
        %v4391 = vld [vmem:[#allocation11 + $0x730] sm:$0xff]
        %v4392 = vld [vmem:[#allocation11 + $0x738] sm:$0xff]
        %v4393 = vld [vmem:[#allocation11 + $0x740] sm:$0xff]
        %v4394 = vld [vmem:[#allocation11 + $0x748] sm:$0xff]
        %v4395 = vld [vmem:[#allocation11 + $0x750] sm:$0xff]
        %v4396 = vld [vmem:[#allocation11 + $0x758] sm:$0xff]
        %v4397 = vld [vmem:[#allocation11 + $0x760] sm:$0xff]
        %v4398 = vld [vmem:[#allocation11 + $0x768] sm:$0xff]
        %v4399 = vld [vmem:[#allocation11 + $0x770] sm:$0xff]
        %v4400 = vld [vmem:[#allocation11 + $0x778] sm:$0xff]
        %v4401 = vld [vmem:[#allocation11 + $0x780] sm:$0xff]
        %v4402 = vld [vmem:[#allocation11 + $0x788] sm:$0xff]
        %v4403 = vld [vmem:[#allocation11 + $0x790] sm:$0xff]
        %v4404 = vld [vmem:[#allocation11 + $0x798] sm:$0xff]
        %v4405 = vld [vmem:[#allocation11 + $0x7a0] sm:$0xff]
        %v4406 = vld [vmem:[#allocation11 + $0x7a8] sm:$0xff]
        %v4407 = vld [vmem:[#allocation11 + $0x7b0] sm:$0xff]
        %v4408 = vld [vmem:[#allocation11 + $0x7b8] sm:$0xff]
        %v4409 = vld [vmem:[#allocation11 + $0x7c0] sm:$0xff]
        %v4410 = vld [vmem:[#allocation11 + $0x7c8] sm:$0xff]
        %v4411 = vld [vmem:[#allocation11 + $0x7d0] sm:$0xff]
        %v4412 = vld [vmem:[#allocation11 + $0x7d8] sm:$0xff]
        %v4413 = vld [vmem:[#allocation11 + $0x7e0] sm:$0xff]
        %v4414 = vld [vmem:[#allocation11 + $0x7e8] sm:$0xff]
        %v4415 = vld [vmem:[#allocation11 + $0x7f0] sm:$0xff]
        %v4416 = vld [vmem:[#allocation11 + $0x7f8] sm:$0xff]
        %v4417 = vld [vmem:[#allocation11 + $0x800] sm:$0xff]
        %v4418 = vld [vmem:[#allocation11 + $0x808] sm:$0xff]
        %v4419 = vld [vmem:[#allocation11 + $0x810] sm:$0xff]
        %v4420 = vld [vmem:[#allocation11 + $0x818] sm:$0xff]
        %v4421 = vld [vmem:[#allocation11 + $0x820] sm:$0xff]
        %v4422 = vld [vmem:[#allocation11 + $0x828] sm:$0xff]
        %v4423 = vld [vmem:[#allocation11 + $0x830] sm:$0xff]
        %v4424 = vld [vmem:[#allocation11 + $0x838] sm:$0xff]
        %v4425 = vld [vmem:[#allocation11 + $0x840] sm:$0xff]
        %v4426 = vld [vmem:[#allocation11 + $0x848] sm:$0xff]
        %v4427 = vld [vmem:[#allocation11 + $0x850] sm:$0xff]
        %v4428 = vld [vmem:[#allocation11 + $0x858] sm:$0xff]
        %v4429 = vld [vmem:[#allocation11 + $0x860] sm:$0xff]
        %v4430 = vld [vmem:[#allocation11 + $0x868] sm:$0xff]
        %v4431 = vld [vmem:[#allocation11 + $0x870] sm:$0xff]
        %v4432 = vld [vmem:[#allocation11 + $0x878] sm:$0xff]
        %v4433 = vld [vmem:[#allocation11 + $0x880] sm:$0xff]
        %v4434 = vld [vmem:[#allocation11 + $0x888] sm:$0xff]
        %v4435 = vld [vmem:[#allocation11 + $0x890] sm:$0xff]
        %v4436 = vld [vmem:[#allocation11 + $0x898] sm:$0xff]
        %v4437 = vld [vmem:[#allocation11 + $0x8a0] sm:$0xff]
        %v4438 = vld [vmem:[#allocation11 + $0x8a8] sm:$0xff]
        %v4439 = vld [vmem:[#allocation11 + $0x8b0] sm:$0xff]
        %v4440 = vld [vmem:[#allocation11 + $0x8b8] sm:$0xff]
        %v4441 = vld [vmem:[#allocation11 + $0x8c0] sm:$0xff]
        %v4442 = vld [vmem:[#allocation11 + $0x8c8] sm:$0xff]
        %v4443 = vld [vmem:[#allocation11 + $0x8d0] sm:$0xff]
        %v4444 = vld [vmem:[#allocation11 + $0x8d8] sm:$0xff]
        %v4445 = vld [vmem:[#allocation11 + $0x8e0] sm:$0xff]
        %v4446 = vld [vmem:[#allocation11 + $0x8e8] sm:$0xff]
        %v4447 = vld [vmem:[#allocation11 + $0x8f0] sm:$0xff]
        %v4448 = vld [vmem:[#allocation11 + $0x8f8] sm:$0xff]
        %v4449 = vld [vmem:[#allocation2] sm:$0x3f]
        %v4451 = vlaneseq
        %v4452 = vshrl.u32 %v4451, 7
        %v4453 = vsub.s32 0, %v4452
        %v4454 = vrot.slane %v4449, %v4453
        %v4455 = vlaneseq
        %v4456 = vshrl.u32 %v4455, 7
        %v4457 = vsub.s32 1, %v4456
        %v4458 = vrot.slane %v4449, %v4457
        %v4459 = vlaneseq
        %v4460 = vshrl.u32 %v4459, 7
        %v4461 = vsub.s32 2, %v4460
        %v4462 = vrot.slane %v4449, %v4461
        %v4463 = vlaneseq
        %v4464 = vshrl.u32 %v4463, 7
        %v4465 = vsub.s32 3, %v4464
        %v4466 = vrot.slane %v4449, %v4465
        %v4467 = vlaneseq
        %v4468 = vshrl.u32 %v4467, 7
        %v4469 = vsub.s32 4, %v4468
        %v4470 = vrot.slane %v4449, %v4469
        %v4471 = vlaneseq
        %v4472 = vshrl.u32 %v4471, 7
        %v4473 = vsub.s32 5, %v4472
        %v4474 = vrot.slane %v4449, %v4473
        %v4484 = vunpack.c.l.b16 %v4158
        %v4485 = vunpack.c.h.b16 %v4158
        %v4486 = vunpack.c.l.b16 %v4159
        %v4487 = vunpack.c.h.b16 %v4159
        %v4488 = vunpack.c.l.b16 %v4160
        %v4489 = vunpack.c.h.b16 %v4160
        %v4490 = vpack.c.b16 %v4484, %v4484
        %v4491 = vpack.c.b16 %v4485, %v4485
        %v4492 = vpack.c.b16 %v4486, %v4486
        %v4493 = vpack.c.b16 %v4487, %v4487
        %v4494 = vpack.c.b16 %v4488, %v4488
        %v4495 = vpack.c.b16 %v4489, %v4489
        %v4790 = vunpack.c.l.b16 %v4161
        %v4791 = vunpack.c.h.b16 %v4161
        %v4792 = vunpack.c.l.b16 %v4162
        %v4793 = vunpack.c.h.b16 %v4162
        %v4794 = vunpack.c.l.b16 %v4163
        %v4795 = vunpack.c.h.b16 %v4163
        %v4796 = vunpack.c.l.b16 %v4164
        %v4797 = vunpack.c.h.b16 %v4164
        %v4798 = vunpack.c.l.b16 %v4165
        %v4799 = vunpack.c.h.b16 %v4165
        %v4800 = vunpack.c.l.b16 %v4166
        %v4801 = vunpack.c.h.b16 %v4166
        %v4802 = vunpack.c.l.b16 %v4167
        %v4803 = vunpack.c.h.b16 %v4167
        %v4804 = vunpack.c.l.b16 %v4168
        %v4805 = vunpack.c.h.b16 %v4168
        %v4806 = vunpack.c.l.b16 %v4169
        %v4807 = vunpack.c.h.b16 %v4169
        %v4808 = vunpack.c.l.b16 %v4170
        %v4809 = vunpack.c.h.b16 %v4170
        %v4810 = vunpack.c.l.b16 %v4171
        %v4811 = vunpack.c.h.b16 %v4171
        %v4812 = vunpack.c.l.b16 %v4172
        %v4813 = vunpack.c.h.b16 %v4172
        %v4814 = vunpack.c.l.b16 %v4173
        %v4815 = vunpack.c.h.b16 %v4173
        %v4816 = vunpack.c.l.b16 %v4174
        %v4817 = vunpack.c.h.b16 %v4174
        %v4818 = vunpack.c.l.b16 %v4175
        %v4819 = vunpack.c.h.b16 %v4175
        %v4820 = vunpack.c.l.b16 %v4176
        %v4821 = vunpack.c.h.b16 %v4176
        %v4822 = vunpack.c.l.b16 %v4177
        %v4823 = vunpack.c.h.b16 %v4177
        %v4824 = vunpack.c.l.b16 %v4178
        %v4825 = vunpack.c.h.b16 %v4178
        %v4826 = vunpack.c.l.b16 %v4179
        %v4827 = vunpack.c.h.b16 %v4179
        %v4828 = vunpack.c.l.b16 %v4180
        %v4829 = vunpack.c.h.b16 %v4180
        %v4830 = vunpack.c.l.b16 %v4181
        %v4831 = vunpack.c.h.b16 %v4181
        %v4832 = vunpack.c.l.b16 %v4182
        %v4833 = vunpack.c.h.b16 %v4182
        %v4834 = vunpack.c.l.b16 %v4183
        %v4835 = vunpack.c.h.b16 %v4183
        %v4836 = vunpack.c.l.b16 %v4184
        %v4837 = vunpack.c.h.b16 %v4184
        %v4838 = vunpack.c.l.b16 %v4185
        %v4839 = vunpack.c.h.b16 %v4185
        %v4840 = vunpack.c.l.b16 %v4186
        %v4841 = vunpack.c.h.b16 %v4186
        %v4842 = vunpack.c.l.b16 %v4187
        %v4843 = vunpack.c.h.b16 %v4187
        %v4844 = vunpack.c.l.b16 %v4188
        %v4845 = vunpack.c.h.b16 %v4188
        %v4846 = vunpack.c.l.b16 %v4189
        %v4847 = vunpack.c.h.b16 %v4189
        %v4848 = vunpack.c.l.b16 %v4190
        %v4849 = vunpack.c.h.b16 %v4190
        %v4850 = vunpack.c.l.b16 %v4191
        %v4851 = vunpack.c.h.b16 %v4191
        %v4852 = vunpack.c.l.b16 %v4192
        %v4853 = vunpack.c.h.b16 %v4192
        %v4854 = vunpack.c.l.b16 %v4193
        %v4855 = vunpack.c.h.b16 %v4193
        %v4856 = vunpack.c.l.b16 %v4194
        %v4857 = vunpack.c.h.b16 %v4194
        %v4858 = vunpack.c.l.b16 %v4195
        %v4859 = vunpack.c.h.b16 %v4195
        %v4860 = vunpack.c.l.b16 %v4196
        %v4861 = vunpack.c.h.b16 %v4196
        %v4862 = vunpack.c.l.b16 %v4197
        %v4863 = vunpack.c.h.b16 %v4197
        %v4864 = vunpack.c.l.b16 %v4198
        %v4865 = vunpack.c.h.b16 %v4198
        %v4866 = vunpack.c.l.b16 %v4199
        %v4867 = vunpack.c.h.b16 %v4199
        %v4868 = vunpack.c.l.b16 %v4200
        %v4869 = vunpack.c.h.b16 %v4200
        %v4870 = vunpack.c.l.b16 %v4201
        %v4871 = vunpack.c.h.b16 %v4201
        %v4872 = vunpack.c.l.b16 %v4202
        %v4873 = vunpack.c.h.b16 %v4202
        %v4874 = vunpack.c.l.b16 %v4203
        %v4875 = vunpack.c.h.b16 %v4203
        %v4876 = vunpack.c.l.b16 %v4204
        %v4877 = vunpack.c.h.b16 %v4204
        %v4878 = vunpack.c.l.b16 %v4205
        %v4879 = vunpack.c.h.b16 %v4205
        %v4880 = vunpack.c.l.b16 %v4206
        %v4881 = vunpack.c.h.b16 %v4206
        %v4882 = vunpack.c.l.b16 %v4207
        %v4883 = vunpack.c.h.b16 %v4207
        %v4884 = vunpack.c.l.b16 %v4208
        %v4885 = vunpack.c.h.b16 %v4208
        %v4886 = vunpack.c.l.b16 %v4209
        %v4887 = vunpack.c.h.b16 %v4209
        %v4888 = vunpack.c.l.b16 %v4210
        %v4889 = vunpack.c.h.b16 %v4210
        %v4890 = vunpack.c.l.b16 %v4211
        %v4891 = vunpack.c.h.b16 %v4211
        %v4892 = vunpack.c.l.b16 %v4212
        %v4893 = vunpack.c.h.b16 %v4212
        %v4894 = vunpack.c.l.b16 %v4213
        %v4895 = vunpack.c.h.b16 %v4213
        %v4896 = vunpack.c.l.b16 %v4214
        %v4897 = vunpack.c.h.b16 %v4214
        %v4898 = vunpack.c.l.b16 %v4215
        %v4899 = vunpack.c.h.b16 %v4215
        %v4900 = vunpack.c.l.b16 %v4216
        %v4901 = vunpack.c.h.b16 %v4216
        %v4902 = vunpack.c.l.b16 %v4217
        %v4903 = vunpack.c.h.b16 %v4217
        %v4904 = vunpack.c.l.b16 %v4218
        %v4905 = vunpack.c.h.b16 %v4218
        %v4906 = vunpack.c.l.b16 %v4219
        %v4907 = vunpack.c.h.b16 %v4219
        %v4908 = vunpack.c.l.b16 %v4220
        %v4909 = vunpack.c.h.b16 %v4220
        %v4910 = vunpack.c.l.b16 %v4221
        %v4911 = vunpack.c.h.b16 %v4221
        %v4912 = vunpack.c.l.b16 %v4222
        %v4913 = vunpack.c.h.b16 %v4222
        %v4914 = vunpack.c.l.b16 %v4223
        %v4915 = vunpack.c.h.b16 %v4223
        %v4916 = vunpack.c.l.b16 %v4224
        %v4917 = vunpack.c.h.b16 %v4224
        %v4918 = vunpack.c.l.b16 %v4225
        %v4919 = vunpack.c.h.b16 %v4225
        %v4920 = vunpack.c.l.b16 %v4226
        %v4921 = vunpack.c.h.b16 %v4226
        %v4922 = vunpack.c.l.b16 %v4227
        %v4923 = vunpack.c.h.b16 %v4227
        %v4924 = vunpack.c.l.b16 %v4228
        %v4925 = vunpack.c.h.b16 %v4228
        %v4926 = vunpack.c.l.b16 %v4229
        %v4927 = vunpack.c.h.b16 %v4229
        %v4928 = vunpack.c.l.b16 %v4230
        %v4929 = vunpack.c.h.b16 %v4230
        %v4930 = vunpack.c.l.b16 %v4231
        %v4931 = vunpack.c.h.b16 %v4231
        %v4932 = vunpack.c.l.b16 %v4232
        %v4933 = vunpack.c.h.b16 %v4232
        %v4934 = vunpack.c.l.b16 %v4233
        %v4935 = vunpack.c.h.b16 %v4233
        %v4936 = vunpack.c.l.b16 %v4234
        %v4937 = vunpack.c.h.b16 %v4234
        %v4938 = vunpack.c.l.b16 %v4235
        %v4939 = vunpack.c.h.b16 %v4235
        %v4940 = vunpack.c.l.b16 %v4236
        %v4941 = vunpack.c.h.b16 %v4236
        %v4942 = vunpack.c.l.b16 %v4237
        %v4943 = vunpack.c.h.b16 %v4237
        %v4944 = vunpack.c.l.b16 %v4238
        %v4945 = vunpack.c.h.b16 %v4238
        %v4946 = vunpack.c.l.b16 %v4239
        %v4947 = vunpack.c.h.b16 %v4239
        %v4948 = vunpack.c.l.b16 %v4240
        %v4949 = vunpack.c.h.b16 %v4240
        %v4950 = vunpack.c.l.b16 %v4241
        %v4951 = vunpack.c.h.b16 %v4241
        %v4952 = vunpack.c.l.b16 %v4242
        %v4953 = vunpack.c.h.b16 %v4242
        %v4954 = vunpack.c.l.b16 %v4243
        %v4955 = vunpack.c.h.b16 %v4243
        %v4956 = vunpack.c.l.b16 %v4244
        %v4957 = vunpack.c.h.b16 %v4244
        %v4958 = vunpack.c.l.b16 %v4245
        %v4959 = vunpack.c.h.b16 %v4245
        %v4960 = vunpack.c.l.b16 %v4246
        %v4961 = vunpack.c.h.b16 %v4246
        %v4962 = vunpack.c.l.b16 %v4247
        %v4963 = vunpack.c.h.b16 %v4247
        %v4964 = vunpack.c.l.b16 %v4248
        %v4965 = vunpack.c.h.b16 %v4248
        %v4966 = vunpack.c.l.b16 %v4249
        %v4967 = vunpack.c.h.b16 %v4249
        %v4968 = vunpack.c.l.b16 %v4250
        %v4969 = vunpack.c.h.b16 %v4250
        %v4970 = vunpack.c.l.b16 %v4251
        %v4971 = vunpack.c.h.b16 %v4251
        %v4972 = vunpack.c.l.b16 %v4252
        %v4973 = vunpack.c.h.b16 %v4252
        %v4974 = vunpack.c.l.b16 %v4253
        %v4975 = vunpack.c.h.b16 %v4253
        %v4976 = vunpack.c.l.b16 %v4254
        %v4977 = vunpack.c.h.b16 %v4254
        %v4978 = vunpack.c.l.b16 %v4255
        %v4979 = vunpack.c.h.b16 %v4255
        %v4980 = vunpack.c.l.b16 %v4256
        %v4981 = vunpack.c.h.b16 %v4256
        %v4982 = vunpack.c.l.b16 %v4257
        %v4983 = vunpack.c.h.b16 %v4257
        %v4984 = vunpack.c.l.b16 %v4258
        %v4985 = vunpack.c.h.b16 %v4258
        %v4986 = vunpack.c.l.b16 %v4259
        %v4987 = vunpack.c.h.b16 %v4259
        %v4988 = vunpack.c.l.b16 %v4260
        %v4989 = vunpack.c.h.b16 %v4260
        %v4990 = vunpack.c.l.b16 %v4261
        %v4991 = vunpack.c.h.b16 %v4261
        %v4992 = vunpack.c.l.b16 %v4262
        %v4993 = vunpack.c.h.b16 %v4262
        %v4994 = vunpack.c.l.b16 %v4263
        %v4995 = vunpack.c.h.b16 %v4263
        %v4996 = vunpack.c.l.b16 %v4264
        %v4997 = vunpack.c.h.b16 %v4264
        %v4998 = vunpack.c.l.b16 %v4265
        %v4999 = vunpack.c.h.b16 %v4265
        %v5000 = vunpack.c.l.b16 %v4266
        %v5001 = vunpack.c.h.b16 %v4266
        %v5002 = vunpack.c.l.b16 %v4267
        %v5003 = vunpack.c.h.b16 %v4267
        %v5004 = vunpack.c.l.b16 %v4268
        %v5005 = vunpack.c.h.b16 %v4268
        %v5006 = vunpack.c.l.b16 %v4269
        %v5007 = vunpack.c.h.b16 %v4269
        %v5008 = vunpack.c.l.b16 %v4270
        %v5009 = vunpack.c.h.b16 %v4270
        %v5010 = vunpack.c.l.b16 %v4271
        %v5011 = vunpack.c.h.b16 %v4271
        %v5012 = vunpack.c.l.b16 %v4272
        %v5013 = vunpack.c.h.b16 %v4272
        %v5014 = vunpack.c.l.b16 %v4273
        %v5015 = vunpack.c.h.b16 %v4273
        %v5016 = vunpack.c.l.b16 %v4274
        %v5017 = vunpack.c.h.b16 %v4274
        %v5018 = vunpack.c.l.b16 %v4275
        %v5019 = vunpack.c.h.b16 %v4275
        %v5020 = vunpack.c.l.b16 %v4276
        %v5021 = vunpack.c.h.b16 %v4276
        %v5022 = vunpack.c.l.b16 %v4277
        %v5023 = vunpack.c.h.b16 %v4277
        %v5024 = vunpack.c.l.b16 %v4278
        %v5025 = vunpack.c.h.b16 %v4278
        %v5026 = vunpack.c.l.b16 %v4279
        %v5027 = vunpack.c.h.b16 %v4279
        %v5028 = vunpack.c.l.b16 %v4280
        %v5029 = vunpack.c.h.b16 %v4280
        %v5030 = vunpack.c.l.b16 %v4281
        %v5031 = vunpack.c.h.b16 %v4281
        %v5032 = vunpack.c.l.b16 %v4282
        %v5033 = vunpack.c.h.b16 %v4282
        %v5034 = vunpack.c.l.b16 %v4283
        %v5035 = vunpack.c.h.b16 %v4283
        %v5036 = vunpack.c.l.b16 %v4284
        %v5037 = vunpack.c.h.b16 %v4284
        %v5038 = vunpack.c.l.b16 %v4285
        %v5039 = vunpack.c.h.b16 %v4285
        %v5040 = vunpack.c.l.b16 %v4286
        %v5041 = vunpack.c.h.b16 %v4286
        %v5042 = vunpack.c.l.b16 %v4287
        %v5043 = vunpack.c.h.b16 %v4287
        %v5044 = vunpack.c.l.b16 %v4288
        %v5045 = vunpack.c.h.b16 %v4288
        %v5046 = vunpack.c.l.b16 %v4289
        %v5047 = vunpack.c.h.b16 %v4289
        %v5048 = vunpack.c.l.b16 %v4290
        %v5049 = vunpack.c.h.b16 %v4290
        %v5050 = vunpack.c.l.b16 %v4291
        %v5051 = vunpack.c.h.b16 %v4291
        %v5052 = vunpack.c.l.b16 %v4292
        %v5053 = vunpack.c.h.b16 %v4292
        %v5054 = vunpack.c.l.b16 %v4293
        %v5055 = vunpack.c.h.b16 %v4293
        %v5056 = vunpack.c.l.b16 %v4294
        %v5057 = vunpack.c.h.b16 %v4294
        %v5058 = vunpack.c.l.b16 %v4295
        %v5059 = vunpack.c.h.b16 %v4295
        %v5060 = vunpack.c.l.b16 %v4296
        %v5061 = vunpack.c.h.b16 %v4296
        %v5062 = vunpack.c.l.b16 %v4297
        %v5063 = vunpack.c.h.b16 %v4297
        %v5064 = vunpack.c.l.b16 %v4298
        %v5065 = vunpack.c.h.b16 %v4298
        %v5066 = vunpack.c.l.b16 %v4299
        %v5067 = vunpack.c.h.b16 %v4299
        %v5068 = vunpack.c.l.b16 %v4300
        %v5069 = vunpack.c.h.b16 %v4300
        %v5070 = vunpack.c.l.b16 %v4301
        %v5071 = vunpack.c.h.b16 %v4301
        %v5072 = vunpack.c.l.b16 %v4302
        %v5073 = vunpack.c.h.b16 %v4302
        %v5074 = vunpack.c.l.b16 %v4303
        %v5075 = vunpack.c.h.b16 %v4303
        %v5076 = vunpack.c.l.b16 %v4304
        %v5077 = vunpack.c.h.b16 %v4304
        %v5078 = vunpack.c.l.b16 %v4305
        %v5079 = vunpack.c.h.b16 %v4305
        %v5080 = vunpack.c.l.b16 %v4306
        %v5081 = vunpack.c.h.b16 %v4306
        %v5082 = vunpack.c.l.b16 %v4307
        %v5083 = vunpack.c.h.b16 %v4307
        %v5084 = vunpack.c.l.b16 %v4308
        %v5085 = vunpack.c.h.b16 %v4308
        %v5086 = vunpack.c.l.b16 %v4309
        %v5087 = vunpack.c.h.b16 %v4309
        %v5088 = vunpack.c.l.b16 %v4310
        %v5089 = vunpack.c.h.b16 %v4310
        %v5090 = vunpack.c.l.b16 %v4311
        %v5091 = vunpack.c.h.b16 %v4311
        %v5092 = vunpack.c.l.b16 %v4312
        %v5093 = vunpack.c.h.b16 %v4312
        %v5094 = vunpack.c.l.b16 %v4313
        %v5095 = vunpack.c.h.b16 %v4313
        %v5096 = vunpack.c.l.b16 %v4314
        %v5097 = vunpack.c.h.b16 %v4314
        %v5098 = vunpack.c.l.b16 %v4315
        %v5099 = vunpack.c.h.b16 %v4315
        %v5100 = vunpack.c.l.b16 %v4316
        %v5101 = vunpack.c.h.b16 %v4316
        %v5102 = vunpack.c.l.b16 %v4317
        %v5103 = vunpack.c.h.b16 %v4317
        %v5104 = vunpack.c.l.b16 %v4318
        %v5105 = vunpack.c.h.b16 %v4318
        %v5106 = vunpack.c.l.b16 %v4319
        %v5107 = vunpack.c.h.b16 %v4319
        %v5108 = vunpack.c.l.b16 %v4320
        %v5109 = vunpack.c.h.b16 %v4320
        %v5110 = vunpack.c.l.b16 %v4321
        %v5111 = vunpack.c.h.b16 %v4321
        %v5112 = vunpack.c.l.b16 %v4322
        %v5113 = vunpack.c.h.b16 %v4322
        %v5114 = vunpack.c.l.b16 %v4323
        %v5115 = vunpack.c.h.b16 %v4323
        %v5116 = vunpack.c.l.b16 %v4324
        %v5117 = vunpack.c.h.b16 %v4324
        %v5118 = vunpack.c.l.b16 %v4325
        %v5119 = vunpack.c.h.b16 %v4325
        %v5120 = vunpack.c.l.b16 %v4326
        %v5121 = vunpack.c.h.b16 %v4326
        %v5122 = vunpack.c.l.b16 %v4327
        %v5123 = vunpack.c.h.b16 %v4327
        %v5124 = vunpack.c.l.b16 %v4328
        %v5125 = vunpack.c.h.b16 %v4328
        %v5126 = vunpack.c.l.b16 %v4329
        %v5127 = vunpack.c.h.b16 %v4329
        %v5128 = vunpack.c.l.b16 %v4330
        %v5129 = vunpack.c.h.b16 %v4330
        %v5130 = vunpack.c.l.b16 %v4331
        %v5131 = vunpack.c.h.b16 %v4331
        %v5132 = vunpack.c.l.b16 %v4332
        %v5133 = vunpack.c.h.b16 %v4332
        %v5134 = vunpack.c.l.b16 %v4333
        %v5135 = vunpack.c.h.b16 %v4333
        %v5136 = vunpack.c.l.b16 %v4334
        %v5137 = vunpack.c.h.b16 %v4334
        %v5138 = vunpack.c.l.b16 %v4335
        %v5139 = vunpack.c.h.b16 %v4335
        %v5140 = vunpack.c.l.b16 %v4336
        %v5141 = vunpack.c.h.b16 %v4336
        %v5142 = vunpack.c.l.b16 %v4337
        %v5143 = vunpack.c.h.b16 %v4337
        %v5144 = vunpack.c.l.b16 %v4338
        %v5145 = vunpack.c.h.b16 %v4338
        %v5146 = vunpack.c.l.b16 %v4339
        %v5147 = vunpack.c.h.b16 %v4339
        %v5148 = vunpack.c.l.b16 %v4340
        %v5149 = vunpack.c.h.b16 %v4340
        %v5150 = vunpack.c.l.b16 %v4341
        %v5151 = vunpack.c.h.b16 %v4341
        %v5152 = vunpack.c.l.b16 %v4342
        %v5153 = vunpack.c.h.b16 %v4342
        %v5154 = vunpack.c.l.b16 %v4343
        %v5155 = vunpack.c.h.b16 %v4343
        %v5156 = vunpack.c.l.b16 %v4344
        %v5157 = vunpack.c.h.b16 %v4344
        %v5158 = vunpack.c.l.b16 %v4345
        %v5159 = vunpack.c.h.b16 %v4345
        %v5160 = vunpack.c.l.b16 %v4346
        %v5161 = vunpack.c.h.b16 %v4346
        %v5162 = vunpack.c.l.b16 %v4347
        %v5163 = vunpack.c.h.b16 %v4347
        %v5164 = vunpack.c.l.b16 %v4348
        %v5165 = vunpack.c.h.b16 %v4348
        %v5166 = vunpack.c.l.b16 %v4349
        %v5167 = vunpack.c.h.b16 %v4349
        %v5168 = vunpack.c.l.b16 %v4350
        %v5169 = vunpack.c.h.b16 %v4350
        %v5170 = vunpack.c.l.b16 %v4351
        %v5171 = vunpack.c.h.b16 %v4351
        %v5172 = vunpack.c.l.b16 %v4352
        %v5173 = vunpack.c.h.b16 %v4352
        %v5174 = vunpack.c.l.b16 %v4353
        %v5175 = vunpack.c.h.b16 %v4353
        %v5176 = vunpack.c.l.b16 %v4354
        %v5177 = vunpack.c.h.b16 %v4354
        %v5178 = vunpack.c.l.b16 %v4355
        %v5179 = vunpack.c.h.b16 %v4355
        %v5180 = vunpack.c.l.b16 %v4356
        %v5181 = vunpack.c.h.b16 %v4356
        %v5182 = vunpack.c.l.b16 %v4357
        %v5183 = vunpack.c.h.b16 %v4357
        %v5184 = vunpack.c.l.b16 %v4358
        %v5185 = vunpack.c.h.b16 %v4358
        %v5186 = vunpack.c.l.b16 %v4359
        %v5187 = vunpack.c.h.b16 %v4359
        %v5188 = vunpack.c.l.b16 %v4360
        %v5189 = vunpack.c.h.b16 %v4360
        %v5190 = vunpack.c.l.b16 %v4361
        %v5191 = vunpack.c.h.b16 %v4361
        %v5192 = vunpack.c.l.b16 %v4362
        %v5193 = vunpack.c.h.b16 %v4362
        %v5194 = vunpack.c.l.b16 %v4363
        %v5195 = vunpack.c.h.b16 %v4363
        %v5196 = vunpack.c.l.b16 %v4364
        %v5197 = vunpack.c.h.b16 %v4364
        %v5198 = vunpack.c.l.b16 %v4365
        %v5199 = vunpack.c.h.b16 %v4365
        %v5200 = vunpack.c.l.b16 %v4366
        %v5201 = vunpack.c.h.b16 %v4366
        %v5202 = vunpack.c.l.b16 %v4367
        %v5203 = vunpack.c.h.b16 %v4367
        %v5204 = vunpack.c.l.b16 %v4368
        %v5205 = vunpack.c.h.b16 %v4368
        %v5206 = vunpack.c.l.b16 %v4369
        %v5207 = vunpack.c.h.b16 %v4369
        %v5208 = vunpack.c.l.b16 %v4370
        %v5209 = vunpack.c.h.b16 %v4370
        %v5210 = vunpack.c.l.b16 %v4371
        %v5211 = vunpack.c.h.b16 %v4371
        %v5212 = vunpack.c.l.b16 %v4372
        %v5213 = vunpack.c.h.b16 %v4372
        %v5214 = vunpack.c.l.b16 %v4373
        %v5215 = vunpack.c.h.b16 %v4373
        %v5216 = vunpack.c.l.b16 %v4374
        %v5217 = vunpack.c.h.b16 %v4374
        %v5218 = vunpack.c.l.b16 %v4375
        %v5219 = vunpack.c.h.b16 %v4375
        %v5220 = vunpack.c.l.b16 %v4376
        %v5221 = vunpack.c.h.b16 %v4376
        %v5222 = vunpack.c.l.b16 %v4377
        %v5223 = vunpack.c.h.b16 %v4377
        %v5224 = vunpack.c.l.b16 %v4378
        %v5225 = vunpack.c.h.b16 %v4378
        %v5226 = vunpack.c.l.b16 %v4379
        %v5227 = vunpack.c.h.b16 %v4379
        %v5228 = vunpack.c.l.b16 %v4380
        %v5229 = vunpack.c.h.b16 %v4380
        %v5230 = vunpack.c.l.b16 %v4381
        %v5231 = vunpack.c.h.b16 %v4381
        %v5232 = vunpack.c.l.b16 %v4382
        %v5233 = vunpack.c.h.b16 %v4382
        %v5234 = vunpack.c.l.b16 %v4383
        %v5235 = vunpack.c.h.b16 %v4383
        %v5236 = vunpack.c.l.b16 %v4384
        %v5237 = vunpack.c.h.b16 %v4384
        %v5238 = vunpack.c.l.b16 %v4385
        %v5239 = vunpack.c.h.b16 %v4385
        %v5240 = vunpack.c.l.b16 %v4386
        %v5241 = vunpack.c.h.b16 %v4386
        %v5242 = vunpack.c.l.b16 %v4387
        %v5243 = vunpack.c.h.b16 %v4387
        %v5244 = vunpack.c.l.b16 %v4388
        %v5245 = vunpack.c.h.b16 %v4388
        %v5246 = vunpack.c.l.b16 %v4389
        %v5247 = vunpack.c.h.b16 %v4389
        %v5248 = vunpack.c.l.b16 %v4390
        %v5249 = vunpack.c.h.b16 %v4390
        %v5250 = vunpack.c.l.b16 %v4391
        %v5251 = vunpack.c.h.b16 %v4391
        %v5252 = vunpack.c.l.b16 %v4392
        %v5253 = vunpack.c.h.b16 %v4392
        %v5254 = vunpack.c.l.b16 %v4393
        %v5255 = vunpack.c.h.b16 %v4393
        %v5256 = vunpack.c.l.b16 %v4394
        %v5257 = vunpack.c.h.b16 %v4394
        %v5258 = vunpack.c.l.b16 %v4395
        %v5259 = vunpack.c.h.b16 %v4395
        %v5260 = vunpack.c.l.b16 %v4396
        %v5261 = vunpack.c.h.b16 %v4396
        %v5262 = vunpack.c.l.b16 %v4397
        %v5263 = vunpack.c.h.b16 %v4397
        %v5264 = vunpack.c.l.b16 %v4398
        %v5265 = vunpack.c.h.b16 %v4398
        %v5266 = vunpack.c.l.b16 %v4399
        %v5267 = vunpack.c.h.b16 %v4399
        %v5268 = vunpack.c.l.b16 %v4400
        %v5269 = vunpack.c.h.b16 %v4400
        %v5270 = vunpack.c.l.b16 %v4401
        %v5271 = vunpack.c.h.b16 %v4401
        %v5272 = vunpack.c.l.b16 %v4402
        %v5273 = vunpack.c.h.b16 %v4402
        %v5274 = vunpack.c.l.b16 %v4403
        %v5275 = vunpack.c.h.b16 %v4403
        %v5276 = vunpack.c.l.b16 %v4404
        %v5277 = vunpack.c.h.b16 %v4404
        %v5278 = vunpack.c.l.b16 %v4405
        %v5279 = vunpack.c.h.b16 %v4405
        %v5280 = vunpack.c.l.b16 %v4406
        %v5281 = vunpack.c.h.b16 %v4406
        %v5282 = vunpack.c.l.b16 %v4407
        %v5283 = vunpack.c.h.b16 %v4407
        %v5284 = vunpack.c.l.b16 %v4408
        %v5285 = vunpack.c.h.b16 %v4408
        %v5286 = vunpack.c.l.b16 %v4409
        %v5287 = vunpack.c.h.b16 %v4409
        %v5288 = vunpack.c.l.b16 %v4410
        %v5289 = vunpack.c.h.b16 %v4410
        %v5290 = vunpack.c.l.b16 %v4411
        %v5291 = vunpack.c.h.b16 %v4411
        %v5292 = vunpack.c.l.b16 %v4412
        %v5293 = vunpack.c.h.b16 %v4412
        %v5294 = vunpack.c.l.b16 %v4413
        %v5295 = vunpack.c.h.b16 %v4413
        %v5296 = vunpack.c.l.b16 %v4414
        %v5297 = vunpack.c.h.b16 %v4414
        %v5298 = vunpack.c.l.b16 %v4415
        %v5299 = vunpack.c.h.b16 %v4415
        %v5300 = vunpack.c.l.b16 %v4416
        %v5301 = vunpack.c.h.b16 %v4416
        %v5302 = vunpack.c.l.b16 %v4417
        %v5303 = vunpack.c.h.b16 %v4417
        %v5304 = vunpack.c.l.b16 %v4418
        %v5305 = vunpack.c.h.b16 %v4418
        %v5306 = vunpack.c.l.b16 %v4419
        %v5307 = vunpack.c.h.b16 %v4419
        %v5308 = vunpack.c.l.b16 %v4420
        %v5309 = vunpack.c.h.b16 %v4420
        %v5310 = vunpack.c.l.b16 %v4421
        %v5311 = vunpack.c.h.b16 %v4421
        %v5312 = vunpack.c.l.b16 %v4422
        %v5313 = vunpack.c.h.b16 %v4422
        %v5314 = vunpack.c.l.b16 %v4423
        %v5315 = vunpack.c.h.b16 %v4423
        %v5316 = vunpack.c.l.b16 %v4424
        %v5317 = vunpack.c.h.b16 %v4424
        %v5318 = vunpack.c.l.b16 %v4425
        %v5319 = vunpack.c.h.b16 %v4425
        %v5320 = vunpack.c.l.b16 %v4426
        %v5321 = vunpack.c.h.b16 %v4426
        %v5322 = vunpack.c.l.b16 %v4427
        %v5323 = vunpack.c.h.b16 %v4427
        %v5324 = vunpack.c.l.b16 %v4428
        %v5325 = vunpack.c.h.b16 %v4428
        %v5326 = vunpack.c.l.b16 %v4429
        %v5327 = vunpack.c.h.b16 %v4429
        %v5328 = vunpack.c.l.b16 %v4430
        %v5329 = vunpack.c.h.b16 %v4430
        %v5330 = vunpack.c.l.b16 %v4431
        %v5331 = vunpack.c.h.b16 %v4431
        %v5332 = vunpack.c.l.b16 %v4432
        %v5333 = vunpack.c.h.b16 %v4432
        %v5334 = vunpack.c.l.b16 %v4433
        %v5335 = vunpack.c.h.b16 %v4433
        %v5336 = vunpack.c.l.b16 %v4434
        %v5337 = vunpack.c.h.b16 %v4434
        %v5338 = vunpack.c.l.b16 %v4435
        %v5339 = vunpack.c.h.b16 %v4435
        %v5340 = vunpack.c.l.b16 %v4436
        %v5341 = vunpack.c.h.b16 %v4436
        %v5342 = vunpack.c.l.b16 %v4437
        %v5343 = vunpack.c.h.b16 %v4437
        %v5344 = vunpack.c.l.b16 %v4438
        %v5345 = vunpack.c.h.b16 %v4438
        %v5346 = vunpack.c.l.b16 %v4439
        %v5347 = vunpack.c.h.b16 %v4439
        %v5348 = vunpack.c.l.b16 %v4440
        %v5349 = vunpack.c.h.b16 %v4440
        %v5350 = vunpack.c.l.b16 %v4441
        %v5351 = vunpack.c.h.b16 %v4441
        %v5352 = vunpack.c.l.b16 %v4442
        %v5353 = vunpack.c.h.b16 %v4442
        %v5354 = vunpack.c.l.b16 %v4443
        %v5355 = vunpack.c.h.b16 %v4443
        %v5356 = vunpack.c.l.b16 %v4444
        %v5357 = vunpack.c.h.b16 %v4444
        %v5358 = vunpack.c.l.b16 %v4445
        %v5359 = vunpack.c.h.b16 %v4445
        %v5360 = vunpack.c.l.b16 %v4446
        %v5361 = vunpack.c.h.b16 %v4446
        %v5362 = vunpack.c.l.b16 %v4447
        %v5363 = vunpack.c.h.b16 %v4447
        %v5364 = vunpack.c.l.b16 %v4448
        %v5365 = vunpack.c.h.b16 %v4448
        %v5366 = vpack.c.b16 %v4796, %v4790
        %v5367 = vpack.c.b16 %v4797, %v4791
        %v5368 = vpack.c.b16 %v4798, %v4792
        %v5369 = vpack.c.b16 %v4799, %v4793
        %v5370 = vpack.c.b16 %v4800, %v4794
        %v5371 = vpack.c.b16 %v4801, %v4795
        %v5372 = vpack.c.b16 %v4808, %v4802
        %v5373 = vpack.c.b16 %v4809, %v4803
        %v5374 = vpack.c.b16 %v4810, %v4804
        %v5375 = vpack.c.b16 %v4811, %v4805
        %v5376 = vpack.c.b16 %v4812, %v4806
        %v5377 = vpack.c.b16 %v4813, %v4807
        %v5378 = vpack.c.b16 %v4820, %v4814
        %v5379 = vpack.c.b16 %v4821, %v4815
        %v5380 = vpack.c.b16 %v4822, %v4816
        %v5381 = vpack.c.b16 %v4823, %v4817
        %v5382 = vpack.c.b16 %v4824, %v4818
        %v5383 = vpack.c.b16 %v4825, %v4819
        %v5384 = vpack.c.b16 %v4832, %v4826
        %v5385 = vpack.c.b16 %v4833, %v4827
        %v5386 = vpack.c.b16 %v4834, %v4828
        %v5387 = vpack.c.b16 %v4835, %v4829
        %v5388 = vpack.c.b16 %v4836, %v4830
        %v5389 = vpack.c.b16 %v4837, %v4831
        %v5390 = vpack.c.b16 %v4844, %v4838
        %v5391 = vpack.c.b16 %v4845, %v4839
        %v5392 = vpack.c.b16 %v4846, %v4840
        %v5393 = vpack.c.b16 %v4847, %v4841
        %v5394 = vpack.c.b16 %v4848, %v4842
        %v5395 = vpack.c.b16 %v4849, %v4843
        %v5396 = vpack.c.b16 %v4856, %v4850
        %v5397 = vpack.c.b16 %v4857, %v4851
        %v5398 = vpack.c.b16 %v4858, %v4852
        %v5399 = vpack.c.b16 %v4859, %v4853
        %v5400 = vpack.c.b16 %v4860, %v4854
        %v5401 = vpack.c.b16 %v4861, %v4855
        %v5402 = vpack.c.b16 %v4868, %v4862
        %v5403 = vpack.c.b16 %v4869, %v4863
        %v5404 = vpack.c.b16 %v4870, %v4864
        %v5405 = vpack.c.b16 %v4871, %v4865
        %v5406 = vpack.c.b16 %v4872, %v4866
        %v5407 = vpack.c.b16 %v4873, %v4867
        %v5408 = vpack.c.b16 %v4880, %v4874
        %v5409 = vpack.c.b16 %v4881, %v4875
        %v5410 = vpack.c.b16 %v4882, %v4876
        %v5411 = vpack.c.b16 %v4883, %v4877
        %v5412 = vpack.c.b16 %v4884, %v4878
        %v5413 = vpack.c.b16 %v4885, %v4879
        %v5414 = vpack.c.b16 %v4892, %v4886
        %v5415 = vpack.c.b16 %v4893, %v4887
        %v5416 = vpack.c.b16 %v4894, %v4888
        %v5417 = vpack.c.b16 %v4895, %v4889
        %v5418 = vpack.c.b16 %v4896, %v4890
        %v5419 = vpack.c.b16 %v4897, %v4891
        %v5420 = vpack.c.b16 %v4904, %v4898
        %v5421 = vpack.c.b16 %v4905, %v4899
        %v5422 = vpack.c.b16 %v4906, %v4900
        %v5423 = vpack.c.b16 %v4907, %v4901
        %v5424 = vpack.c.b16 %v4908, %v4902
        %v5425 = vpack.c.b16 %v4909, %v4903
        %v5426 = vpack.c.b16 %v4916, %v4910
        %v5427 = vpack.c.b16 %v4917, %v4911
        %v5428 = vpack.c.b16 %v4918, %v4912
        %v5429 = vpack.c.b16 %v4919, %v4913
        %v5430 = vpack.c.b16 %v4920, %v4914
        %v5431 = vpack.c.b16 %v4921, %v4915
        %v5432 = vpack.c.b16 %v4928, %v4922
        %v5433 = vpack.c.b16 %v4929, %v4923
        %v5434 = vpack.c.b16 %v4930, %v4924
        %v5435 = vpack.c.b16 %v4931, %v4925
        %v5436 = vpack.c.b16 %v4932, %v4926
        %v5437 = vpack.c.b16 %v4933, %v4927
        %v5438 = vpack.c.b16 %v4940, %v4934
        %v5439 = vpack.c.b16 %v4941, %v4935
        %v5440 = vpack.c.b16 %v4942, %v4936
        %v5441 = vpack.c.b16 %v4943, %v4937
        %v5442 = vpack.c.b16 %v4944, %v4938
        %v5443 = vpack.c.b16 %v4945, %v4939
        %v5444 = vpack.c.b16 %v4952, %v4946
        %v5445 = vpack.c.b16 %v4953, %v4947
        %v5446 = vpack.c.b16 %v4954, %v4948
        %v5447 = vpack.c.b16 %v4955, %v4949
        %v5448 = vpack.c.b16 %v4956, %v4950
        %v5449 = vpack.c.b16 %v4957, %v4951
        %v5450 = vpack.c.b16 %v4964, %v4958
        %v5451 = vpack.c.b16 %v4965, %v4959
        %v5452 = vpack.c.b16 %v4966, %v4960
        %v5453 = vpack.c.b16 %v4967, %v4961
        %v5454 = vpack.c.b16 %v4968, %v4962
        %v5455 = vpack.c.b16 %v4969, %v4963
        %v5456 = vpack.c.b16 %v4976, %v4970
        %v5457 = vpack.c.b16 %v4977, %v4971
        %v5458 = vpack.c.b16 %v4978, %v4972
        %v5459 = vpack.c.b16 %v4979, %v4973
        %v5460 = vpack.c.b16 %v4980, %v4974
        %v5461 = vpack.c.b16 %v4981, %v4975
        %v5462 = vpack.c.b16 %v4988, %v4982
        %v5463 = vpack.c.b16 %v4989, %v4983
        %v5464 = vpack.c.b16 %v4990, %v4984
        %v5465 = vpack.c.b16 %v4991, %v4985
        %v5466 = vpack.c.b16 %v4992, %v4986
        %v5467 = vpack.c.b16 %v4993, %v4987
        %v5468 = vpack.c.b16 %v5000, %v4994
        %v5469 = vpack.c.b16 %v5001, %v4995
        %v5470 = vpack.c.b16 %v5002, %v4996
        %v5471 = vpack.c.b16 %v5003, %v4997
        %v5472 = vpack.c.b16 %v5004, %v4998
        %v5473 = vpack.c.b16 %v5005, %v4999
        %v5474 = vpack.c.b16 %v5012, %v5006
        %v5475 = vpack.c.b16 %v5013, %v5007
        %v5476 = vpack.c.b16 %v5014, %v5008
        %v5477 = vpack.c.b16 %v5015, %v5009
        %v5478 = vpack.c.b16 %v5016, %v5010
        %v5479 = vpack.c.b16 %v5017, %v5011
        %v5480 = vpack.c.b16 %v5024, %v5018
        %v5481 = vpack.c.b16 %v5025, %v5019
        %v5482 = vpack.c.b16 %v5026, %v5020
        %v5483 = vpack.c.b16 %v5027, %v5021
        %v5484 = vpack.c.b16 %v5028, %v5022
        %v5485 = vpack.c.b16 %v5029, %v5023
        %v5486 = vpack.c.b16 %v5036, %v5030
        %v5487 = vpack.c.b16 %v5037, %v5031
        %v5488 = vpack.c.b16 %v5038, %v5032
        %v5489 = vpack.c.b16 %v5039, %v5033
        %v5490 = vpack.c.b16 %v5040, %v5034
        %v5491 = vpack.c.b16 %v5041, %v5035
        %v5492 = vpack.c.b16 %v5048, %v5042
        %v5493 = vpack.c.b16 %v5049, %v5043
        %v5494 = vpack.c.b16 %v5050, %v5044
        %v5495 = vpack.c.b16 %v5051, %v5045
        %v5496 = vpack.c.b16 %v5052, %v5046
        %v5497 = vpack.c.b16 %v5053, %v5047
        %v5498 = vpack.c.b16 %v5060, %v5054
        %v5499 = vpack.c.b16 %v5061, %v5055
        %v5500 = vpack.c.b16 %v5062, %v5056
        %v5501 = vpack.c.b16 %v5063, %v5057
        %v5502 = vpack.c.b16 %v5064, %v5058
        %v5503 = vpack.c.b16 %v5065, %v5059
        %v5504 = vpack.c.b16 %v5072, %v5066
        %v5505 = vpack.c.b16 %v5073, %v5067
        %v5506 = vpack.c.b16 %v5074, %v5068
        %v5507 = vpack.c.b16 %v5075, %v5069
        %v5508 = vpack.c.b16 %v5076, %v5070
        %v5509 = vpack.c.b16 %v5077, %v5071
        %v5510 = vpack.c.b16 %v5084, %v5078
        %v5511 = vpack.c.b16 %v5085, %v5079
        %v5512 = vpack.c.b16 %v5086, %v5080
        %v5513 = vpack.c.b16 %v5087, %v5081
        %v5514 = vpack.c.b16 %v5088, %v5082
        %v5515 = vpack.c.b16 %v5089, %v5083
        %v5516 = vpack.c.b16 %v5096, %v5090
        %v5517 = vpack.c.b16 %v5097, %v5091
        %v5518 = vpack.c.b16 %v5098, %v5092
        %v5519 = vpack.c.b16 %v5099, %v5093
        %v5520 = vpack.c.b16 %v5100, %v5094
        %v5521 = vpack.c.b16 %v5101, %v5095
        %v5522 = vpack.c.b16 %v5108, %v5102
        %v5523 = vpack.c.b16 %v5109, %v5103
        %v5524 = vpack.c.b16 %v5110, %v5104
        %v5525 = vpack.c.b16 %v5111, %v5105
        %v5526 = vpack.c.b16 %v5112, %v5106
        %v5527 = vpack.c.b16 %v5113, %v5107
        %v5528 = vpack.c.b16 %v5120, %v5114
        %v5529 = vpack.c.b16 %v5121, %v5115
        %v5530 = vpack.c.b16 %v5122, %v5116
        %v5531 = vpack.c.b16 %v5123, %v5117
        %v5532 = vpack.c.b16 %v5124, %v5118
        %v5533 = vpack.c.b16 %v5125, %v5119
        %v5534 = vpack.c.b16 %v5132, %v5126
        %v5535 = vpack.c.b16 %v5133, %v5127
        %v5536 = vpack.c.b16 %v5134, %v5128
        %v5537 = vpack.c.b16 %v5135, %v5129
        %v5538 = vpack.c.b16 %v5136, %v5130
        %v5539 = vpack.c.b16 %v5137, %v5131
        %v5540 = vpack.c.b16 %v5144, %v5138
        %v5541 = vpack.c.b16 %v5145, %v5139
        %v5542 = vpack.c.b16 %v5146, %v5140
        %v5543 = vpack.c.b16 %v5147, %v5141
        %v5544 = vpack.c.b16 %v5148, %v5142
        %v5545 = vpack.c.b16 %v5149, %v5143
        %v5546 = vpack.c.b16 %v5156, %v5150
        %v5547 = vpack.c.b16 %v5157, %v5151
        %v5548 = vpack.c.b16 %v5158, %v5152
        %v5549 = vpack.c.b16 %v5159, %v5153
        %v5550 = vpack.c.b16 %v5160, %v5154
        %v5551 = vpack.c.b16 %v5161, %v5155
        %v5552 = vpack.c.b16 %v5168, %v5162
        %v5553 = vpack.c.b16 %v5169, %v5163
        %v5554 = vpack.c.b16 %v5170, %v5164
        %v5555 = vpack.c.b16 %v5171, %v5165
        %v5556 = vpack.c.b16 %v5172, %v5166
        %v5557 = vpack.c.b16 %v5173, %v5167
        %v5558 = vpack.c.b16 %v5180, %v5174
        %v5559 = vpack.c.b16 %v5181, %v5175
        %v5560 = vpack.c.b16 %v5182, %v5176
        %v5561 = vpack.c.b16 %v5183, %v5177
        %v5562 = vpack.c.b16 %v5184, %v5178
        %v5563 = vpack.c.b16 %v5185, %v5179
        %v5564 = vpack.c.b16 %v5192, %v5186
        %v5565 = vpack.c.b16 %v5193, %v5187
        %v5566 = vpack.c.b16 %v5194, %v5188
        %v5567 = vpack.c.b16 %v5195, %v5189
        %v5568 = vpack.c.b16 %v5196, %v5190
        %v5569 = vpack.c.b16 %v5197, %v5191
        %v5570 = vpack.c.b16 %v5204, %v5198
        %v5571 = vpack.c.b16 %v5205, %v5199
        %v5572 = vpack.c.b16 %v5206, %v5200
        %v5573 = vpack.c.b16 %v5207, %v5201
        %v5574 = vpack.c.b16 %v5208, %v5202
        %v5575 = vpack.c.b16 %v5209, %v5203
        %v5576 = vpack.c.b16 %v5216, %v5210
        %v5577 = vpack.c.b16 %v5217, %v5211
        %v5578 = vpack.c.b16 %v5218, %v5212
        %v5579 = vpack.c.b16 %v5219, %v5213
        %v5580 = vpack.c.b16 %v5220, %v5214
        %v5581 = vpack.c.b16 %v5221, %v5215
        %v5582 = vpack.c.b16 %v5228, %v5222
        %v5583 = vpack.c.b16 %v5229, %v5223
        %v5584 = vpack.c.b16 %v5230, %v5224
        %v5585 = vpack.c.b16 %v5231, %v5225
        %v5586 = vpack.c.b16 %v5232, %v5226
        %v5587 = vpack.c.b16 %v5233, %v5227
        %v5588 = vpack.c.b16 %v5240, %v5234
        %v5589 = vpack.c.b16 %v5241, %v5235
        %v5590 = vpack.c.b16 %v5242, %v5236
        %v5591 = vpack.c.b16 %v5243, %v5237
        %v5592 = vpack.c.b16 %v5244, %v5238
        %v5593 = vpack.c.b16 %v5245, %v5239
        %v5594 = vpack.c.b16 %v5252, %v5246
        %v5595 = vpack.c.b16 %v5253, %v5247
        %v5596 = vpack.c.b16 %v5254, %v5248
        %v5597 = vpack.c.b16 %v5255, %v5249
        %v5598 = vpack.c.b16 %v5256, %v5250
        %v5599 = vpack.c.b16 %v5257, %v5251
        %v5600 = vpack.c.b16 %v5264, %v5258
        %v5601 = vpack.c.b16 %v5265, %v5259
        %v5602 = vpack.c.b16 %v5266, %v5260
        %v5603 = vpack.c.b16 %v5267, %v5261
        %v5604 = vpack.c.b16 %v5268, %v5262
        %v5605 = vpack.c.b16 %v5269, %v5263
        %v5606 = vpack.c.b16 %v5276, %v5270
        %v5607 = vpack.c.b16 %v5277, %v5271
        %v5608 = vpack.c.b16 %v5278, %v5272
        %v5609 = vpack.c.b16 %v5279, %v5273
        %v5610 = vpack.c.b16 %v5280, %v5274
        %v5611 = vpack.c.b16 %v5281, %v5275
        %v5612 = vpack.c.b16 %v5288, %v5282
        %v5613 = vpack.c.b16 %v5289, %v5283
        %v5614 = vpack.c.b16 %v5290, %v5284
        %v5615 = vpack.c.b16 %v5291, %v5285
        %v5616 = vpack.c.b16 %v5292, %v5286
        %v5617 = vpack.c.b16 %v5293, %v5287
        %v5618 = vpack.c.b16 %v5300, %v5294
        %v5619 = vpack.c.b16 %v5301, %v5295
        %v5620 = vpack.c.b16 %v5302, %v5296
        %v5621 = vpack.c.b16 %v5303, %v5297
        %v5622 = vpack.c.b16 %v5304, %v5298
        %v5623 = vpack.c.b16 %v5305, %v5299
        %v5624 = vpack.c.b16 %v5312, %v5306
        %v5625 = vpack.c.b16 %v5313, %v5307
        %v5626 = vpack.c.b16 %v5314, %v5308
        %v5627 = vpack.c.b16 %v5315, %v5309
        %v5628 = vpack.c.b16 %v5316, %v5310
        %v5629 = vpack.c.b16 %v5317, %v5311
        %v5630 = vpack.c.b16 %v5324, %v5318
        %v5631 = vpack.c.b16 %v5325, %v5319
        %v5632 = vpack.c.b16 %v5326, %v5320
        %v5633 = vpack.c.b16 %v5327, %v5321
        %v5634 = vpack.c.b16 %v5328, %v5322
        %v5635 = vpack.c.b16 %v5329, %v5323
        %v5636 = vpack.c.b16 %v5336, %v5330
        %v5637 = vpack.c.b16 %v5337, %v5331
        %v5638 = vpack.c.b16 %v5338, %v5332
        %v5639 = vpack.c.b16 %v5339, %v5333
        %v5640 = vpack.c.b16 %v5340, %v5334
        %v5641 = vpack.c.b16 %v5341, %v5335
        %v5642 = vpack.c.b16 %v5348, %v5342
        %v5643 = vpack.c.b16 %v5349, %v5343
        %v5644 = vpack.c.b16 %v5350, %v5344
        %v5645 = vpack.c.b16 %v5351, %v5345
        %v5646 = vpack.c.b16 %v5352, %v5346
        %v5647 = vpack.c.b16 %v5353, %v5347
        %v5648 = vpack.c.b16 %v5360, %v5354
        %v5649 = vpack.c.b16 %v5361, %v5355
        %v5650 = vpack.c.b16 %v5362, %v5356
        %v5651 = vpack.c.b16 %v5363, %v5357
        %v5652 = vpack.c.b16 %v5364, %v5358
        %v5653 = vpack.c.b16 %v5365, %v5359
        %5942 = vmatprep.subr.bf16.mxu0 %v5367
        %5943 = vmatpush1.bf16.msra.mxu0 %v5366
        %5944 = vmatprep.subr.bf16.mxu0 %v5373
        %5945 = vmatpush1.bf16.msra.mxu0 %v5372
        %5946 = vmatprep.subr.bf16.mxu0 %v5379
        %5947 = vmatpush1.bf16.msra.mxu0 %v5378
        %5948 = vmatprep.subr.bf16.mxu0 %v5385
        %5949 = vmatpush1.bf16.msra.mxu0 %v5384
        %5950 = vmatprep.subr.bf16.mxu0 %v5391
        %5951 = vmatpush1.bf16.msra.mxu0 %v5390
        %5952 = vmatprep.subr.bf16.mxu0 %v5397
        %5953 = vmatpush1.bf16.msra.mxu0 %v5396
        %5954 = vmatprep.subr.bf16.mxu0 %v5403
        %5955 = vmatpush1.bf16.msra.mxu0 %v5402
        %5956 = vmatprep.subr.bf16.mxu0 %v5409
        %5957 = vmatpush1.bf16.msra.mxu0 %v5408
        %5958 = vmatprep.subr.bf16.mxu0 %v5415
        %5959 = vmatpush1.bf16.msra.mxu0 %v5414
        %5960 = vmatprep.subr.bf16.mxu0 %v5421
        %5961 = vmatpush1.bf16.msra.mxu0 %v5420
        %5962 = vmatprep.subr.bf16.mxu0 %v5427
        %5963 = vmatpush1.bf16.msra.mxu0 %v5426
        %5964 = vmatprep.subr.bf16.mxu0 %v5433
        %5965 = vmatpush1.bf16.msra.mxu0 %v5432
        %5966 = vmatprep.subr.bf16.mxu0 %v5439
        %5967 = vmatpush1.bf16.msra.mxu0 %v5438
        %5968 = vmatprep.subr.bf16.mxu0 %v5445
        %5969 = vmatpush1.bf16.msra.mxu0 %v5444
        %5970 = vmatprep.subr.bf16.mxu0 %v5451
        %5971 = vmatpush1.bf16.msra.mxu0 %v5450
        %5972 = vmatprep.subr.bf16.mxu0 %v5457
        %5973 = vmatpush1.bf16.msra.mxu0 %v5456
        %5974 = vmatprep.mubr.bf16.mxu0 %v4491
        %5975 = vmatmul.mubr.bf16.gmra.mrb[0].mxu0 %v4490
        %v5976 = vpop.f32.mrb[0].mxu0
        %v5977 = vadd.f32 %v4454, %v5976
        %v5978 = vpop.f32.mrb[0].mxu0
        %v5979 = vadd.f32 %v4458, %v5978
        %v5980 = vpop.f32.mrb[0].mxu0
        %v5981 = vpop.f32.mrb[0].mxu0
        %5982 = vdwg.mxu0
        %5983 = vmatprep.subr.bf16.mxu0 %v5463
        %5984 = vmatpush1.bf16.msra.mxu0 %v5462
        %5985 = vmatprep.subr.bf16.mxu0 %v5469
        %5986 = vmatpush1.bf16.msra.mxu0 %v5468
        %5987 = vmatprep.subr.bf16.mxu0 %v5475
        %5988 = vmatpush1.bf16.msra.mxu0 %v5474
        %5989 = vmatprep.subr.bf16.mxu0 %v5481
        %5990 = vmatpush1.bf16.msra.mxu0 %v5480
        %5991 = vmatprep.subr.bf16.mxu0 %v5487
        %5992 = vmatpush1.bf16.msra.mxu0 %v5486
        %5993 = vmatprep.subr.bf16.mxu0 %v5493
        %5994 = vmatpush1.bf16.msra.mxu0 %v5492
        %5995 = vmatprep.subr.bf16.mxu0 %v5499
        %5996 = vmatpush1.bf16.msra.mxu0 %v5498
        %5997 = vmatprep.subr.bf16.mxu0 %v5505
        %5998 = vmatpush1.bf16.msra.mxu0 %v5504
        %5999 = vmatprep.subr.bf16.mxu0 %v5511
        %6000 = vmatpush1.bf16.msra.mxu0 %v5510
        %6001 = vmatprep.subr.bf16.mxu0 %v5517
        %6002 = vmatpush1.bf16.msra.mxu0 %v5516
        %6003 = vmatprep.subr.bf16.mxu0 %v5523
        %6004 = vmatpush1.bf16.msra.mxu0 %v5522
        %6005 = vmatprep.subr.bf16.mxu0 %v5529
        %6006 = vmatpush1.bf16.msra.mxu0 %v5528
        %6007 = vmatprep.subr.bf16.mxu0 %v5535
        %6008 = vmatpush1.bf16.msra.mxu0 %v5534
        %6009 = vmatprep.subr.bf16.mxu0 %v5541
        %6010 = vmatpush1.bf16.msra.mxu0 %v5540
        %6011 = vmatprep.subr.bf16.mxu0 %v5547
        %6012 = vmatpush1.bf16.msra.mxu0 %v5546
        %6013 = vmatprep.subr.bf16.mxu0 %v5553
        %6014 = vmatpush1.bf16.msra.mxu0 %v5552
        %6015 = vmatprep.mubr.bf16.mxu0 %v4493
        %6016 = vmatmul.mubr.bf16.gmra.mrb[0].mxu0 %v4492
        %v6017 = vpop.f32.mrb[0].mxu0
        %v6018 = vadd.f32 %v5977, %v6017
        %v6019 = vpop.f32.mrb[0].mxu0
        %v6020 = vadd.f32 %v5979, %v6019
        %v6021 = vpop.f32.mrb[0].mxu0
        %v6022 = vpop.f32.mrb[0].mxu0
        %6023 = vdwg.mxu0
        %6024 = vmatprep.subr.bf16.mxu0 %v5559
        %6025 = vmatpush1.bf16.msra.mxu0 %v5558
        %6026 = vmatprep.subr.bf16.mxu0 %v5565
        %6027 = vmatpush1.bf16.msra.mxu0 %v5564
        %6028 = vmatprep.subr.bf16.mxu0 %v5571
        %6029 = vmatpush1.bf16.msra.mxu0 %v5570
        %6030 = vmatprep.subr.bf16.mxu0 %v5577
        %6031 = vmatpush1.bf16.msra.mxu0 %v5576
        %6032 = vmatprep.subr.bf16.mxu0 %v5583
        %6033 = vmatpush1.bf16.msra.mxu0 %v5582
        %6034 = vmatprep.subr.bf16.mxu0 %v5589
        %6035 = vmatpush1.bf16.msra.mxu0 %v5588
        %6036 = vmatprep.subr.bf16.mxu0 %v5595
        %6037 = vmatpush1.bf16.msra.mxu0 %v5594
        %6038 = vmatprep.subr.bf16.mxu0 %v5601
        %6039 = vmatpush1.bf16.msra.mxu0 %v5600
        %6040 = vmatprep.subr.bf16.mxu0 %v5607
        %6041 = vmatpush1.bf16.msra.mxu0 %v5606
        %6042 = vmatprep.subr.bf16.mxu0 %v5613
        %6043 = vmatpush1.bf16.msra.mxu0 %v5612
        %6044 = vmatprep.subr.bf16.mxu0 %v5619
        %6045 = vmatpush1.bf16.msra.mxu0 %v5618
        %6046 = vmatprep.subr.bf16.mxu0 %v5625
        %6047 = vmatpush1.bf16.msra.mxu0 %v5624
        %6048 = vmatprep.subr.bf16.mxu0 %v5631
        %6049 = vmatpush1.bf16.msra.mxu0 %v5630
        %6050 = vmatprep.subr.bf16.mxu0 %v5637
        %6051 = vmatpush1.bf16.msra.mxu0 %v5636
        %6052 = vmatprep.subr.bf16.mxu0 %v5643
        %6053 = vmatpush1.bf16.msra.mxu0 %v5642
        %6054 = vmatprep.subr.bf16.mxu0 %v5649
        %6055 = vmatpush1.bf16.msra.mxu0 %v5648
        %6056 = vmatprep.mubr.bf16.mxu0 %v4495
        %6057 = vmatmul.mubr.bf16.gmra.mrb[0].mxu0 %v4494
        %v6058 = vpop.f32.mrb[0].mxu0
        %v6059 = vadd.f32 %v6018, %v6058
        %v6060 = vpop.f32.mrb[0].mxu0
        %v6061 = vadd.f32 %v6020, %v6060
        %v6062 = vpop.f32.mrb[0].mxu0
        %v6063 = vpop.f32.mrb[0].mxu0
        %6064 = vdwg.mxu0
        %6065 = vmatprep.subr.bf16.mxu0 %v5369
        %6066 = vmatpush1.bf16.msra.mxu0 %v5368
        %6067 = vmatprep.subr.bf16.mxu0 %v5375
        %6068 = vmatpush1.bf16.msra.mxu0 %v5374
        %6069 = vmatprep.subr.bf16.mxu0 %v5381
        %6070 = vmatpush1.bf16.msra.mxu0 %v5380
        %6071 = vmatprep.subr.bf16.mxu0 %v5387
        %6072 = vmatpush1.bf16.msra.mxu0 %v5386
        %6073 = vmatprep.subr.bf16.mxu0 %v5393
        %6074 = vmatpush1.bf16.msra.mxu0 %v5392
        %6075 = vmatprep.subr.bf16.mxu0 %v5399
        %6076 = vmatpush1.bf16.msra.mxu0 %v5398
        %6077 = vmatprep.subr.bf16.mxu0 %v5405
        %6078 = vmatpush1.bf16.msra.mxu0 %v5404
        %6079 = vmatprep.subr.bf16.mxu0 %v5411
        %6080 = vmatpush1.bf16.msra.mxu0 %v5410
        %6081 = vmatprep.subr.bf16.mxu0 %v5417
        %6082 = vmatpush1.bf16.msra.mxu0 %v5416
        %6083 = vmatprep.subr.bf16.mxu0 %v5423
        %6084 = vmatpush1.bf16.msra.mxu0 %v5422
        %6085 = vmatprep.subr.bf16.mxu0 %v5429
        %6086 = vmatpush1.bf16.msra.mxu0 %v5428
        %6087 = vmatprep.subr.bf16.mxu0 %v5435
        %6088 = vmatpush1.bf16.msra.mxu0 %v5434
        %6089 = vmatprep.subr.bf16.mxu0 %v5441
        %6090 = vmatpush1.bf16.msra.mxu0 %v5440
        %6091 = vmatprep.subr.bf16.mxu0 %v5447
        %6092 = vmatpush1.bf16.msra.mxu0 %v5446
        %6093 = vmatprep.subr.bf16.mxu0 %v5453
        %6094 = vmatpush1.bf16.msra.mxu0 %v5452
        %6095 = vmatprep.subr.bf16.mxu0 %v5459
        %6096 = vmatpush1.bf16.msra.mxu0 %v5458
        %6097 = vmatprep.mubr.bf16.mxu0 %v4491
        %6098 = vmatmul.mubr.bf16.gmra.mrb[0].mxu0 %v4490
        %v6099 = vpop.f32.mrb[0].mxu0
        %v6100 = vadd.f32 %v4462, %v6099
        %v6101 = vpop.f32.mrb[0].mxu0
        %v6102 = vadd.f32 %v4466, %v6101
        %v6103 = vpop.f32.mrb[0].mxu0
        %v6104 = vpop.f32.mrb[0].mxu0
        %6105 = vdwg.mxu0
        %6106 = vmatprep.subr.bf16.mxu0 %v5465
        %6107 = vmatpush1.bf16.msra.mxu0 %v5464
        %6108 = vmatprep.subr.bf16.mxu0 %v5471
        %6109 = vmatpush1.bf16.msra.mxu0 %v5470
        %6110 = vmatprep.subr.bf16.mxu0 %v5477
        %6111 = vmatpush1.bf16.msra.mxu0 %v5476
        %6112 = vmatprep.subr.bf16.mxu0 %v5483
        %6113 = vmatpush1.bf16.msra.mxu0 %v5482
        %6114 = vmatprep.subr.bf16.mxu0 %v5489
        %6115 = vmatpush1.bf16.msra.mxu0 %v5488
        %6116 = vmatprep.subr.bf16.mxu0 %v5495
        %6117 = vmatpush1.bf16.msra.mxu0 %v5494
        %6118 = vmatprep.subr.bf16.mxu0 %v5501
        %6119 = vmatpush1.bf16.msra.mxu0 %v5500
        %6120 = vmatprep.subr.bf16.mxu0 %v5507
        %6121 = vmatpush1.bf16.msra.mxu0 %v5506
        %6122 = vmatprep.subr.bf16.mxu0 %v5513
        %6123 = vmatpush1.bf16.msra.mxu0 %v5512
        %6124 = vmatprep.subr.bf16.mxu0 %v5519
        %6125 = vmatpush1.bf16.msra.mxu0 %v5518
        %6126 = vmatprep.subr.bf16.mxu0 %v5525
        %6127 = vmatpush1.bf16.msra.mxu0 %v5524
        %6128 = vmatprep.subr.bf16.mxu0 %v5531
        %6129 = vmatpush1.bf16.msra.mxu0 %v5530
        %6130 = vmatprep.subr.bf16.mxu0 %v5537
        %6131 = vmatpush1.bf16.msra.mxu0 %v5536
        %6132 = vmatprep.subr.bf16.mxu0 %v5543
        %6133 = vmatpush1.bf16.msra.mxu0 %v5542
        %6134 = vmatprep.subr.bf16.mxu0 %v5549
        %6135 = vmatpush1.bf16.msra.mxu0 %v5548
        %6136 = vmatprep.subr.bf16.mxu0 %v5555
        %6137 = vmatpush1.bf16.msra.mxu0 %v5554
        %6138 = vmatprep.mubr.bf16.mxu0 %v4493
        %6139 = vmatmul.mubr.bf16.gmra.mrb[0].mxu0 %v4492
        %v6140 = vpop.f32.mrb[0].mxu0
        %v6141 = vadd.f32 %v6100, %v6140
        %v6142 = vpop.f32.mrb[0].mxu0
        %v6143 = vadd.f32 %v6102, %v6142
        %v6144 = vpop.f32.mrb[0].mxu0
        %v6145 = vpop.f32.mrb[0].mxu0
        %6146 = vdwg.mxu0
        %6147 = vmatprep.subr.bf16.mxu0 %v5561
        %6148 = vmatpush1.bf16.msra.mxu0 %v5560
        %6149 = vmatprep.subr.bf16.mxu0 %v5567
        %6150 = vmatpush1.bf16.msra.mxu0 %v5566
        %6151 = vmatprep.subr.bf16.mxu0 %v5573
        %6152 = vmatpush1.bf16.msra.mxu0 %v5572
        %6153 = vmatprep.subr.bf16.mxu0 %v5579
        %6154 = vmatpush1.bf16.msra.mxu0 %v5578
        %6155 = vmatprep.subr.bf16.mxu0 %v5585
        %6156 = vmatpush1.bf16.msra.mxu0 %v5584
        %6157 = vmatprep.subr.bf16.mxu0 %v5591
        %6158 = vmatpush1.bf16.msra.mxu0 %v5590
        %6159 = vmatprep.subr.bf16.mxu0 %v5597
        %6160 = vmatpush1.bf16.msra.mxu0 %v5596
        %6161 = vmatprep.subr.bf16.mxu0 %v5603
        %6162 = vmatpush1.bf16.msra.mxu0 %v5602
        %6163 = vmatprep.subr.bf16.mxu0 %v5609
        %6164 = vmatpush1.bf16.msra.mxu0 %v5608
        %6165 = vmatprep.subr.bf16.mxu0 %v5615
        %6166 = vmatpush1.bf16.msra.mxu0 %v5614
        %6167 = vmatprep.subr.bf16.mxu0 %v5621
        %6168 = vmatpush1.bf16.msra.mxu0 %v5620
        %6169 = vmatprep.subr.bf16.mxu0 %v5627
        %6170 = vmatpush1.bf16.msra.mxu0 %v5626
        %6171 = vmatprep.subr.bf16.mxu0 %v5633
        %6172 = vmatpush1.bf16.msra.mxu0 %v5632
        %6173 = vmatprep.subr.bf16.mxu0 %v5639
        %6174 = vmatpush1.bf16.msra.mxu0 %v5638
        %6175 = vmatprep.subr.bf16.mxu0 %v5645
        %6176 = vmatpush1.bf16.msra.mxu0 %v5644
        %6177 = vmatprep.subr.bf16.mxu0 %v5651
        %6178 = vmatpush1.bf16.msra.mxu0 %v5650
        %6179 = vmatprep.mubr.bf16.mxu0 %v4495
        %6180 = vmatmul.mubr.bf16.gmra.mrb[0].mxu0 %v4494
        %v6181 = vpop.f32.mrb[0].mxu0
        %v6182 = vadd.f32 %v6141, %v6181
        %v6183 = vpop.f32.mrb[0].mxu0
        %v6184 = vadd.f32 %v6143, %v6183
        %v6185 = vpop.f32.mrb[0].mxu0
        %v6186 = vpop.f32.mrb[0].mxu0
        %6187 = vdwg.mxu0
        %6188 = vmatprep.subr.bf16.mxu0 %v5371
        %6189 = vmatpush1.bf16.msra.mxu0 %v5370
        %6190 = vmatprep.subr.bf16.mxu0 %v5377
        %6191 = vmatpush1.bf16.msra.mxu0 %v5376
        %6192 = vmatprep.subr.bf16.mxu0 %v5383
        %6193 = vmatpush1.bf16.msra.mxu0 %v5382
        %6194 = vmatprep.subr.bf16.mxu0 %v5389
        %6195 = vmatpush1.bf16.msra.mxu0 %v5388
        %6196 = vmatprep.subr.bf16.mxu0 %v5395
        %6197 = vmatpush1.bf16.msra.mxu0 %v5394
        %6198 = vmatprep.subr.bf16.mxu0 %v5401
        %6199 = vmatpush1.bf16.msra.mxu0 %v5400
        %6200 = vmatprep.subr.bf16.mxu0 %v5407
        %6201 = vmatpush1.bf16.msra.mxu0 %v5406
        %6202 = vmatprep.subr.bf16.mxu0 %v5413
        %6203 = vmatpush1.bf16.msra.mxu0 %v5412
        %6204 = vmatprep.subr.bf16.mxu0 %v5419
        %6205 = vmatpush1.bf16.msra.mxu0 %v5418
        %6206 = vmatprep.subr.bf16.mxu0 %v5425
        %6207 = vmatpush1.bf16.msra.mxu0 %v5424
        %6208 = vmatprep.subr.bf16.mxu0 %v5431
        %6209 = vmatpush1.bf16.msra.mxu0 %v5430
        %6210 = vmatprep.subr.bf16.mxu0 %v5437
        %6211 = vmatpush1.bf16.msra.mxu0 %v5436
        %6212 = vmatprep.subr.bf16.mxu0 %v5443
        %6213 = vmatpush1.bf16.msra.mxu0 %v5442
        %6214 = vmatprep.subr.bf16.mxu0 %v5449
        %6215 = vmatpush1.bf16.msra.mxu0 %v5448
        %6216 = vmatprep.subr.bf16.mxu0 %v5455
        %6217 = vmatpush1.bf16.msra.mxu0 %v5454
        %6218 = vmatprep.subr.bf16.mxu0 %v5461
        %6219 = vmatpush1.bf16.msra.mxu0 %v5460
        %6220 = vmatprep.mubr.bf16.mxu0 %v4491
        %6221 = vmatmul.mubr.bf16.gmra.mrb[0].mxu0 %v4490
        %v6222 = vpop.f32.mrb[0].mxu0
        %v6223 = vadd.f32 %v4470, %v6222
        %v6224 = vpop.f32.mrb[0].mxu0
        %v6225 = vadd.f32 %v4474, %v6224
        %v6226 = vpop.f32.mrb[0].mxu0
        %v6227 = vpop.f32.mrb[0].mxu0
        %6228 = vdwg.mxu0
        %6229 = vmatprep.subr.bf16.mxu0 %v5467
        %6230 = vmatpush1.bf16.msra.mxu0 %v5466
        %6231 = vmatprep.subr.bf16.mxu0 %v5473
        %6232 = vmatpush1.bf16.msra.mxu0 %v5472
        %6233 = vmatprep.subr.bf16.mxu0 %v5479
        %6234 = vmatpush1.bf16.msra.mxu0 %v5478
        %6235 = vmatprep.subr.bf16.mxu0 %v5485
        %6236 = vmatpush1.bf16.msra.mxu0 %v5484
        %6237 = vmatprep.subr.bf16.mxu0 %v5491
        %6238 = vmatpush1.bf16.msra.mxu0 %v5490
        %6239 = vmatprep.subr.bf16.mxu0 %v5497
        %6240 = vmatpush1.bf16.msra.mxu0 %v5496
        %6241 = vmatprep.subr.bf16.mxu0 %v5503
        %6242 = vmatpush1.bf16.msra.mxu0 %v5502
        %6243 = vmatprep.subr.bf16.mxu0 %v5509
        %6244 = vmatpush1.bf16.msra.mxu0 %v5508
        %6245 = vmatprep.subr.bf16.mxu0 %v5515
        %6246 = vmatpush1.bf16.msra.mxu0 %v5514
        %6247 = vmatprep.subr.bf16.mxu0 %v5521
        %6248 = vmatpush1.bf16.msra.mxu0 %v5520
        %6249 = vmatprep.subr.bf16.mxu0 %v5527
        %6250 = vmatpush1.bf16.msra.mxu0 %v5526
        %6251 = vmatprep.subr.bf16.mxu0 %v5533
        %6252 = vmatpush1.bf16.msra.mxu0 %v5532
        %6253 = vmatprep.subr.bf16.mxu0 %v5539
        %6254 = vmatpush1.bf16.msra.mxu0 %v5538
        %6255 = vmatprep.subr.bf16.mxu0 %v5545
        %6256 = vmatpush1.bf16.msra.mxu0 %v5544
        %6257 = vmatprep.subr.bf16.mxu0 %v5551
        %6258 = vmatpush1.bf16.msra.mxu0 %v5550
        %6259 = vmatprep.subr.bf16.mxu0 %v5557
        %6260 = vmatpush1.bf16.msra.mxu0 %v5556
        %6261 = vmatprep.mubr.bf16.mxu0 %v4493
        %6262 = vmatmul.mubr.bf16.gmra.mrb[0].mxu0 %v4492
        %v6263 = vpop.f32.mrb[0].mxu0
        %v6264 = vadd.f32 %v6223, %v6263
        %v6265 = vpop.f32.mrb[0].mxu0
        %v6266 = vadd.f32 %v6225, %v6265
        %v6267 = vpop.f32.mrb[0].mxu0
        %v6268 = vpop.f32.mrb[0].mxu0
        %6269 = vdwg.mxu0
        %6270 = vmatprep.subr.bf16.mxu0 %v5563
        %6271 = vmatpush1.bf16.msra.mxu0 %v5562
        %6272 = vmatprep.subr.bf16.mxu0 %v5569
        %6273 = vmatpush1.bf16.msra.mxu0 %v5568
        %6274 = vmatprep.subr.bf16.mxu0 %v5575
        %6275 = vmatpush1.bf16.msra.mxu0 %v5574
        %6276 = vmatprep.subr.bf16.mxu0 %v5581
        %6277 = vmatpush1.bf16.msra.mxu0 %v5580
        %6278 = vmatprep.subr.bf16.mxu0 %v5587
        %6279 = vmatpush1.bf16.msra.mxu0 %v5586
        %6280 = vmatprep.subr.bf16.mxu0 %v5593
        %6281 = vmatpush1.bf16.msra.mxu0 %v5592
        %6282 = vmatprep.subr.bf16.mxu0 %v5599
        %6283 = vmatpush1.bf16.msra.mxu0 %v5598
        %6284 = vmatprep.subr.bf16.mxu0 %v5605
        %6285 = vmatpush1.bf16.msra.mxu0 %v5604
        %6286 = vmatprep.subr.bf16.mxu0 %v5611
        %6287 = vmatpush1.bf16.msra.mxu0 %v5610
        %6288 = vmatprep.subr.bf16.mxu0 %v5617
        %6289 = vmatpush1.bf16.msra.mxu0 %v5616
        %6290 = vmatprep.subr.bf16.mxu0 %v5623
        %6291 = vmatpush1.bf16.msra.mxu0 %v5622
        %6292 = vmatprep.subr.bf16.mxu0 %v5629
        %6293 = vmatpush1.bf16.msra.mxu0 %v5628
        %6294 = vmatprep.subr.bf16.mxu0 %v5635
        %6295 = vmatpush1.bf16.msra.mxu0 %v5634
        %6296 = vmatprep.subr.bf16.mxu0 %v5641
        %6297 = vmatpush1.bf16.msra.mxu0 %v5640
        %6298 = vmatprep.subr.bf16.mxu0 %v5647
        %6299 = vmatpush1.bf16.msra.mxu0 %v5646
        %6300 = vmatprep.subr.bf16.mxu0 %v5653
        %6301 = vmatpush1.bf16.msra.mxu0 %v5652
        %6302 = vmatprep.mubr.bf16.mxu0 %v4495
        %6303 = vmatmul.mubr.bf16.gmra.mrb[0].mxu0 %v4494
        %v6304 = vpop.f32.mrb[0].mxu0
        %v6305 = vadd.f32 %v6264, %v6304
        %v6306 = vpop.f32.mrb[0].mxu0
        %v6307 = vadd.f32 %v6266, %v6306
        %v6308 = vpop.f32.mrb[0].mxu0
        %v6309 = vpop.f32.mrb[0].mxu0
        %6310 = vdwg.mxu0
        %6311 = vst [vmem:[%s312] sm:$0xff] %v6059
        %6312 = vst [vmem:[%s312 + $0x8] sm:$0xff] %v6061
        %6313 = vst [vmem:[%s312 + $0x10] sm:$0xff] %v6182
        %6314 = vst [vmem:[%s312 + $0x18] sm:$0xff] %v6184
        %6315 = vst [vmem:[%s312 + $0x20] sm:$0xff] %v6305
        %6316 = vst [vmem:[%s312 + $0x28] sm:$0xff] %v6307
        %s6317 = sand.u32 %s158, 1
        %s6318 = scalar_lea.sflag [#allocation5], %s6317
        %s6319 = sand.u32 %s158, 1
        %s6320 = smul.addr %s6319, 48
        %s6321 = scalar_lea.vmem [#allocation12], %s6320
        // Predicated region
        $region65: #{tpu_custom_call.1} parent=39 // pred_check
          %p6322 = pneg %p168
        $region66: #{tpu_custom_call.1} parent=39 // pred_check_branch
          %6324 = sbr.rel (%p6322) target = $region68
        $region67: #{tpu_custom_call.1} parent=39 // pred_region
          %s6326 = ssub.s32 768, 768
          %6327 = vsyncadd %s6318, %s6326
          %s6328 = smul.addr %s29, 6
          %s6329 = smul.addr %s28, 6
          %s6330 = sadd.s32 %s6328, %s6329
          %s6331 = smul.addr %s6330, 128
          %s6332 = scalar_lea.hbm %s5, %s6331
          %s6334 = sshll.u32 %s6321, 4
          %s6335 = int_to_ptr.vmem [resolvable:$true] %s6334
          %6337 = dma.vmem_to_hbm [thread:$0]  %s6335, 768, %s6332, %s6318
        $region68: #{tpu_custom_call.1} parent=39 // pred_fallthru
          _
      $region40: #{tpu_custom_call.1} parent=5 // pred_fallthru
        _
      %p6338 = scmp.le.s32.totalorder 2, %s19
      // Predicated region
      $region69: #{tpu_custom_call.1} parent=5 // pred_check
        %p6339 = pneg %p6338
      $region70: #{tpu_custom_call.1} parent=5 // pred_check_branch
        %6341 = sbr.rel (%p6339) target = $region72
      $region71: #{tpu_custom_call.1} parent=5 // pred_region
        %s6342 = ssub.s32 %s19, 2
        // Predicated region
        $region73: #{tpu_custom_call.1} parent=71 // pred_check
          %p6343 = pneg %p174
        $region74: #{tpu_custom_call.1} parent=71 // pred_check_branch
          %6345 = sbr.rel (%p6343) target = $region76
        $region75: #{tpu_custom_call.1} parent=71 // pred_region
          %s6346 = sand.u32 %s159, 1
          %s6347 = scalar_lea.sflag [#allocation5], %s6346
          %s6348 = sand.u32 %s159, 1
          %s6349 = smul.addr %s6348, 48
          %s6350 = scalar_lea.vmem [#allocation12], %s6349
          %6351 = dma.done %s6347, 768
        $region76: #{tpu_custom_call.1} parent=71 // pred_fallthru
          _
      $region72: #{tpu_custom_call.1} parent=5 // pred_fallthru
        _
    $region6: #{tpu_custom_call.1} parent=1 // loop_footer
      %s23 = sadd.s32 1, %s19
    $region7: #{tpu_custom_call.1} parent=1 // loop_footer_branch
      %18 = sbr.rel target = $region3
    $region8: #{tpu_custom_call.1} parent=1 // loop_exit
      _
    %6352 = vsyncpa [#allocation4], 1
    %s6353 = scalar_lea.sflag [#allocation4], 1
    %6354 = vsyncpa %s6353, 1
    %6355 = vsyncpa [#allocation7], 1
    %s6356 = scalar_lea.sflag [#allocation7], 1
    %6357 = vsyncpa %s6356, 1
    %6358 = vsyncpa [#allocation10], 1
    %6359 = vsyncpa [#allocation5], 1
    %s6360 = scalar_lea.sflag [#allocation5], 1
    %6361 = vsyncpa %s6360, 1

</llo_original>
